<compile_context>
chip_gen: v7x
topology: tpu7x:2x2x1
jax: 0.10.0
libtpu: 0.0.40
codegen_flags: <defaults>
</compile_context>

<pallas_src>
import functools

import jax
import jax.numpy as jnp
import numpy as np
from jax.experimental import pallas as pl
from jax.experimental.pallas import tpu as pltpu


def _round_up(x, m):
    return (x + m - 1) // m * m


def make_tap_masks(H, W, ks):
    """[ks*ks, H*W] f32: 1.0 where tap (dh, dw) reads a valid (non-pad) pixel."""
    ph = pw = (ks - 1) // 2
    p = np.arange(H * W)
    h, w = p // W, p % W
    rows = []
    for dh in range(ks):
        for dw in range(ks):
            hh, ww = h + dh - ph, w + dw - pw
            rows.append(((hh >= 0) & (hh < H) & (ww >= 0) & (ww < W))
                        .astype(np.float32))
    return np.stack(rows)


def _device_tuning():
    """(fold_batch, tap_dtype) tuned per TPU generation."""
    kind = ""
    try:
        kind = jax.devices()[0].device_kind.lower()
    except Exception:
        pass
    dual_tc = "v7" in kind                       # v7x: 2 TensorCores per chip
    bf16_vpu = ("v6" in kind) or dual_tc         # native bf16 VPU on v6e/v7x
    # Single-TC chips: fold batch into lanes. v7x: keep the parallel batch grid.
    return (not dual_tc), (jnp.bfloat16 if bf16_vpu else jnp.float32)


# ----------------------------------------------------------------------------
# Fused RDN kernel.
# ----------------------------------------------------------------------------
def make_rdn_kernel(*, metas, D, C, G, ks, W, lanes, tap_dtype):
    KK = ks * ks
    ph = pw = (ks - 1) // 2

    def kernel(x_ref, m_ref, w_ref, b_ref, o_ref, patch_ref, xb_ref, fd_ref):
        # Hoist the tap-mask rows once (JAX does not CSE repeated slices).
        masks = m_ref[...]                                   # [KK, lanes] tap_dtype
        mask_rows = [masks[t:t + 1] for t in range(KK)]

        li = [0]                                             # layer cursor

        def conv(x, relu=False):
            """x: [Cin, lanes] -> [Cout, lanes] f32 ('same' conv via im2col matmul)."""
            k, cin, cout, K, woff, boff = metas[li[0]]
            li[0] += 1
            w = w_ref[pl.ds(woff, cout), pl.ds(0, K)]        # bf16 [Cout, K]
            b = b_ref[pl.ds(boff, cout), :]                  # f32  [Cout, 1]
            if k == 1:
                patch = x.astype(jnp.bfloat16)
            else:
                xs = x.astype(tap_dtype)                     # cast once per conv
                for dh in range(k):
                    for dw in range(k):
                        t = dh * k + dw
                        # output pixel p reads input pixel p + delta (flattened).
                        delta = (dh - ph) * W + (dw - pw)
                        if delta == 0:
                            tap = xs                         # center tap: always valid
                        else:
                            xt = pltpu.roll(xs, (-delta) % lanes, axis=1)
                            tap = xt * mask_rows[t]          # zero wrapped / pad taps
                        patch_ref[pl.ds(t * cin, cin), :] = tap.astype(jnp.bfloat16)
                patch = patch_ref[pl.ds(0, K), :]            # resident bf16 im2col
            acc = jnp.dot(w, patch, preferred_element_type=jnp.float32) + b
            if relu:
                acc = jnp.maximum(acc, 0.0)
            return acc

        x = x_ref[0]                                         # [Cin_pad, lanes] f32
        f1 = conv(x)                                         # conv1
        f0 = conv(f1)                                        # conv2

        rdb_in = f0                                          # f32 residual chain
        for i in range(D):
            xb_ref[pl.ds(0, G), :] = rdb_in.astype(jnp.bfloat16)
            for j in range(1, C + 1):                        # RDBs_1 dense block
                tmp = conv(xb_ref[pl.ds(0, G * j), :], relu=True)
                xb_ref[pl.ds(G * j, G), :] = tmp.astype(jnp.bfloat16)
            rdb_in = conv(xb_ref[...]) + rdb_in              # 1x1 fuse + local residual
            fd_ref[pl.ds(i * G, G), :] = rdb_in.astype(jnp.bfloat16)

        g1 = conv(fd_ref[...])                               # conv3 (1x1)
        g2 = conv(g1)                                        # conv4
        o_ref[0] = conv(g2).astype(o_ref.dtype)              # conv5 (cout padded to 8)

    return kernel


def rdn_forward(x_nchw, w_slab, b_slab, masks_hw, *, metas, D, C, G, ks,
                out_channels, k_patch_rows, fold_batch, tap_dtype):
    N, Cin, H, W = x_nchw.shape
    HW = H * W
    cin_pad = _round_up(Cin, 8)
    cout_pad = _round_up(out_channels, 8)

    x = x_nchw
    if cin_pad != Cin:
        x = jnp.pad(x, ((0, 0), (0, cin_pad - Cin), (0, 0), (0, 0)))

    if fold_batch:                       # v5e/v6e: batch folded into the lane axis
        lanes, n_blk = N * HW, 1
        x_flat = jnp.transpose(x, (1, 0, 2, 3)).reshape(1, cin_pad, lanes)
        masks = jnp.tile(jnp.asarray(masks_hw), (1, N))
    else:                                # v7x: one batch element per TensorCore
        lanes, n_blk = HW, N
        x_flat = x.reshape(N, cin_pad, lanes)
        masks = jnp.asarray(masks_hw)
    masks = masks.astype(tap_dtype)

    kernel = make_rdn_kernel(metas=metas, D=D, C=C, G=G, ks=ks, W=W,
                             lanes=lanes, tap_dtype=tap_dtype)

    out = pl.pallas_call(
        kernel,
        out_shape=jax.ShapeDtypeStruct((n_blk, cout_pad, lanes), x_nchw.dtype),
        grid=(n_blk,),
        in_specs=[
            pl.BlockSpec((1, cin_pad, lanes), lambda n: (n, 0, 0)),
            pl.BlockSpec(masks.shape, lambda n: (0, 0)),     # resident across grid steps
            pl.BlockSpec(w_slab.shape, lambda n: (0, 0)),    # single weight slab DMA
            pl.BlockSpec(b_slab.shape, lambda n: (0, 0)),    # single bias slab DMA
        ],
        out_specs=pl.BlockSpec((1, cout_pad, lanes), lambda n: (n, 0, 0)),
        scratch_shapes=[
            pltpu.VMEM((k_patch_rows, lanes), jnp.bfloat16),   # reused im2col patch
            pltpu.VMEM((G * (C + 1), lanes), jnp.bfloat16),    # dense-block concat
            pltpu.VMEM((G * D, lanes), jnp.bfloat16),          # RDB-output concat
        ],
        compiler_params=pltpu.CompilerParams(
            dimension_semantics=("parallel",)),
    )(x_flat, masks, w_slab, b_slab)

    if fold_batch:
        out = out.reshape(cout_pad, N, H, W).transpose(1, 0, 2, 3)
    else:
        out = out.reshape(N, cout_pad, H, W)
    return out[:, :out_channels]


# ----------------------------------------------------------------------------
# Parameters (deterministic, kaiming-normal-like, matching the module structure).
# ----------------------------------------------------------------------------
def _conv_param(key, k, cin, cout):
    kw_, kb_ = jax.random.split(key)
    fan_in = k * k * cin
    std = (2.0 / fan_in) ** 0.5                  # kaiming_normal_ (relu gain)
    w = std * jax.random.normal(kw_, (cout, cin, k, k), jnp.float32)   # OIHW
    bound = 1.0 / (fan_in ** 0.5)                # PyTorch default bias init
    b = jax.random.uniform(kb_, (cout,), jnp.float32, -bound, bound)
    return w, b


def make_rdn_params(key, input_channel, output_channel, D, C, G, G0, ks):
    layers = [("conv1", ks, input_channel, G0), ("conv2", ks, G0, G)]
    for i in range(D):
        for j in range(1, C + 1):
            layers.append((f"rdb{i}_conv{j}", ks, G * j, G))
        layers.append((f"rdb{i}_fuse", 1, G * (C + 1), G))
    layers += [("conv3", 1, G * D, G0), ("conv4", ks, G0, G),
               ("conv5", ks, G, output_channel)]
    keys = jax.random.split(key, len(layers))
    params = []
    for kk, (name, k, cin, cout) in zip(keys, layers):
        w, b = _conv_param(kk, k, cin, cout)
        params.append((name, k, w, b))
    return params


def pack_param_slabs(params, input_cin_pad):
    """Pack every layer into one bf16 weight slab + one f32 bias slab.

    Weight rows per layer are [Cout_pad, k*k*Cin_pad] placed at 16-row-aligned
    offsets (bf16 (16,128) tile); K is ordered (dh, dw, cin) to match the
    kernel's im2col patch layout.  Returns (w_slab, b_slab, metas, patch_rows).
    """
    metas, blocks = [], []
    w_rows = b_rows = 0
    k_patch = 0
    for idx, (_, k, w, b) in enumerate(params):
        w = np.asarray(w, np.float32)
        b = np.asarray(b, np.float32)
        cout, cin = w.shape[0], w.shape[1]
        cin_p = input_cin_pad if idx == 0 else cin
        cout_p = _round_up(cout, 8)
        wp = np.zeros((cout_p, cin_p, k, k), np.float32)
        wp[:cout, :cin] = w
        bp = np.zeros((cout_p, 1), np.float32)
        bp[:cout, 0] = b
        K = k * k * cin_p
        if k > 1:
            k_patch = max(k_patch, K)
        wmat = wp.transpose(2, 3, 1, 0).reshape(K, cout_p).T      # [Cout_pad, K]
        metas.append((k, cin_p, cout_p, K, w_rows, b_rows))
        blocks.append((wmat, bp))
        w_rows += _round_up(cout_p, 16)
        b_rows += _round_up(cout_p, 8)
    k_cols = _round_up(max(m[3] for m in metas), 128)
    w_slab = np.zeros((w_rows, k_cols), np.float32)
    b_slab = np.zeros((b_rows, 1), np.float32)
    for (k, cin_p, cout_p, K, woff, boff), (wmat, bp) in zip(metas, blocks):
        w_slab[woff:woff + cout_p, :K] = wmat
        b_slab[boff:boff + cout_p, :] = bp
    k_patch_rows = _round_up(max(k_patch, 16), 16)
    return (jnp.asarray(w_slab, jnp.bfloat16), jnp.asarray(b_slab, jnp.float32),
            tuple(metas), k_patch_rows)


# ----------------------------------------------------------------------------
# Pure-JAX reference (same bf16-operand / f32-accumulate scheme) for validation.
# ----------------------------------------------------------------------------
def rdn_reference(x_nchw, params, *, D, C):
    it = iter(params)

    def conv(x, relu=False):
        _, k, w, b = next(it)
        pad = (k - 1) // 2
        y = jax.lax.conv_general_dilated(
            x.astype(jnp.bfloat16), w.astype(jnp.bfloat16),
            window_strides=(1, 1), padding=[(pad, pad), (pad, pad)],
            dimension_numbers=("NCHW", "OIHW", "NCHW"),
            preferred_element_type=jnp.float32)
        y = y + b.reshape(1, -1, 1, 1)
        return jnp.maximum(y, 0.0) if relu else y

    f1 = conv(x_nchw)
    f0 = conv(f1)
    rdb_in = f0
    outs = []
    for _ in range(D):
        xb = rdb_in
        for _ in range(C):
            t = conv(xb, relu=True)
            xb = jnp.concatenate([xb, t], axis=1)
        rdb_in = conv(xb) + rdb_in
        outs.append(rdb_in)
    fd = jnp.concatenate(outs, axis=1)
    return conv(conv(conv(fd)))


if __name__ == "__main__":
    # Small, module-consistent config (channel counts G/G0 multiples of 8).
    input_channel, output_channel = 4, 3
    D, C, G, G0, ks = 2, 3, 8, 16, 3
    N, H, W = 2, 16, 16

    key = jax.random.PRNGKey(0)
    kx, kp = jax.random.split(key)
    x_nchw = jax.random.normal(kx, (N, input_channel, H, W), jnp.float32)

    params = make_rdn_params(kp, input_channel, output_channel, D, C, G, G0, ks)
    w_slab, b_slab, metas, k_patch_rows = pack_param_slabs(
        params, _round_up(input_channel, 8))
    masks_hw = make_tap_masks(H, W, ks)

    fold_batch, tap_dtype = _device_tuning()

    fwd = jax.jit(functools.partial(
        rdn_forward, metas=metas, D=D, C=C, G=G, ks=ks,
        out_channels=output_channel, k_patch_rows=k_patch_rows,
        fold_batch=fold_batch, tap_dtype=tap_dtype))
    out = fwd(x_nchw, w_slab, b_slab, masks_hw)
    jax.block_until_ready(out)

    assert out.shape == (N, output_channel, H, W), out.shape

    ref = rdn_reference(x_nchw, params, D=D, C=C)
    err = float(jnp.max(jnp.abs(out - ref)))
    assert err < 1e-2, f"max abs error vs reference: {err}"
    print("KERNEL_OK")
</pallas_src>

<mosaic_0001>
module attributes {stable_mosaic.version = 11 : i64} {
  func.func @kernel(%arg0: i32, %arg1: memref<1x8x512xf32, #tpu.memory_space<vmem>>, %arg2: memref<9x512xf32, #tpu.memory_space<vmem>>, %arg3: memref<208x256xbf16, #tpu.memory_space<vmem>>, %arg4: memref<120x1xf32, #tpu.memory_space<vmem>>, %arg5: memref<1x8x512xf32, #tpu.memory_space<vmem>>, %arg6: memref<224x512xbf16, #tpu.memory_space<vmem>>, %arg7: memref<32x512xbf16, #tpu.memory_space<vmem>>, %arg8: memref<16x512xbf16, #tpu.memory_space<vmem>>) attributes {dimension_semantics = [#tpu.dimension_semantics<parallel>], iteration_bounds = array<i64: 1>, scalar_prefetch = 0 : i64, scratch_operands = 3 : i64, tpu.core_type = #tpu.core_type<tc>, window_params = [{transform_indices = @transform_0, window_bounds = array<i64: 1, 8, 512>}, {pipeline_mode = #tpu.pipeline_mode<synchronous>, transform_indices = @transform_1, window_bounds = array<i64: 9, 512>}, {pipeline_mode = #tpu.pipeline_mode<synchronous>, transform_indices = @transform_2, window_bounds = array<i64: 208, 256>}, {pipeline_mode = #tpu.pipeline_mode<synchronous>, transform_indices = @transform_3, window_bounds = array<i64: 120, 1>}, {transform_indices = @transform_4, window_bounds = array<i64: 1, 8, 512>}]} {
    %c0 = arith.constant 0 : index
    %c0_0 = arith.constant 0 : index
    %0 = vector.load %arg2[%c0, %c0_0] : memref<9x512xf32, #tpu.memory_space<vmem>>, vector<9x512xf32>
    %1 = vector.extract_strided_slice %0 {offsets = [0, 0], sizes = [1, 512], strides = [1, 1]} : vector<9x512xf32> to vector<1x512xf32>
    %2 = vector.extract_strided_slice %0 {offsets = [1, 0], sizes = [1, 512], strides = [1, 1]} : vector<9x512xf32> to vector<1x512xf32>
    %3 = vector.extract_strided_slice %0 {offsets = [2, 0], sizes = [1, 512], strides = [1, 1]} : vector<9x512xf32> to vector<1x512xf32>
    %4 = vector.extract_strided_slice %0 {offsets = [3, 0], sizes = [1, 512], strides = [1, 1]} : vector<9x512xf32> to vector<1x512xf32>
    %5 = vector.extract_strided_slice %0 {offsets = [5, 0], sizes = [1, 512], strides = [1, 1]} : vector<9x512xf32> to vector<1x512xf32>
    %6 = vector.extract_strided_slice %0 {offsets = [6, 0], sizes = [1, 512], strides = [1, 1]} : vector<9x512xf32> to vector<1x512xf32>
    %7 = vector.extract_strided_slice %0 {offsets = [7, 0], sizes = [1, 512], strides = [1, 1]} : vector<9x512xf32> to vector<1x512xf32>
    %8 = vector.extract_strided_slice %0 {offsets = [8, 0], sizes = [1, 512], strides = [1, 1]} : vector<9x512xf32> to vector<1x512xf32>
    %c0_1 = arith.constant 0 : index
    %c0_2 = arith.constant 0 : index
    %c0_3 = arith.constant 0 : index
    %9 = vector.load %arg1[%c0_1, %c0_2, %c0_3] : memref<1x8x512xf32, #tpu.memory_space<vmem>>, vector<1x8x512xf32>
    %10 = vector.shape_cast %9 : vector<1x8x512xf32> to vector<8x512xf32>
    %c0_4 = arith.constant 0 : index
    %c0_5 = arith.constant 0 : index
    %11 = vector.load %arg3[%c0_4, %c0_5] : memref<208x256xbf16, #tpu.memory_space<vmem>>, vector<16x72xbf16>
    %c0_6 = arith.constant 0 : index
    %c0_7 = arith.constant 0 : index
    %12 = vector.load %arg4[%c0_6, %c0_7] : memref<120x1xf32, #tpu.memory_space<vmem>>, vector<16x1xf32>
    %c17_i32 = arith.constant 17 : i32
    %13 = tpu.dynamic_rotate %10 by %c17_i32 dim 1 : vector<8x512xf32>, i32 -> vector<8x512xf32>
    %14 = vector.broadcast %1 : vector<1x512xf32> to vector<8x512xf32>
    %15 = arith.mulf %13, %14 : vector<8x512xf32>
    %16 = arith.truncf %15 : vector<8x512xf32> to vector<8x512xbf16>
    %c0_8 = arith.constant 0 : index
    %c0_9 = arith.constant 0 : index
    %17 = vector.load %arg6[%c0_8, %c0_9] : memref<224x512xbf16, #tpu.memory_space<vmem>>, vector<8x512xbf16>
    tpu.vector_store %arg6[%c0_8, %c0_9], %16 {strides = array<i32>} : memref<224x512xbf16, #tpu.memory_space<vmem>>, vector<8x512xbf16>,
    %c16_i32 = arith.constant 16 : i32
    %18 = tpu.dynamic_rotate %10 by %c16_i32 dim 1 : vector<8x512xf32>, i32 -> vector<8x512xf32>
    %19 = vector.broadcast %2 : vector<1x512xf32> to vector<8x512xf32>
    %20 = arith.mulf %18, %19 : vector<8x512xf32>
    %21 = arith.truncf %20 : vector<8x512xf32> to vector<8x512xbf16>
    %c8 = arith.constant 8 : index
    %c0_10 = arith.constant 0 : index
    %22 = vector.load %arg6[%c8, %c0_10] : memref<224x512xbf16, #tpu.memory_space<vmem>>, vector<8x512xbf16>
    tpu.vector_store %arg6[%c8, %c0_10], %21 {strides = array<i32>} : memref<224x512xbf16, #tpu.memory_space<vmem>>, vector<8x512xbf16>,
    %c15_i32 = arith.constant 15 : i32
    %23 = tpu.dynamic_rotate %10 by %c15_i32 dim 1 : vector<8x512xf32>, i32 -> vector<8x512xf32>
    %24 = vector.broadcast %3 : vector<1x512xf32> to vector<8x512xf32>
    %25 = arith.mulf %23, %24 : vector<8x512xf32>
    %26 = arith.truncf %25 : vector<8x512xf32> to vector<8x512xbf16>
    %c16 = arith.constant 16 : index
    %c0_11 = arith.constant 0 : index
    %27 = vector.load %arg6[%c16, %c0_11] : memref<224x512xbf16, #tpu.memory_space<vmem>>, vector<8x512xbf16>
    tpu.vector_store %arg6[%c16, %c0_11], %26 {strides = array<i32>} : memref<224x512xbf16, #tpu.memory_space<vmem>>, vector<8x512xbf16>,
    %c1_i32 = arith.constant 1 : i32
    %28 = tpu.dynamic_rotate %10 by %c1_i32 dim 1 : vector<8x512xf32>, i32 -> vector<8x512xf32>
    %29 = vector.broadcast %4 : vector<1x512xf32> to vector<8x512xf32>
    %30 = arith.mulf %28, %29 : vector<8x512xf32>
    %31 = arith.truncf %30 : vector<8x512xf32> to vector<8x512xbf16>
    %c24 = arith.constant 24 : index
    %c0_12 = arith.constant 0 : index
    %32 = vector.load %arg6[%c24, %c0_12] : memref<224x512xbf16, #tpu.memory_space<vmem>>, vector<8x512xbf16>
    tpu.vector_store %arg6[%c24, %c0_12], %31 {strides = array<i32>} : memref<224x512xbf16, #tpu.memory_space<vmem>>, vector<8x512xbf16>,
    %33 = arith.truncf %10 : vector<8x512xf32> to vector<8x512xbf16>
    %c32 = arith.constant 32 : index
    %c0_13 = arith.constant 0 : index
    %34 = vector.load %arg6[%c32, %c0_13] : memref<224x512xbf16, #tpu.memory_space<vmem>>, vector<8x512xbf16>
    tpu.vector_store %arg6[%c32, %c0_13], %33 {strides = array<i32>} : memref<224x512xbf16, #tpu.memory_space<vmem>>, vector<8x512xbf16>,
    %c511_i32 = arith.constant 511 : i32
    %35 = tpu.dynamic_rotate %10 by %c511_i32 dim 1 : vector<8x512xf32>, i32 -> vector<8x512xf32>
    %36 = vector.broadcast %5 : vector<1x512xf32> to vector<8x512xf32>
    %37 = arith.mulf %35, %36 : vector<8x512xf32>
    %38 = arith.truncf %37 : vector<8x512xf32> to vector<8x512xbf16>
    %c40 = arith.constant 40 : index
    %c0_14 = arith.constant 0 : index
    %39 = vector.load %arg6[%c40, %c0_14] : memref<224x512xbf16, #tpu.memory_space<vmem>>, vector<8x512xbf16>
    tpu.vector_store %arg6[%c40, %c0_14], %38 {strides = array<i32>} : memref<224x512xbf16, #tpu.memory_space<vmem>>, vector<8x512xbf16>,
    %c497_i32 = arith.constant 497 : i32
    %40 = tpu.dynamic_rotate %10 by %c497_i32 dim 1 : vector<8x512xf32>, i32 -> vector<8x512xf32>
    %41 = vector.broadcast %6 : vector<1x512xf32> to vector<8x512xf32>
    %42 = arith.mulf %40, %41 : vector<8x512xf32>
    %43 = arith.truncf %42 : vector<8x512xf32> to vector<8x512xbf16>
    %c48 = arith.constant 48 : index
    %c0_15 = arith.constant 0 : index
    %44 = vector.load %arg6[%c48, %c0_15] : memref<224x512xbf16, #tpu.memory_space<vmem>>, vector<8x512xbf16>
    tpu.vector_store %arg6[%c48, %c0_15], %43 {strides = array<i32>} : memref<224x512xbf16, #tpu.memory_space<vmem>>, vector<8x512xbf16>,
    %c496_i32 = arith.constant 496 : i32
    %45 = tpu.dynamic_rotate %10 by %c496_i32 dim 1 : vector<8x512xf32>, i32 -> vector<8x512xf32>
    %46 = vector.broadcast %7 : vector<1x512xf32> to vector<8x512xf32>
    %47 = arith.mulf %45, %46 : vector<8x512xf32>
    %48 = arith.truncf %47 : vector<8x512xf32> to vector<8x512xbf16>
    %c56 = arith.constant 56 : index
    %c0_16 = arith.constant 0 : index
    %49 = vector.load %arg6[%c56, %c0_16] : memref<224x512xbf16, #tpu.memory_space<vmem>>, vector<8x512xbf16>
    tpu.vector_store %arg6[%c56, %c0_16], %48 {strides = array<i32>} : memref<224x512xbf16, #tpu.memory_space<vmem>>, vector<8x512xbf16>,
    %c495_i32 = arith.constant 495 : i32
    %50 = tpu.dynamic_rotate %10 by %c495_i32 dim 1 : vector<8x512xf32>, i32 -> vector<8x512xf32>
    %51 = vector.broadcast %8 : vector<1x512xf32> to vector<8x512xf32>
    %52 = arith.mulf %50, %51 : vector<8x512xf32>
    %53 = arith.truncf %52 : vector<8x512xf32> to vector<8x512xbf16>
    %c64 = arith.constant 64 : index
    %c0_17 = arith.constant 0 : index
    %54 = vector.load %arg6[%c64, %c0_17] : memref<224x512xbf16, #tpu.memory_space<vmem>>, vector<8x512xbf16>
    tpu.vector_store %arg6[%c64, %c0_17], %53 {strides = array<i32>} : memref<224x512xbf16, #tpu.memory_space<vmem>>, vector<8x512xbf16>,
    %c0_18 = arith.constant 0 : index
    %c0_19 = arith.constant 0 : index
    %55 = vector.load %arg6[%c0_18, %c0_19] : memref<224x512xbf16, #tpu.memory_space<vmem>>, vector<72x512xbf16>
    %cst = arith.constant dense<0.000000e+00> : vector<16x512xf32>
    %56 = tpu.matmul %11, %55, %cst {dimension_numbers = #tpu.dot_dimension_numbers<[1], [0], [0], [1], [0, 0, 1, 1], [], []>} : vector<16x72xbf16>, vector<72x512xbf16>, vector<16x512xf32> -> vector<16x512xf32>
    %57 = vector.broadcast %12 : vector<16x1xf32> to vector<16x512xf32>
    %58 = arith.addf %56, %57 : vector<16x512xf32>
    %c16_20 = arith.constant 16 : index
    %c0_21 = arith.constant 0 : index
    %59 = vector.load %arg3[%c16_20, %c0_21] : memref<208x256xbf16, #tpu.memory_space<vmem>>, vector<8x144xbf16>
    %c16_22 = arith.constant 16 : index
    %c0_23 = arith.constant 0 : index
    %60 = vector.load %arg4[%c16_22, %c0_23] : memref<120x1xf32, #tpu.memory_space<vmem>>, vector<8x1xf32>
    %c17_i32_24 = arith.constant 17 : i32
    %61 = tpu.dynamic_rotate %58 by %c17_i32_24 dim 1 : vector<16x512xf32>, i32 -> vector<16x512xf32>
    %62 = vector.broadcast %1 : vector<1x512xf32> to vector<16x512xf32>
    %63 = arith.mulf %61, %62 : vector<16x512xf32>
    %64 = arith.truncf %63 : vector<16x512xf32> to vector<16x512xbf16>
    %c0_25 = arith.constant 0 : index
    %c0_26 = arith.constant 0 : index
    %65 = vector.load %arg6[%c0_25, %c0_26] : memref<224x512xbf16, #tpu.memory_space<vmem>>, vector<16x512xbf16>
    tpu.vector_store %arg6[%c0_25, %c0_26], %64 {strides = array<i32>} : memref<224x512xbf16, #tpu.memory_space<vmem>>, vector<16x512xbf16>,
    %c16_i32_27 = arith.constant 16 : i32
    %66 = tpu.dynamic_rotate %58 by %c16_i32_27 dim 1 : vector<16x512xf32>, i32 -> vector<16x512xf32>
    %67 = vector.broadcast %2 : vector<1x512xf32> to vector<16x512xf32>
    %68 = arith.mulf %66, %67 : vector<16x512xf32>
    %69 = arith.truncf %68 : vector<16x512xf32> to vector<16x512xbf16>
    %c16_28 = arith.constant 16 : index
    %c0_29 = arith.constant 0 : index
    %70 = vector.load %arg6[%c16_28, %c0_29] : memref<224x512xbf16, #tpu.memory_space<vmem>>, vector<16x512xbf16>
    tpu.vector_store %arg6[%c16_28, %c0_29], %69 {strides = array<i32>} : memref<224x512xbf16, #tpu.memory_space<vmem>>, vector<16x512xbf16>,
    %c15_i32_30 = arith.constant 15 : i32
    %71 = tpu.dynamic_rotate %58 by %c15_i32_30 dim 1 : vector<16x512xf32>, i32 -> vector<16x512xf32>
    %72 = vector.broadcast %3 : vector<1x512xf32> to vector<16x512xf32>
    %73 = arith.mulf %71, %72 : vector<16x512xf32>
    %74 = arith.truncf %73 : vector<16x512xf32> to vector<16x512xbf16>
    %c32_31 = arith.constant 32 : index
    %c0_32 = arith.constant 0 : index
    %75 = vector.load %arg6[%c32_31, %c0_32] : memref<224x512xbf16, #tpu.memory_space<vmem>>, vector<16x512xbf16>
    tpu.vector_store %arg6[%c32_31, %c0_32], %74 {strides = array<i32>} : memref<224x512xbf16, #tpu.memory_space<vmem>>, vector<16x512xbf16>,
    %c1_i32_33 = arith.constant 1 : i32
    %76 = tpu.dynamic_rotate %58 by %c1_i32_33 dim 1 : vector<16x512xf32>, i32 -> vector<16x512xf32>
    %77 = vector.broadcast %4 : vector<1x512xf32> to vector<16x512xf32>
    %78 = arith.mulf %76, %77 : vector<16x512xf32>
    %79 = arith.truncf %78 : vector<16x512xf32> to vector<16x512xbf16>
    %c48_34 = arith.constant 48 : index
    %c0_35 = arith.constant 0 : index
    %80 = vector.load %arg6[%c48_34, %c0_35] : memref<224x512xbf16, #tpu.memory_space<vmem>>, vector<16x512xbf16>
    tpu.vector_store %arg6[%c48_34, %c0_35], %79 {strides = array<i32>} : memref<224x512xbf16, #tpu.memory_space<vmem>>, vector<16x512xbf16>,
    %81 = arith.truncf %58 : vector<16x512xf32> to vector<16x512xbf16>
    %c64_36 = arith.constant 64 : index
    %c0_37 = arith.constant 0 : index
    %82 = vector.load %arg6[%c64_36, %c0_37] : memref<224x512xbf16, #tpu.memory_space<vmem>>, vector<16x512xbf16>
    tpu.vector_store %arg6[%c64_36, %c0_37], %81 {strides = array<i32>} : memref<224x512xbf16, #tpu.memory_space<vmem>>, vector<16x512xbf16>,
    %c511_i32_38 = arith.constant 511 : i32
    %83 = tpu.dynamic_rotate %58 by %c511_i32_38 dim 1 : vector<16x512xf32>, i32 -> vector<16x512xf32>
    %84 = vector.broadcast %5 : vector<1x512xf32> to vector<16x512xf32>
    %85 = arith.mulf %83, %84 : vector<16x512xf32>
    %86 = arith.truncf %85 : vector<16x512xf32> to vector<16x512xbf16>
    %c80 = arith.constant 80 : index
    %c0_39 = arith.constant 0 : index
    %87 = vector.load %arg6[%c80, %c0_39] : memref<224x512xbf16, #tpu.memory_space<vmem>>, vector<16x512xbf16>
    tpu.vector_store %arg6[%c80, %c0_39], %86 {strides = array<i32>} : memref<224x512xbf16, #tpu.memory_space<vmem>>, vector<16x512xbf16>,
    %c497_i32_40 = arith.constant 497 : i32
    %88 = tpu.dynamic_rotate %58 by %c497_i32_40 dim 1 : vector<16x512xf32>, i32 -> vector<16x512xf32>
    %89 = vector.broadcast %6 : vector<1x512xf32> to vector<16x512xf32>
    %90 = arith.mulf %88, %89 : vector<16x512xf32>
    %91 = arith.truncf %90 : vector<16x512xf32> to vector<16x512xbf16>
    %c96 = arith.constant 96 : index
    %c0_41 = arith.constant 0 : index
    %92 = vector.load %arg6[%c96, %c0_41] : memref<224x512xbf16, #tpu.memory_space<vmem>>, vector<16x512xbf16>
    tpu.vector_store %arg6[%c96, %c0_41], %91 {strides = array<i32>} : memref<224x512xbf16, #tpu.memory_space<vmem>>, vector<16x512xbf16>,
    %c496_i32_42 = arith.constant 496 : i32
    %93 = tpu.dynamic_rotate %58 by %c496_i32_42 dim 1 : vector<16x512xf32>, i32 -> vector<16x512xf32>
    %94 = vector.broadcast %7 : vector<1x512xf32> to vector<16x512xf32>
    %95 = arith.mulf %93, %94 : vector<16x512xf32>
    %96 = arith.truncf %95 : vector<16x512xf32> to vector<16x512xbf16>
    %c112 = arith.constant 112 : index
    %c0_43 = arith.constant 0 : index
    %97 = vector.load %arg6[%c112, %c0_43] : memref<224x512xbf16, #tpu.memory_space<vmem>>, vector<16x512xbf16>
    tpu.vector_store %arg6[%c112, %c0_43], %96 {strides = array<i32>} : memref<224x512xbf16, #tpu.memory_space<vmem>>, vector<16x512xbf16>,
    %c495_i32_44 = arith.constant 495 : i32
    %98 = tpu.dynamic_rotate %58 by %c495_i32_44 dim 1 : vector<16x512xf32>, i32 -> vector<16x512xf32>
    %99 = vector.broadcast %8 : vector<1x512xf32> to vector<16x512xf32>
    %100 = arith.mulf %98, %99 : vector<16x512xf32>
    %101 = arith.truncf %100 : vector<16x512xf32> to vector<16x512xbf16>
    %c128 = arith.constant 128 : index
    %c0_45 = arith.constant 0 : index
    %102 = vector.load %arg6[%c128, %c0_45] : memref<224x512xbf16, #tpu.memory_space<vmem>>, vector<16x512xbf16>
    tpu.vector_store %arg6[%c128, %c0_45], %101 {strides = array<i32>} : memref<224x512xbf16, #tpu.memory_space<vmem>>, vector<16x512xbf16>,
    %c0_46 = arith.constant 0 : index
    %c0_47 = arith.constant 0 : index
    %103 = vector.load %arg6[%c0_46, %c0_47] : memref<224x512xbf16, #tpu.memory_space<vmem>>, vector<144x512xbf16>
    %cst_48 = arith.constant dense<0.000000e+00> : vector<8x512xf32>
    %104 = tpu.matmul %59, %103, %cst_48 {dimension_numbers = #tpu.dot_dimension_numbers<[1], [0], [0], [1], [0, 0, 1, 1], [], []>} : vector<8x144xbf16>, vector<144x512xbf16>, vector<8x512xf32> -> vector<8x512xf32>
    %105 = vector.broadcast %60 : vector<8x1xf32> to vector<8x512xf32>
    %106 = arith.addf %104, %105 : vector<8x512xf32>
    %107 = arith.truncf %106 : vector<8x512xf32> to vector<8x512xbf16>
    %c0_49 = arith.constant 0 : index
    %c0_50 = arith.constant 0 : index
    %108 = vector.load %arg7[%c0_49, %c0_50] : memref<32x512xbf16, #tpu.memory_space<vmem>>, vector<8x512xbf16>
    tpu.vector_store %arg7[%c0_49, %c0_50], %107 {strides = array<i32>} : memref<32x512xbf16, #tpu.memory_space<vmem>>, vector<8x512xbf16>,
    %c0_51 = arith.constant 0 : index
    %c0_52 = arith.constant 0 : index
    %109 = vector.load %arg7[%c0_51, %c0_52] : memref<32x512xbf16, #tpu.memory_space<vmem>>, vector<8x512xbf16>
    %c32_53 = arith.constant 32 : index
    %c0_54 = arith.constant 0 : index
    %110 = vector.load %arg3[%c32_53, %c0_54] : memref<208x256xbf16, #tpu.memory_space<vmem>>, vector<8x72xbf16>
    %c24_55 = arith.constant 24 : index
    %c0_56 = arith.constant 0 : index
    %111 = vector.load %arg4[%c24_55, %c0_56] : memref<120x1xf32, #tpu.memory_space<vmem>>, vector<8x1xf32>
    %112 = arith.extf %109 : vector<8x512xbf16> to vector<8x512xf32>
    %c17_i32_57 = arith.constant 17 : i32
    %113 = tpu.dynamic_rotate %112 by %c17_i32_57 dim 1 : vector<8x512xf32>, i32 -> vector<8x512xf32>
    %114 = vector.broadcast %1 : vector<1x512xf32> to vector<8x512xf32>
    %115 = arith.mulf %113, %114 : vector<8x512xf32>
    %116 = arith.truncf %115 : vector<8x512xf32> to vector<8x512xbf16>
    %c0_58 = arith.constant 0 : index
    %c0_59 = arith.constant 0 : index
    %117 = vector.load %arg6[%c0_58, %c0_59] : memref<224x512xbf16, #tpu.memory_space<vmem>>, vector<8x512xbf16>
    tpu.vector_store %arg6[%c0_58, %c0_59], %116 {strides = array<i32>} : memref<224x512xbf16, #tpu.memory_space<vmem>>, vector<8x512xbf16>,
    %c16_i32_60 = arith.constant 16 : i32
    %118 = tpu.dynamic_rotate %112 by %c16_i32_60 dim 1 : vector<8x512xf32>, i32 -> vector<8x512xf32>
    %119 = vector.broadcast %2 : vector<1x512xf32> to vector<8x512xf32>
    %120 = arith.mulf %118, %119 : vector<8x512xf32>
    %121 = arith.truncf %120 : vector<8x512xf32> to vector<8x512xbf16>
    %c8_61 = arith.constant 8 : index
    %c0_62 = arith.constant 0 : index
    %122 = vector.load %arg6[%c8_61, %c0_62] : memref<224x512xbf16, #tpu.memory_space<vmem>>, vector<8x512xbf16>
    tpu.vector_store %arg6[%c8_61, %c0_62], %121 {strides = array<i32>} : memref<224x512xbf16, #tpu.memory_space<vmem>>, vector<8x512xbf16>,
    %c15_i32_63 = arith.constant 15 : i32
    %123 = tpu.dynamic_rotate %112 by %c15_i32_63 dim 1 : vector<8x512xf32>, i32 -> vector<8x512xf32>
    %124 = vector.broadcast %3 : vector<1x512xf32> to vector<8x512xf32>
    %125 = arith.mulf %123, %124 : vector<8x512xf32>
    %126 = arith.truncf %125 : vector<8x512xf32> to vector<8x512xbf16>
    %c16_64 = arith.constant 16 : index
    %c0_65 = arith.constant 0 : index
    %127 = vector.load %arg6[%c16_64, %c0_65] : memref<224x512xbf16, #tpu.memory_space<vmem>>, vector<8x512xbf16>
    tpu.vector_store %arg6[%c16_64, %c0_65], %126 {strides = array<i32>} : memref<224x512xbf16, #tpu.memory_space<vmem>>, vector<8x512xbf16>,
    %c1_i32_66 = arith.constant 1 : i32
    %128 = tpu.dynamic_rotate %112 by %c1_i32_66 dim 1 : vector<8x512xf32>, i32 -> vector<8x512xf32>
    %129 = vector.broadcast %4 : vector<1x512xf32> to vector<8x512xf32>
    %130 = arith.mulf %128, %129 : vector<8x512xf32>
    %131 = arith.truncf %130 : vector<8x512xf32> to vector<8x512xbf16>
    %c24_67 = arith.constant 24 : index
    %c0_68 = arith.constant 0 : index
    %132 = vector.load %arg6[%c24_67, %c0_68] : memref<224x512xbf16, #tpu.memory_space<vmem>>, vector<8x512xbf16>
    tpu.vector_store %arg6[%c24_67, %c0_68], %131 {strides = array<i32>} : memref<224x512xbf16, #tpu.memory_space<vmem>>, vector<8x512xbf16>,
    %133 = arith.truncf %112 : vector<8x512xf32> to vector<8x512xbf16>
    %c32_69 = arith.constant 32 : index
    %c0_70 = arith.constant 0 : index
    %134 = vector.load %arg6[%c32_69, %c0_70] : memref<224x512xbf16, #tpu.memory_space<vmem>>, vector<8x512xbf16>
    tpu.vector_store %arg6[%c32_69, %c0_70], %133 {strides = array<i32>} : memref<224x512xbf16, #tpu.memory_space<vmem>>, vector<8x512xbf16>,
    %c511_i32_71 = arith.constant 511 : i32
    %135 = tpu.dynamic_rotate %112 by %c511_i32_71 dim 1 : vector<8x512xf32>, i32 -> vector<8x512xf32>
    %136 = vector.broadcast %5 : vector<1x512xf32> to vector<8x512xf32>
    %137 = arith.mulf %135, %136 : vector<8x512xf32>
    %138 = arith.truncf %137 : vector<8x512xf32> to vector<8x512xbf16>
    %c40_72 = arith.constant 40 : index
    %c0_73 = arith.constant 0 : index
    %139 = vector.load %arg6[%c40_72, %c0_73] : memref<224x512xbf16, #tpu.memory_space<vmem>>, vector<8x512xbf16>
    tpu.vector_store %arg6[%c40_72, %c0_73], %138 {strides = array<i32>} : memref<224x512xbf16, #tpu.memory_space<vmem>>, vector<8x512xbf16>,
    %c497_i32_74 = arith.constant 497 : i32
    %140 = tpu.dynamic_rotate %112 by %c497_i32_74 dim 1 : vector<8x512xf32>, i32 -> vector<8x512xf32>
    %141 = vector.broadcast %6 : vector<1x512xf32> to vector<8x512xf32>
    %142 = arith.mulf %140, %141 : vector<8x512xf32>
    %143 = arith.truncf %142 : vector<8x512xf32> to vector<8x512xbf16>
    %c48_75 = arith.constant 48 : index
    %c0_76 = arith.constant 0 : index
    %144 = vector.load %arg6[%c48_75, %c0_76] : memref<224x512xbf16, #tpu.memory_space<vmem>>, vector<8x512xbf16>
    tpu.vector_store %arg6[%c48_75, %c0_76], %143 {strides = array<i32>} : memref<224x512xbf16, #tpu.memory_space<vmem>>, vector<8x512xbf16>,
    %c496_i32_77 = arith.constant 496 : i32
    %145 = tpu.dynamic_rotate %112 by %c496_i32_77 dim 1 : vector<8x512xf32>, i32 -> vector<8x512xf32>
    %146 = vector.broadcast %7 : vector<1x512xf32> to vector<8x512xf32>
    %147 = arith.mulf %145, %146 : vector<8x512xf32>
    %148 = arith.truncf %147 : vector<8x512xf32> to vector<8x512xbf16>
    %c56_78 = arith.constant 56 : index
    %c0_79 = arith.constant 0 : index
    %149 = vector.load %arg6[%c56_78, %c0_79] : memref<224x512xbf16, #tpu.memory_space<vmem>>, vector<8x512xbf16>
    tpu.vector_store %arg6[%c56_78, %c0_79], %148 {strides = array<i32>} : memref<224x512xbf16, #tpu.memory_space<vmem>>, vector<8x512xbf16>,
    %c495_i32_80 = arith.constant 495 : i32
    %150 = tpu.dynamic_rotate %112 by %c495_i32_80 dim 1 : vector<8x512xf32>, i32 -> vector<8x512xf32>
    %151 = vector.broadcast %8 : vector<1x512xf32> to vector<8x512xf32>
    %152 = arith.mulf %150, %151 : vector<8x512xf32>
    %153 = arith.truncf %152 : vector<8x512xf32> to vector<8x512xbf16>
    %c64_81 = arith.constant 64 : index
    %c0_82 = arith.constant 0 : index
    %154 = vector.load %arg6[%c64_81, %c0_82] : memref<224x512xbf16, #tpu.memory_space<vmem>>, vector<8x512xbf16>
    tpu.vector_store %arg6[%c64_81, %c0_82], %153 {strides = array<i32>} : memref<224x512xbf16, #tpu.memory_space<vmem>>, vector<8x512xbf16>,
    %c0_83 = arith.constant 0 : index
    %c0_84 = arith.constant 0 : index
    %155 = vector.load %arg6[%c0_83, %c0_84] : memref<224x512xbf16, #tpu.memory_space<vmem>>, vector<72x512xbf16>
    %cst_85 = arith.constant dense<0.000000e+00> : vector<8x512xf32>
    %156 = tpu.matmul %110, %155, %cst_85 {dimension_numbers = #tpu.dot_dimension_numbers<[1], [0], [0], [1], [0, 0, 1, 1], [], []>} : vector<8x72xbf16>, vector<72x512xbf16>, vector<8x512xf32> -> vector<8x512xf32>
    %157 = vector.broadcast %111 : vector<8x1xf32> to vector<8x512xf32>
    %158 = arith.addf %156, %157 : vector<8x512xf32>
    %cst_86 = arith.constant 0.000000e+00 : f32
    %159 = vector.broadcast %cst_86 : f32 to vector<8x512xf32>
    %160 = arith.maximumf %158, %159 : vector<8x512xf32>
    %161 = arith.truncf %160 : vector<8x512xf32> to vector<8x512xbf16>
    %c8_87 = arith.constant 8 : index
    %c0_88 = arith.constant 0 : index
    %162 = vector.load %arg7[%c8_87, %c0_88] : memref<32x512xbf16, #tpu.memory_space<vmem>>, vector<8x512xbf16>
    tpu.vector_store %arg7[%c8_87, %c0_88], %161 {strides = array<i32>} : memref<32x512xbf16, #tpu.memory_space<vmem>>, vector<8x512xbf16>,
    %c0_89 = arith.constant 0 : index
    %c0_90 = arith.constant 0 : index
    %163 = vector.load %arg7[%c0_89, %c0_90] : memref<32x512xbf16, #tpu.memory_space<vmem>>, vector<16x512xbf16>
    %c48_91 = arith.constant 48 : index
    %c0_92 = arith.constant 0 : index
    %164 = vector.load %arg3[%c48_91, %c0_92] : memref<208x256xbf16, #tpu.memory_space<vmem>>, vector<8x144xbf16>
    %c32_93 = arith.constant 32 : index
    %c0_94 = arith.constant 0 : index
    %165 = vector.load %arg4[%c32_93, %c0_94] : memref<120x1xf32, #tpu.memory_space<vmem>>, vector<8x1xf32>
    %166 = arith.extf %163 : vector<16x512xbf16> to vector<16x512xf32>
    %c17_i32_95 = arith.constant 17 : i32
    %167 = tpu.dynamic_rotate %166 by %c17_i32_95 dim 1 : vector<16x512xf32>, i32 -> vector<16x512xf32>
    %168 = vector.broadcast %1 : vector<1x512xf32> to vector<16x512xf32>
    %169 = arith.mulf %167, %168 : vector<16x512xf32>
    %170 = arith.truncf %169 : vector<16x512xf32> to vector<16x512xbf16>
    %c0_96 = arith.constant 0 : index
    %c0_97 = arith.constant 0 : index
    %171 = vector.load %arg6[%c0_96, %c0_97] : memref<224x512xbf16, #tpu.memory_space<vmem>>, vector<16x512xbf16>
    tpu.vector_store %arg6[%c0_96, %c0_97], %170 {strides = array<i32>} : memref<224x512xbf16, #tpu.memory_space<vmem>>, vector<16x512xbf16>,
    %c16_i32_98 = arith.constant 16 : i32
    %172 = tpu.dynamic_rotate %166 by %c16_i32_98 dim 1 : vector<16x512xf32>, i32 -> vector<16x512xf32>
    %173 = vector.broadcast %2 : vector<1x512xf32> to vector<16x512xf32>
    %174 = arith.mulf %172, %173 : vector<16x512xf32>
    %175 = arith.truncf %174 : vector<16x512xf32> to vector<16x512xbf16>
    %c16_99 = arith.constant 16 : index
    %c0_100 = arith.constant 0 : index
    %176 = vector.load %arg6[%c16_99, %c0_100] : memref<224x512xbf16, #tpu.memory_space<vmem>>, vector<16x512xbf16>
    tpu.vector_store %arg6[%c16_99, %c0_100], %175 {strides = array<i32>} : memref<224x512xbf16, #tpu.memory_space<vmem>>, vector<16x512xbf16>,
    %c15_i32_101 = arith.constant 15 : i32
    %177 = tpu.dynamic_rotate %166 by %c15_i32_101 dim 1 : vector<16x512xf32>, i32 -> vector<16x512xf32>
    %178 = vector.broadcast %3 : vector<1x512xf32> to vector<16x512xf32>
    %179 = arith.mulf %177, %178 : vector<16x512xf32>
    %180 = arith.truncf %179 : vector<16x512xf32> to vector<16x512xbf16>
    %c32_102 = arith.constant 32 : index
    %c0_103 = arith.constant 0 : index
    %181 = vector.load %arg6[%c32_102, %c0_103] : memref<224x512xbf16, #tpu.memory_space<vmem>>, vector<16x512xbf16>
    tpu.vector_store %arg6[%c32_102, %c0_103], %180 {strides = array<i32>} : memref<224x512xbf16, #tpu.memory_space<vmem>>, vector<16x512xbf16>,
    %c1_i32_104 = arith.constant 1 : i32
    %182 = tpu.dynamic_rotate %166 by %c1_i32_104 dim 1 : vector<16x512xf32>, i32 -> vector<16x512xf32>
    %183 = vector.broadcast %4 : vector<1x512xf32> to vector<16x512xf32>
    %184 = arith.mulf %182, %183 : vector<16x512xf32>
    %185 = arith.truncf %184 : vector<16x512xf32> to vector<16x512xbf16>
    %c48_105 = arith.constant 48 : index
    %c0_106 = arith.constant 0 : index
    %186 = vector.load %arg6[%c48_105, %c0_106] : memref<224x512xbf16, #tpu.memory_space<vmem>>, vector<16x512xbf16>
    tpu.vector_store %arg6[%c48_105, %c0_106], %185 {strides = array<i32>} : memref<224x512xbf16, #tpu.memory_space<vmem>>, vector<16x512xbf16>,
    %187 = arith.truncf %166 : vector<16x512xf32> to vector<16x512xbf16>
    %c64_107 = arith.constant 64 : index
    %c0_108 = arith.constant 0 : index
    %188 = vector.load %arg6[%c64_107, %c0_108] : memref<224x512xbf16, #tpu.memory_space<vmem>>, vector<16x512xbf16>
    tpu.vector_store %arg6[%c64_107, %c0_108], %187 {strides = array<i32>} : memref<224x512xbf16, #tpu.memory_space<vmem>>, vector<16x512xbf16>,
    %c511_i32_109 = arith.constant 511 : i32
    %189 = tpu.dynamic_rotate %166 by %c511_i32_109 dim 1 : vector<16x512xf32>, i32 -> vector<16x512xf32>
    %190 = vector.broadcast %5 : vector<1x512xf32> to vector<16x512xf32>
    %191 = arith.mulf %189, %190 : vector<16x512xf32>
    %192 = arith.truncf %191 : vector<16x512xf32> to vector<16x512xbf16>
    %c80_110 = arith.constant 80 : index
    %c0_111 = arith.constant 0 : index
    %193 = vector.load %arg6[%c80_110, %c0_111] : memref<224x512xbf16, #tpu.memory_space<vmem>>, vector<16x512xbf16>
    tpu.vector_store %arg6[%c80_110, %c0_111], %192 {strides = array<i32>} : memref<224x512xbf16, #tpu.memory_space<vmem>>, vector<16x512xbf16>,
    %c497_i32_112 = arith.constant 497 : i32
    %194 = tpu.dynamic_rotate %166 by %c497_i32_112 dim 1 : vector<16x512xf32>, i32 -> vector<16x512xf32>
    %195 = vector.broadcast %6 : vector<1x512xf32> to vector<16x512xf32>
    %196 = arith.mulf %194, %195 : vector<16x512xf32>
    %197 = arith.truncf %196 : vector<16x512xf32> to vector<16x512xbf16>
    %c96_113 = arith.constant 96 : index
    %c0_114 = arith.constant 0 : index
    %198 = vector.load %arg6[%c96_113, %c0_114] : memref<224x512xbf16, #tpu.memory_space<vmem>>, vector<16x512xbf16>
    tpu.vector_store %arg6[%c96_113, %c0_114], %197 {strides = array<i32>} : memref<224x512xbf16, #tpu.memory_space<vmem>>, vector<16x512xbf16>,
    %c496_i32_115 = arith.constant 496 : i32
    %199 = tpu.dynamic_rotate %166 by %c496_i32_115 dim 1 : vector<16x512xf32>, i32 -> vector<16x512xf32>
    %200 = vector.broadcast %7 : vector<1x512xf32> to vector<16x512xf32>
    %201 = arith.mulf %199, %200 : vector<16x512xf32>
    %202 = arith.truncf %201 : vector<16x512xf32> to vector<16x512xbf16>
    %c112_116 = arith.constant 112 : index
    %c0_117 = arith.constant 0 : index
    %203 = vector.load %arg6[%c112_116, %c0_117] : memref<224x512xbf16, #tpu.memory_space<vmem>>, vector<16x512xbf16>
    tpu.vector_store %arg6[%c112_116, %c0_117], %202 {strides = array<i32>} : memref<224x512xbf16, #tpu.memory_space<vmem>>, vector<16x512xbf16>,
    %c495_i32_118 = arith.constant 495 : i32
    %204 = tpu.dynamic_rotate %166 by %c495_i32_118 dim 1 : vector<16x512xf32>, i32 -> vector<16x512xf32>
    %205 = vector.broadcast %8 : vector<1x512xf32> to vector<16x512xf32>
    %206 = arith.mulf %204, %205 : vector<16x512xf32>
    %207 = arith.truncf %206 : vector<16x512xf32> to vector<16x512xbf16>
    %c128_119 = arith.constant 128 : index
    %c0_120 = arith.constant 0 : index
    %208 = vector.load %arg6[%c128_119, %c0_120] : memref<224x512xbf16, #tpu.memory_space<vmem>>, vector<16x512xbf16>
    tpu.vector_store %arg6[%c128_119, %c0_120], %207 {strides = array<i32>} : memref<224x512xbf16, #tpu.memory_space<vmem>>, vector<16x512xbf16>,
    %c0_121 = arith.constant 0 : index
    %c0_122 = arith.constant 0 : index
    %209 = vector.load %arg6[%c0_121, %c0_122] : memref<224x512xbf16, #tpu.memory_space<vmem>>, vector<144x512xbf16>
    %cst_123 = arith.constant dense<0.000000e+00> : vector<8x512xf32>
    %210 = tpu.matmul %164, %209, %cst_123 {dimension_numbers = #tpu.dot_dimension_numbers<[1], [0], [0], [1], [0, 0, 1, 1], [], []>} : vector<8x144xbf16>, vector<144x512xbf16>, vector<8x512xf32> -> vector<8x512xf32>
    %211 = vector.broadcast %165 : vector<8x1xf32> to vector<8x512xf32>
    %212 = arith.addf %210, %211 : vector<8x512xf32>
    %cst_124 = arith.constant 0.000000e+00 : f32
    %213 = vector.broadcast %cst_124 : f32 to vector<8x512xf32>
    %214 = arith.maximumf %212, %213 : vector<8x512xf32>
    %215 = arith.truncf %214 : vector<8x512xf32> to vector<8x512xbf16>
    %c16_125 = arith.constant 16 : index
    %c0_126 = arith.constant 0 : index
    %216 = vector.load %arg7[%c16_125, %c0_126] : memref<32x512xbf16, #tpu.memory_space<vmem>>, vector<8x512xbf16>
    tpu.vector_store %arg7[%c16_125, %c0_126], %215 {strides = array<i32>} : memref<32x512xbf16, #tpu.memory_space<vmem>>, vector<8x512xbf16>,
    %c0_127 = arith.constant 0 : index
    %c0_128 = arith.constant 0 : index
    %217 = vector.load %arg7[%c0_127, %c0_128] : memref<32x512xbf16, #tpu.memory_space<vmem>>, vector<24x512xbf16>
    %c64_129 = arith.constant 64 : index
    %c0_130 = arith.constant 0 : index
    %218 = vector.load %arg3[%c64_129, %c0_130] : memref<208x256xbf16, #tpu.memory_space<vmem>>, vector<8x216xbf16>
    %c40_131 = arith.constant 40 : index
    %c0_132 = arith.constant 0 : index
    %219 = vector.load %arg4[%c40_131, %c0_132] : memref<120x1xf32, #tpu.memory_space<vmem>>, vector<8x1xf32>
    %220 = arith.extf %217 : vector<24x512xbf16> to vector<24x512xf32>
    %c17_i32_133 = arith.constant 17 : i32
    %221 = tpu.dynamic_rotate %220 by %c17_i32_133 dim 1 : vector<24x512xf32>, i32 -> vector<24x512xf32>
    %222 = vector.broadcast %1 : vector<1x512xf32> to vector<24x512xf32>
    %223 = arith.mulf %221, %222 : vector<24x512xf32>
    %224 = arith.truncf %223 : vector<24x512xf32> to vector<24x512xbf16>
    %c0_134 = arith.constant 0 : index
    %c0_135 = arith.constant 0 : index
    %225 = vector.load %arg6[%c0_134, %c0_135] : memref<224x512xbf16, #tpu.memory_space<vmem>>, vector<24x512xbf16>
    tpu.vector_store %arg6[%c0_134, %c0_135], %224 {strides = array<i32>} : memref<224x512xbf16, #tpu.memory_space<vmem>>, vector<24x512xbf16>,
    %c16_i32_136 = arith.constant 16 : i32
    %226 = tpu.dynamic_rotate %220 by %c16_i32_136 dim 1 : vector<24x512xf32>, i32 -> vector<24x512xf32>
    %227 = vector.broadcast %2 : vector<1x512xf32> to vector<24x512xf32>
    %228 = arith.mulf %226, %227 : vector<24x512xf32>
    %229 = arith.truncf %228 : vector<24x512xf32> to vector<24x512xbf16>
    %c24_137 = arith.constant 24 : index
    %c0_138 = arith.constant 0 : index
    %230 = vector.load %arg6[%c24_137, %c0_138] : memref<224x512xbf16, #tpu.memory_space<vmem>>, vector<24x512xbf16>
    tpu.vector_store %arg6[%c24_137, %c0_138], %229 {strides = array<i32>} : memref<224x512xbf16, #tpu.memory_space<vmem>>, vector<24x512xbf16>,
    %c15_i32_139 = arith.constant 15 : i32
    %231 = tpu.dynamic_rotate %220 by %c15_i32_139 dim 1 : vector<24x512xf32>, i32 -> vector<24x512xf32>
    %232 = vector.broadcast %3 : vector<1x512xf32> to vector<24x512xf32>
    %233 = arith.mulf %231, %232 : vector<24x512xf32>
    %234 = arith.truncf %233 : vector<24x512xf32> to vector<24x512xbf16>
    %c48_140 = arith.constant 48 : index
    %c0_141 = arith.constant 0 : index
    %235 = vector.load %arg6[%c48_140, %c0_141] : memref<224x512xbf16, #tpu.memory_space<vmem>>, vector<24x512xbf16>
    tpu.vector_store %arg6[%c48_140, %c0_141], %234 {strides = array<i32>} : memref<224x512xbf16, #tpu.memory_space<vmem>>, vector<24x512xbf16>,
    %c1_i32_142 = arith.constant 1 : i32
    %236 = tpu.dynamic_rotate %220 by %c1_i32_142 dim 1 : vector<24x512xf32>, i32 -> vector<24x512xf32>
    %237 = vector.broadcast %4 : vector<1x512xf32> to vector<24x512xf32>
    %238 = arith.mulf %236, %237 : vector<24x512xf32>
    %239 = arith.truncf %238 : vector<24x512xf32> to vector<24x512xbf16>
    %c72 = arith.constant 72 : index
    %c0_143 = arith.constant 0 : index
    %240 = vector.load %arg6[%c72, %c0_143] : memref<224x512xbf16, #tpu.memory_space<vmem>>, vector<24x512xbf16>
    tpu.vector_store %arg6[%c72, %c0_143], %239 {strides = array<i32>} : memref<224x512xbf16, #tpu.memory_space<vmem>>, vector<24x512xbf16>,
    %241 = arith.truncf %220 : vector<24x512xf32> to vector<24x512xbf16>
    %c96_144 = arith.constant 96 : index
    %c0_145 = arith.constant 0 : index
    %242 = vector.load %arg6[%c96_144, %c0_145] : memref<224x512xbf16, #tpu.memory_space<vmem>>, vector<24x512xbf16>
    tpu.vector_store %arg6[%c96_144, %c0_145], %241 {strides = array<i32>} : memref<224x512xbf16, #tpu.memory_space<vmem>>, vector<24x512xbf16>,
    %c511_i32_146 = arith.constant 511 : i32
    %243 = tpu.dynamic_rotate %220 by %c511_i32_146 dim 1 : vector<24x512xf32>, i32 -> vector<24x512xf32>
    %244 = vector.broadcast %5 : vector<1x512xf32> to vector<24x512xf32>
    %245 = arith.mulf %243, %244 : vector<24x512xf32>
    %246 = arith.truncf %245 : vector<24x512xf32> to vector<24x512xbf16>
    %c120 = arith.constant 120 : index
    %c0_147 = arith.constant 0 : index
    %247 = vector.load %arg6[%c120, %c0_147] : memref<224x512xbf16, #tpu.memory_space<vmem>>, vector<24x512xbf16>
    tpu.vector_store %arg6[%c120, %c0_147], %246 {strides = array<i32>} : memref<224x512xbf16, #tpu.memory_space<vmem>>, vector<24x512xbf16>,
    %c497_i32_148 = arith.constant 497 : i32
    %248 = tpu.dynamic_rotate %220 by %c497_i32_148 dim 1 : vector<24x512xf32>, i32 -> vector<24x512xf32>
    %249 = vector.broadcast %6 : vector<1x512xf32> to vector<24x512xf32>
    %250 = arith.mulf %248, %249 : vector<24x512xf32>
    %251 = arith.truncf %250 : vector<24x512xf32> to vector<24x512xbf16>
    %c144 = arith.constant 144 : index
    %c0_149 = arith.constant 0 : index
    %252 = vector.load %arg6[%c144, %c0_149] : memref<224x512xbf16, #tpu.memory_space<vmem>>, vector<24x512xbf16>
    tpu.vector_store %arg6[%c144, %c0_149], %251 {strides = array<i32>} : memref<224x512xbf16, #tpu.memory_space<vmem>>, vector<24x512xbf16>,
    %c496_i32_150 = arith.constant 496 : i32
    %253 = tpu.dynamic_rotate %220 by %c496_i32_150 dim 1 : vector<24x512xf32>, i32 -> vector<24x512xf32>
    %254 = vector.broadcast %7 : vector<1x512xf32> to vector<24x512xf32>
    %255 = arith.mulf %253, %254 : vector<24x512xf32>
    %256 = arith.truncf %255 : vector<24x512xf32> to vector<24x512xbf16>
    %c168 = arith.constant 168 : index
    %c0_151 = arith.constant 0 : index
    %257 = vector.load %arg6[%c168, %c0_151] : memref<224x512xbf16, #tpu.memory_space<vmem>>, vector<24x512xbf16>
    tpu.vector_store %arg6[%c168, %c0_151], %256 {strides = array<i32>} : memref<224x512xbf16, #tpu.memory_space<vmem>>, vector<24x512xbf16>,
    %c495_i32_152 = arith.constant 495 : i32
    %258 = tpu.dynamic_rotate %220 by %c495_i32_152 dim 1 : vector<24x512xf32>, i32 -> vector<24x512xf32>
    %259 = vector.broadcast %8 : vector<1x512xf32> to vector<24x512xf32>
    %260 = arith.mulf %258, %259 : vector<24x512xf32>
    %261 = arith.truncf %260 : vector<24x512xf32> to vector<24x512xbf16>
    %c192 = arith.constant 192 : index
    %c0_153 = arith.constant 0 : index
    %262 = vector.load %arg6[%c192, %c0_153] : memref<224x512xbf16, #tpu.memory_space<vmem>>, vector<24x512xbf16>
    tpu.vector_store %arg6[%c192, %c0_153], %261 {strides = array<i32>} : memref<224x512xbf16, #tpu.memory_space<vmem>>, vector<24x512xbf16>,
    %c0_154 = arith.constant 0 : index
    %c0_155 = arith.constant 0 : index
    %263 = vector.load %arg6[%c0_154, %c0_155] : memref<224x512xbf16, #tpu.memory_space<vmem>>, vector<216x512xbf16>
    %cst_156 = arith.constant dense<0.000000e+00> : vector<8x512xf32>
    %264 = tpu.matmul %218, %263, %cst_156 {dimension_numbers = #tpu.dot_dimension_numbers<[1], [0], [0], [1], [0, 0, 1, 1], [], []>} : vector<8x216xbf16>, vector<216x512xbf16>, vector<8x512xf32> -> vector<8x512xf32>
    %265 = vector.broadcast %219 : vector<8x1xf32> to vector<8x512xf32>
    %266 = arith.addf %264, %265 : vector<8x512xf32>
    %cst_157 = arith.constant 0.000000e+00 : f32
    %267 = vector.broadcast %cst_157 : f32 to vector<8x512xf32>
    %268 = arith.maximumf %266, %267 : vector<8x512xf32>
    %269 = arith.truncf %268 : vector<8x512xf32> to vector<8x512xbf16>
    %c24_158 = arith.constant 24 : index
    %c0_159 = arith.constant 0 : index
    %270 = vector.load %arg7[%c24_158, %c0_159] : memref<32x512xbf16, #tpu.memory_space<vmem>>, vector<8x512xbf16>
    tpu.vector_store %arg7[%c24_158, %c0_159], %269 {strides = array<i32>} : memref<32x512xbf16, #tpu.memory_space<vmem>>, vector<8x512xbf16>,
    %c0_160 = arith.constant 0 : index
    %c0_161 = arith.constant 0 : index
    %271 = vector.load %arg7[%c0_160, %c0_161] : memref<32x512xbf16, #tpu.memory_space<vmem>>, vector<32x512xbf16>
    %c80_162 = arith.constant 80 : index
    %c0_163 = arith.constant 0 : index
    %272 = vector.load %arg3[%c80_162, %c0_163] : memref<208x256xbf16, #tpu.memory_space<vmem>>, vector<8x32xbf16>
    %c48_164 = arith.constant 48 : index
    %c0_165 = arith.constant 0 : index
    %273 = vector.load %arg4[%c48_164, %c0_165] : memref<120x1xf32, #tpu.memory_space<vmem>>, vector<8x1xf32>
    %cst_166 = arith.constant dense<0.000000e+00> : vector<8x512xf32>
    %274 = tpu.matmul %272, %271, %cst_166 {dimension_numbers = #tpu.dot_dimension_numbers<[1], [0], [0], [1], [0, 0, 1, 1], [], []>} : vector<8x32xbf16>, vector<32x512xbf16>, vector<8x512xf32> -> vector<8x512xf32>
    %275 = vector.broadcast %273 : vector<8x1xf32> to vector<8x512xf32>
    %276 = arith.addf %274, %275 : vector<8x512xf32>
    %277 = arith.addf %276, %106 : vector<8x512xf32>
    %278 = arith.truncf %277 : vector<8x512xf32> to vector<8x512xbf16>
    %c0_167 = arith.constant 0 : index
    %c0_168 = arith.constant 0 : index
    %279 = vector.load %arg8[%c0_167, %c0_168] : memref<16x512xbf16, #tpu.memory_space<vmem>>, vector<8x512xbf16>
    tpu.vector_store %arg8[%c0_167, %c0_168], %278 {strides = array<i32>} : memref<16x512xbf16, #tpu.memory_space<vmem>>, vector<8x512xbf16>,
    %280 = arith.truncf %277 : vector<8x512xf32> to vector<8x512xbf16>
    %c0_169 = arith.constant 0 : index
    %c0_170 = arith.constant 0 : index
    %281 = vector.load %arg7[%c0_169, %c0_170] : memref<32x512xbf16, #tpu.memory_space<vmem>>, vector<8x512xbf16>
    tpu.vector_store %arg7[%c0_169, %c0_170], %280 {strides = array<i32>} : memref<32x512xbf16, #tpu.memory_space<vmem>>, vector<8x512xbf16>,
    %c0_171 = arith.constant 0 : index
    %c0_172 = arith.constant 0 : index
    %282 = vector.load %arg7[%c0_171, %c0_172] : memref<32x512xbf16, #tpu.memory_space<vmem>>, vector<8x512xbf16>
    %c96_173 = arith.constant 96 : index
    %c0_174 = arith.constant 0 : index
    %283 = vector.load %arg3[%c96_173, %c0_174] : memref<208x256xbf16, #tpu.memory_space<vmem>>, vector<8x72xbf16>
    %c56_175 = arith.constant 56 : index
    %c0_176 = arith.constant 0 : index
    %284 = vector.load %arg4[%c56_175, %c0_176] : memref<120x1xf32, #tpu.memory_space<vmem>>, vector<8x1xf32>
    %285 = arith.extf %282 : vector<8x512xbf16> to vector<8x512xf32>
    %c17_i32_177 = arith.constant 17 : i32
    %286 = tpu.dynamic_rotate %285 by %c17_i32_177 dim 1 : vector<8x512xf32>, i32 -> vector<8x512xf32>
    %287 = vector.broadcast %1 : vector<1x512xf32> to vector<8x512xf32>
    %288 = arith.mulf %286, %287 : vector<8x512xf32>
    %289 = arith.truncf %288 : vector<8x512xf32> to vector<8x512xbf16>
    %c0_178 = arith.constant 0 : index
    %c0_179 = arith.constant 0 : index
    %290 = vector.load %arg6[%c0_178, %c0_179] : memref<224x512xbf16, #tpu.memory_space<vmem>>, vector<8x512xbf16>
    tpu.vector_store %arg6[%c0_178, %c0_179], %289 {strides = array<i32>} : memref<224x512xbf16, #tpu.memory_space<vmem>>, vector<8x512xbf16>,
    %c16_i32_180 = arith.constant 16 : i32
    %291 = tpu.dynamic_rotate %285 by %c16_i32_180 dim 1 : vector<8x512xf32>, i32 -> vector<8x512xf32>
    %292 = vector.broadcast %2 : vector<1x512xf32> to vector<8x512xf32>
    %293 = arith.mulf %291, %292 : vector<8x512xf32>
    %294 = arith.truncf %293 : vector<8x512xf32> to vector<8x512xbf16>
    %c8_181 = arith.constant 8 : index
    %c0_182 = arith.constant 0 : index
    %295 = vector.load %arg6[%c8_181, %c0_182] : memref<224x512xbf16, #tpu.memory_space<vmem>>, vector<8x512xbf16>
    tpu.vector_store %arg6[%c8_181, %c0_182], %294 {strides = array<i32>} : memref<224x512xbf16, #tpu.memory_space<vmem>>, vector<8x512xbf16>,
    %c15_i32_183 = arith.constant 15 : i32
    %296 = tpu.dynamic_rotate %285 by %c15_i32_183 dim 1 : vector<8x512xf32>, i32 -> vector<8x512xf32>
    %297 = vector.broadcast %3 : vector<1x512xf32> to vector<8x512xf32>
    %298 = arith.mulf %296, %297 : vector<8x512xf32>
    %299 = arith.truncf %298 : vector<8x512xf32> to vector<8x512xbf16>
    %c16_184 = arith.constant 16 : index
    %c0_185 = arith.constant 0 : index
    %300 = vector.load %arg6[%c16_184, %c0_185] : memref<224x512xbf16, #tpu.memory_space<vmem>>, vector<8x512xbf16>
    tpu.vector_store %arg6[%c16_184, %c0_185], %299 {strides = array<i32>} : memref<224x512xbf16, #tpu.memory_space<vmem>>, vector<8x512xbf16>,
    %c1_i32_186 = arith.constant 1 : i32
    %301 = tpu.dynamic_rotate %285 by %c1_i32_186 dim 1 : vector<8x512xf32>, i32 -> vector<8x512xf32>
    %302 = vector.broadcast %4 : vector<1x512xf32> to vector<8x512xf32>
    %303 = arith.mulf %301, %302 : vector<8x512xf32>
    %304 = arith.truncf %303 : vector<8x512xf32> to vector<8x512xbf16>
    %c24_187 = arith.constant 24 : index
    %c0_188 = arith.constant 0 : index
    %305 = vector.load %arg6[%c24_187, %c0_188] : memref<224x512xbf16, #tpu.memory_space<vmem>>, vector<8x512xbf16>
    tpu.vector_store %arg6[%c24_187, %c0_188], %304 {strides = array<i32>} : memref<224x512xbf16, #tpu.memory_space<vmem>>, vector<8x512xbf16>,
    %306 = arith.truncf %285 : vector<8x512xf32> to vector<8x512xbf16>
    %c32_189 = arith.constant 32 : index
    %c0_190 = arith.constant 0 : index
    %307 = vector.load %arg6[%c32_189, %c0_190] : memref<224x512xbf16, #tpu.memory_space<vmem>>, vector<8x512xbf16>
    tpu.vector_store %arg6[%c32_189, %c0_190], %306 {strides = array<i32>} : memref<224x512xbf16, #tpu.memory_space<vmem>>, vector<8x512xbf16>,
    %c511_i32_191 = arith.constant 511 : i32
    %308 = tpu.dynamic_rotate %285 by %c511_i32_191 dim 1 : vector<8x512xf32>, i32 -> vector<8x512xf32>
    %309 = vector.broadcast %5 : vector<1x512xf32> to vector<8x512xf32>
    %310 = arith.mulf %308, %309 : vector<8x512xf32>
    %311 = arith.truncf %310 : vector<8x512xf32> to vector<8x512xbf16>
    %c40_192 = arith.constant 40 : index
    %c0_193 = arith.constant 0 : index
    %312 = vector.load %arg6[%c40_192, %c0_193] : memref<224x512xbf16, #tpu.memory_space<vmem>>, vector<8x512xbf16>
    tpu.vector_store %arg6[%c40_192, %c0_193], %311 {strides = array<i32>} : memref<224x512xbf16, #tpu.memory_space<vmem>>, vector<8x512xbf16>,
    %c497_i32_194 = arith.constant 497 : i32
    %313 = tpu.dynamic_rotate %285 by %c497_i32_194 dim 1 : vector<8x512xf32>, i32 -> vector<8x512xf32>
    %314 = vector.broadcast %6 : vector<1x512xf32> to vector<8x512xf32>
    %315 = arith.mulf %313, %314 : vector<8x512xf32>
    %316 = arith.truncf %315 : vector<8x512xf32> to vector<8x512xbf16>
    %c48_195 = arith.constant 48 : index
    %c0_196 = arith.constant 0 : index
    %317 = vector.load %arg6[%c48_195, %c0_196] : memref<224x512xbf16, #tpu.memory_space<vmem>>, vector<8x512xbf16>
    tpu.vector_store %arg6[%c48_195, %c0_196], %316 {strides = array<i32>} : memref<224x512xbf16, #tpu.memory_space<vmem>>, vector<8x512xbf16>,
    %c496_i32_197 = arith.constant 496 : i32
    %318 = tpu.dynamic_rotate %285 by %c496_i32_197 dim 1 : vector<8x512xf32>, i32 -> vector<8x512xf32>
    %319 = vector.broadcast %7 : vector<1x512xf32> to vector<8x512xf32>
    %320 = arith.mulf %318, %319 : vector<8x512xf32>
    %321 = arith.truncf %320 : vector<8x512xf32> to vector<8x512xbf16>
    %c56_198 = arith.constant 56 : index
    %c0_199 = arith.constant 0 : index
    %322 = vector.load %arg6[%c56_198, %c0_199] : memref<224x512xbf16, #tpu.memory_space<vmem>>, vector<8x512xbf16>
    tpu.vector_store %arg6[%c56_198, %c0_199], %321 {strides = array<i32>} : memref<224x512xbf16, #tpu.memory_space<vmem>>, vector<8x512xbf16>,
    %c495_i32_200 = arith.constant 495 : i32
    %323 = tpu.dynamic_rotate %285 by %c495_i32_200 dim 1 : vector<8x512xf32>, i32 -> vector<8x512xf32>
    %324 = vector.broadcast %8 : vector<1x512xf32> to vector<8x512xf32>
    %325 = arith.mulf %323, %324 : vector<8x512xf32>
    %326 = arith.truncf %325 : vector<8x512xf32> to vector<8x512xbf16>
    %c64_201 = arith.constant 64 : index
    %c0_202 = arith.constant 0 : index
    %327 = vector.load %arg6[%c64_201, %c0_202] : memref<224x512xbf16, #tpu.memory_space<vmem>>, vector<8x512xbf16>
    tpu.vector_store %arg6[%c64_201, %c0_202], %326 {strides = array<i32>} : memref<224x512xbf16, #tpu.memory_space<vmem>>, vector<8x512xbf16>,
    %c0_203 = arith.constant 0 : index
    %c0_204 = arith.constant 0 : index
    %328 = vector.load %arg6[%c0_203, %c0_204] : memref<224x512xbf16, #tpu.memory_space<vmem>>, vector<72x512xbf16>
    %cst_205 = arith.constant dense<0.000000e+00> : vector<8x512xf32>
    %329 = tpu.matmul %283, %328, %cst_205 {dimension_numbers = #tpu.dot_dimension_numbers<[1], [0], [0], [1], [0, 0, 1, 1], [], []>} : vector<8x72xbf16>, vector<72x512xbf16>, vector<8x512xf32> -> vector<8x512xf32>
    %330 = vector.broadcast %284 : vector<8x1xf32> to vector<8x512xf32>
    %331 = arith.addf %329, %330 : vector<8x512xf32>
    %cst_206 = arith.constant 0.000000e+00 : f32
    %332 = vector.broadcast %cst_206 : f32 to vector<8x512xf32>
    %333 = arith.maximumf %331, %332 : vector<8x512xf32>
    %334 = arith.truncf %333 : vector<8x512xf32> to vector<8x512xbf16>
    %c8_207 = arith.constant 8 : index
    %c0_208 = arith.constant 0 : index
    %335 = vector.load %arg7[%c8_207, %c0_208] : memref<32x512xbf16, #tpu.memory_space<vmem>>, vector<8x512xbf16>
    tpu.vector_store %arg7[%c8_207, %c0_208], %334 {strides = array<i32>} : memref<32x512xbf16, #tpu.memory_space<vmem>>, vector<8x512xbf16>,
    %c0_209 = arith.constant 0 : index
    %c0_210 = arith.constant 0 : index
    %336 = vector.load %arg7[%c0_209, %c0_210] : memref<32x512xbf16, #tpu.memory_space<vmem>>, vector<16x512xbf16>
    %c112_211 = arith.constant 112 : index
    %c0_212 = arith.constant 0 : index
    %337 = vector.load %arg3[%c112_211, %c0_212] : memref<208x256xbf16, #tpu.memory_space<vmem>>, vector<8x144xbf16>
    %c64_213 = arith.constant 64 : index
    %c0_214 = arith.constant 0 : index
    %338 = vector.load %arg4[%c64_213, %c0_214] : memref<120x1xf32, #tpu.memory_space<vmem>>, vector<8x1xf32>
    %339 = arith.extf %336 : vector<16x512xbf16> to vector<16x512xf32>
    %c17_i32_215 = arith.constant 17 : i32
    %340 = tpu.dynamic_rotate %339 by %c17_i32_215 dim 1 : vector<16x512xf32>, i32 -> vector<16x512xf32>
    %341 = vector.broadcast %1 : vector<1x512xf32> to vector<16x512xf32>
    %342 = arith.mulf %340, %341 : vector<16x512xf32>
    %343 = arith.truncf %342 : vector<16x512xf32> to vector<16x512xbf16>
    %c0_216 = arith.constant 0 : index
    %c0_217 = arith.constant 0 : index
    %344 = vector.load %arg6[%c0_216, %c0_217] : memref<224x512xbf16, #tpu.memory_space<vmem>>, vector<16x512xbf16>
    tpu.vector_store %arg6[%c0_216, %c0_217], %343 {strides = array<i32>} : memref<224x512xbf16, #tpu.memory_space<vmem>>, vector<16x512xbf16>,
    %c16_i32_218 = arith.constant 16 : i32
    %345 = tpu.dynamic_rotate %339 by %c16_i32_218 dim 1 : vector<16x512xf32>, i32 -> vector<16x512xf32>
    %346 = vector.broadcast %2 : vector<1x512xf32> to vector<16x512xf32>
    %347 = arith.mulf %345, %346 : vector<16x512xf32>
    %348 = arith.truncf %347 : vector<16x512xf32> to vector<16x512xbf16>
    %c16_219 = arith.constant 16 : index
    %c0_220 = arith.constant 0 : index
    %349 = vector.load %arg6[%c16_219, %c0_220] : memref<224x512xbf16, #tpu.memory_space<vmem>>, vector<16x512xbf16>
    tpu.vector_store %arg6[%c16_219, %c0_220], %348 {strides = array<i32>} : memref<224x512xbf16, #tpu.memory_space<vmem>>, vector<16x512xbf16>,
    %c15_i32_221 = arith.constant 15 : i32
    %350 = tpu.dynamic_rotate %339 by %c15_i32_221 dim 1 : vector<16x512xf32>, i32 -> vector<16x512xf32>
    %351 = vector.broadcast %3 : vector<1x512xf32> to vector<16x512xf32>
    %352 = arith.mulf %350, %351 : vector<16x512xf32>
    %353 = arith.truncf %352 : vector<16x512xf32> to vector<16x512xbf16>
    %c32_222 = arith.constant 32 : index
    %c0_223 = arith.constant 0 : index
    %354 = vector.load %arg6[%c32_222, %c0_223] : memref<224x512xbf16, #tpu.memory_space<vmem>>, vector<16x512xbf16>
    tpu.vector_store %arg6[%c32_222, %c0_223], %353 {strides = array<i32>} : memref<224x512xbf16, #tpu.memory_space<vmem>>, vector<16x512xbf16>,
    %c1_i32_224 = arith.constant 1 : i32
    %355 = tpu.dynamic_rotate %339 by %c1_i32_224 dim 1 : vector<16x512xf32>, i32 -> vector<16x512xf32>
    %356 = vector.broadcast %4 : vector<1x512xf32> to vector<16x512xf32>
    %357 = arith.mulf %355, %356 : vector<16x512xf32>
    %358 = arith.truncf %357 : vector<16x512xf32> to vector<16x512xbf16>
    %c48_225 = arith.constant 48 : index
    %c0_226 = arith.constant 0 : index
    %359 = vector.load %arg6[%c48_225, %c0_226] : memref<224x512xbf16, #tpu.memory_space<vmem>>, vector<16x512xbf16>
    tpu.vector_store %arg6[%c48_225, %c0_226], %358 {strides = array<i32>} : memref<224x512xbf16, #tpu.memory_space<vmem>>, vector<16x512xbf16>,
    %360 = arith.truncf %339 : vector<16x512xf32> to vector<16x512xbf16>
    %c64_227 = arith.constant 64 : index
    %c0_228 = arith.constant 0 : index
    %361 = vector.load %arg6[%c64_227, %c0_228] : memref<224x512xbf16, #tpu.memory_space<vmem>>, vector<16x512xbf16>
    tpu.vector_store %arg6[%c64_227, %c0_228], %360 {strides = array<i32>} : memref<224x512xbf16, #tpu.memory_space<vmem>>, vector<16x512xbf16>,
    %c511_i32_229 = arith.constant 511 : i32
    %362 = tpu.dynamic_rotate %339 by %c511_i32_229 dim 1 : vector<16x512xf32>, i32 -> vector<16x512xf32>
    %363 = vector.broadcast %5 : vector<1x512xf32> to vector<16x512xf32>
    %364 = arith.mulf %362, %363 : vector<16x512xf32>
    %365 = arith.truncf %364 : vector<16x512xf32> to vector<16x512xbf16>
    %c80_230 = arith.constant 80 : index
    %c0_231 = arith.constant 0 : index
    %366 = vector.load %arg6[%c80_230, %c0_231] : memref<224x512xbf16, #tpu.memory_space<vmem>>, vector<16x512xbf16>
    tpu.vector_store %arg6[%c80_230, %c0_231], %365 {strides = array<i32>} : memref<224x512xbf16, #tpu.memory_space<vmem>>, vector<16x512xbf16>,
    %c497_i32_232 = arith.constant 497 : i32
    %367 = tpu.dynamic_rotate %339 by %c497_i32_232 dim 1 : vector<16x512xf32>, i32 -> vector<16x512xf32>
    %368 = vector.broadcast %6 : vector<1x512xf32> to vector<16x512xf32>
    %369 = arith.mulf %367, %368 : vector<16x512xf32>
    %370 = arith.truncf %369 : vector<16x512xf32> to vector<16x512xbf16>
    %c96_233 = arith.constant 96 : index
    %c0_234 = arith.constant 0 : index
    %371 = vector.load %arg6[%c96_233, %c0_234] : memref<224x512xbf16, #tpu.memory_space<vmem>>, vector<16x512xbf16>
    tpu.vector_store %arg6[%c96_233, %c0_234], %370 {strides = array<i32>} : memref<224x512xbf16, #tpu.memory_space<vmem>>, vector<16x512xbf16>,
    %c496_i32_235 = arith.constant 496 : i32
    %372 = tpu.dynamic_rotate %339 by %c496_i32_235 dim 1 : vector<16x512xf32>, i32 -> vector<16x512xf32>
    %373 = vector.broadcast %7 : vector<1x512xf32> to vector<16x512xf32>
    %374 = arith.mulf %372, %373 : vector<16x512xf32>
    %375 = arith.truncf %374 : vector<16x512xf32> to vector<16x512xbf16>
    %c112_236 = arith.constant 112 : index
    %c0_237 = arith.constant 0 : index
    %376 = vector.load %arg6[%c112_236, %c0_237] : memref<224x512xbf16, #tpu.memory_space<vmem>>, vector<16x512xbf16>
    tpu.vector_store %arg6[%c112_236, %c0_237], %375 {strides = array<i32>} : memref<224x512xbf16, #tpu.memory_space<vmem>>, vector<16x512xbf16>,
    %c495_i32_238 = arith.constant 495 : i32
    %377 = tpu.dynamic_rotate %339 by %c495_i32_238 dim 1 : vector<16x512xf32>, i32 -> vector<16x512xf32>
    %378 = vector.broadcast %8 : vector<1x512xf32> to vector<16x512xf32>
    %379 = arith.mulf %377, %378 : vector<16x512xf32>
    %380 = arith.truncf %379 : vector<16x512xf32> to vector<16x512xbf16>
    %c128_239 = arith.constant 128 : index
    %c0_240 = arith.constant 0 : index
    %381 = vector.load %arg6[%c128_239, %c0_240] : memref<224x512xbf16, #tpu.memory_space<vmem>>, vector<16x512xbf16>
    tpu.vector_store %arg6[%c128_239, %c0_240], %380 {strides = array<i32>} : memref<224x512xbf16, #tpu.memory_space<vmem>>, vector<16x512xbf16>,
    %c0_241 = arith.constant 0 : index
    %c0_242 = arith.constant 0 : index
    %382 = vector.load %arg6[%c0_241, %c0_242] : memref<224x512xbf16, #tpu.memory_space<vmem>>, vector<144x512xbf16>
    %cst_243 = arith.constant dense<0.000000e+00> : vector<8x512xf32>
    %383 = tpu.matmul %337, %382, %cst_243 {dimension_numbers = #tpu.dot_dimension_numbers<[1], [0], [0], [1], [0, 0, 1, 1], [], []>} : vector<8x144xbf16>, vector<144x512xbf16>, vector<8x512xf32> -> vector<8x512xf32>
    %384 = vector.broadcast %338 : vector<8x1xf32> to vector<8x512xf32>
    %385 = arith.addf %383, %384 : vector<8x512xf32>
    %cst_244 = arith.constant 0.000000e+00 : f32
    %386 = vector.broadcast %cst_244 : f32 to vector<8x512xf32>
    %387 = arith.maximumf %385, %386 : vector<8x512xf32>
    %388 = arith.truncf %387 : vector<8x512xf32> to vector<8x512xbf16>
    %c16_245 = arith.constant 16 : index
    %c0_246 = arith.constant 0 : index
    %389 = vector.load %arg7[%c16_245, %c0_246] : memref<32x512xbf16, #tpu.memory_space<vmem>>, vector<8x512xbf16>
    tpu.vector_store %arg7[%c16_245, %c0_246], %388 {strides = array<i32>} : memref<32x512xbf16, #tpu.memory_space<vmem>>, vector<8x512xbf16>,
    %c0_247 = arith.constant 0 : index
    %c0_248 = arith.constant 0 : index
    %390 = vector.load %arg7[%c0_247, %c0_248] : memref<32x512xbf16, #tpu.memory_space<vmem>>, vector<24x512xbf16>
    %c128_249 = arith.constant 128 : index
    %c0_250 = arith.constant 0 : index
    %391 = vector.load %arg3[%c128_249, %c0_250] : memref<208x256xbf16, #tpu.memory_space<vmem>>, vector<8x216xbf16>
    %c72_251 = arith.constant 72 : index
    %c0_252 = arith.constant 0 : index
    %392 = vector.load %arg4[%c72_251, %c0_252] : memref<120x1xf32, #tpu.memory_space<vmem>>, vector<8x1xf32>
    %393 = arith.extf %390 : vector<24x512xbf16> to vector<24x512xf32>
    %c17_i32_253 = arith.constant 17 : i32
    %394 = tpu.dynamic_rotate %393 by %c17_i32_253 dim 1 : vector<24x512xf32>, i32 -> vector<24x512xf32>
    %395 = vector.broadcast %1 : vector<1x512xf32> to vector<24x512xf32>
    %396 = arith.mulf %394, %395 : vector<24x512xf32>
    %397 = arith.truncf %396 : vector<24x512xf32> to vector<24x512xbf16>
    %c0_254 = arith.constant 0 : index
    %c0_255 = arith.constant 0 : index
    %398 = vector.load %arg6[%c0_254, %c0_255] : memref<224x512xbf16, #tpu.memory_space<vmem>>, vector<24x512xbf16>
    tpu.vector_store %arg6[%c0_254, %c0_255], %397 {strides = array<i32>} : memref<224x512xbf16, #tpu.memory_space<vmem>>, vector<24x512xbf16>,
    %c16_i32_256 = arith.constant 16 : i32
    %399 = tpu.dynamic_rotate %393 by %c16_i32_256 dim 1 : vector<24x512xf32>, i32 -> vector<24x512xf32>
    %400 = vector.broadcast %2 : vector<1x512xf32> to vector<24x512xf32>
    %401 = arith.mulf %399, %400 : vector<24x512xf32>
    %402 = arith.truncf %401 : vector<24x512xf32> to vector<24x512xbf16>
    %c24_257 = arith.constant 24 : index
    %c0_258 = arith.constant 0 : index
    %403 = vector.load %arg6[%c24_257, %c0_258] : memref<224x512xbf16, #tpu.memory_space<vmem>>, vector<24x512xbf16>
    tpu.vector_store %arg6[%c24_257, %c0_258], %402 {strides = array<i32>} : memref<224x512xbf16, #tpu.memory_space<vmem>>, vector<24x512xbf16>,
    %c15_i32_259 = arith.constant 15 : i32
    %404 = tpu.dynamic_rotate %393 by %c15_i32_259 dim 1 : vector<24x512xf32>, i32 -> vector<24x512xf32>
    %405 = vector.broadcast %3 : vector<1x512xf32> to vector<24x512xf32>
    %406 = arith.mulf %404, %405 : vector<24x512xf32>
    %407 = arith.truncf %406 : vector<24x512xf32> to vector<24x512xbf16>
    %c48_260 = arith.constant 48 : index
    %c0_261 = arith.constant 0 : index
    %408 = vector.load %arg6[%c48_260, %c0_261] : memref<224x512xbf16, #tpu.memory_space<vmem>>, vector<24x512xbf16>
    tpu.vector_store %arg6[%c48_260, %c0_261], %407 {strides = array<i32>} : memref<224x512xbf16, #tpu.memory_space<vmem>>, vector<24x512xbf16>,
    %c1_i32_262 = arith.constant 1 : i32
    %409 = tpu.dynamic_rotate %393 by %c1_i32_262 dim 1 : vector<24x512xf32>, i32 -> vector<24x512xf32>
    %410 = vector.broadcast %4 : vector<1x512xf32> to vector<24x512xf32>
    %411 = arith.mulf %409, %410 : vector<24x512xf32>
    %412 = arith.truncf %411 : vector<24x512xf32> to vector<24x512xbf16>
    %c72_263 = arith.constant 72 : index
    %c0_264 = arith.constant 0 : index
    %413 = vector.load %arg6[%c72_263, %c0_264] : memref<224x512xbf16, #tpu.memory_space<vmem>>, vector<24x512xbf16>
    tpu.vector_store %arg6[%c72_263, %c0_264], %412 {strides = array<i32>} : memref<224x512xbf16, #tpu.memory_space<vmem>>, vector<24x512xbf16>,
    %414 = arith.truncf %393 : vector<24x512xf32> to vector<24x512xbf16>
    %c96_265 = arith.constant 96 : index
    %c0_266 = arith.constant 0 : index
    %415 = vector.load %arg6[%c96_265, %c0_266] : memref<224x512xbf16, #tpu.memory_space<vmem>>, vector<24x512xbf16>
    tpu.vector_store %arg6[%c96_265, %c0_266], %414 {strides = array<i32>} : memref<224x512xbf16, #tpu.memory_space<vmem>>, vector<24x512xbf16>,
    %c511_i32_267 = arith.constant 511 : i32
    %416 = tpu.dynamic_rotate %393 by %c511_i32_267 dim 1 : vector<24x512xf32>, i32 -> vector<24x512xf32>
    %417 = vector.broadcast %5 : vector<1x512xf32> to vector<24x512xf32>
    %418 = arith.mulf %416, %417 : vector<24x512xf32>
    %419 = arith.truncf %418 : vector<24x512xf32> to vector<24x512xbf16>
    %c120_268 = arith.constant 120 : index
    %c0_269 = arith.constant 0 : index
    %420 = vector.load %arg6[%c120_268, %c0_269] : memref<224x512xbf16, #tpu.memory_space<vmem>>, vector<24x512xbf16>
    tpu.vector_store %arg6[%c120_268, %c0_269], %419 {strides = array<i32>} : memref<224x512xbf16, #tpu.memory_space<vmem>>, vector<24x512xbf16>,
    %c497_i32_270 = arith.constant 497 : i32
    %421 = tpu.dynamic_rotate %393 by %c497_i32_270 dim 1 : vector<24x512xf32>, i32 -> vector<24x512xf32>
    %422 = vector.broadcast %6 : vector<1x512xf32> to vector<24x512xf32>
    %423 = arith.mulf %421, %422 : vector<24x512xf32>
    %424 = arith.truncf %423 : vector<24x512xf32> to vector<24x512xbf16>
    %c144_271 = arith.constant 144 : index
    %c0_272 = arith.constant 0 : index
    %425 = vector.load %arg6[%c144_271, %c0_272] : memref<224x512xbf16, #tpu.memory_space<vmem>>, vector<24x512xbf16>
    tpu.vector_store %arg6[%c144_271, %c0_272], %424 {strides = array<i32>} : memref<224x512xbf16, #tpu.memory_space<vmem>>, vector<24x512xbf16>,
    %c496_i32_273 = arith.constant 496 : i32
    %426 = tpu.dynamic_rotate %393 by %c496_i32_273 dim 1 : vector<24x512xf32>, i32 -> vector<24x512xf32>
    %427 = vector.broadcast %7 : vector<1x512xf32> to vector<24x512xf32>
    %428 = arith.mulf %426, %427 : vector<24x512xf32>
    %429 = arith.truncf %428 : vector<24x512xf32> to vector<24x512xbf16>
    %c168_274 = arith.constant 168 : index
    %c0_275 = arith.constant 0 : index
    %430 = vector.load %arg6[%c168_274, %c0_275] : memref<224x512xbf16, #tpu.memory_space<vmem>>, vector<24x512xbf16>
    tpu.vector_store %arg6[%c168_274, %c0_275], %429 {strides = array<i32>} : memref<224x512xbf16, #tpu.memory_space<vmem>>, vector<24x512xbf16>,
    %c495_i32_276 = arith.constant 495 : i32
    %431 = tpu.dynamic_rotate %393 by %c495_i32_276 dim 1 : vector<24x512xf32>, i32 -> vector<24x512xf32>
    %432 = vector.broadcast %8 : vector<1x512xf32> to vector<24x512xf32>
    %433 = arith.mulf %431, %432 : vector<24x512xf32>
    %434 = arith.truncf %433 : vector<24x512xf32> to vector<24x512xbf16>
    %c192_277 = arith.constant 192 : index
    %c0_278 = arith.constant 0 : index
    %435 = vector.load %arg6[%c192_277, %c0_278] : memref<224x512xbf16, #tpu.memory_space<vmem>>, vector<24x512xbf16>
    tpu.vector_store %arg6[%c192_277, %c0_278], %434 {strides = array<i32>} : memref<224x512xbf16, #tpu.memory_space<vmem>>, vector<24x512xbf16>,
    %c0_279 = arith.constant 0 : index
    %c0_280 = arith.constant 0 : index
    %436 = vector.load %arg6[%c0_279, %c0_280] : memref<224x512xbf16, #tpu.memory_space<vmem>>, vector<216x512xbf16>
    %cst_281 = arith.constant dense<0.000000e+00> : vector<8x512xf32>
    %437 = tpu.matmul %391, %436, %cst_281 {dimension_numbers = #tpu.dot_dimension_numbers<[1], [0], [0], [1], [0, 0, 1, 1], [], []>} : vector<8x216xbf16>, vector<216x512xbf16>, vector<8x512xf32> -> vector<8x512xf32>
    %438 = vector.broadcast %392 : vector<8x1xf32> to vector<8x512xf32>
    %439 = arith.addf %437, %438 : vector<8x512xf32>
    %cst_282 = arith.constant 0.000000e+00 : f32
    %440 = vector.broadcast %cst_282 : f32 to vector<8x512xf32>
    %441 = arith.maximumf %439, %440 : vector<8x512xf32>
    %442 = arith.truncf %441 : vector<8x512xf32> to vector<8x512xbf16>
    %c24_283 = arith.constant 24 : index
    %c0_284 = arith.constant 0 : index
    %443 = vector.load %arg7[%c24_283, %c0_284] : memref<32x512xbf16, #tpu.memory_space<vmem>>, vector<8x512xbf16>
    tpu.vector_store %arg7[%c24_283, %c0_284], %442 {strides = array<i32>} : memref<32x512xbf16, #tpu.memory_space<vmem>>, vector<8x512xbf16>,
    %c0_285 = arith.constant 0 : index
    %c0_286 = arith.constant 0 : index
    %444 = vector.load %arg7[%c0_285, %c0_286] : memref<32x512xbf16, #tpu.memory_space<vmem>>, vector<32x512xbf16>
    %c144_287 = arith.constant 144 : index
    %c0_288 = arith.constant 0 : index
    %445 = vector.load %arg3[%c144_287, %c0_288] : memref<208x256xbf16, #tpu.memory_space<vmem>>, vector<8x32xbf16>
    %c80_289 = arith.constant 80 : index
    %c0_290 = arith.constant 0 : index
    %446 = vector.load %arg4[%c80_289, %c0_290] : memref<120x1xf32, #tpu.memory_space<vmem>>, vector<8x1xf32>
    %cst_291 = arith.constant dense<0.000000e+00> : vector<8x512xf32>
    %447 = tpu.matmul %445, %444, %cst_291 {dimension_numbers = #tpu.dot_dimension_numbers<[1], [0], [0], [1], [0, 0, 1, 1], [], []>} : vector<8x32xbf16>, vector<32x512xbf16>, vector<8x512xf32> -> vector<8x512xf32>
    %448 = vector.broadcast %446 : vector<8x1xf32> to vector<8x512xf32>
    %449 = arith.addf %447, %448 : vector<8x512xf32>
    %450 = arith.addf %449, %277 : vector<8x512xf32>
    %451 = arith.truncf %450 : vector<8x512xf32> to vector<8x512xbf16>
    %c8_292 = arith.constant 8 : index
    %c0_293 = arith.constant 0 : index
    %452 = vector.load %arg8[%c8_292, %c0_293] : memref<16x512xbf16, #tpu.memory_space<vmem>>, vector<8x512xbf16>
    tpu.vector_store %arg8[%c8_292, %c0_293], %451 {strides = array<i32>} : memref<16x512xbf16, #tpu.memory_space<vmem>>, vector<8x512xbf16>,
    %c0_294 = arith.constant 0 : index
    %c0_295 = arith.constant 0 : index
    %453 = vector.load %arg8[%c0_294, %c0_295] : memref<16x512xbf16, #tpu.memory_space<vmem>>, vector<16x512xbf16>
    %c160 = arith.constant 160 : index
    %c0_296 = arith.constant 0 : index
    %454 = vector.load %arg3[%c160, %c0_296] : memref<208x256xbf16, #tpu.memory_space<vmem>>, vector<16x16xbf16>
    %c88 = arith.constant 88 : index
    %c0_297 = arith.constant 0 : index
    %455 = vector.load %arg4[%c88, %c0_297] : memref<120x1xf32, #tpu.memory_space<vmem>>, vector<16x1xf32>
    %cst_298 = arith.constant dense<0.000000e+00> : vector<16x512xf32>
    %456 = tpu.matmul %454, %453, %cst_298 {dimension_numbers = #tpu.dot_dimension_numbers<[1], [0], [0], [1], [0, 0, 1, 1], [], []>} : vector<16x16xbf16>, vector<16x512xbf16>, vector<16x512xf32> -> vector<16x512xf32>
    %457 = vector.broadcast %455 : vector<16x1xf32> to vector<16x512xf32>
    %458 = arith.addf %456, %457 : vector<16x512xf32>
    %c176 = arith.constant 176 : index
    %c0_299 = arith.constant 0 : index
    %459 = vector.load %arg3[%c176, %c0_299] : memref<208x256xbf16, #tpu.memory_space<vmem>>, vector<8x144xbf16>
    %c104 = arith.constant 104 : index
    %c0_300 = arith.constant 0 : index
    %460 = vector.load %arg4[%c104, %c0_300] : memref<120x1xf32, #tpu.memory_space<vmem>>, vector<8x1xf32>
    %c17_i32_301 = arith.constant 17 : i32
    %461 = tpu.dynamic_rotate %458 by %c17_i32_301 dim 1 : vector<16x512xf32>, i32 -> vector<16x512xf32>
    %462 = vector.broadcast %1 : vector<1x512xf32> to vector<16x512xf32>
    %463 = arith.mulf %461, %462 : vector<16x512xf32>
    %464 = arith.truncf %463 : vector<16x512xf32> to vector<16x512xbf16>
    %c0_302 = arith.constant 0 : index
    %c0_303 = arith.constant 0 : index
    %465 = vector.load %arg6[%c0_302, %c0_303] : memref<224x512xbf16, #tpu.memory_space<vmem>>, vector<16x512xbf16>
    tpu.vector_store %arg6[%c0_302, %c0_303], %464 {strides = array<i32>} : memref<224x512xbf16, #tpu.memory_space<vmem>>, vector<16x512xbf16>,
    %c16_i32_304 = arith.constant 16 : i32
    %466 = tpu.dynamic_rotate %458 by %c16_i32_304 dim 1 : vector<16x512xf32>, i32 -> vector<16x512xf32>
    %467 = vector.broadcast %2 : vector<1x512xf32> to vector<16x512xf32>
    %468 = arith.mulf %466, %467 : vector<16x512xf32>
    %469 = arith.truncf %468 : vector<16x512xf32> to vector<16x512xbf16>
    %c16_305 = arith.constant 16 : index
    %c0_306 = arith.constant 0 : index
    %470 = vector.load %arg6[%c16_305, %c0_306] : memref<224x512xbf16, #tpu.memory_space<vmem>>, vector<16x512xbf16>
    tpu.vector_store %arg6[%c16_305, %c0_306], %469 {strides = array<i32>} : memref<224x512xbf16, #tpu.memory_space<vmem>>, vector<16x512xbf16>,
    %c15_i32_307 = arith.constant 15 : i32
    %471 = tpu.dynamic_rotate %458 by %c15_i32_307 dim 1 : vector<16x512xf32>, i32 -> vector<16x512xf32>
    %472 = vector.broadcast %3 : vector<1x512xf32> to vector<16x512xf32>
    %473 = arith.mulf %471, %472 : vector<16x512xf32>
    %474 = arith.truncf %473 : vector<16x512xf32> to vector<16x512xbf16>
    %c32_308 = arith.constant 32 : index
    %c0_309 = arith.constant 0 : index
    %475 = vector.load %arg6[%c32_308, %c0_309] : memref<224x512xbf16, #tpu.memory_space<vmem>>, vector<16x512xbf16>
    tpu.vector_store %arg6[%c32_308, %c0_309], %474 {strides = array<i32>} : memref<224x512xbf16, #tpu.memory_space<vmem>>, vector<16x512xbf16>,
    %c1_i32_310 = arith.constant 1 : i32
    %476 = tpu.dynamic_rotate %458 by %c1_i32_310 dim 1 : vector<16x512xf32>, i32 -> vector<16x512xf32>
    %477 = vector.broadcast %4 : vector<1x512xf32> to vector<16x512xf32>
    %478 = arith.mulf %476, %477 : vector<16x512xf32>
    %479 = arith.truncf %478 : vector<16x512xf32> to vector<16x512xbf16>
    %c48_311 = arith.constant 48 : index
    %c0_312 = arith.constant 0 : index
    %480 = vector.load %arg6[%c48_311, %c0_312] : memref<224x512xbf16, #tpu.memory_space<vmem>>, vector<16x512xbf16>
    tpu.vector_store %arg6[%c48_311, %c0_312], %479 {strides = array<i32>} : memref<224x512xbf16, #tpu.memory_space<vmem>>, vector<16x512xbf16>,
    %481 = arith.truncf %458 : vector<16x512xf32> to vector<16x512xbf16>
    %c64_313 = arith.constant 64 : index
    %c0_314 = arith.constant 0 : index
    %482 = vector.load %arg6[%c64_313, %c0_314] : memref<224x512xbf16, #tpu.memory_space<vmem>>, vector<16x512xbf16>
    tpu.vector_store %arg6[%c64_313, %c0_314], %481 {strides = array<i32>} : memref<224x512xbf16, #tpu.memory_space<vmem>>, vector<16x512xbf16>,
    %c511_i32_315 = arith.constant 511 : i32
    %483 = tpu.dynamic_rotate %458 by %c511_i32_315 dim 1 : vector<16x512xf32>, i32 -> vector<16x512xf32>
    %484 = vector.broadcast %5 : vector<1x512xf32> to vector<16x512xf32>
    %485 = arith.mulf %483, %484 : vector<16x512xf32>
    %486 = arith.truncf %485 : vector<16x512xf32> to vector<16x512xbf16>
    %c80_316 = arith.constant 80 : index
    %c0_317 = arith.constant 0 : index
    %487 = vector.load %arg6[%c80_316, %c0_317] : memref<224x512xbf16, #tpu.memory_space<vmem>>, vector<16x512xbf16>
    tpu.vector_store %arg6[%c80_316, %c0_317], %486 {strides = array<i32>} : memref<224x512xbf16, #tpu.memory_space<vmem>>, vector<16x512xbf16>,
    %c497_i32_318 = arith.constant 497 : i32
    %488 = tpu.dynamic_rotate %458 by %c497_i32_318 dim 1 : vector<16x512xf32>, i32 -> vector<16x512xf32>
    %489 = vector.broadcast %6 : vector<1x512xf32> to vector<16x512xf32>
    %490 = arith.mulf %488, %489 : vector<16x512xf32>
    %491 = arith.truncf %490 : vector<16x512xf32> to vector<16x512xbf16>
    %c96_319 = arith.constant 96 : index
    %c0_320 = arith.constant 0 : index
    %492 = vector.load %arg6[%c96_319, %c0_320] : memref<224x512xbf16, #tpu.memory_space<vmem>>, vector<16x512xbf16>
    tpu.vector_store %arg6[%c96_319, %c0_320], %491 {strides = array<i32>} : memref<224x512xbf16, #tpu.memory_space<vmem>>, vector<16x512xbf16>,
    %c496_i32_321 = arith.constant 496 : i32
    %493 = tpu.dynamic_rotate %458 by %c496_i32_321 dim 1 : vector<16x512xf32>, i32 -> vector<16x512xf32>
    %494 = vector.broadcast %7 : vector<1x512xf32> to vector<16x512xf32>
    %495 = arith.mulf %493, %494 : vector<16x512xf32>
    %496 = arith.truncf %495 : vector<16x512xf32> to vector<16x512xbf16>
    %c112_322 = arith.constant 112 : index
    %c0_323 = arith.constant 0 : index
    %497 = vector.load %arg6[%c112_322, %c0_323] : memref<224x512xbf16, #tpu.memory_space<vmem>>, vector<16x512xbf16>
    tpu.vector_store %arg6[%c112_322, %c0_323], %496 {strides = array<i32>} : memref<224x512xbf16, #tpu.memory_space<vmem>>, vector<16x512xbf16>,
    %c495_i32_324 = arith.constant 495 : i32
    %498 = tpu.dynamic_rotate %458 by %c495_i32_324 dim 1 : vector<16x512xf32>, i32 -> vector<16x512xf32>
    %499 = vector.broadcast %8 : vector<1x512xf32> to vector<16x512xf32>
    %500 = arith.mulf %498, %499 : vector<16x512xf32>
    %501 = arith.truncf %500 : vector<16x512xf32> to vector<16x512xbf16>
    %c128_325 = arith.constant 128 : index
    %c0_326 = arith.constant 0 : index
    %502 = vector.load %arg6[%c128_325, %c0_326] : memref<224x512xbf16, #tpu.memory_space<vmem>>, vector<16x512xbf16>
    tpu.vector_store %arg6[%c128_325, %c0_326], %501 {strides = array<i32>} : memref<224x512xbf16, #tpu.memory_space<vmem>>, vector<16x512xbf16>,
    %c0_327 = arith.constant 0 : index
    %c0_328 = arith.constant 0 : index
    %503 = vector.load %arg6[%c0_327, %c0_328] : memref<224x512xbf16, #tpu.memory_space<vmem>>, vector<144x512xbf16>
    %cst_329 = arith.constant dense<0.000000e+00> : vector<8x512xf32>
    %504 = tpu.matmul %459, %503, %cst_329 {dimension_numbers = #tpu.dot_dimension_numbers<[1], [0], [0], [1], [0, 0, 1, 1], [], []>} : vector<8x144xbf16>, vector<144x512xbf16>, vector<8x512xf32> -> vector<8x512xf32>
    %505 = vector.broadcast %460 : vector<8x1xf32> to vector<8x512xf32>
    %506 = arith.addf %504, %505 : vector<8x512xf32>
    %c192_330 = arith.constant 192 : index
    %c0_331 = arith.constant 0 : index
    %507 = vector.load %arg3[%c192_330, %c0_331] : memref<208x256xbf16, #tpu.memory_space<vmem>>, vector<8x72xbf16>
    %c112_332 = arith.constant 112 : index
    %c0_333 = arith.constant 0 : index
    %508 = vector.load %arg4[%c112_332, %c0_333] : memref<120x1xf32, #tpu.memory_space<vmem>>, vector<8x1xf32>
    %c17_i32_334 = arith.constant 17 : i32
    %509 = tpu.dynamic_rotate %506 by %c17_i32_334 dim 1 : vector<8x512xf32>, i32 -> vector<8x512xf32>
    %510 = vector.broadcast %1 : vector<1x512xf32> to vector<8x512xf32>
    %511 = arith.mulf %509, %510 : vector<8x512xf32>
    %512 = arith.truncf %511 : vector<8x512xf32> to vector<8x512xbf16>
    %c0_335 = arith.constant 0 : index
    %c0_336 = arith.constant 0 : index
    %513 = vector.load %arg6[%c0_335, %c0_336] : memref<224x512xbf16, #tpu.memory_space<vmem>>, vector<8x512xbf16>
    tpu.vector_store %arg6[%c0_335, %c0_336], %512 {strides = array<i32>} : memref<224x512xbf16, #tpu.memory_space<vmem>>, vector<8x512xbf16>,
    %c16_i32_337 = arith.constant 16 : i32
    %514 = tpu.dynamic_rotate %506 by %c16_i32_337 dim 1 : vector<8x512xf32>, i32 -> vector<8x512xf32>
    %515 = vector.broadcast %2 : vector<1x512xf32> to vector<8x512xf32>
    %516 = arith.mulf %514, %515 : vector<8x512xf32>
    %517 = arith.truncf %516 : vector<8x512xf32> to vector<8x512xbf16>
    %c8_338 = arith.constant 8 : index
    %c0_339 = arith.constant 0 : index
    %518 = vector.load %arg6[%c8_338, %c0_339] : memref<224x512xbf16, #tpu.memory_space<vmem>>, vector<8x512xbf16>
    tpu.vector_store %arg6[%c8_338, %c0_339], %517 {strides = array<i32>} : memref<224x512xbf16, #tpu.memory_space<vmem>>, vector<8x512xbf16>,
    %c15_i32_340 = arith.constant 15 : i32
    %519 = tpu.dynamic_rotate %506 by %c15_i32_340 dim 1 : vector<8x512xf32>, i32 -> vector<8x512xf32>
    %520 = vector.broadcast %3 : vector<1x512xf32> to vector<8x512xf32>
    %521 = arith.mulf %519, %520 : vector<8x512xf32>
    %522 = arith.truncf %521 : vector<8x512xf32> to vector<8x512xbf16>
    %c16_341 = arith.constant 16 : index
    %c0_342 = arith.constant 0 : index
    %523 = vector.load %arg6[%c16_341, %c0_342] : memref<224x512xbf16, #tpu.memory_space<vmem>>, vector<8x512xbf16>
    tpu.vector_store %arg6[%c16_341, %c0_342], %522 {strides = array<i32>} : memref<224x512xbf16, #tpu.memory_space<vmem>>, vector<8x512xbf16>,
    %c1_i32_343 = arith.constant 1 : i32
    %524 = tpu.dynamic_rotate %506 by %c1_i32_343 dim 1 : vector<8x512xf32>, i32 -> vector<8x512xf32>
    %525 = vector.broadcast %4 : vector<1x512xf32> to vector<8x512xf32>
    %526 = arith.mulf %524, %525 : vector<8x512xf32>
    %527 = arith.truncf %526 : vector<8x512xf32> to vector<8x512xbf16>
    %c24_344 = arith.constant 24 : index
    %c0_345 = arith.constant 0 : index
    %528 = vector.load %arg6[%c24_344, %c0_345] : memref<224x512xbf16, #tpu.memory_space<vmem>>, vector<8x512xbf16>
    tpu.vector_store %arg6[%c24_344, %c0_345], %527 {strides = array<i32>} : memref<224x512xbf16, #tpu.memory_space<vmem>>, vector<8x512xbf16>,
    %529 = arith.truncf %506 : vector<8x512xf32> to vector<8x512xbf16>
    %c32_346 = arith.constant 32 : index
    %c0_347 = arith.constant 0 : index
    %530 = vector.load %arg6[%c32_346, %c0_347] : memref<224x512xbf16, #tpu.memory_space<vmem>>, vector<8x512xbf16>
    tpu.vector_store %arg6[%c32_346, %c0_347], %529 {strides = array<i32>} : memref<224x512xbf16, #tpu.memory_space<vmem>>, vector<8x512xbf16>,
    %c511_i32_348 = arith.constant 511 : i32
    %531 = tpu.dynamic_rotate %506 by %c511_i32_348 dim 1 : vector<8x512xf32>, i32 -> vector<8x512xf32>
    %532 = vector.broadcast %5 : vector<1x512xf32> to vector<8x512xf32>
    %533 = arith.mulf %531, %532 : vector<8x512xf32>
    %534 = arith.truncf %533 : vector<8x512xf32> to vector<8x512xbf16>
    %c40_349 = arith.constant 40 : index
    %c0_350 = arith.constant 0 : index
    %535 = vector.load %arg6[%c40_349, %c0_350] : memref<224x512xbf16, #tpu.memory_space<vmem>>, vector<8x512xbf16>
    tpu.vector_store %arg6[%c40_349, %c0_350], %534 {strides = array<i32>} : memref<224x512xbf16, #tpu.memory_space<vmem>>, vector<8x512xbf16>,
    %c497_i32_351 = arith.constant 497 : i32
    %536 = tpu.dynamic_rotate %506 by %c497_i32_351 dim 1 : vector<8x512xf32>, i32 -> vector<8x512xf32>
    %537 = vector.broadcast %6 : vector<1x512xf32> to vector<8x512xf32>
    %538 = arith.mulf %536, %537 : vector<8x512xf32>
    %539 = arith.truncf %538 : vector<8x512xf32> to vector<8x512xbf16>
    %c48_352 = arith.constant 48 : index
    %c0_353 = arith.constant 0 : index
    %540 = vector.load %arg6[%c48_352, %c0_353] : memref<224x512xbf16, #tpu.memory_space<vmem>>, vector<8x512xbf16>
    tpu.vector_store %arg6[%c48_352, %c0_353], %539 {strides = array<i32>} : memref<224x512xbf16, #tpu.memory_space<vmem>>, vector<8x512xbf16>,
    %c496_i32_354 = arith.constant 496 : i32
    %541 = tpu.dynamic_rotate %506 by %c496_i32_354 dim 1 : vector<8x512xf32>, i32 -> vector<8x512xf32>
    %542 = vector.broadcast %7 : vector<1x512xf32> to vector<8x512xf32>
    %543 = arith.mulf %541, %542 : vector<8x512xf32>
    %544 = arith.truncf %543 : vector<8x512xf32> to vector<8x512xbf16>
    %c56_355 = arith.constant 56 : index
    %c0_356 = arith.constant 0 : index
    %545 = vector.load %arg6[%c56_355, %c0_356] : memref<224x512xbf16, #tpu.memory_space<vmem>>, vector<8x512xbf16>
    tpu.vector_store %arg6[%c56_355, %c0_356], %544 {strides = array<i32>} : memref<224x512xbf16, #tpu.memory_space<vmem>>, vector<8x512xbf16>,
    %c495_i32_357 = arith.constant 495 : i32
    %546 = tpu.dynamic_rotate %506 by %c495_i32_357 dim 1 : vector<8x512xf32>, i32 -> vector<8x512xf32>
    %547 = vector.broadcast %8 : vector<1x512xf32> to vector<8x512xf32>
    %548 = arith.mulf %546, %547 : vector<8x512xf32>
    %549 = arith.truncf %548 : vector<8x512xf32> to vector<8x512xbf16>
    %c64_358 = arith.constant 64 : index
    %c0_359 = arith.constant 0 : index
    %550 = vector.load %arg6[%c64_358, %c0_359] : memref<224x512xbf16, #tpu.memory_space<vmem>>, vector<8x512xbf16>
    tpu.vector_store %arg6[%c64_358, %c0_359], %549 {strides = array<i32>} : memref<224x512xbf16, #tpu.memory_space<vmem>>, vector<8x512xbf16>,
    %c0_360 = arith.constant 0 : index
    %c0_361 = arith.constant 0 : index
    %551 = vector.load %arg6[%c0_360, %c0_361] : memref<224x512xbf16, #tpu.memory_space<vmem>>, vector<72x512xbf16>
    %cst_362 = arith.constant dense<0.000000e+00> : vector<8x512xf32>
    %552 = tpu.matmul %507, %551, %cst_362 {dimension_numbers = #tpu.dot_dimension_numbers<[1], [0], [0], [1], [0, 0, 1, 1], [], []>} : vector<8x72xbf16>, vector<72x512xbf16>, vector<8x512xf32> -> vector<8x512xf32>
    %553 = vector.broadcast %508 : vector<8x1xf32> to vector<8x512xf32>
    %554 = arith.addf %552, %553 : vector<8x512xf32>
    %c0_363 = arith.constant 0 : index
    %c0_364 = arith.constant 0 : index
    %c0_365 = arith.constant 0 : index
    %555 = vector.load %arg5[%c0_363, %c0_364, %c0_365] : memref<1x8x512xf32, #tpu.memory_space<vmem>>, vector<1x8x512xf32>
    %556 = vector.shape_cast %555 : vector<1x8x512xf32> to vector<8x512xf32>
    %557 = vector.shape_cast %554 : vector<8x512xf32> to vector<1x8x512xf32>
    tpu.vector_store %arg5[%c0_363, %c0_364, %c0_365], %557 {strides = array<i32>} : memref<1x8x512xf32, #tpu.memory_space<vmem>>, vector<1x8x512xf32>,
    return
  }
  func.func @transform_0(%arg0: i32) -> (i32, i32, i32) {
    %c0_i32 = arith.constant 0 : i32
    %c0_i32_0 = arith.constant 0 : i32
    %c0_i32_1 = arith.constant 0 : i32
    return %arg0, %c0_i32, %c0_i32_0 : i32, i32, i32
  }
  func.func @transform_1(%arg0: i32) -> (i32, i32) {
    %c0_i32 = arith.constant 0 : i32
    %c0_i32_0 = arith.constant 0 : i32
    %c0_i32_1 = arith.constant 0 : i32
    return %c0_i32, %c0_i32_0 : i32, i32
  }
  func.func @transform_2(%arg0: i32) -> (i32, i32) {
    %c0_i32 = arith.constant 0 : i32
    %c0_i32_0 = arith.constant 0 : i32
    %c0_i32_1 = arith.constant 0 : i32
    return %c0_i32, %c0_i32_0 : i32, i32
  }
  func.func @transform_3(%arg0: i32) -> (i32, i32) {
    %c0_i32 = arith.constant 0 : i32
    %c0_i32_0 = arith.constant 0 : i32
    %c0_i32_1 = arith.constant 0 : i32
    return %c0_i32, %c0_i32_0 : i32, i32
  }
  func.func @transform_4(%arg0: i32) -> (i32, i32, i32) {
    %c0_i32 = arith.constant 0 : i32
    %c0_i32_0 = arith.constant 0 : i32
    %c0_i32_1 = arith.constant 0 : i32
    return %arg0, %c0_i32, %c0_i32_0 : i32, i32, i32
  }
}

</mosaic_0001>

<llo_original>
// kernel: rdn_forward.1
$region0: #{rdn_forward.1}
  #allocation0 [shape = 'u32[]', space=smem, size = 0x4, offset = 0x4, fixed_abs, tag = 'smem constant byte address 0x4 - core index']
  #allocation1 [shape = 'u32[144,128]{1,0:T(1,128)}', space=vmem, size = 0x12000, scoped, tag = 'internal scratch']
  #allocation2 [shape = 'bf16[224,512]{1,0:T(16,128)(2,1)}', space=vmem, size = 0x38000, scoped, tag = 'scratch operand']
  #allocation3 [shape = 'bf16[32,512]{1,0:T(16,128)(2,1)}', space=vmem, size = 0x8000, scoped, tag = 'scratch operand']
  #allocation4 [shape = 'bf16[16,512]{1,0:T(16,128)(2,1)}', space=vmem, size = 0x4000, scoped, tag = 'scratch operand']
  %s0 = inlined_call_operand.vmem [shape: f32[1,8,512], index: 0, kind: input, shape index: {}]
  %s1 = inlined_call_operand.vmem [shape: f32[9,512], index: 1, kind: input, shape index: {}]
  %s2 = inlined_call_operand.vmem [shape: bf16[208,256], index: 2, kind: input, shape index: {}]
  %s3 = inlined_call_operand.vmem [shape: f32[120,1], index: 3, kind: input, shape index: {}]
  %s4 = inlined_call_operand.vmem [shape: f32[1,8,512], index: 4, kind: output, shape index: {}]
  %s5 = sld [smem:[#allocation0]]
  $region26: #{rdn_forward.1} parent=0
    _
  %s7 = ssub.s32 1, %s5
  %s8 = scalar_select 0, %s7, %s5
  // Predicated region
  $region2: #{rdn_forward.1} parent=0 // pred_check
    _
  $region3: #{rdn_forward.1} parent=0 // pred_check_branch
    %10 = sbr.rel (0) target = $region5
  $region4: #{rdn_forward.1} parent=0 // pred_region
    _
  $region5: #{rdn_forward.1} parent=0 // pred_fallthru
    _
  // Predicated region
  $region6: #{rdn_forward.1} parent=0 // pred_check
    _
  $region7: #{rdn_forward.1} parent=0 // pred_check_branch
    %12 = sbr.rel (0) target = $region9
  $region8: #{rdn_forward.1} parent=0 // pred_region
    _
  $region9: #{rdn_forward.1} parent=0 // pred_fallthru
    _
  // Predicated region
  $region10: #{rdn_forward.1} parent=0 // pred_check
    _
  $region11: #{rdn_forward.1} parent=0 // pred_check_branch
    %14 = sbr.rel (0) target = $region13
  $region12: #{rdn_forward.1} parent=0 // pred_region
    _
  $region13: #{rdn_forward.1} parent=0 // pred_fallthru
    _
  // Predicated region
  $region14: #{rdn_forward.1} parent=0 // pred_check
    _
  $region15: #{rdn_forward.1} parent=0 // pred_check_branch
    %16 = sbr.rel (0) target = $region17
  $region16: #{rdn_forward.1} parent=0 // pred_region
    _
  $region17: #{rdn_forward.1} parent=0 // pred_fallthru
    _
  %v18 = vld [vmem:[%s1] sm:$0xff]
  %v19 = vld [vmem:[%s1 + $0x8] sm:$0xff]
  %v20 = vld [vmem:[%s1 + $0x10] sm:$0xff]
  %v21 = vld [vmem:[%s1 + $0x18] sm:$0xff]
  %v22 = vld [vmem:[%s1 + $0x20] sm:$0x1]
  %v23 = vld [vmem:[%s1 + $0x28] sm:$0x1]
  %v24 = vld [vmem:[%s1 + $0x30] sm:$0x1]
  %v25 = vld [vmem:[%s1 + $0x38] sm:$0x1]
  %v26 = vld [vmem:[%s0] sm:$0xff]
  %v27 = vld [vmem:[%s0 + $0x8] sm:$0xff]
  %v28 = vld [vmem:[%s0 + $0x10] sm:$0xff]
  %v29 = vld [vmem:[%s0 + $0x18] sm:$0xff]
  %v30 = vld [vmem:[%s2] sm:$0xf]
  %v31 = vld [vmem:[%s2 + $0x8] sm:$0xf]
  %v32 = vld [vmem:[%s3] sm:$0xff]
  %v33 = vld [vmem:[%s3 + $0x8] sm:$0xff]
  %34 = vrot.lane.b32.xlu0 %v26, 17
  %v35 = vpop.permute.xlu0 %34
  %36 = vrot.lane.b32.xlu0 %v27, 17
  %v37 = vpop.permute.xlu0 %36
  %38 = vrot.lane.b32.xlu0 %v28, 17
  %v39 = vpop.permute.xlu0 %38
  %40 = vrot.lane.b32.xlu0 %v29, 17
  %v41 = vpop.permute.xlu0 %40
  %v42 = vlaneseq
  %v43 = vand.u32 %v42, 127
  %vm44 = vcmp.lt.s32.totalorder %v43, 17
  %v45 = vsel %vm44, %v39, %v41
  %v46 = vsel %vm44, %v37, %v39
  %v47 = vsel %vm44, %v35, %v37
  %v48 = vsel %vm44, %v41, %v35
  %v49 = vlaneseq
  %v50 = vshrl.u32 %v49, 7
  %v51 = vsub.s32 0, %v50
  %v52 = vrot.slane %v18, %v51
  %v53 = vlaneseq
  %v54 = vshrl.u32 %v53, 7
  %v55 = vsub.s32 0, %v54
  %v56 = vrot.slane %v19, %v55
  %v57 = vlaneseq
  %v58 = vshrl.u32 %v57, 7
  %v59 = vsub.s32 0, %v58
  %v60 = vrot.slane %v20, %v59
  %v61 = vlaneseq
  %v62 = vshrl.u32 %v61, 7
  %v63 = vsub.s32 0, %v62
  %v64 = vrot.slane %v21, %v63
  %v65 = vmul.f32 %v48, %v52
  %v66 = vmul.f32 %v47, %v56
  %v67 = vmul.f32 %v46, %v60
  %v68 = vmul.f32 %v45, %v64
  %v69 = vpack.c.bf16 %v65, %v65
  %v70 = vpack.c.bf16 %v66, %v66
  %v71 = vpack.c.bf16 %v67, %v67
  %v72 = vpack.c.bf16 %v68, %v68
  %73 = vst [vmem:[#allocation2] sm:$0xf] %v69
  %74 = vst [vmem:[#allocation2 + $0x8] sm:$0xf] %v70
  %75 = vst [vmem:[#allocation2 + $0x10] sm:$0xf] %v71
  %76 = vst [vmem:[#allocation2 + $0x18] sm:$0xf] %v72
  %77 = vrot.lane.b32.xlu0 %v26, 16
  %v78 = vpop.permute.xlu0 %77
  %79 = vrot.lane.b32.xlu0 %v27, 16
  %v80 = vpop.permute.xlu0 %79
  %81 = vrot.lane.b32.xlu0 %v28, 16
  %v82 = vpop.permute.xlu0 %81
  %83 = vrot.lane.b32.xlu0 %v29, 16
  %v84 = vpop.permute.xlu0 %83
  %vm85 = vcmp.lt.s32.totalorder %v43, 16
  %v86 = vsel %vm85, %v82, %v84
  %v87 = vsel %vm85, %v80, %v82
  %v88 = vsel %vm85, %v78, %v80
  %v89 = vsel %vm85, %v84, %v78
  %v90 = vlaneseq
  %v91 = vshrl.u32 %v90, 7
  %v92 = vsub.s32 1, %v91
  %v93 = vrot.slane %v18, %v92
  %v94 = vlaneseq
  %v95 = vshrl.u32 %v94, 7
  %v96 = vsub.s32 1, %v95
  %v97 = vrot.slane %v19, %v96
  %v98 = vlaneseq
  %v99 = vshrl.u32 %v98, 7
  %v100 = vsub.s32 1, %v99
  %v101 = vrot.slane %v20, %v100
  %v102 = vlaneseq
  %v103 = vshrl.u32 %v102, 7
  %v104 = vsub.s32 1, %v103
  %v105 = vrot.slane %v21, %v104
  %v106 = vmul.f32 %v89, %v93
  %v107 = vmul.f32 %v88, %v97
  %v108 = vmul.f32 %v87, %v101
  %v109 = vmul.f32 %v86, %v105
  %v110 = vpack.c.bf16 %v106, %v106
  %v111 = vpack.c.bf16 %v107, %v107
  %v112 = vpack.c.bf16 %v108, %v108
  %v113 = vpack.c.bf16 %v109, %v109
  %v118 = vrot.slane %v110, 4
  %v119 = vrot.slane %v111, 4
  %v120 = vrot.slane %v112, 4
  %v121 = vrot.slane %v113, 4
  %126 = vst [vmem:[#allocation2] sm:$0xf0] %v118
  %127 = vst [vmem:[#allocation2 + $0x8] sm:$0xf0] %v119
  %128 = vst [vmem:[#allocation2 + $0x10] sm:$0xf0] %v120
  %129 = vst [vmem:[#allocation2 + $0x18] sm:$0xf0] %v121
  %130 = vrot.lane.b32.xlu0 %v26, 15
  %v131 = vpop.permute.xlu0 %130
  %132 = vrot.lane.b32.xlu0 %v27, 15
  %v133 = vpop.permute.xlu0 %132
  %134 = vrot.lane.b32.xlu0 %v28, 15
  %v135 = vpop.permute.xlu0 %134
  %136 = vrot.lane.b32.xlu0 %v29, 15
  %v137 = vpop.permute.xlu0 %136
  %vm138 = vcmp.lt.s32.totalorder %v43, 15
  %v139 = vsel %vm138, %v135, %v137
  %v140 = vsel %vm138, %v133, %v135
  %v141 = vsel %vm138, %v131, %v133
  %v142 = vsel %vm138, %v137, %v131
  %v143 = vlaneseq
  %v144 = vshrl.u32 %v143, 7
  %v145 = vsub.s32 2, %v144
  %v146 = vrot.slane %v18, %v145
  %v147 = vlaneseq
  %v148 = vshrl.u32 %v147, 7
  %v149 = vsub.s32 2, %v148
  %v150 = vrot.slane %v19, %v149
  %v151 = vlaneseq
  %v152 = vshrl.u32 %v151, 7
  %v153 = vsub.s32 2, %v152
  %v154 = vrot.slane %v20, %v153
  %v155 = vlaneseq
  %v156 = vshrl.u32 %v155, 7
  %v157 = vsub.s32 2, %v156
  %v158 = vrot.slane %v21, %v157
  %v159 = vmul.f32 %v142, %v146
  %v160 = vmul.f32 %v141, %v150
  %v161 = vmul.f32 %v140, %v154
  %v162 = vmul.f32 %v139, %v158
  %v163 = vpack.c.bf16 %v159, %v159
  %v164 = vpack.c.bf16 %v160, %v160
  %v165 = vpack.c.bf16 %v161, %v161
  %v166 = vpack.c.bf16 %v162, %v162
  %167 = vst [vmem:[#allocation2 + $0x20] sm:$0xf] %v163
  %168 = vst [vmem:[#allocation2 + $0x28] sm:$0xf] %v164
  %169 = vst [vmem:[#allocation2 + $0x30] sm:$0xf] %v165
  %170 = vst [vmem:[#allocation2 + $0x38] sm:$0xf] %v166
  %171 = vrot.lane.b32.xlu0 %v26, 1
  %v172 = vpop.permute.xlu0 %171
  %173 = vrot.lane.b32.xlu0 %v27, 1
  %v174 = vpop.permute.xlu0 %173
  %175 = vrot.lane.b32.xlu0 %v28, 1
  %v176 = vpop.permute.xlu0 %175
  %177 = vrot.lane.b32.xlu0 %v29, 1
  %v178 = vpop.permute.xlu0 %177
  %vm179 = vcmp.lt.s32.totalorder %v43, 1
  %v180 = vsel %vm179, %v176, %v178
  %v181 = vsel %vm179, %v174, %v176
  %v182 = vsel %vm179, %v172, %v174
  %v183 = vsel %vm179, %v178, %v172
  %v184 = vlaneseq
  %v185 = vshrl.u32 %v184, 7
  %v186 = vsub.s32 3, %v185
  %v187 = vrot.slane %v18, %v186
  %v188 = vlaneseq
  %v189 = vshrl.u32 %v188, 7
  %v190 = vsub.s32 3, %v189
  %v191 = vrot.slane %v19, %v190
  %v192 = vlaneseq
  %v193 = vshrl.u32 %v192, 7
  %v194 = vsub.s32 3, %v193
  %v195 = vrot.slane %v20, %v194
  %v196 = vlaneseq
  %v197 = vshrl.u32 %v196, 7
  %v198 = vsub.s32 3, %v197
  %v199 = vrot.slane %v21, %v198
  %v200 = vmul.f32 %v183, %v187
  %v201 = vmul.f32 %v182, %v191
  %v202 = vmul.f32 %v181, %v195
  %v203 = vmul.f32 %v180, %v199
  %v204 = vpack.c.bf16 %v200, %v200
  %v205 = vpack.c.bf16 %v201, %v201
  %v206 = vpack.c.bf16 %v202, %v202
  %v207 = vpack.c.bf16 %v203, %v203
  %v212 = vrot.slane %v204, 4
  %v213 = vrot.slane %v205, 4
  %v214 = vrot.slane %v206, 4
  %v215 = vrot.slane %v207, 4
  %220 = vst [vmem:[#allocation2 + $0x20] sm:$0xf0] %v212
  %221 = vst [vmem:[#allocation2 + $0x28] sm:$0xf0] %v213
  %222 = vst [vmem:[#allocation2 + $0x30] sm:$0xf0] %v214
  %223 = vst [vmem:[#allocation2 + $0x38] sm:$0xf0] %v215
  %v224 = vpack.c.bf16 %v26, %v26
  %v225 = vpack.c.bf16 %v27, %v27
  %v226 = vpack.c.bf16 %v28, %v28
  %v227 = vpack.c.bf16 %v29, %v29
  %228 = vst [vmem:[#allocation2 + $0x40] sm:$0xf] %v224
  %229 = vst [vmem:[#allocation2 + $0x48] sm:$0xf] %v225
  %230 = vst [vmem:[#allocation2 + $0x50] sm:$0xf] %v226
  %231 = vst [vmem:[#allocation2 + $0x58] sm:$0xf] %v227
  %232 = vrot.lane.b32.xlu0 %v26, 127
  %v233 = vpop.permute.xlu0 %232
  %234 = vrot.lane.b32.xlu0 %v27, 127
  %v235 = vpop.permute.xlu0 %234
  %236 = vrot.lane.b32.xlu0 %v28, 127
  %v237 = vpop.permute.xlu0 %236
  %238 = vrot.lane.b32.xlu0 %v29, 127
  %v239 = vpop.permute.xlu0 %238
  %vm240 = vcmp.lt.s32.totalorder %v43, 127
  %v241 = vsel %vm240, %v237, %v239
  %v242 = vsel %vm240, %v235, %v237
  %v243 = vsel %vm240, %v233, %v235
  %v244 = vsel %vm240, %v239, %v233
  %v245 = vlaneseq
  %v246 = vshrl.u32 %v245, 7
  %v247 = vsub.s32 5, %v246
  %v248 = vrot.slane %v18, %v247
  %v249 = vlaneseq
  %v250 = vshrl.u32 %v249, 7
  %v251 = vsub.s32 5, %v250
  %v252 = vrot.slane %v19, %v251
  %v253 = vlaneseq
  %v254 = vshrl.u32 %v253, 7
  %v255 = vsub.s32 5, %v254
  %v256 = vrot.slane %v20, %v255
  %v257 = vlaneseq
  %v258 = vshrl.u32 %v257, 7
  %v259 = vsub.s32 5, %v258
  %v260 = vrot.slane %v21, %v259
  %v261 = vmul.f32 %v243, %v248
  %v262 = vmul.f32 %v242, %v252
  %v263 = vmul.f32 %v241, %v256
  %v264 = vmul.f32 %v244, %v260
  %v265 = vpack.c.bf16 %v261, %v261
  %v266 = vpack.c.bf16 %v262, %v262
  %v267 = vpack.c.bf16 %v263, %v263
  %v268 = vpack.c.bf16 %v264, %v264
  %v273 = vrot.slane %v265, 4
  %v274 = vrot.slane %v266, 4
  %v275 = vrot.slane %v267, 4
  %v276 = vrot.slane %v268, 4
  %281 = vst [vmem:[#allocation2 + $0x40] sm:$0xf0] %v273
  %282 = vst [vmem:[#allocation2 + $0x48] sm:$0xf0] %v274
  %283 = vst [vmem:[#allocation2 + $0x50] sm:$0xf0] %v275
  %284 = vst [vmem:[#allocation2 + $0x58] sm:$0xf0] %v276
  %285 = vrot.lane.b32.xlu0 %v26, 113
  %v286 = vpop.permute.xlu0 %285
  %287 = vrot.lane.b32.xlu0 %v27, 113
  %v288 = vpop.permute.xlu0 %287
  %289 = vrot.lane.b32.xlu0 %v28, 113
  %v290 = vpop.permute.xlu0 %289
  %291 = vrot.lane.b32.xlu0 %v29, 113
  %v292 = vpop.permute.xlu0 %291
  %vm293 = vcmp.lt.s32.totalorder %v43, 113
  %v294 = vsel %vm293, %v290, %v292
  %v295 = vsel %vm293, %v288, %v290
  %v296 = vsel %vm293, %v286, %v288
  %v297 = vsel %vm293, %v292, %v286
  %v298 = vlaneseq
  %v299 = vshrl.u32 %v298, 7
  %v300 = vsub.s32 6, %v299
  %v301 = vrot.slane %v18, %v300
  %v302 = vlaneseq
  %v303 = vshrl.u32 %v302, 7
  %v304 = vsub.s32 6, %v303
  %v305 = vrot.slane %v19, %v304
  %v306 = vlaneseq
  %v307 = vshrl.u32 %v306, 7
  %v308 = vsub.s32 6, %v307
  %v309 = vrot.slane %v20, %v308
  %v310 = vlaneseq
  %v311 = vshrl.u32 %v310, 7
  %v312 = vsub.s32 6, %v311
  %v313 = vrot.slane %v21, %v312
  %v314 = vmul.f32 %v296, %v301
  %v315 = vmul.f32 %v295, %v305
  %v316 = vmul.f32 %v294, %v309
  %v317 = vmul.f32 %v297, %v313
  %v318 = vpack.c.bf16 %v314, %v314
  %v319 = vpack.c.bf16 %v315, %v315
  %v320 = vpack.c.bf16 %v316, %v316
  %v321 = vpack.c.bf16 %v317, %v317
  %322 = vst [vmem:[#allocation2 + $0x60] sm:$0xf] %v318
  %323 = vst [vmem:[#allocation2 + $0x68] sm:$0xf] %v319
  %324 = vst [vmem:[#allocation2 + $0x70] sm:$0xf] %v320
  %325 = vst [vmem:[#allocation2 + $0x78] sm:$0xf] %v321
  %326 = vrot.lane.b32.xlu0 %v26, 112
  %v327 = vpop.permute.xlu0 %326
  %328 = vrot.lane.b32.xlu0 %v27, 112
  %v329 = vpop.permute.xlu0 %328
  %330 = vrot.lane.b32.xlu0 %v28, 112
  %v331 = vpop.permute.xlu0 %330
  %332 = vrot.lane.b32.xlu0 %v29, 112
  %v333 = vpop.permute.xlu0 %332
  %vm334 = vcmp.lt.s32.totalorder %v43, 112
  %v335 = vsel %vm334, %v331, %v333
  %v336 = vsel %vm334, %v329, %v331
  %v337 = vsel %vm334, %v327, %v329
  %v338 = vsel %vm334, %v333, %v327
  %v339 = vlaneseq
  %v340 = vshrl.u32 %v339, 7
  %v341 = vsub.s32 7, %v340
  %v342 = vrot.slane %v18, %v341
  %v343 = vlaneseq
  %v344 = vshrl.u32 %v343, 7
  %v345 = vsub.s32 7, %v344
  %v346 = vrot.slane %v19, %v345
  %v347 = vlaneseq
  %v348 = vshrl.u32 %v347, 7
  %v349 = vsub.s32 7, %v348
  %v350 = vrot.slane %v20, %v349
  %v351 = vlaneseq
  %v352 = vshrl.u32 %v351, 7
  %v353 = vsub.s32 7, %v352
  %v354 = vrot.slane %v21, %v353
  %v355 = vmul.f32 %v337, %v342
  %v356 = vmul.f32 %v336, %v346
  %v357 = vmul.f32 %v335, %v350
  %v358 = vmul.f32 %v338, %v354
  %v359 = vpack.c.bf16 %v355, %v355
  %v360 = vpack.c.bf16 %v356, %v356
  %v361 = vpack.c.bf16 %v357, %v357
  %v362 = vpack.c.bf16 %v358, %v358
  %v367 = vrot.slane %v359, 4
  %v368 = vrot.slane %v360, 4
  %v369 = vrot.slane %v361, 4
  %v370 = vrot.slane %v362, 4
  %375 = vst [vmem:[#allocation2 + $0x60] sm:$0xf0] %v367
  %376 = vst [vmem:[#allocation2 + $0x68] sm:$0xf0] %v368
  %377 = vst [vmem:[#allocation2 + $0x70] sm:$0xf0] %v369
  %378 = vst [vmem:[#allocation2 + $0x78] sm:$0xf0] %v370
  %379 = vrot.lane.b32.xlu0 %v26, 111
  %v380 = vpop.permute.xlu0 %379
  %381 = vrot.lane.b32.xlu0 %v27, 111
  %v382 = vpop.permute.xlu0 %381
  %383 = vrot.lane.b32.xlu0 %v28, 111
  %v384 = vpop.permute.xlu0 %383
  %385 = vrot.lane.b32.xlu0 %v29, 111
  %v386 = vpop.permute.xlu0 %385
  %vm387 = vcmp.lt.s32.totalorder %v43, 111
  %v388 = vsel %vm387, %v384, %v386
  %v389 = vsel %vm387, %v382, %v384
  %v390 = vsel %vm387, %v380, %v382
  %v391 = vsel %vm387, %v386, %v380
  %v392 = vlaneseq
  %v393 = vshrl.u32 %v392, 7
  %v394 = vsub.s32 0, %v393
  %v395 = vrot.slane %v22, %v394
  %v396 = vlaneseq
  %v397 = vshrl.u32 %v396, 7
  %v398 = vsub.s32 0, %v397
  %v399 = vrot.slane %v23, %v398
  %v400 = vlaneseq
  %v401 = vshrl.u32 %v400, 7
  %v402 = vsub.s32 0, %v401
  %v403 = vrot.slane %v24, %v402
  %v404 = vlaneseq
  %v405 = vshrl.u32 %v404, 7
  %v406 = vsub.s32 0, %v405
  %v407 = vrot.slane %v25, %v406
  %v408 = vmul.f32 %v390, %v395
  %v409 = vmul.f32 %v389, %v399
  %v410 = vmul.f32 %v388, %v403
  %v411 = vmul.f32 %v391, %v407
  %v412 = vpack.c.bf16 %v408, %v408
  %v413 = vpack.c.bf16 %v409, %v409
  %v414 = vpack.c.bf16 %v410, %v410
  %v415 = vpack.c.bf16 %v411, %v411
  %416 = vst [vmem:[#allocation2 + $0x80] sm:$0xf] %v412
  %417 = vst [vmem:[#allocation2 + $0x88] sm:$0xf] %v413
  %418 = vst [vmem:[#allocation2 + $0x90] sm:$0xf] %v414
  %419 = vst [vmem:[#allocation2 + $0x98] sm:$0xf] %v415
  %v420 = vld [vmem:[#allocation2] sm:$0xff]
  %v421 = vld [vmem:[#allocation2 + $0x8] sm:$0xff]
  %v422 = vld [vmem:[#allocation2 + $0x10] sm:$0xff]
  %v423 = vld [vmem:[#allocation2 + $0x18] sm:$0xff]
  %v424 = vld [vmem:[#allocation2 + $0x20] sm:$0xff]
  %v425 = vld [vmem:[#allocation2 + $0x28] sm:$0xff]
  %v426 = vld [vmem:[#allocation2 + $0x30] sm:$0xff]
  %v427 = vld [vmem:[#allocation2 + $0x38] sm:$0xff]
  %v428 = vld [vmem:[#allocation2 + $0x40] sm:$0xff]
  %v429 = vld [vmem:[#allocation2 + $0x48] sm:$0xff]
  %v430 = vld [vmem:[#allocation2 + $0x50] sm:$0xff]
  %v431 = vld [vmem:[#allocation2 + $0x58] sm:$0xff]
  %v432 = vld [vmem:[#allocation2 + $0x60] sm:$0xff]
  %v433 = vld [vmem:[#allocation2 + $0x68] sm:$0xff]
  %v434 = vld [vmem:[#allocation2 + $0x70] sm:$0xff]
  %v435 = vld [vmem:[#allocation2 + $0x78] sm:$0xff]
  %v436 = vld [vmem:[#allocation2 + $0x80] sm:$0xf]
  %v437 = vld [vmem:[#allocation2 + $0x88] sm:$0xf]
  %v438 = vld [vmem:[#allocation2 + $0x90] sm:$0xf]
  %v439 = vld [vmem:[#allocation2 + $0x98] sm:$0xf]
  %441 = vset.pattern.permute.xlu0 0
  %442 = vperm.xlu0 %441, %v32
  %v443 = vpop.permute.xlu0 %442
  %446 = vset.pattern.permute.xlu0 0
  %447 = vperm.xlu0 %446, %v33
  %v448 = vpop.permute.xlu0 %447
  %v452 = vunpack.c.l.b16 %v30
  %v453 = vunpack.c.l.b16 %v31
  %v454 = vpack.c.b16 %v453, %v452
  %vm455 = vcmask 588800
  %v457 = vsel %vm455, %v454, 0
  %vm459 = vcmask 1043456
  %v461 = vsel %vm459, %v436, 0
  %v464 = vsel %vm459, %v437, 0
  %v467 = vsel %vm459, %v438, 0
  %v470 = vsel %vm459, %v439, 0
  %472 = vmatprep.subr.bf16.mxu0 %v421
  %473 = vmatpush1.bf16.msra.mxu0 %v420
  %474 = vmatprep.subr.bf16.mxu0 %v425
  %475 = vmatpush1.bf16.msra.mxu0 %v424
  %476 = vmatprep.subr.bf16.mxu0 %v429
  %477 = vmatpush1.bf16.msra.mxu0 %v428
  %478 = vmatprep.subr.bf16.mxu0 %v433
  %479 = vmatpush1.bf16.msra.mxu0 %v432
  %480 = vmatprep.subr.bf16.mxu0 %v464
  %481 = vmatpush1.bf16.msra.mxu0 %v461
  %482 = vmatprep.subr.bf16.mxu0 0
  %483 = vmatpush1.bf16.msra.mxu0 0
  %484 = vmatprep.subr.bf16.mxu0 0
  %485 = vmatpush1.bf16.msra.mxu0 0
  %486 = vmatprep.subr.bf16.mxu0 0
  %487 = vmatpush1.bf16.msra.mxu0 0
  %488 = vmatprep.subr.bf16.mxu0 0
  %489 = vmatpush1.bf16.msra.mxu0 0
  %490 = vmatprep.subr.bf16.mxu0 0
  %491 = vmatpush1.bf16.msra.mxu0 0
  %492 = vmatprep.subr.bf16.mxu0 0
  %493 = vmatpush1.bf16.msra.mxu0 0
  %494 = vmatprep.subr.bf16.mxu0 0
  %495 = vmatpush1.bf16.msra.mxu0 0
  %496 = vmatprep.subr.bf16.mxu0 0
  %497 = vmatpush1.bf16.msra.mxu0 0
  %498 = vmatprep.subr.bf16.mxu0 0
  %499 = vmatpush1.bf16.msra.mxu0 0
  %500 = vmatprep.subr.bf16.mxu0 0
  %501 = vmatpush1.bf16.msra.mxu0 0
  %502 = vmatprep.subr.bf16.mxu0 0
  %503 = vmatpush1.bf16.msra.mxu0 0
  %504 = vmatprep.mubr.bf16.mxu0 0
  %505 = vmatmul.mubr.bf16.gmra.mrb[0].mxu0 %v457
  %v506 = vpop.f32.mrb[0].mxu0
  %v507 = vadd.f32 %v443, %v506
  %v508 = vpop.f32.mrb[0].mxu0
  %v509 = vadd.f32 %v443, %v508
  %v510 = vpop.f32.mrb[0].mxu0
  %v511 = vadd.f32 %v448, %v510
  %v512 = vpop.f32.mrb[0].mxu0
  %v513 = vadd.f32 %v448, %v512
  %514 = vdwg.mxu0
  %515 = vmatprep.subr.bf16.mxu0 %v423
  %516 = vmatpush1.bf16.msra.mxu0 %v422
  %517 = vmatprep.subr.bf16.mxu0 %v427
  %518 = vmatpush1.bf16.msra.mxu0 %v426
  %519 = vmatprep.subr.bf16.mxu0 %v431
  %520 = vmatpush1.bf16.msra.mxu0 %v430
  %521 = vmatprep.subr.bf16.mxu0 %v435
  %522 = vmatpush1.bf16.msra.mxu0 %v434
  %523 = vmatprep.subr.bf16.mxu0 %v470
  %524 = vmatpush1.bf16.msra.mxu0 %v467
  %525 = vmatprep.subr.bf16.mxu0 0
  %526 = vmatpush1.bf16.msra.mxu0 0
  %527 = vmatprep.subr.bf16.mxu0 0
  %528 = vmatpush1.bf16.msra.mxu0 0
  %529 = vmatprep.subr.bf16.mxu0 0
  %530 = vmatpush1.bf16.msra.mxu0 0
  %531 = vmatprep.subr.bf16.mxu0 0
  %532 = vmatpush1.bf16.msra.mxu0 0
  %533 = vmatprep.subr.bf16.mxu0 0
  %534 = vmatpush1.bf16.msra.mxu0 0
  %535 = vmatprep.subr.bf16.mxu0 0
  %536 = vmatpush1.bf16.msra.mxu0 0
  %537 = vmatprep.subr.bf16.mxu0 0
  %538 = vmatpush1.bf16.msra.mxu0 0
  %539 = vmatprep.subr.bf16.mxu0 0
  %540 = vmatpush1.bf16.msra.mxu0 0
  %541 = vmatprep.subr.bf16.mxu0 0
  %542 = vmatpush1.bf16.msra.mxu0 0
  %543 = vmatprep.subr.bf16.mxu0 0
  %544 = vmatpush1.bf16.msra.mxu0 0
  %545 = vmatprep.subr.bf16.mxu0 0
  %546 = vmatpush1.bf16.msra.mxu0 0
  %547 = vmatprep.mubr.bf16.mxu0 0
  %548 = vmatmul.mubr.bf16.gmra.mrb[0].mxu0 %v457
  %v549 = vpop.f32.mrb[0].mxu0
  %v550 = vadd.f32 %v443, %v549
  %v551 = vpop.f32.mrb[0].mxu0
  %v552 = vadd.f32 %v443, %v551
  %v553 = vpop.f32.mrb[0].mxu0
  %v554 = vadd.f32 %v448, %v553
  %v555 = vpop.f32.mrb[0].mxu0
  %v556 = vadd.f32 %v448, %v555
  %557 = vdwg.mxu0
  %v558 = vld [vmem:[%s2 + $0x10] sm:$0xff]
  %v559 = vld [vmem:[%s3 + $0x10] sm:$0xff]
  %560 = vrot.lane.b32.xlu0 %v507, 17
  %v561 = vpop.permute.xlu0 %560
  %562 = vrot.lane.b32.xlu0 %v511, 17
  %v563 = vpop.permute.xlu0 %562
  %564 = vrot.lane.b32.xlu0 %v509, 17
  %v565 = vpop.permute.xlu0 %564
  %566 = vrot.lane.b32.xlu0 %v513, 17
  %v567 = vpop.permute.xlu0 %566
  %568 = vrot.lane.b32.xlu0 %v550, 17
  %v569 = vpop.permute.xlu0 %568
  %570 = vrot.lane.b32.xlu0 %v554, 17
  %v571 = vpop.permute.xlu0 %570
  %572 = vrot.lane.b32.xlu0 %v552, 17
  %v573 = vpop.permute.xlu0 %572
  %574 = vrot.lane.b32.xlu0 %v556, 17
  %v575 = vpop.permute.xlu0 %574
  %v576 = vsel %vm44, %v569, %v573
  %v577 = vsel %vm44, %v571, %v575
  %v578 = vsel %vm44, %v565, %v569
  %v579 = vsel %vm44, %v567, %v571
  %v580 = vsel %vm44, %v561, %v565
  %v581 = vsel %vm44, %v563, %v567
  %v582 = vsel %vm44, %v573, %v561
  %v583 = vsel %vm44, %v575, %v563
  %v584 = vmul.f32 %v582, %v52
  %v585 = vmul.f32 %v580, %v56
  %v586 = vmul.f32 %v578, %v60
  %v587 = vmul.f32 %v576, %v64
  %v588 = vmul.f32 %v583, %v52
  %v589 = vmul.f32 %v581, %v56
  %v590 = vmul.f32 %v579, %v60
  %v591 = vmul.f32 %v577, %v64
  %v592 = vpack.c.bf16 %v588, %v584
  %v593 = vpack.c.bf16 %v589, %v585
  %v594 = vpack.c.bf16 %v590, %v586
  %v595 = vpack.c.bf16 %v591, %v587
  %596 = vst [vmem:[#allocation2] sm:$0xff] %v592
  %597 = vst [vmem:[#allocation2 + $0x8] sm:$0xff] %v593
  %598 = vst [vmem:[#allocation2 + $0x10] sm:$0xff] %v594
  %599 = vst [vmem:[#allocation2 + $0x18] sm:$0xff] %v595
  %600 = vrot.lane.b32.xlu0 %v507, 16
  %v601 = vpop.permute.xlu0 %600
  %602 = vrot.lane.b32.xlu0 %v511, 16
  %v603 = vpop.permute.xlu0 %602
  %604 = vrot.lane.b32.xlu0 %v509, 16
  %v605 = vpop.permute.xlu0 %604
  %606 = vrot.lane.b32.xlu0 %v513, 16
  %v607 = vpop.permute.xlu0 %606
  %608 = vrot.lane.b32.xlu0 %v550, 16
  %v609 = vpop.permute.xlu0 %608
  %610 = vrot.lane.b32.xlu0 %v554, 16
  %v611 = vpop.permute.xlu0 %610
  %612 = vrot.lane.b32.xlu0 %v552, 16
  %v613 = vpop.permute.xlu0 %612
  %614 = vrot.lane.b32.xlu0 %v556, 16
  %v615 = vpop.permute.xlu0 %614
  %v616 = vsel %vm85, %v609, %v613
  %v617 = vsel %vm85, %v611, %v615
  %v618 = vsel %vm85, %v605, %v609
  %v619 = vsel %vm85, %v607, %v611
  %v620 = vsel %vm85, %v601, %v605
  %v621 = vsel %vm85, %v603, %v607
  %v622 = vsel %vm85, %v613, %v601
  %v623 = vsel %vm85, %v615, %v603
  %v624 = vmul.f32 %v622, %v93
  %v625 = vmul.f32 %v620, %v97
  %v626 = vmul.f32 %v618, %v101
  %v627 = vmul.f32 %v616, %v105
  %v628 = vmul.f32 %v623, %v93
  %v629 = vmul.f32 %v621, %v97
  %v630 = vmul.f32 %v619, %v101
  %v631 = vmul.f32 %v617, %v105
  %v632 = vpack.c.bf16 %v628, %v624
  %v633 = vpack.c.bf16 %v629, %v625
  %v634 = vpack.c.bf16 %v630, %v626
  %v635 = vpack.c.bf16 %v631, %v627
  %636 = vst [vmem:[#allocation2 + $0x20] sm:$0xff] %v632
  %637 = vst [vmem:[#allocation2 + $0x28] sm:$0xff] %v633
  %638 = vst [vmem:[#allocation2 + $0x30] sm:$0xff] %v634
  %639 = vst [vmem:[#allocation2 + $0x38] sm:$0xff] %v635
  %640 = vrot.lane.b32.xlu0 %v507, 15
  %v641 = vpop.permute.xlu0 %640
  %642 = vrot.lane.b32.xlu0 %v511, 15
  %v643 = vpop.permute.xlu0 %642
  %644 = vrot.lane.b32.xlu0 %v509, 15
  %v645 = vpop.permute.xlu0 %644
  %646 = vrot.lane.b32.xlu0 %v513, 15
  %v647 = vpop.permute.xlu0 %646
  %648 = vrot.lane.b32.xlu0 %v550, 15
  %v649 = vpop.permute.xlu0 %648
  %650 = vrot.lane.b32.xlu0 %v554, 15
  %v651 = vpop.permute.xlu0 %650
  %652 = vrot.lane.b32.xlu0 %v552, 15
  %v653 = vpop.permute.xlu0 %652
  %654 = vrot.lane.b32.xlu0 %v556, 15
  %v655 = vpop.permute.xlu0 %654
  %v656 = vsel %vm138, %v649, %v653
  %v657 = vsel %vm138, %v651, %v655
  %v658 = vsel %vm138, %v645, %v649
  %v659 = vsel %vm138, %v647, %v651
  %v660 = vsel %vm138, %v641, %v645
  %v661 = vsel %vm138, %v643, %v647
  %v662 = vsel %vm138, %v653, %v641
  %v663 = vsel %vm138, %v655, %v643
  %v664 = vmul.f32 %v662, %v146
  %v665 = vmul.f32 %v660, %v150
  %v666 = vmul.f32 %v658, %v154
  %v667 = vmul.f32 %v656, %v158
  %v668 = vmul.f32 %v663, %v146
  %v669 = vmul.f32 %v661, %v150
  %v670 = vmul.f32 %v659, %v154
  %v671 = vmul.f32 %v657, %v158
  %v672 = vpack.c.bf16 %v668, %v664
  %v673 = vpack.c.bf16 %v669, %v665
  %v674 = vpack.c.bf16 %v670, %v666
  %v675 = vpack.c.bf16 %v671, %v667
  %676 = vst [vmem:[#allocation2 + $0x40] sm:$0xff] %v672
  %677 = vst [vmem:[#allocation2 + $0x48] sm:$0xff] %v673
  %678 = vst [vmem:[#allocation2 + $0x50] sm:$0xff] %v674
  %679 = vst [vmem:[#allocation2 + $0x58] sm:$0xff] %v675
  %680 = vrot.lane.b32.xlu0 %v507, 1
  %v681 = vpop.permute.xlu0 %680
  %682 = vrot.lane.b32.xlu0 %v511, 1
  %v683 = vpop.permute.xlu0 %682
  %684 = vrot.lane.b32.xlu0 %v509, 1
  %v685 = vpop.permute.xlu0 %684
  %686 = vrot.lane.b32.xlu0 %v513, 1
  %v687 = vpop.permute.xlu0 %686
  %688 = vrot.lane.b32.xlu0 %v550, 1
  %v689 = vpop.permute.xlu0 %688
  %690 = vrot.lane.b32.xlu0 %v554, 1
  %v691 = vpop.permute.xlu0 %690
  %692 = vrot.lane.b32.xlu0 %v552, 1
  %v693 = vpop.permute.xlu0 %692
  %694 = vrot.lane.b32.xlu0 %v556, 1
  %v695 = vpop.permute.xlu0 %694
  %v696 = vsel %vm179, %v689, %v693
  %v697 = vsel %vm179, %v691, %v695
  %v698 = vsel %vm179, %v685, %v689
  %v699 = vsel %vm179, %v687, %v691
  %v700 = vsel %vm179, %v681, %v685
  %v701 = vsel %vm179, %v683, %v687
  %v702 = vsel %vm179, %v693, %v681
  %v703 = vsel %vm179, %v695, %v683
  %v704 = vmul.f32 %v702, %v187
  %v705 = vmul.f32 %v700, %v191
  %v706 = vmul.f32 %v698, %v195
  %v707 = vmul.f32 %v696, %v199
  %v708 = vmul.f32 %v703, %v187
  %v709 = vmul.f32 %v701, %v191
  %v710 = vmul.f32 %v699, %v195
  %v711 = vmul.f32 %v697, %v199
  %v712 = vpack.c.bf16 %v708, %v704
  %v713 = vpack.c.bf16 %v709, %v705
  %v714 = vpack.c.bf16 %v710, %v706
  %v715 = vpack.c.bf16 %v711, %v707
  %716 = vst [vmem:[#allocation2 + $0x60] sm:$0xff] %v712
  %717 = vst [vmem:[#allocation2 + $0x68] sm:$0xff] %v713
  %718 = vst [vmem:[#allocation2 + $0x70] sm:$0xff] %v714
  %719 = vst [vmem:[#allocation2 + $0x78] sm:$0xff] %v715
  %v720 = vpack.c.bf16 %v511, %v507
  %v721 = vpack.c.bf16 %v513, %v509
  %v722 = vpack.c.bf16 %v554, %v550
  %v723 = vpack.c.bf16 %v556, %v552
  %724 = vst [vmem:[#allocation2 + $0x80] sm:$0xff] %v720
  %725 = vst [vmem:[#allocation2 + $0x88] sm:$0xff] %v721
  %726 = vst [vmem:[#allocation2 + $0x90] sm:$0xff] %v722
  %727 = vst [vmem:[#allocation2 + $0x98] sm:$0xff] %v723
  %728 = vrot.lane.b32.xlu0 %v507, 127
  %v729 = vpop.permute.xlu0 %728
  %730 = vrot.lane.b32.xlu0 %v511, 127
  %v731 = vpop.permute.xlu0 %730
  %732 = vrot.lane.b32.xlu0 %v509, 127
  %v733 = vpop.permute.xlu0 %732
  %734 = vrot.lane.b32.xlu0 %v513, 127
  %v735 = vpop.permute.xlu0 %734
  %736 = vrot.lane.b32.xlu0 %v550, 127
  %v737 = vpop.permute.xlu0 %736
  %738 = vrot.lane.b32.xlu0 %v554, 127
  %v739 = vpop.permute.xlu0 %738
  %740 = vrot.lane.b32.xlu0 %v552, 127
  %v741 = vpop.permute.xlu0 %740
  %742 = vrot.lane.b32.xlu0 %v556, 127
  %v743 = vpop.permute.xlu0 %742
  %v744 = vsel %vm240, %v737, %v741
  %v745 = vsel %vm240, %v739, %v743
  %v746 = vsel %vm240, %v733, %v737
  %v747 = vsel %vm240, %v735, %v739
  %v748 = vsel %vm240, %v729, %v733
  %v749 = vsel %vm240, %v731, %v735
  %v750 = vsel %vm240, %v741, %v729
  %v751 = vsel %vm240, %v743, %v731
  %v752 = vmul.f32 %v748, %v248
  %v753 = vmul.f32 %v746, %v252
  %v754 = vmul.f32 %v744, %v256
  %v755 = vmul.f32 %v750, %v260
  %v756 = vmul.f32 %v749, %v248
  %v757 = vmul.f32 %v747, %v252
  %v758 = vmul.f32 %v745, %v256
  %v759 = vmul.f32 %v751, %v260
  %v760 = vpack.c.bf16 %v756, %v752
  %v761 = vpack.c.bf16 %v757, %v753
  %v762 = vpack.c.bf16 %v758, %v754
  %v763 = vpack.c.bf16 %v759, %v755
  %764 = vst [vmem:[#allocation2 + $0xa0] sm:$0xff] %v760
  %765 = vst [vmem:[#allocation2 + $0xa8] sm:$0xff] %v761
  %766 = vst [vmem:[#allocation2 + $0xb0] sm:$0xff] %v762
  %767 = vst [vmem:[#allocation2 + $0xb8] sm:$0xff] %v763
  %768 = vrot.lane.b32.xlu0 %v507, 113
  %v769 = vpop.permute.xlu0 %768
  %770 = vrot.lane.b32.xlu0 %v511, 113
  %v771 = vpop.permute.xlu0 %770
  %772 = vrot.lane.b32.xlu0 %v509, 113
  %v773 = vpop.permute.xlu0 %772
  %774 = vrot.lane.b32.xlu0 %v513, 113
  %v775 = vpop.permute.xlu0 %774
  %776 = vrot.lane.b32.xlu0 %v550, 113
  %v777 = vpop.permute.xlu0 %776
  %778 = vrot.lane.b32.xlu0 %v554, 113
  %v779 = vpop.permute.xlu0 %778
  %780 = vrot.lane.b32.xlu0 %v552, 113
  %v781 = vpop.permute.xlu0 %780
  %782 = vrot.lane.b32.xlu0 %v556, 113
  %v783 = vpop.permute.xlu0 %782
  %v784 = vsel %vm293, %v777, %v781
  %v785 = vsel %vm293, %v779, %v783
  %v786 = vsel %vm293, %v773, %v777
  %v787 = vsel %vm293, %v775, %v779
  %v788 = vsel %vm293, %v769, %v773
  %v789 = vsel %vm293, %v771, %v775
  %v790 = vsel %vm293, %v781, %v769
  %v791 = vsel %vm293, %v783, %v771
  %v792 = vmul.f32 %v788, %v301
  %v793 = vmul.f32 %v786, %v305
  %v794 = vmul.f32 %v784, %v309
  %v795 = vmul.f32 %v790, %v313
  %v796 = vmul.f32 %v789, %v301
  %v797 = vmul.f32 %v787, %v305
  %v798 = vmul.f32 %v785, %v309
  %v799 = vmul.f32 %v791, %v313
  %v800 = vpack.c.bf16 %v796, %v792
  %v801 = vpack.c.bf16 %v797, %v793
  %v802 = vpack.c.bf16 %v798, %v794
  %v803 = vpack.c.bf16 %v799, %v795
  %804 = vst [vmem:[#allocation2 + $0xc0] sm:$0xff] %v800
  %805 = vst [vmem:[#allocation2 + $0xc8] sm:$0xff] %v801
  %806 = vst [vmem:[#allocation2 + $0xd0] sm:$0xff] %v802
  %807 = vst [vmem:[#allocation2 + $0xd8] sm:$0xff] %v803
  %808 = vrot.lane.b32.xlu0 %v507, 112
  %v809 = vpop.permute.xlu0 %808
  %810 = vrot.lane.b32.xlu0 %v511, 112
  %v811 = vpop.permute.xlu0 %810
  %812 = vrot.lane.b32.xlu0 %v509, 112
  %v813 = vpop.permute.xlu0 %812
  %814 = vrot.lane.b32.xlu0 %v513, 112
  %v815 = vpop.permute.xlu0 %814
  %816 = vrot.lane.b32.xlu0 %v550, 112
  %v817 = vpop.permute.xlu0 %816
  %818 = vrot.lane.b32.xlu0 %v554, 112
  %v819 = vpop.permute.xlu0 %818
  %820 = vrot.lane.b32.xlu0 %v552, 112
  %v821 = vpop.permute.xlu0 %820
  %822 = vrot.lane.b32.xlu0 %v556, 112
  %v823 = vpop.permute.xlu0 %822
  %v824 = vsel %vm334, %v817, %v821
  %v825 = vsel %vm334, %v819, %v823
  %v826 = vsel %vm334, %v813, %v817
  %v827 = vsel %vm334, %v815, %v819
  %v828 = vsel %vm334, %v809, %v813
  %v829 = vsel %vm334, %v811, %v815
  %v830 = vsel %vm334, %v821, %v809
  %v831 = vsel %vm334, %v823, %v811
  %v832 = vmul.f32 %v828, %v342
  %v833 = vmul.f32 %v826, %v346
  %v834 = vmul.f32 %v824, %v350
  %v835 = vmul.f32 %v830, %v354
  %v836 = vmul.f32 %v829, %v342
  %v837 = vmul.f32 %v827, %v346
  %v838 = vmul.f32 %v825, %v350
  %v839 = vmul.f32 %v831, %v354
  %v840 = vpack.c.bf16 %v836, %v832
  %v841 = vpack.c.bf16 %v837, %v833
  %v842 = vpack.c.bf16 %v838, %v834
  %v843 = vpack.c.bf16 %v839, %v835
  %844 = vst [vmem:[#allocation2 + $0xe0] sm:$0xff] %v840
  %845 = vst [vmem:[#allocation2 + $0xe8] sm:$0xff] %v841
  %846 = vst [vmem:[#allocation2 + $0xf0] sm:$0xff] %v842
  %847 = vst [vmem:[#allocation2 + $0xf8] sm:$0xff] %v843
  %848 = vrot.lane.b32.xlu0 %v507, 111
  %v849 = vpop.permute.xlu0 %848
  %850 = vrot.lane.b32.xlu0 %v511, 111
  %v851 = vpop.permute.xlu0 %850
  %852 = vrot.lane.b32.xlu0 %v509, 111
  %v853 = vpop.permute.xlu0 %852
  %854 = vrot.lane.b32.xlu0 %v513, 111
  %v855 = vpop.permute.xlu0 %854
  %856 = vrot.lane.b32.xlu0 %v550, 111
  %v857 = vpop.permute.xlu0 %856
  %858 = vrot.lane.b32.xlu0 %v554, 111
  %v859 = vpop.permute.xlu0 %858
  %860 = vrot.lane.b32.xlu0 %v552, 111
  %v861 = vpop.permute.xlu0 %860
  %862 = vrot.lane.b32.xlu0 %v556, 111
  %v863 = vpop.permute.xlu0 %862
  %v864 = vsel %vm387, %v857, %v861
  %v865 = vsel %vm387, %v859, %v863
  %v866 = vsel %vm387, %v853, %v857
  %v867 = vsel %vm387, %v855, %v859
  %v868 = vsel %vm387, %v849, %v853
  %v869 = vsel %vm387, %v851, %v855
  %v870 = vsel %vm387, %v861, %v849
  %v871 = vsel %vm387, %v863, %v851
  %v872 = vmul.f32 %v868, %v395
  %v873 = vmul.f32 %v866, %v399
  %v874 = vmul.f32 %v864, %v403
  %v875 = vmul.f32 %v870, %v407
  %v876 = vmul.f32 %v869, %v395
  %v877 = vmul.f32 %v867, %v399
  %v878 = vmul.f32 %v865, %v403
  %v879 = vmul.f32 %v871, %v407
  %v880 = vpack.c.bf16 %v876, %v872
  %v881 = vpack.c.bf16 %v877, %v873
  %v882 = vpack.c.bf16 %v878, %v874
  %v883 = vpack.c.bf16 %v879, %v875
  %884 = vst [vmem:[#allocation2 + $0x100] sm:$0xff] %v880
  %885 = vst [vmem:[#allocation2 + $0x108] sm:$0xff] %v881
  %886 = vst [vmem:[#allocation2 + $0x110] sm:$0xff] %v882
  %887 = vst [vmem:[#allocation2 + $0x118] sm:$0xff] %v883
  %v888 = vld [vmem:[#allocation2] sm:$0xff]
  %v889 = vld [vmem:[#allocation2 + $0x8] sm:$0xff]
  %v890 = vld [vmem:[#allocation2 + $0x10] sm:$0xff]
  %v891 = vld [vmem:[#allocation2 + $0x18] sm:$0xff]
  %v892 = vld [vmem:[#allocation2 + $0x20] sm:$0xff]
  %v893 = vld [vmem:[#allocation2 + $0x28] sm:$0xff]
  %v894 = vld [vmem:[#allocation2 + $0x30] sm:$0xff]
  %v895 = vld [vmem:[#allocation2 + $0x38] sm:$0xff]
  %v896 = vld [vmem:[#allocation2 + $0x40] sm:$0xff]
  %v897 = vld [vmem:[#allocation2 + $0x48] sm:$0xff]
  %v898 = vld [vmem:[#allocation2 + $0x50] sm:$0xff]
  %v899 = vld [vmem:[#allocation2 + $0x58] sm:$0xff]
  %v900 = vld [vmem:[#allocation2 + $0x60] sm:$0xff]
  %v901 = vld [vmem:[#allocation2 + $0x68] sm:$0xff]
  %v902 = vld [vmem:[#allocation2 + $0x70] sm:$0xff]
  %v903 = vld [vmem:[#allocation2 + $0x78] sm:$0xff]
  %v904 = vld [vmem:[#allocation2 + $0x80] sm:$0xff]
  %v905 = vld [vmem:[#allocation2 + $0x88] sm:$0xff]
  %v906 = vld [vmem:[#allocation2 + $0x90] sm:$0xff]
  %v907 = vld [vmem:[#allocation2 + $0x98] sm:$0xff]
  %v908 = vld [vmem:[#allocation2 + $0xa0] sm:$0xff]
  %v909 = vld [vmem:[#allocation2 + $0xa8] sm:$0xff]
  %v910 = vld [vmem:[#allocation2 + $0xb0] sm:$0xff]
  %v911 = vld [vmem:[#allocation2 + $0xb8] sm:$0xff]
  %v912 = vld [vmem:[#allocation2 + $0xc0] sm:$0xff]
  %v913 = vld [vmem:[#allocation2 + $0xc8] sm:$0xff]
  %v914 = vld [vmem:[#allocation2 + $0xd0] sm:$0xff]
  %v915 = vld [vmem:[#allocation2 + $0xd8] sm:$0xff]
  %v916 = vld [vmem:[#allocation2 + $0xe0] sm:$0xff]
  %v917 = vld [vmem:[#allocation2 + $0xe8] sm:$0xff]
  %v918 = vld [vmem:[#allocation2 + $0xf0] sm:$0xff]
  %v919 = vld [vmem:[#allocation2 + $0xf8] sm:$0xff]
  %v920 = vld [vmem:[#allocation2 + $0x100] sm:$0xff]
  %v921 = vld [vmem:[#allocation2 + $0x108] sm:$0xff]
  %v922 = vld [vmem:[#allocation2 + $0x110] sm:$0xff]
  %v923 = vld [vmem:[#allocation2 + $0x118] sm:$0xff]
  %925 = vset.pattern.permute.xlu0 0
  %926 = vperm.xlu0 %925, %v559
  %v927 = vpop.permute.xlu0 %926
  %v930 = vunpack.c.l.b16 %v558
  %v931 = vunpack.c.h.b16 %v558
  %v932 = vpack.c.b16 %v930, %v930
  %v933 = vpack.c.b16 %v931, %v931
  %vm935 = vcmask 130048
  %v937 = vsel %vm935, %v933, 0
  %939 = vmatprep.subr.bf16.mxu0 %v889
  %940 = vmatpush1.bf16.msra.mxu0 %v888
  %941 = vmatprep.subr.bf16.mxu0 %v893
  %942 = vmatpush1.bf16.msra.mxu0 %v892
  %943 = vmatprep.subr.bf16.mxu0 %v897
  %944 = vmatpush1.bf16.msra.mxu0 %v896
  %945 = vmatprep.subr.bf16.mxu0 %v901
  %946 = vmatpush1.bf16.msra.mxu0 %v900
  %947 = vmatprep.subr.bf16.mxu0 %v905
  %948 = vmatpush1.bf16.msra.mxu0 %v904
  %949 = vmatprep.subr.bf16.mxu0 %v909
  %950 = vmatpush1.bf16.msra.mxu0 %v908
  %951 = vmatprep.subr.bf16.mxu0 %v913
  %952 = vmatpush1.bf16.msra.mxu0 %v912
  %953 = vmatprep.subr.bf16.mxu0 %v917
  %954 = vmatpush1.bf16.msra.mxu0 %v916
  %955 = vmatprep.subr.bf16.mxu0 %v921
  %956 = vmatpush1.bf16.msra.mxu0 %v920
  %957 = vmatprep.subr.bf16.mxu0 0
  %958 = vmatpush1.bf16.msra.mxu0 0
  %959 = vmatprep.subr.bf16.mxu0 0
  %960 = vmatpush1.bf16.msra.mxu0 0
  %961 = vmatprep.subr.bf16.mxu0 0
  %962 = vmatpush1.bf16.msra.mxu0 0
  %963 = vmatprep.subr.bf16.mxu0 0
  %964 = vmatpush1.bf16.msra.mxu0 0
  %965 = vmatprep.subr.bf16.mxu0 0
  %966 = vmatpush1.bf16.msra.mxu0 0
  %967 = vmatprep.subr.bf16.mxu0 0
  %968 = vmatpush1.bf16.msra.mxu0 0
  %969 = vmatprep.subr.bf16.mxu0 0
  %970 = vmatpush1.bf16.msra.mxu0 0
  %971 = vmatprep.mubr.bf16.mxu0 %v937
  %972 = vmatmul.mubr.bf16.gmra.mrb[0].mxu0 %v932
  %v973 = vpop.f32.mrb[0].mxu0
  %v974 = vadd.f32 %v927, %v973
  %v975 = vpop.f32.mrb[0].mxu0
  %v976 = vadd.f32 %v927, %v975
  %v977 = vpop.f32.mrb[0].mxu0
  %v978 = vpop.f32.mrb[0].mxu0
  %979 = vdwg.mxu0
  %980 = vmatprep.subr.bf16.mxu0 %v891
  %981 = vmatpush1.bf16.msra.mxu0 %v890
  %982 = vmatprep.subr.bf16.mxu0 %v895
  %983 = vmatpush1.bf16.msra.mxu0 %v894
  %984 = vmatprep.subr.bf16.mxu0 %v899
  %985 = vmatpush1.bf16.msra.mxu0 %v898
  %986 = vmatprep.subr.bf16.mxu0 %v903
  %987 = vmatpush1.bf16.msra.mxu0 %v902
  %988 = vmatprep.subr.bf16.mxu0 %v907
  %989 = vmatpush1.bf16.msra.mxu0 %v906
  %990 = vmatprep.subr.bf16.mxu0 %v911
  %991 = vmatpush1.bf16.msra.mxu0 %v910
  %992 = vmatprep.subr.bf16.mxu0 %v915
  %993 = vmatpush1.bf16.msra.mxu0 %v914
  %994 = vmatprep.subr.bf16.mxu0 %v919
  %995 = vmatpush1.bf16.msra.mxu0 %v918
  %996 = vmatprep.subr.bf16.mxu0 %v923
  %997 = vmatpush1.bf16.msra.mxu0 %v922
  %998 = vmatprep.subr.bf16.mxu0 0
  %999 = vmatpush1.bf16.msra.mxu0 0
  %1000 = vmatprep.subr.bf16.mxu0 0
  %1001 = vmatpush1.bf16.msra.mxu0 0
  %1002 = vmatprep.subr.bf16.mxu0 0
  %1003 = vmatpush1.bf16.msra.mxu0 0
  %1004 = vmatprep.subr.bf16.mxu0 0
  %1005 = vmatpush1.bf16.msra.mxu0 0
  %1006 = vmatprep.subr.bf16.mxu0 0
  %1007 = vmatpush1.bf16.msra.mxu0 0
  %1008 = vmatprep.subr.bf16.mxu0 0
  %1009 = vmatpush1.bf16.msra.mxu0 0
  %1010 = vmatprep.subr.bf16.mxu0 0
  %1011 = vmatpush1.bf16.msra.mxu0 0
  %1012 = vmatprep.mubr.bf16.mxu0 %v937
  %1013 = vmatmul.mubr.bf16.gmra.mrb[0].mxu0 %v932
  %v1014 = vpop.f32.mrb[0].mxu0
  %v1015 = vadd.f32 %v927, %v1014
  %v1016 = vpop.f32.mrb[0].mxu0
  %v1017 = vadd.f32 %v927, %v1016
  %v1018 = vpop.f32.mrb[0].mxu0
  %v1019 = vpop.f32.mrb[0].mxu0
  %1020 = vdwg.mxu0
  %v1021 = vpack.c.bf16 %v974, %v974
  %v1022 = vpack.c.bf16 %v976, %v976
  %v1023 = vpack.c.bf16 %v1015, %v1015
  %v1024 = vpack.c.bf16 %v1017, %v1017
  %1025 = vst [vmem:[#allocation3] sm:$0xf] %v1021
  %1026 = vst [vmem:[#allocation3 + $0x8] sm:$0xf] %v1022
  %1027 = vst [vmem:[#allocation3 + $0x10] sm:$0xf] %v1023
  %1028 = vst [vmem:[#allocation3 + $0x18] sm:$0xf] %v1024
  %v1029 = vld [vmem:[#allocation3] sm:$0xf]
  %v1030 = vld [vmem:[#allocation3 + $0x8] sm:$0xf]
  %v1031 = vld [vmem:[#allocation3 + $0x10] sm:$0xf]
  %v1032 = vld [vmem:[#allocation3 + $0x18] sm:$0xf]
  %v1033 = vld [vmem:[%s2 + $0x20] sm:$0xf]
  %v1034 = vld [vmem:[%s3 + $0x18] sm:$0xff]
  %v1035 = vunpack.c.l.bf16 %v1029
  %v1036 = vunpack.c.l.bf16 %v1030
  %v1037 = vunpack.c.l.bf16 %v1031
  %v1038 = vunpack.c.l.bf16 %v1032
  %1039 = vrot.lane.b32.xlu0 %v1035, 17
  %v1040 = vpop.permute.xlu0 %1039
  %1041 = vrot.lane.b32.xlu0 %v1036, 17
  %v1042 = vpop.permute.xlu0 %1041
  %1043 = vrot.lane.b32.xlu0 %v1037, 17
  %v1044 = vpop.permute.xlu0 %1043
  %1045 = vrot.lane.b32.xlu0 %v1038, 17
  %v1046 = vpop.permute.xlu0 %1045
  %v1047 = vsel %vm44, %v1044, %v1046
  %v1048 = vsel %vm44, %v1042, %v1044
  %v1049 = vsel %vm44, %v1040, %v1042
  %v1050 = vsel %vm44, %v1046, %v1040
  %v1051 = vmul.f32 %v1050, %v52
  %v1052 = vmul.f32 %v1049, %v56
  %v1053 = vmul.f32 %v1048, %v60
  %v1054 = vmul.f32 %v1047, %v64
  %v1055 = vpack.c.bf16 %v1051, %v1051
  %v1056 = vpack.c.bf16 %v1052, %v1052
  %v1057 = vpack.c.bf16 %v1053, %v1053
  %v1058 = vpack.c.bf16 %v1054, %v1054
  %1059 = vst [vmem:[#allocation2] sm:$0xf] %v1055
  %1060 = vst [vmem:[#allocation2 + $0x8] sm:$0xf] %v1056
  %1061 = vst [vmem:[#allocation2 + $0x10] sm:$0xf] %v1057
  %1062 = vst [vmem:[#allocation2 + $0x18] sm:$0xf] %v1058
  %1063 = vrot.lane.b32.xlu0 %v1035, 16
  %v1064 = vpop.permute.xlu0 %1063
  %1065 = vrot.lane.b32.xlu0 %v1036, 16
  %v1066 = vpop.permute.xlu0 %1065
  %1067 = vrot.lane.b32.xlu0 %v1037, 16
  %v1068 = vpop.permute.xlu0 %1067
  %1069 = vrot.lane.b32.xlu0 %v1038, 16
  %v1070 = vpop.permute.xlu0 %1069
  %v1071 = vsel %vm85, %v1068, %v1070
  %v1072 = vsel %vm85, %v1066, %v1068
  %v1073 = vsel %vm85, %v1064, %v1066
  %v1074 = vsel %vm85, %v1070, %v1064
  %v1075 = vmul.f32 %v1074, %v93
  %v1076 = vmul.f32 %v1073, %v97
  %v1077 = vmul.f32 %v1072, %v101
  %v1078 = vmul.f32 %v1071, %v105
  %v1079 = vpack.c.bf16 %v1075, %v1075
  %v1080 = vpack.c.bf16 %v1076, %v1076
  %v1081 = vpack.c.bf16 %v1077, %v1077
  %v1082 = vpack.c.bf16 %v1078, %v1078
  %v1087 = vrot.slane %v1079, 4
  %v1088 = vrot.slane %v1080, 4
  %v1089 = vrot.slane %v1081, 4
  %v1090 = vrot.slane %v1082, 4
  %1095 = vst [vmem:[#allocation2] sm:$0xf0] %v1087
  %1096 = vst [vmem:[#allocation2 + $0x8] sm:$0xf0] %v1088
  %1097 = vst [vmem:[#allocation2 + $0x10] sm:$0xf0] %v1089
  %1098 = vst [vmem:[#allocation2 + $0x18] sm:$0xf0] %v1090
  %1099 = vrot.lane.b32.xlu0 %v1035, 15
  %v1100 = vpop.permute.xlu0 %1099
  %1101 = vrot.lane.b32.xlu0 %v1036, 15
  %v1102 = vpop.permute.xlu0 %1101
  %1103 = vrot.lane.b32.xlu0 %v1037, 15
  %v1104 = vpop.permute.xlu0 %1103
  %1105 = vrot.lane.b32.xlu0 %v1038, 15
  %v1106 = vpop.permute.xlu0 %1105
  %v1107 = vsel %vm138, %v1104, %v1106
  %v1108 = vsel %vm138, %v1102, %v1104
  %v1109 = vsel %vm138, %v1100, %v1102
  %v1110 = vsel %vm138, %v1106, %v1100
  %v1111 = vmul.f32 %v1110, %v146
  %v1112 = vmul.f32 %v1109, %v150
  %v1113 = vmul.f32 %v1108, %v154
  %v1114 = vmul.f32 %v1107, %v158
  %v1115 = vpack.c.bf16 %v1111, %v1111
  %v1116 = vpack.c.bf16 %v1112, %v1112
  %v1117 = vpack.c.bf16 %v1113, %v1113
  %v1118 = vpack.c.bf16 %v1114, %v1114
  %1119 = vst [vmem:[#allocation2 + $0x20] sm:$0xf] %v1115
  %1120 = vst [vmem:[#allocation2 + $0x28] sm:$0xf] %v1116
  %1121 = vst [vmem:[#allocation2 + $0x30] sm:$0xf] %v1117
  %1122 = vst [vmem:[#allocation2 + $0x38] sm:$0xf] %v1118
  %1123 = vrot.lane.b32.xlu0 %v1035, 1
  %v1124 = vpop.permute.xlu0 %1123
  %1125 = vrot.lane.b32.xlu0 %v1036, 1
  %v1126 = vpop.permute.xlu0 %1125
  %1127 = vrot.lane.b32.xlu0 %v1037, 1
  %v1128 = vpop.permute.xlu0 %1127
  %1129 = vrot.lane.b32.xlu0 %v1038, 1
  %v1130 = vpop.permute.xlu0 %1129
  %v1131 = vsel %vm179, %v1128, %v1130
  %v1132 = vsel %vm179, %v1126, %v1128
  %v1133 = vsel %vm179, %v1124, %v1126
  %v1134 = vsel %vm179, %v1130, %v1124
  %v1135 = vmul.f32 %v1134, %v187
  %v1136 = vmul.f32 %v1133, %v191
  %v1137 = vmul.f32 %v1132, %v195
  %v1138 = vmul.f32 %v1131, %v199
  %v1139 = vpack.c.bf16 %v1135, %v1135
  %v1140 = vpack.c.bf16 %v1136, %v1136
  %v1141 = vpack.c.bf16 %v1137, %v1137
  %v1142 = vpack.c.bf16 %v1138, %v1138
  %v1147 = vrot.slane %v1139, 4
  %v1148 = vrot.slane %v1140, 4
  %v1149 = vrot.slane %v1141, 4
  %v1150 = vrot.slane %v1142, 4
  %1155 = vst [vmem:[#allocation2 + $0x20] sm:$0xf0] %v1147
  %1156 = vst [vmem:[#allocation2 + $0x28] sm:$0xf0] %v1148
  %1157 = vst [vmem:[#allocation2 + $0x30] sm:$0xf0] %v1149
  %1158 = vst [vmem:[#allocation2 + $0x38] sm:$0xf0] %v1150
  %1159 = vst [vmem:[#allocation2 + $0x40] sm:$0xf] %v1029
  %1160 = vst [vmem:[#allocation2 + $0x48] sm:$0xf] %v1030
  %1161 = vst [vmem:[#allocation2 + $0x50] sm:$0xf] %v1031
  %1162 = vst [vmem:[#allocation2 + $0x58] sm:$0xf] %v1032
  %1163 = vrot.lane.b32.xlu0 %v1035, 127
  %v1164 = vpop.permute.xlu0 %1163
  %1165 = vrot.lane.b32.xlu0 %v1036, 127
  %v1166 = vpop.permute.xlu0 %1165
  %1167 = vrot.lane.b32.xlu0 %v1037, 127
  %v1168 = vpop.permute.xlu0 %1167
  %1169 = vrot.lane.b32.xlu0 %v1038, 127
  %v1170 = vpop.permute.xlu0 %1169
  %v1171 = vsel %vm240, %v1168, %v1170
  %v1172 = vsel %vm240, %v1166, %v1168
  %v1173 = vsel %vm240, %v1164, %v1166
  %v1174 = vsel %vm240, %v1170, %v1164
  %v1175 = vmul.f32 %v1173, %v248
  %v1176 = vmul.f32 %v1172, %v252
  %v1177 = vmul.f32 %v1171, %v256
  %v1178 = vmul.f32 %v1174, %v260
  %v1179 = vpack.c.bf16 %v1175, %v1175
  %v1180 = vpack.c.bf16 %v1176, %v1176
  %v1181 = vpack.c.bf16 %v1177, %v1177
  %v1182 = vpack.c.bf16 %v1178, %v1178
  %v1187 = vrot.slane %v1179, 4
  %v1188 = vrot.slane %v1180, 4
  %v1189 = vrot.slane %v1181, 4
  %v1190 = vrot.slane %v1182, 4
  %1195 = vst [vmem:[#allocation2 + $0x40] sm:$0xf0] %v1187
  %1196 = vst [vmem:[#allocation2 + $0x48] sm:$0xf0] %v1188
  %1197 = vst [vmem:[#allocation2 + $0x50] sm:$0xf0] %v1189
  %1198 = vst [vmem:[#allocation2 + $0x58] sm:$0xf0] %v1190
  %1199 = vrot.lane.b32.xlu0 %v1035, 113
  %v1200 = vpop.permute.xlu0 %1199
  %1201 = vrot.lane.b32.xlu0 %v1036, 113
  %v1202 = vpop.permute.xlu0 %1201
  %1203 = vrot.lane.b32.xlu0 %v1037, 113
  %v1204 = vpop.permute.xlu0 %1203
  %1205 = vrot.lane.b32.xlu0 %v1038, 113
  %v1206 = vpop.permute.xlu0 %1205
  %v1207 = vsel %vm293, %v1204, %v1206
  %v1208 = vsel %vm293, %v1202, %v1204
  %v1209 = vsel %vm293, %v1200, %v1202
  %v1210 = vsel %vm293, %v1206, %v1200
  %v1211 = vmul.f32 %v1209, %v301
  %v1212 = vmul.f32 %v1208, %v305
  %v1213 = vmul.f32 %v1207, %v309
  %v1214 = vmul.f32 %v1210, %v313
  %v1215 = vpack.c.bf16 %v1211, %v1211
  %v1216 = vpack.c.bf16 %v1212, %v1212
  %v1217 = vpack.c.bf16 %v1213, %v1213
  %v1218 = vpack.c.bf16 %v1214, %v1214
  %1219 = vst [vmem:[#allocation2 + $0x60] sm:$0xf] %v1215
  %1220 = vst [vmem:[#allocation2 + $0x68] sm:$0xf] %v1216
  %1221 = vst [vmem:[#allocation2 + $0x70] sm:$0xf] %v1217
  %1222 = vst [vmem:[#allocation2 + $0x78] sm:$0xf] %v1218
  %1223 = vrot.lane.b32.xlu0 %v1035, 112
  %v1224 = vpop.permute.xlu0 %1223
  %1225 = vrot.lane.b32.xlu0 %v1036, 112
  %v1226 = vpop.permute.xlu0 %1225
  %1227 = vrot.lane.b32.xlu0 %v1037, 112
  %v1228 = vpop.permute.xlu0 %1227
  %1229 = vrot.lane.b32.xlu0 %v1038, 112
  %v1230 = vpop.permute.xlu0 %1229
  %v1231 = vsel %vm334, %v1228, %v1230
  %v1232 = vsel %vm334, %v1226, %v1228
  %v1233 = vsel %vm334, %v1224, %v1226
  %v1234 = vsel %vm334, %v1230, %v1224
  %v1235 = vmul.f32 %v1233, %v342
  %v1236 = vmul.f32 %v1232, %v346
  %v1237 = vmul.f32 %v1231, %v350
  %v1238 = vmul.f32 %v1234, %v354
  %v1239 = vpack.c.bf16 %v1235, %v1235
  %v1240 = vpack.c.bf16 %v1236, %v1236
  %v1241 = vpack.c.bf16 %v1237, %v1237
  %v1242 = vpack.c.bf16 %v1238, %v1238
  %v1247 = vrot.slane %v1239, 4
  %v1248 = vrot.slane %v1240, 4
  %v1249 = vrot.slane %v1241, 4
  %v1250 = vrot.slane %v1242, 4
  %1255 = vst [vmem:[#allocation2 + $0x60] sm:$0xf0] %v1247
  %1256 = vst [vmem:[#allocation2 + $0x68] sm:$0xf0] %v1248
  %1257 = vst [vmem:[#allocation2 + $0x70] sm:$0xf0] %v1249
  %1258 = vst [vmem:[#allocation2 + $0x78] sm:$0xf0] %v1250
  %1259 = vrot.lane.b32.xlu0 %v1035, 111
  %v1260 = vpop.permute.xlu0 %1259
  %1261 = vrot.lane.b32.xlu0 %v1036, 111
  %v1262 = vpop.permute.xlu0 %1261
  %1263 = vrot.lane.b32.xlu0 %v1037, 111
  %v1264 = vpop.permute.xlu0 %1263
  %1265 = vrot.lane.b32.xlu0 %v1038, 111
  %v1266 = vpop.permute.xlu0 %1265
  %v1267 = vsel %vm387, %v1264, %v1266
  %v1268 = vsel %vm387, %v1262, %v1264
  %v1269 = vsel %vm387, %v1260, %v1262
  %v1270 = vsel %vm387, %v1266, %v1260
  %v1271 = vmul.f32 %v1269, %v395
  %v1272 = vmul.f32 %v1268, %v399
  %v1273 = vmul.f32 %v1267, %v403
  %v1274 = vmul.f32 %v1270, %v407
  %v1275 = vpack.c.bf16 %v1271, %v1271
  %v1276 = vpack.c.bf16 %v1272, %v1272
  %v1277 = vpack.c.bf16 %v1273, %v1273
  %v1278 = vpack.c.bf16 %v1274, %v1274
  %1279 = vst [vmem:[#allocation2 + $0x80] sm:$0xf] %v1275
  %1280 = vst [vmem:[#allocation2 + $0x88] sm:$0xf] %v1276
  %1281 = vst [vmem:[#allocation2 + $0x90] sm:$0xf] %v1277
  %1282 = vst [vmem:[#allocation2 + $0x98] sm:$0xf] %v1278
  %v1283 = vld [vmem:[#allocation2] sm:$0xff]
  %v1284 = vld [vmem:[#allocation2 + $0x8] sm:$0xff]
  %v1285 = vld [vmem:[#allocation2 + $0x10] sm:$0xff]
  %v1286 = vld [vmem:[#allocation2 + $0x18] sm:$0xff]
  %v1287 = vld [vmem:[#allocation2 + $0x20] sm:$0xff]
  %v1288 = vld [vmem:[#allocation2 + $0x28] sm:$0xff]
  %v1289 = vld [vmem:[#allocation2 + $0x30] sm:$0xff]
  %v1290 = vld [vmem:[#allocation2 + $0x38] sm:$0xff]
  %v1291 = vld [vmem:[#allocation2 + $0x40] sm:$0xff]
  %v1292 = vld [vmem:[#allocation2 + $0x48] sm:$0xff]
  %v1293 = vld [vmem:[#allocation2 + $0x50] sm:$0xff]
  %v1294 = vld [vmem:[#allocation2 + $0x58] sm:$0xff]
  %v1295 = vld [vmem:[#allocation2 + $0x60] sm:$0xff]
  %v1296 = vld [vmem:[#allocation2 + $0x68] sm:$0xff]
  %v1297 = vld [vmem:[#allocation2 + $0x70] sm:$0xff]
  %v1298 = vld [vmem:[#allocation2 + $0x78] sm:$0xff]
  %v1299 = vld [vmem:[#allocation2 + $0x80] sm:$0xf]
  %v1300 = vld [vmem:[#allocation2 + $0x88] sm:$0xf]
  %v1301 = vld [vmem:[#allocation2 + $0x90] sm:$0xf]
  %v1302 = vld [vmem:[#allocation2 + $0x98] sm:$0xf]
  %1304 = vset.pattern.permute.xlu0 0
  %1305 = vperm.xlu0 %1304, %v1034
  %v1306 = vpop.permute.xlu0 %1305
  %v1309 = vsel %vm455, %v1033, 0
  %v1312 = vsel %vm459, %v1299, 0
  %v1315 = vsel %vm459, %v1300, 0
  %v1318 = vsel %vm459, %v1301, 0
  %v1321 = vsel %vm459, %v1302, 0
  %1323 = vmatprep.subr.bf16.mxu0 %v1284
  %1324 = vmatpush1.bf16.msra.mxu0 %v1283
  %1325 = vmatprep.subr.bf16.mxu0 %v1288
  %1326 = vmatpush1.bf16.msra.mxu0 %v1287
  %1327 = vmatprep.subr.bf16.mxu0 %v1292
  %1328 = vmatpush1.bf16.msra.mxu0 %v1291
  %1329 = vmatprep.subr.bf16.mxu0 %v1296
  %1330 = vmatpush1.bf16.msra.mxu0 %v1295
  %1331 = vmatprep.subr.bf16.mxu0 %v1315
  %1332 = vmatpush1.bf16.msra.mxu0 %v1312
  %1333 = vmatprep.subr.bf16.mxu0 0
  %1334 = vmatpush1.bf16.msra.mxu0 0
  %1335 = vmatprep.subr.bf16.mxu0 0
  %1336 = vmatpush1.bf16.msra.mxu0 0
  %1337 = vmatprep.subr.bf16.mxu0 0
  %1338 = vmatpush1.bf16.msra.mxu0 0
  %1339 = vmatprep.subr.bf16.mxu0 0
  %1340 = vmatpush1.bf16.msra.mxu0 0
  %1341 = vmatprep.subr.bf16.mxu0 0
  %1342 = vmatpush1.bf16.msra.mxu0 0
  %1343 = vmatprep.subr.bf16.mxu0 0
  %1344 = vmatpush1.bf16.msra.mxu0 0
  %1345 = vmatprep.subr.bf16.mxu0 0
  %1346 = vmatpush1.bf16.msra.mxu0 0
  %1347 = vmatprep.subr.bf16.mxu0 0
  %1348 = vmatpush1.bf16.msra.mxu0 0
  %1349 = vmatprep.subr.bf16.mxu0 0
  %1350 = vmatpush1.bf16.msra.mxu0 0
  %1351 = vmatprep.subr.bf16.mxu0 0
  %1352 = vmatpush1.bf16.msra.mxu0 0
  %1353 = vmatprep.subr.bf16.mxu0 0
  %1354 = vmatpush1.bf16.msra.mxu0 0
  %1355 = vmatprep.mubr.bf16.mxu0 0
  %1356 = vmatmul.mubr.bf16.gmra.mrb[0].mxu0 %v1309
  %v1357 = vpop.f32.mrb[0].mxu0
  %v1358 = vadd.f32 %v1306, %v1357
  %v1359 = vpop.f32.mrb[0].mxu0
  %v1360 = vadd.f32 %v1306, %v1359
  %v1361 = vpop.f32.mrb[0].mxu0
  %v1362 = vpop.f32.mrb[0].mxu0
  %1363 = vdwg.mxu0
  %1364 = vmatprep.subr.bf16.mxu0 %v1286
  %1365 = vmatpush1.bf16.msra.mxu0 %v1285
  %1366 = vmatprep.subr.bf16.mxu0 %v1290
  %1367 = vmatpush1.bf16.msra.mxu0 %v1289
  %1368 = vmatprep.subr.bf16.mxu0 %v1294
  %1369 = vmatpush1.bf16.msra.mxu0 %v1293
  %1370 = vmatprep.subr.bf16.mxu0 %v1298
  %1371 = vmatpush1.bf16.msra.mxu0 %v1297
  %1372 = vmatprep.subr.bf16.mxu0 %v1321
  %1373 = vmatpush1.bf16.msra.mxu0 %v1318
  %1374 = vmatprep.subr.bf16.mxu0 0
  %1375 = vmatpush1.bf16.msra.mxu0 0
  %1376 = vmatprep.subr.bf16.mxu0 0
  %1377 = vmatpush1.bf16.msra.mxu0 0
  %1378 = vmatprep.subr.bf16.mxu0 0
  %1379 = vmatpush1.bf16.msra.mxu0 0
  %1380 = vmatprep.subr.bf16.mxu0 0
  %1381 = vmatpush1.bf16.msra.mxu0 0
  %1382 = vmatprep.subr.bf16.mxu0 0
  %1383 = vmatpush1.bf16.msra.mxu0 0
  %1384 = vmatprep.subr.bf16.mxu0 0
  %1385 = vmatpush1.bf16.msra.mxu0 0
  %1386 = vmatprep.subr.bf16.mxu0 0
  %1387 = vmatpush1.bf16.msra.mxu0 0
  %1388 = vmatprep.subr.bf16.mxu0 0
  %1389 = vmatpush1.bf16.msra.mxu0 0
  %1390 = vmatprep.subr.bf16.mxu0 0
  %1391 = vmatpush1.bf16.msra.mxu0 0
  %1392 = vmatprep.subr.bf16.mxu0 0
  %1393 = vmatpush1.bf16.msra.mxu0 0
  %1394 = vmatprep.subr.bf16.mxu0 0
  %1395 = vmatpush1.bf16.msra.mxu0 0
  %1396 = vmatprep.mubr.bf16.mxu0 0
  %1397 = vmatmul.mubr.bf16.gmra.mrb[0].mxu0 %v1309
  %v1398 = vpop.f32.mrb[0].mxu0
  %v1399 = vadd.f32 %v1306, %v1398
  %v1400 = vpop.f32.mrb[0].mxu0
  %v1401 = vadd.f32 %v1306, %v1400
  %v1402 = vpop.f32.mrb[0].mxu0
  %v1403 = vpop.f32.mrb[0].mxu0
  %1404 = vdwg.mxu0
  %v1405 = vmax.f32 %v1358, 0.0
  %v1406 = vmax.f32 %v1360, 0.0
  %v1407 = vmax.f32 %v1399, 0.0
  %v1408 = vmax.f32 %v1401, 0.0
  %v1409 = vpack.c.bf16 %v1405, %v1405
  %v1410 = vpack.c.bf16 %v1406, %v1406
  %v1411 = vpack.c.bf16 %v1407, %v1407
  %v1412 = vpack.c.bf16 %v1408, %v1408
  %v1417 = vrot.slane %v1409, 4
  %v1418 = vrot.slane %v1410, 4
  %v1419 = vrot.slane %v1411, 4
  %v1420 = vrot.slane %v1412, 4
  %1425 = vst [vmem:[#allocation3] sm:$0xf0] %v1417
  %1426 = vst [vmem:[#allocation3 + $0x8] sm:$0xf0] %v1418
  %1427 = vst [vmem:[#allocation3 + $0x10] sm:$0xf0] %v1419
  %1428 = vst [vmem:[#allocation3 + $0x18] sm:$0xf0] %v1420
  %v1429 = vld [vmem:[#allocation3] sm:$0xff]
  %v1430 = vld [vmem:[#allocation3 + $0x8] sm:$0xff]
  %v1431 = vld [vmem:[#allocation3 + $0x10] sm:$0xff]
  %v1432 = vld [vmem:[#allocation3 + $0x18] sm:$0xff]
  %v1433 = vld [vmem:[%s2 + $0x30] sm:$0xff]
  %v1434 = vld [vmem:[%s3 + $0x20] sm:$0xff]
  %v1435 = vunpack.c.l.bf16 %v1429
  %v1436 = vunpack.c.l.bf16 %v1430
  %v1437 = vunpack.c.l.bf16 %v1431
  %v1438 = vunpack.c.l.bf16 %v1432
  %v1439 = vunpack.c.h.bf16 %v1429
  %v1440 = vunpack.c.h.bf16 %v1430
  %v1441 = vunpack.c.h.bf16 %v1431
  %v1442 = vunpack.c.h.bf16 %v1432
  %1443 = vrot.lane.b32.xlu0 %v1435, 17
  %v1444 = vpop.permute.xlu0 %1443
  %1445 = vrot.lane.b32.xlu0 %v1439, 17
  %v1446 = vpop.permute.xlu0 %1445
  %1447 = vrot.lane.b32.xlu0 %v1436, 17
  %v1448 = vpop.permute.xlu0 %1447
  %1449 = vrot.lane.b32.xlu0 %v1440, 17
  %v1450 = vpop.permute.xlu0 %1449
  %1451 = vrot.lane.b32.xlu0 %v1437, 17
  %v1452 = vpop.permute.xlu0 %1451
  %1453 = vrot.lane.b32.xlu0 %v1441, 17
  %v1454 = vpop.permute.xlu0 %1453
  %1455 = vrot.lane.b32.xlu0 %v1438, 17
  %v1456 = vpop.permute.xlu0 %1455
  %1457 = vrot.lane.b32.xlu0 %v1442, 17
  %v1458 = vpop.permute.xlu0 %1457
  %v1459 = vsel %vm44, %v1452, %v1456
  %v1460 = vsel %vm44, %v1454, %v1458
  %v1461 = vsel %vm44, %v1448, %v1452
  %v1462 = vsel %vm44, %v1450, %v1454
  %v1463 = vsel %vm44, %v1444, %v1448
  %v1464 = vsel %vm44, %v1446, %v1450
  %v1465 = vsel %vm44, %v1456, %v1444
  %v1466 = vsel %vm44, %v1458, %v1446
  %v1467 = vmul.f32 %v1465, %v52
  %v1468 = vmul.f32 %v1463, %v56
  %v1469 = vmul.f32 %v1461, %v60
  %v1470 = vmul.f32 %v1459, %v64
  %v1471 = vmul.f32 %v1466, %v52
  %v1472 = vmul.f32 %v1464, %v56
  %v1473 = vmul.f32 %v1462, %v60
  %v1474 = vmul.f32 %v1460, %v64
  %v1475 = vpack.c.bf16 %v1471, %v1467
  %v1476 = vpack.c.bf16 %v1472, %v1468
  %v1477 = vpack.c.bf16 %v1473, %v1469
  %v1478 = vpack.c.bf16 %v1474, %v1470
  %1479 = vst [vmem:[#allocation2] sm:$0xff] %v1475
  %1480 = vst [vmem:[#allocation2 + $0x8] sm:$0xff] %v1476
  %1481 = vst [vmem:[#allocation2 + $0x10] sm:$0xff] %v1477
  %1482 = vst [vmem:[#allocation2 + $0x18] sm:$0xff] %v1478
  %1483 = vrot.lane.b32.xlu0 %v1435, 16
  %v1484 = vpop.permute.xlu0 %1483
  %1485 = vrot.lane.b32.xlu0 %v1439, 16
  %v1486 = vpop.permute.xlu0 %1485
  %1487 = vrot.lane.b32.xlu0 %v1436, 16
  %v1488 = vpop.permute.xlu0 %1487
  %1489 = vrot.lane.b32.xlu0 %v1440, 16
  %v1490 = vpop.permute.xlu0 %1489
  %1491 = vrot.lane.b32.xlu0 %v1437, 16
  %v1492 = vpop.permute.xlu0 %1491
  %1493 = vrot.lane.b32.xlu0 %v1441, 16
  %v1494 = vpop.permute.xlu0 %1493
  %1495 = vrot.lane.b32.xlu0 %v1438, 16
  %v1496 = vpop.permute.xlu0 %1495
  %1497 = vrot.lane.b32.xlu0 %v1442, 16
  %v1498 = vpop.permute.xlu0 %1497
  %v1499 = vsel %vm85, %v1492, %v1496
  %v1500 = vsel %vm85, %v1494, %v1498
  %v1501 = vsel %vm85, %v1488, %v1492
  %v1502 = vsel %vm85, %v1490, %v1494
  %v1503 = vsel %vm85, %v1484, %v1488
  %v1504 = vsel %vm85, %v1486, %v1490
  %v1505 = vsel %vm85, %v1496, %v1484
  %v1506 = vsel %vm85, %v1498, %v1486
  %v1507 = vmul.f32 %v1505, %v93
  %v1508 = vmul.f32 %v1503, %v97
  %v1509 = vmul.f32 %v1501, %v101
  %v1510 = vmul.f32 %v1499, %v105
  %v1511 = vmul.f32 %v1506, %v93
  %v1512 = vmul.f32 %v1504, %v97
  %v1513 = vmul.f32 %v1502, %v101
  %v1514 = vmul.f32 %v1500, %v105
  %v1515 = vpack.c.bf16 %v1511, %v1507
  %v1516 = vpack.c.bf16 %v1512, %v1508
  %v1517 = vpack.c.bf16 %v1513, %v1509
  %v1518 = vpack.c.bf16 %v1514, %v1510
  %1519 = vst [vmem:[#allocation2 + $0x20] sm:$0xff] %v1515
  %1520 = vst [vmem:[#allocation2 + $0x28] sm:$0xff] %v1516
  %1521 = vst [vmem:[#allocation2 + $0x30] sm:$0xff] %v1517
  %1522 = vst [vmem:[#allocation2 + $0x38] sm:$0xff] %v1518
  %1523 = vrot.lane.b32.xlu0 %v1435, 15
  %v1524 = vpop.permute.xlu0 %1523
  %1525 = vrot.lane.b32.xlu0 %v1439, 15
  %v1526 = vpop.permute.xlu0 %1525
  %1527 = vrot.lane.b32.xlu0 %v1436, 15
  %v1528 = vpop.permute.xlu0 %1527
  %1529 = vrot.lane.b32.xlu0 %v1440, 15
  %v1530 = vpop.permute.xlu0 %1529
  %1531 = vrot.lane.b32.xlu0 %v1437, 15
  %v1532 = vpop.permute.xlu0 %1531
  %1533 = vrot.lane.b32.xlu0 %v1441, 15
  %v1534 = vpop.permute.xlu0 %1533
  %1535 = vrot.lane.b32.xlu0 %v1438, 15
  %v1536 = vpop.permute.xlu0 %1535
  %1537 = vrot.lane.b32.xlu0 %v1442, 15
  %v1538 = vpop.permute.xlu0 %1537
  %v1539 = vsel %vm138, %v1532, %v1536
  %v1540 = vsel %vm138, %v1534, %v1538
  %v1541 = vsel %vm138, %v1528, %v1532
  %v1542 = vsel %vm138, %v1530, %v1534
  %v1543 = vsel %vm138, %v1524, %v1528
  %v1544 = vsel %vm138, %v1526, %v1530
  %v1545 = vsel %vm138, %v1536, %v1524
  %v1546 = vsel %vm138, %v1538, %v1526
  %v1547 = vmul.f32 %v1545, %v146
  %v1548 = vmul.f32 %v1543, %v150
  %v1549 = vmul.f32 %v1541, %v154
  %v1550 = vmul.f32 %v1539, %v158
  %v1551 = vmul.f32 %v1546, %v146
  %v1552 = vmul.f32 %v1544, %v150
  %v1553 = vmul.f32 %v1542, %v154
  %v1554 = vmul.f32 %v1540, %v158
  %v1555 = vpack.c.bf16 %v1551, %v1547
  %v1556 = vpack.c.bf16 %v1552, %v1548
  %v1557 = vpack.c.bf16 %v1553, %v1549
  %v1558 = vpack.c.bf16 %v1554, %v1550
  %1559 = vst [vmem:[#allocation2 + $0x40] sm:$0xff] %v1555
  %1560 = vst [vmem:[#allocation2 + $0x48] sm:$0xff] %v1556
  %1561 = vst [vmem:[#allocation2 + $0x50] sm:$0xff] %v1557
  %1562 = vst [vmem:[#allocation2 + $0x58] sm:$0xff] %v1558
  %1563 = vrot.lane.b32.xlu0 %v1435, 1
  %v1564 = vpop.permute.xlu0 %1563
  %1565 = vrot.lane.b32.xlu0 %v1439, 1
  %v1566 = vpop.permute.xlu0 %1565
  %1567 = vrot.lane.b32.xlu0 %v1436, 1
  %v1568 = vpop.permute.xlu0 %1567
  %1569 = vrot.lane.b32.xlu0 %v1440, 1
  %v1570 = vpop.permute.xlu0 %1569
  %1571 = vrot.lane.b32.xlu0 %v1437, 1
  %v1572 = vpop.permute.xlu0 %1571
  %1573 = vrot.lane.b32.xlu0 %v1441, 1
  %v1574 = vpop.permute.xlu0 %1573
  %1575 = vrot.lane.b32.xlu0 %v1438, 1
  %v1576 = vpop.permute.xlu0 %1575
  %1577 = vrot.lane.b32.xlu0 %v1442, 1
  %v1578 = vpop.permute.xlu0 %1577
  %v1579 = vsel %vm179, %v1572, %v1576
  %v1580 = vsel %vm179, %v1574, %v1578
  %v1581 = vsel %vm179, %v1568, %v1572
  %v1582 = vsel %vm179, %v1570, %v1574
  %v1583 = vsel %vm179, %v1564, %v1568
  %v1584 = vsel %vm179, %v1566, %v1570
  %v1585 = vsel %vm179, %v1576, %v1564
  %v1586 = vsel %vm179, %v1578, %v1566
  %v1587 = vmul.f32 %v1585, %v187
  %v1588 = vmul.f32 %v1583, %v191
  %v1589 = vmul.f32 %v1581, %v195
  %v1590 = vmul.f32 %v1579, %v199
  %v1591 = vmul.f32 %v1586, %v187
  %v1592 = vmul.f32 %v1584, %v191
  %v1593 = vmul.f32 %v1582, %v195
  %v1594 = vmul.f32 %v1580, %v199
  %v1595 = vpack.c.bf16 %v1591, %v1587
  %v1596 = vpack.c.bf16 %v1592, %v1588
  %v1597 = vpack.c.bf16 %v1593, %v1589
  %v1598 = vpack.c.bf16 %v1594, %v1590
  %1599 = vst [vmem:[#allocation2 + $0x60] sm:$0xff] %v1595
  %1600 = vst [vmem:[#allocation2 + $0x68] sm:$0xff] %v1596
  %1601 = vst [vmem:[#allocation2 + $0x70] sm:$0xff] %v1597
  %1602 = vst [vmem:[#allocation2 + $0x78] sm:$0xff] %v1598
  %1603 = vst [vmem:[#allocation2 + $0x80] sm:$0xff] %v1429
  %1604 = vst [vmem:[#allocation2 + $0x88] sm:$0xff] %v1430
  %1605 = vst [vmem:[#allocation2 + $0x90] sm:$0xff] %v1431
  %1606 = vst [vmem:[#allocation2 + $0x98] sm:$0xff] %v1432
  %1607 = vrot.lane.b32.xlu0 %v1435, 127
  %v1608 = vpop.permute.xlu0 %1607
  %1609 = vrot.lane.b32.xlu0 %v1439, 127
  %v1610 = vpop.permute.xlu0 %1609
  %1611 = vrot.lane.b32.xlu0 %v1436, 127
  %v1612 = vpop.permute.xlu0 %1611
  %1613 = vrot.lane.b32.xlu0 %v1440, 127
  %v1614 = vpop.permute.xlu0 %1613
  %1615 = vrot.lane.b32.xlu0 %v1437, 127
  %v1616 = vpop.permute.xlu0 %1615
  %1617 = vrot.lane.b32.xlu0 %v1441, 127
  %v1618 = vpop.permute.xlu0 %1617
  %1619 = vrot.lane.b32.xlu0 %v1438, 127
  %v1620 = vpop.permute.xlu0 %1619
  %1621 = vrot.lane.b32.xlu0 %v1442, 127
  %v1622 = vpop.permute.xlu0 %1621
  %v1623 = vsel %vm240, %v1616, %v1620
  %v1624 = vsel %vm240, %v1618, %v1622
  %v1625 = vsel %vm240, %v1612, %v1616
  %v1626 = vsel %vm240, %v1614, %v1618
  %v1627 = vsel %vm240, %v1608, %v1612
  %v1628 = vsel %vm240, %v1610, %v1614
  %v1629 = vsel %vm240, %v1620, %v1608
  %v1630 = vsel %vm240, %v1622, %v1610
  %v1631 = vmul.f32 %v1627, %v248
  %v1632 = vmul.f32 %v1625, %v252
  %v1633 = vmul.f32 %v1623, %v256
  %v1634 = vmul.f32 %v1629, %v260
  %v1635 = vmul.f32 %v1628, %v248
  %v1636 = vmul.f32 %v1626, %v252
  %v1637 = vmul.f32 %v1624, %v256
  %v1638 = vmul.f32 %v1630, %v260
  %v1639 = vpack.c.bf16 %v1635, %v1631
  %v1640 = vpack.c.bf16 %v1636, %v1632
  %v1641 = vpack.c.bf16 %v1637, %v1633
  %v1642 = vpack.c.bf16 %v1638, %v1634
  %1643 = vst [vmem:[#allocation2 + $0xa0] sm:$0xff] %v1639
  %1644 = vst [vmem:[#allocation2 + $0xa8] sm:$0xff] %v1640
  %1645 = vst [vmem:[#allocation2 + $0xb0] sm:$0xff] %v1641
  %1646 = vst [vmem:[#allocation2 + $0xb8] sm:$0xff] %v1642
  %1647 = vrot.lane.b32.xlu0 %v1435, 113
  %v1648 = vpop.permute.xlu0 %1647
  %1649 = vrot.lane.b32.xlu0 %v1439, 113
  %v1650 = vpop.permute.xlu0 %1649
  %1651 = vrot.lane.b32.xlu0 %v1436, 113
  %v1652 = vpop.permute.xlu0 %1651
  %1653 = vrot.lane.b32.xlu0 %v1440, 113
  %v1654 = vpop.permute.xlu0 %1653
  %1655 = vrot.lane.b32.xlu0 %v1437, 113
  %v1656 = vpop.permute.xlu0 %1655
  %1657 = vrot.lane.b32.xlu0 %v1441, 113
  %v1658 = vpop.permute.xlu0 %1657
  %1659 = vrot.lane.b32.xlu0 %v1438, 113
  %v1660 = vpop.permute.xlu0 %1659
  %1661 = vrot.lane.b32.xlu0 %v1442, 113
  %v1662 = vpop.permute.xlu0 %1661
  %v1663 = vsel %vm293, %v1656, %v1660
  %v1664 = vsel %vm293, %v1658, %v1662
  %v1665 = vsel %vm293, %v1652, %v1656
  %v1666 = vsel %vm293, %v1654, %v1658
  %v1667 = vsel %vm293, %v1648, %v1652
  %v1668 = vsel %vm293, %v1650, %v1654
  %v1669 = vsel %vm293, %v1660, %v1648
  %v1670 = vsel %vm293, %v1662, %v1650
  %v1671 = vmul.f32 %v1667, %v301
  %v1672 = vmul.f32 %v1665, %v305
  %v1673 = vmul.f32 %v1663, %v309
  %v1674 = vmul.f32 %v1669, %v313
  %v1675 = vmul.f32 %v1668, %v301
  %v1676 = vmul.f32 %v1666, %v305
  %v1677 = vmul.f32 %v1664, %v309
  %v1678 = vmul.f32 %v1670, %v313
  %v1679 = vpack.c.bf16 %v1675, %v1671
  %v1680 = vpack.c.bf16 %v1676, %v1672
  %v1681 = vpack.c.bf16 %v1677, %v1673
  %v1682 = vpack.c.bf16 %v1678, %v1674
  %1683 = vst [vmem:[#allocation2 + $0xc0] sm:$0xff] %v1679
  %1684 = vst [vmem:[#allocation2 + $0xc8] sm:$0xff] %v1680
  %1685 = vst [vmem:[#allocation2 + $0xd0] sm:$0xff] %v1681
  %1686 = vst [vmem:[#allocation2 + $0xd8] sm:$0xff] %v1682
  %1687 = vrot.lane.b32.xlu0 %v1435, 112
  %v1688 = vpop.permute.xlu0 %1687
  %1689 = vrot.lane.b32.xlu0 %v1439, 112
  %v1690 = vpop.permute.xlu0 %1689
  %1691 = vrot.lane.b32.xlu0 %v1436, 112
  %v1692 = vpop.permute.xlu0 %1691
  %1693 = vrot.lane.b32.xlu0 %v1440, 112
  %v1694 = vpop.permute.xlu0 %1693
  %1695 = vrot.lane.b32.xlu0 %v1437, 112
  %v1696 = vpop.permute.xlu0 %1695
  %1697 = vrot.lane.b32.xlu0 %v1441, 112
  %v1698 = vpop.permute.xlu0 %1697
  %1699 = vrot.lane.b32.xlu0 %v1438, 112
  %v1700 = vpop.permute.xlu0 %1699
  %1701 = vrot.lane.b32.xlu0 %v1442, 112
  %v1702 = vpop.permute.xlu0 %1701
  %v1703 = vsel %vm334, %v1696, %v1700
  %v1704 = vsel %vm334, %v1698, %v1702
  %v1705 = vsel %vm334, %v1692, %v1696
  %v1706 = vsel %vm334, %v1694, %v1698
  %v1707 = vsel %vm334, %v1688, %v1692
  %v1708 = vsel %vm334, %v1690, %v1694
  %v1709 = vsel %vm334, %v1700, %v1688
  %v1710 = vsel %vm334, %v1702, %v1690
  %v1711 = vmul.f32 %v1707, %v342
  %v1712 = vmul.f32 %v1705, %v346
  %v1713 = vmul.f32 %v1703, %v350
  %v1714 = vmul.f32 %v1709, %v354
  %v1715 = vmul.f32 %v1708, %v342
  %v1716 = vmul.f32 %v1706, %v346
  %v1717 = vmul.f32 %v1704, %v350
  %v1718 = vmul.f32 %v1710, %v354
  %v1719 = vpack.c.bf16 %v1715, %v1711
  %v1720 = vpack.c.bf16 %v1716, %v1712
  %v1721 = vpack.c.bf16 %v1717, %v1713
  %v1722 = vpack.c.bf16 %v1718, %v1714
  %1723 = vst [vmem:[#allocation2 + $0xe0] sm:$0xff] %v1719
  %1724 = vst [vmem:[#allocation2 + $0xe8] sm:$0xff] %v1720
  %1725 = vst [vmem:[#allocation2 + $0xf0] sm:$0xff] %v1721
  %1726 = vst [vmem:[#allocation2 + $0xf8] sm:$0xff] %v1722
  %1727 = vrot.lane.b32.xlu0 %v1435, 111
  %v1728 = vpop.permute.xlu0 %1727
  %1729 = vrot.lane.b32.xlu0 %v1439, 111
  %v1730 = vpop.permute.xlu0 %1729
  %1731 = vrot.lane.b32.xlu0 %v1436, 111
  %v1732 = vpop.permute.xlu0 %1731
  %1733 = vrot.lane.b32.xlu0 %v1440, 111
  %v1734 = vpop.permute.xlu0 %1733
  %1735 = vrot.lane.b32.xlu0 %v1437, 111
  %v1736 = vpop.permute.xlu0 %1735
  %1737 = vrot.lane.b32.xlu0 %v1441, 111
  %v1738 = vpop.permute.xlu0 %1737
  %1739 = vrot.lane.b32.xlu0 %v1438, 111
  %v1740 = vpop.permute.xlu0 %1739
  %1741 = vrot.lane.b32.xlu0 %v1442, 111
  %v1742 = vpop.permute.xlu0 %1741
  %v1743 = vsel %vm387, %v1736, %v1740
  %v1744 = vsel %vm387, %v1738, %v1742
  %v1745 = vsel %vm387, %v1732, %v1736
  %v1746 = vsel %vm387, %v1734, %v1738
  %v1747 = vsel %vm387, %v1728, %v1732
  %v1748 = vsel %vm387, %v1730, %v1734
  %v1749 = vsel %vm387, %v1740, %v1728
  %v1750 = vsel %vm387, %v1742, %v1730
  %v1751 = vmul.f32 %v1747, %v395
  %v1752 = vmul.f32 %v1745, %v399
  %v1753 = vmul.f32 %v1743, %v403
  %v1754 = vmul.f32 %v1749, %v407
  %v1755 = vmul.f32 %v1748, %v395
  %v1756 = vmul.f32 %v1746, %v399
  %v1757 = vmul.f32 %v1744, %v403
  %v1758 = vmul.f32 %v1750, %v407
  %v1759 = vpack.c.bf16 %v1755, %v1751
  %v1760 = vpack.c.bf16 %v1756, %v1752
  %v1761 = vpack.c.bf16 %v1757, %v1753
  %v1762 = vpack.c.bf16 %v1758, %v1754
  %1763 = vst [vmem:[#allocation2 + $0x100] sm:$0xff] %v1759
  %1764 = vst [vmem:[#allocation2 + $0x108] sm:$0xff] %v1760
  %1765 = vst [vmem:[#allocation2 + $0x110] sm:$0xff] %v1761
  %1766 = vst [vmem:[#allocation2 + $0x118] sm:$0xff] %v1762
  %v1767 = vld [vmem:[#allocation2] sm:$0xff]
  %v1768 = vld [vmem:[#allocation2 + $0x8] sm:$0xff]
  %v1769 = vld [vmem:[#allocation2 + $0x10] sm:$0xff]
  %v1770 = vld [vmem:[#allocation2 + $0x18] sm:$0xff]
  %v1771 = vld [vmem:[#allocation2 + $0x20] sm:$0xff]
  %v1772 = vld [vmem:[#allocation2 + $0x28] sm:$0xff]
  %v1773 = vld [vmem:[#allocation2 + $0x30] sm:$0xff]
  %v1774 = vld [vmem:[#allocation2 + $0x38] sm:$0xff]
  %v1775 = vld [vmem:[#allocation2 + $0x40] sm:$0xff]
  %v1776 = vld [vmem:[#allocation2 + $0x48] sm:$0xff]
  %v1777 = vld [vmem:[#allocation2 + $0x50] sm:$0xff]
  %v1778 = vld [vmem:[#allocation2 + $0x58] sm:$0xff]
  %v1779 = vld [vmem:[#allocation2 + $0x60] sm:$0xff]
  %v1780 = vld [vmem:[#allocation2 + $0x68] sm:$0xff]
  %v1781 = vld [vmem:[#allocation2 + $0x70] sm:$0xff]
  %v1782 = vld [vmem:[#allocation2 + $0x78] sm:$0xff]
  %v1783 = vld [vmem:[#allocation2 + $0x80] sm:$0xff]
  %v1784 = vld [vmem:[#allocation2 + $0x88] sm:$0xff]
  %v1785 = vld [vmem:[#allocation2 + $0x90] sm:$0xff]
  %v1786 = vld [vmem:[#allocation2 + $0x98] sm:$0xff]
  %v1787 = vld [vmem:[#allocation2 + $0xa0] sm:$0xff]
  %v1788 = vld [vmem:[#allocation2 + $0xa8] sm:$0xff]
  %v1789 = vld [vmem:[#allocation2 + $0xb0] sm:$0xff]
  %v1790 = vld [vmem:[#allocation2 + $0xb8] sm:$0xff]
  %v1791 = vld [vmem:[#allocation2 + $0xc0] sm:$0xff]
  %v1792 = vld [vmem:[#allocation2 + $0xc8] sm:$0xff]
  %v1793 = vld [vmem:[#allocation2 + $0xd0] sm:$0xff]
  %v1794 = vld [vmem:[#allocation2 + $0xd8] sm:$0xff]
  %v1795 = vld [vmem:[#allocation2 + $0xe0] sm:$0xff]
  %v1796 = vld [vmem:[#allocation2 + $0xe8] sm:$0xff]
  %v1797 = vld [vmem:[#allocation2 + $0xf0] sm:$0xff]
  %v1798 = vld [vmem:[#allocation2 + $0xf8] sm:$0xff]
  %v1799 = vld [vmem:[#allocation2 + $0x100] sm:$0xff]
  %v1800 = vld [vmem:[#allocation2 + $0x108] sm:$0xff]
  %v1801 = vld [vmem:[#allocation2 + $0x110] sm:$0xff]
  %v1802 = vld [vmem:[#allocation2 + $0x118] sm:$0xff]
  %1804 = vset.pattern.permute.xlu0 0
  %1805 = vperm.xlu0 %1804, %v1434
  %v1806 = vpop.permute.xlu0 %1805
  %v1809 = vunpack.c.l.b16 %v1433
  %v1810 = vunpack.c.h.b16 %v1433
  %v1811 = vpack.c.b16 %v1809, %v1809
  %v1812 = vpack.c.b16 %v1810, %v1810
  %v1815 = vsel %vm935, %v1812, 0
  %1817 = vmatprep.subr.bf16.mxu0 %v1768
  %1818 = vmatpush1.bf16.msra.mxu0 %v1767
  %1819 = vmatprep.subr.bf16.mxu0 %v1772
  %1820 = vmatpush1.bf16.msra.mxu0 %v1771
  %1821 = vmatprep.subr.bf16.mxu0 %v1776
  %1822 = vmatpush1.bf16.msra.mxu0 %v1775
  %1823 = vmatprep.subr.bf16.mxu0 %v1780
  %1824 = vmatpush1.bf16.msra.mxu0 %v1779
  %1825 = vmatprep.subr.bf16.mxu0 %v1784
  %1826 = vmatpush1.bf16.msra.mxu0 %v1783
  %1827 = vmatprep.subr.bf16.mxu0 %v1788
  %1828 = vmatpush1.bf16.msra.mxu0 %v1787
  %1829 = vmatprep.subr.bf16.mxu0 %v1792
  %1830 = vmatpush1.bf16.msra.mxu0 %v1791
  %1831 = vmatprep.subr.bf16.mxu0 %v1796
  %1832 = vmatpush1.bf16.msra.mxu0 %v1795
  %1833 = vmatprep.subr.bf16.mxu0 %v1800
  %1834 = vmatpush1.bf16.msra.mxu0 %v1799
  %1835 = vmatprep.subr.bf16.mxu0 0
  %1836 = vmatpush1.bf16.msra.mxu0 0
  %1837 = vmatprep.subr.bf16.mxu0 0
  %1838 = vmatpush1.bf16.msra.mxu0 0
  %1839 = vmatprep.subr.bf16.mxu0 0
  %1840 = vmatpush1.bf16.msra.mxu0 0
  %1841 = vmatprep.subr.bf16.mxu0 0
  %1842 = vmatpush1.bf16.msra.mxu0 0
  %1843 = vmatprep.subr.bf16.mxu0 0
  %1844 = vmatpush1.bf16.msra.mxu0 0
  %1845 = vmatprep.subr.bf16.mxu0 0
  %1846 = vmatpush1.bf16.msra.mxu0 0
  %1847 = vmatprep.subr.bf16.mxu0 0
  %1848 = vmatpush1.bf16.msra.mxu0 0
  %1849 = vmatprep.mubr.bf16.mxu0 %v1815
  %1850 = vmatmul.mubr.bf16.gmra.mrb[0].mxu0 %v1811
  %v1851 = vpop.f32.mrb[0].mxu0
  %v1852 = vadd.f32 %v1806, %v1851
  %v1853 = vpop.f32.mrb[0].mxu0
  %v1854 = vadd.f32 %v1806, %v1853
  %v1855 = vpop.f32.mrb[0].mxu0
  %v1856 = vpop.f32.mrb[0].mxu0
  %1857 = vdwg.mxu0
  %1858 = vmatprep.subr.bf16.mxu0 %v1770
  %1859 = vmatpush1.bf16.msra.mxu0 %v1769
  %1860 = vmatprep.subr.bf16.mxu0 %v1774
  %1861 = vmatpush1.bf16.msra.mxu0 %v1773
  %1862 = vmatprep.subr.bf16.mxu0 %v1778
  %1863 = vmatpush1.bf16.msra.mxu0 %v1777
  %1864 = vmatprep.subr.bf16.mxu0 %v1782
  %1865 = vmatpush1.bf16.msra.mxu0 %v1781
  %1866 = vmatprep.subr.bf16.mxu0 %v1786
  %1867 = vmatpush1.bf16.msra.mxu0 %v1785
  %1868 = vmatprep.subr.bf16.mxu0 %v1790
  %1869 = vmatpush1.bf16.msra.mxu0 %v1789
  %1870 = vmatprep.subr.bf16.mxu0 %v1794
  %1871 = vmatpush1.bf16.msra.mxu0 %v1793
  %1872 = vmatprep.subr.bf16.mxu0 %v1798
  %1873 = vmatpush1.bf16.msra.mxu0 %v1797
  %1874 = vmatprep.subr.bf16.mxu0 %v1802
  %1875 = vmatpush1.bf16.msra.mxu0 %v1801
  %1876 = vmatprep.subr.bf16.mxu0 0
  %1877 = vmatpush1.bf16.msra.mxu0 0
  %1878 = vmatprep.subr.bf16.mxu0 0
  %1879 = vmatpush1.bf16.msra.mxu0 0
  %1880 = vmatprep.subr.bf16.mxu0 0
  %1881 = vmatpush1.bf16.msra.mxu0 0
  %1882 = vmatprep.subr.bf16.mxu0 0
  %1883 = vmatpush1.bf16.msra.mxu0 0
  %1884 = vmatprep.subr.bf16.mxu0 0
  %1885 = vmatpush1.bf16.msra.mxu0 0
  %1886 = vmatprep.subr.bf16.mxu0 0
  %1887 = vmatpush1.bf16.msra.mxu0 0
  %1888 = vmatprep.subr.bf16.mxu0 0
  %1889 = vmatpush1.bf16.msra.mxu0 0
  %1890 = vmatprep.mubr.bf16.mxu0 %v1815
  %1891 = vmatmul.mubr.bf16.gmra.mrb[0].mxu0 %v1811
  %v1892 = vpop.f32.mrb[0].mxu0
  %v1893 = vadd.f32 %v1806, %v1892
  %v1894 = vpop.f32.mrb[0].mxu0
  %v1895 = vadd.f32 %v1806, %v1894
  %v1896 = vpop.f32.mrb[0].mxu0
  %v1897 = vpop.f32.mrb[0].mxu0
  %1898 = vdwg.mxu0
  %v1899 = vmax.f32 %v1852, 0.0
  %v1900 = vmax.f32 %v1854, 0.0
  %v1901 = vmax.f32 %v1893, 0.0
  %v1902 = vmax.f32 %v1895, 0.0
  %v1903 = vpack.c.bf16 %v1899, %v1899
  %v1904 = vpack.c.bf16 %v1900, %v1900
  %v1905 = vpack.c.bf16 %v1901, %v1901
  %v1906 = vpack.c.bf16 %v1902, %v1902
  %1907 = vst [vmem:[#allocation3 + $0x20] sm:$0xf] %v1903
  %1908 = vst [vmem:[#allocation3 + $0x28] sm:$0xf] %v1904
  %1909 = vst [vmem:[#allocation3 + $0x30] sm:$0xf] %v1905
  %1910 = vst [vmem:[#allocation3 + $0x38] sm:$0xf] %v1906
  %v1911 = vld [vmem:[#allocation3] sm:$0xff]
  %v1912 = vld [vmem:[#allocation3 + $0x8] sm:$0xff]
  %v1913 = vld [vmem:[#allocation3 + $0x10] sm:$0xff]
  %v1914 = vld [vmem:[#allocation3 + $0x18] sm:$0xff]
  %v1915 = vld [vmem:[#allocation3 + $0x20] sm:$0xf]
  %v1916 = vld [vmem:[#allocation3 + $0x28] sm:$0xf]
  %v1917 = vld [vmem:[#allocation3 + $0x30] sm:$0xf]
  %v1918 = vld [vmem:[#allocation3 + $0x38] sm:$0xf]
  %v1919 = vld [vmem:[%s2 + $0x40] sm:$0xff]
  %v1920 = vld [vmem:[%s3 + $0x28] sm:$0xff]
  %v1921 = vunpack.c.l.bf16 %v1911
  %v1922 = vunpack.c.l.bf16 %v1912
  %v1923 = vunpack.c.l.bf16 %v1913
  %v1924 = vunpack.c.l.bf16 %v1914
  %v1925 = vunpack.c.h.bf16 %v1911
  %v1926 = vunpack.c.h.bf16 %v1912
  %v1927 = vunpack.c.h.bf16 %v1913
  %v1928 = vunpack.c.h.bf16 %v1914
  %v1929 = vunpack.c.l.bf16 %v1915
  %v1930 = vunpack.c.l.bf16 %v1916
  %v1931 = vunpack.c.l.bf16 %v1917
  %v1932 = vunpack.c.l.bf16 %v1918
  %1933 = vrot.lane.b32.xlu0 %v1921, 17
  %v1934 = vpop.permute.xlu0 %1933
  %1935 = vrot.lane.b32.xlu0 %v1925, 17
  %v1936 = vpop.permute.xlu0 %1935
  %1937 = vrot.lane.b32.xlu0 %v1929, 17
  %v1938 = vpop.permute.xlu0 %1937
  %1939 = vrot.lane.b32.xlu0 %v1922, 17
  %v1940 = vpop.permute.xlu0 %1939
  %1941 = vrot.lane.b32.xlu0 %v1926, 17
  %v1942 = vpop.permute.xlu0 %1941
  %1943 = vrot.lane.b32.xlu0 %v1930, 17
  %v1944 = vpop.permute.xlu0 %1943
  %1945 = vrot.lane.b32.xlu0 %v1923, 17
  %v1946 = vpop.permute.xlu0 %1945
  %1947 = vrot.lane.b32.xlu0 %v1927, 17
  %v1948 = vpop.permute.xlu0 %1947
  %1949 = vrot.lane.b32.xlu0 %v1931, 17
  %v1950 = vpop.permute.xlu0 %1949
  %1951 = vrot.lane.b32.xlu0 %v1924, 17
  %v1952 = vpop.permute.xlu0 %1951
  %1953 = vrot.lane.b32.xlu0 %v1928, 17
  %v1954 = vpop.permute.xlu0 %1953
  %1955 = vrot.lane.b32.xlu0 %v1932, 17
  %v1956 = vpop.permute.xlu0 %1955
  %v1957 = vsel %vm44, %v1946, %v1952
  %v1958 = vsel %vm44, %v1948, %v1954
  %v1959 = vsel %vm44, %v1950, %v1956
  %v1960 = vsel %vm44, %v1940, %v1946
  %v1961 = vsel %vm44, %v1942, %v1948
  %v1962 = vsel %vm44, %v1944, %v1950
  %v1963 = vsel %vm44, %v1934, %v1940
  %v1964 = vsel %vm44, %v1936, %v1942
  %v1965 = vsel %vm44, %v1938, %v1944
  %v1966 = vsel %vm44, %v1952, %v1934
  %v1967 = vsel %vm44, %v1954, %v1936
  %v1968 = vsel %vm44, %v1956, %v1938
  %v1969 = vmul.f32 %v1966, %v52
  %v1970 = vmul.f32 %v1963, %v56
  %v1971 = vmul.f32 %v1960, %v60
  %v1972 = vmul.f32 %v1957, %v64
  %v1973 = vmul.f32 %v1967, %v52
  %v1974 = vmul.f32 %v1964, %v56
  %v1975 = vmul.f32 %v1961, %v60
  %v1976 = vmul.f32 %v1958, %v64
  %v1977 = vmul.f32 %v1968, %v52
  %v1978 = vmul.f32 %v1965, %v56
  %v1979 = vmul.f32 %v1962, %v60
  %v1980 = vmul.f32 %v1959, %v64
  %v1981 = vpack.c.bf16 %v1973, %v1969
  %v1982 = vpack.c.bf16 %v1974, %v1970
  %v1983 = vpack.c.bf16 %v1975, %v1971
  %v1984 = vpack.c.bf16 %v1976, %v1972
  %v1985 = vpack.c.bf16 %v1977, %v1977
  %v1986 = vpack.c.bf16 %v1978, %v1978
  %v1987 = vpack.c.bf16 %v1979, %v1979
  %v1988 = vpack.c.bf16 %v1980, %v1980
  %1989 = vst [vmem:[#allocation2] sm:$0xff] %v1981
  %1990 = vst [vmem:[#allocation2 + $0x8] sm:$0xff] %v1982
  %1991 = vst [vmem:[#allocation2 + $0x10] sm:$0xff] %v1983
  %1992 = vst [vmem:[#allocation2 + $0x18] sm:$0xff] %v1984
  %1993 = vst [vmem:[#allocation2 + $0x20] sm:$0xf] %v1985
  %1994 = vst [vmem:[#allocation2 + $0x28] sm:$0xf] %v1986
  %1995 = vst [vmem:[#allocation2 + $0x30] sm:$0xf] %v1987
  %1996 = vst [vmem:[#allocation2 + $0x38] sm:$0xf] %v1988
  %1997 = vrot.lane.b32.xlu0 %v1921, 16
  %v1998 = vpop.permute.xlu0 %1997
  %1999 = vrot.lane.b32.xlu0 %v1925, 16
  %v2000 = vpop.permute.xlu0 %1999
  %2001 = vrot.lane.b32.xlu0 %v1929, 16
  %v2002 = vpop.permute.xlu0 %2001
  %2003 = vrot.lane.b32.xlu0 %v1922, 16
  %v2004 = vpop.permute.xlu0 %2003
  %2005 = vrot.lane.b32.xlu0 %v1926, 16
  %v2006 = vpop.permute.xlu0 %2005
  %2007 = vrot.lane.b32.xlu0 %v1930, 16
  %v2008 = vpop.permute.xlu0 %2007
  %2009 = vrot.lane.b32.xlu0 %v1923, 16
  %v2010 = vpop.permute.xlu0 %2009
  %2011 = vrot.lane.b32.xlu0 %v1927, 16
  %v2012 = vpop.permute.xlu0 %2011
  %2013 = vrot.lane.b32.xlu0 %v1931, 16
  %v2014 = vpop.permute.xlu0 %2013
  %2015 = vrot.lane.b32.xlu0 %v1924, 16
  %v2016 = vpop.permute.xlu0 %2015
  %2017 = vrot.lane.b32.xlu0 %v1928, 16
  %v2018 = vpop.permute.xlu0 %2017
  %2019 = vrot.lane.b32.xlu0 %v1932, 16
  %v2020 = vpop.permute.xlu0 %2019
  %v2021 = vsel %vm85, %v2010, %v2016
  %v2022 = vsel %vm85, %v2012, %v2018
  %v2023 = vsel %vm85, %v2014, %v2020
  %v2024 = vsel %vm85, %v2004, %v2010
  %v2025 = vsel %vm85, %v2006, %v2012
  %v2026 = vsel %vm85, %v2008, %v2014
  %v2027 = vsel %vm85, %v1998, %v2004
  %v2028 = vsel %vm85, %v2000, %v2006
  %v2029 = vsel %vm85, %v2002, %v2008
  %v2030 = vsel %vm85, %v2016, %v1998
  %v2031 = vsel %vm85, %v2018, %v2000
  %v2032 = vsel %vm85, %v2020, %v2002
  %v2033 = vmul.f32 %v2030, %v93
  %v2034 = vmul.f32 %v2027, %v97
  %v2035 = vmul.f32 %v2024, %v101
  %v2036 = vmul.f32 %v2021, %v105
  %v2037 = vmul.f32 %v2031, %v93
  %v2038 = vmul.f32 %v2028, %v97
  %v2039 = vmul.f32 %v2025, %v101
  %v2040 = vmul.f32 %v2022, %v105
  %v2041 = vmul.f32 %v2032, %v93
  %v2042 = vmul.f32 %v2029, %v97
  %v2043 = vmul.f32 %v2026, %v101
  %v2044 = vmul.f32 %v2023, %v105
  %v2045 = vpack.c.bf16 %v2037, %v2033
  %v2046 = vpack.c.bf16 %v2038, %v2034
  %v2047 = vpack.c.bf16 %v2039, %v2035
  %v2048 = vpack.c.bf16 %v2040, %v2036
  %v2049 = vpack.c.bf16 %v2041, %v2041
  %v2050 = vpack.c.bf16 %v2042, %v2042
  %v2051 = vpack.c.bf16 %v2043, %v2043
  %v2052 = vpack.c.bf16 %v2044, %v2044
  %vm2061 = vcmask 1043456
  %v2062 = vrot.slane %v2045, 4
  %v2063 = vrot.slane %v2046, 4
  %v2064 = vrot.slane %v2047, 4
  %v2065 = vrot.slane %v2048, 4
  %v2066 = vrot.slane %v2049, 4
  %v2067 = vsel %vm2061, %v2062, %v2066
  %v2068 = vrot.slane %v2050, 4
  %v2069 = vsel %vm2061, %v2063, %v2068
  %v2070 = vrot.slane %v2051, 4
  %v2071 = vsel %vm2061, %v2064, %v2070
  %v2072 = vrot.slane %v2052, 4
  %v2073 = vsel %vm2061, %v2065, %v2072
  %2082 = vst [vmem:[#allocation2 + $0x20] sm:$0xf0] %v2062
  %2083 = vst [vmem:[#allocation2 + $0x28] sm:$0xf0] %v2063
  %2084 = vst [vmem:[#allocation2 + $0x30] sm:$0xf0] %v2064
  %2085 = vst [vmem:[#allocation2 + $0x38] sm:$0xf0] %v2065
  %2086 = vst [vmem:[#allocation2 + $0x40] sm:$0xff] %v2067
  %2087 = vst [vmem:[#allocation2 + $0x48] sm:$0xff] %v2069
  %2088 = vst [vmem:[#allocation2 + $0x50] sm:$0xff] %v2071
  %2089 = vst [vmem:[#allocation2 + $0x58] sm:$0xff] %v2073
  %2090 = vrot.lane.b32.xlu0 %v1921, 15
  %v2091 = vpop.permute.xlu0 %2090
  %2092 = vrot.lane.b32.xlu0 %v1925, 15
  %v2093 = vpop.permute.xlu0 %2092
  %2094 = vrot.lane.b32.xlu0 %v1929, 15
  %v2095 = vpop.permute.xlu0 %2094
  %2096 = vrot.lane.b32.xlu0 %v1922, 15
  %v2097 = vpop.permute.xlu0 %2096
  %2098 = vrot.lane.b32.xlu0 %v1926, 15
  %v2099 = vpop.permute.xlu0 %2098
  %2100 = vrot.lane.b32.xlu0 %v1930, 15
  %v2101 = vpop.permute.xlu0 %2100
  %2102 = vrot.lane.b32.xlu0 %v1923, 15
  %v2103 = vpop.permute.xlu0 %2102
  %2104 = vrot.lane.b32.xlu0 %v1927, 15
  %v2105 = vpop.permute.xlu0 %2104
  %2106 = vrot.lane.b32.xlu0 %v1931, 15
  %v2107 = vpop.permute.xlu0 %2106
  %2108 = vrot.lane.b32.xlu0 %v1924, 15
  %v2109 = vpop.permute.xlu0 %2108
  %2110 = vrot.lane.b32.xlu0 %v1928, 15
  %v2111 = vpop.permute.xlu0 %2110
  %2112 = vrot.lane.b32.xlu0 %v1932, 15
  %v2113 = vpop.permute.xlu0 %2112
  %v2114 = vsel %vm138, %v2103, %v2109
  %v2115 = vsel %vm138, %v2105, %v2111
  %v2116 = vsel %vm138, %v2107, %v2113
  %v2117 = vsel %vm138, %v2097, %v2103
  %v2118 = vsel %vm138, %v2099, %v2105
  %v2119 = vsel %vm138, %v2101, %v2107
  %v2120 = vsel %vm138, %v2091, %v2097
  %v2121 = vsel %vm138, %v2093, %v2099
  %v2122 = vsel %vm138, %v2095, %v2101
  %v2123 = vsel %vm138, %v2109, %v2091
  %v2124 = vsel %vm138, %v2111, %v2093
  %v2125 = vsel %vm138, %v2113, %v2095
  %v2126 = vmul.f32 %v2123, %v146
  %v2127 = vmul.f32 %v2120, %v150
  %v2128 = vmul.f32 %v2117, %v154
  %v2129 = vmul.f32 %v2114, %v158
  %v2130 = vmul.f32 %v2124, %v146
  %v2131 = vmul.f32 %v2121, %v150
  %v2132 = vmul.f32 %v2118, %v154
  %v2133 = vmul.f32 %v2115, %v158
  %v2134 = vmul.f32 %v2125, %v146
  %v2135 = vmul.f32 %v2122, %v150
  %v2136 = vmul.f32 %v2119, %v154
  %v2137 = vmul.f32 %v2116, %v158
  %v2138 = vpack.c.bf16 %v2130, %v2126
  %v2139 = vpack.c.bf16 %v2131, %v2127
  %v2140 = vpack.c.bf16 %v2132, %v2128
  %v2141 = vpack.c.bf16 %v2133, %v2129
  %v2142 = vpack.c.bf16 %v2134, %v2134
  %v2143 = vpack.c.bf16 %v2135, %v2135
  %v2144 = vpack.c.bf16 %v2136, %v2136
  %v2145 = vpack.c.bf16 %v2137, %v2137
  %2146 = vst [vmem:[#allocation2 + $0x60] sm:$0xff] %v2138
  %2147 = vst [vmem:[#allocation2 + $0x68] sm:$0xff] %v2139
  %2148 = vst [vmem:[#allocation2 + $0x70] sm:$0xff] %v2140
  %2149 = vst [vmem:[#allocation2 + $0x78] sm:$0xff] %v2141
  %2150 = vst [vmem:[#allocation2 + $0x80] sm:$0xf] %v2142
  %2151 = vst [vmem:[#allocation2 + $0x88] sm:$0xf] %v2143
  %2152 = vst [vmem:[#allocation2 + $0x90] sm:$0xf] %v2144
  %2153 = vst [vmem:[#allocation2 + $0x98] sm:$0xf] %v2145
  %2154 = vrot.lane.b32.xlu0 %v1921, 1
  %v2155 = vpop.permute.xlu0 %2154
  %2156 = vrot.lane.b32.xlu0 %v1925, 1
  %v2157 = vpop.permute.xlu0 %2156
  %2158 = vrot.lane.b32.xlu0 %v1929, 1
  %v2159 = vpop.permute.xlu0 %2158
  %2160 = vrot.lane.b32.xlu0 %v1922, 1
  %v2161 = vpop.permute.xlu0 %2160
  %2162 = vrot.lane.b32.xlu0 %v1926, 1
  %v2163 = vpop.permute.xlu0 %2162
  %2164 = vrot.lane.b32.xlu0 %v1930, 1
  %v2165 = vpop.permute.xlu0 %2164
  %2166 = vrot.lane.b32.xlu0 %v1923, 1
  %v2167 = vpop.permute.xlu0 %2166
  %2168 = vrot.lane.b32.xlu0 %v1927, 1
  %v2169 = vpop.permute.xlu0 %2168
  %2170 = vrot.lane.b32.xlu0 %v1931, 1
  %v2171 = vpop.permute.xlu0 %2170
  %2172 = vrot.lane.b32.xlu0 %v1924, 1
  %v2173 = vpop.permute.xlu0 %2172
  %2174 = vrot.lane.b32.xlu0 %v1928, 1
  %v2175 = vpop.permute.xlu0 %2174
  %2176 = vrot.lane.b32.xlu0 %v1932, 1
  %v2177 = vpop.permute.xlu0 %2176
  %v2178 = vsel %vm179, %v2167, %v2173
  %v2179 = vsel %vm179, %v2169, %v2175
  %v2180 = vsel %vm179, %v2171, %v2177
  %v2181 = vsel %vm179, %v2161, %v2167
  %v2182 = vsel %vm179, %v2163, %v2169
  %v2183 = vsel %vm179, %v2165, %v2171
  %v2184 = vsel %vm179, %v2155, %v2161
  %v2185 = vsel %vm179, %v2157, %v2163
  %v2186 = vsel %vm179, %v2159, %v2165
  %v2187 = vsel %vm179, %v2173, %v2155
  %v2188 = vsel %vm179, %v2175, %v2157
  %v2189 = vsel %vm179, %v2177, %v2159
  %v2190 = vmul.f32 %v2187, %v187
  %v2191 = vmul.f32 %v2184, %v191
  %v2192 = vmul.f32 %v2181, %v195
  %v2193 = vmul.f32 %v2178, %v199
  %v2194 = vmul.f32 %v2188, %v187
  %v2195 = vmul.f32 %v2185, %v191
  %v2196 = vmul.f32 %v2182, %v195
  %v2197 = vmul.f32 %v2179, %v199
  %v2198 = vmul.f32 %v2189, %v187
  %v2199 = vmul.f32 %v2186, %v191
  %v2200 = vmul.f32 %v2183, %v195
  %v2201 = vmul.f32 %v2180, %v199
  %v2202 = vpack.c.bf16 %v2194, %v2190
  %v2203 = vpack.c.bf16 %v2195, %v2191
  %v2204 = vpack.c.bf16 %v2196, %v2192
  %v2205 = vpack.c.bf16 %v2197, %v2193
  %v2206 = vpack.c.bf16 %v2198, %v2198
  %v2207 = vpack.c.bf16 %v2199, %v2199
  %v2208 = vpack.c.bf16 %v2200, %v2200
  %v2209 = vpack.c.bf16 %v2201, %v2201
  %v2218 = vrot.slane %v2202, 4
  %v2219 = vrot.slane %v2203, 4
  %v2220 = vrot.slane %v2204, 4
  %v2221 = vrot.slane %v2205, 4
  %v2222 = vrot.slane %v2206, 4
  %v2223 = vsel %vm2061, %v2218, %v2222
  %v2224 = vrot.slane %v2207, 4
  %v2225 = vsel %vm2061, %v2219, %v2224
  %v2226 = vrot.slane %v2208, 4
  %v2227 = vsel %vm2061, %v2220, %v2226
  %v2228 = vrot.slane %v2209, 4
  %v2229 = vsel %vm2061, %v2221, %v2228
  %2238 = vst [vmem:[#allocation2 + $0x80] sm:$0xf0] %v2218
  %2239 = vst [vmem:[#allocation2 + $0x88] sm:$0xf0] %v2219
  %2240 = vst [vmem:[#allocation2 + $0x90] sm:$0xf0] %v2220
  %2241 = vst [vmem:[#allocation2 + $0x98] sm:$0xf0] %v2221
  %2242 = vst [vmem:[#allocation2 + $0xa0] sm:$0xff] %v2223
  %2243 = vst [vmem:[#allocation2 + $0xa8] sm:$0xff] %v2225
  %2244 = vst [vmem:[#allocation2 + $0xb0] sm:$0xff] %v2227
  %2245 = vst [vmem:[#allocation2 + $0xb8] sm:$0xff] %v2229
  %2246 = vst [vmem:[#allocation2 + $0xc0] sm:$0xff] %v1911
  %2247 = vst [vmem:[#allocation2 + $0xc8] sm:$0xff] %v1912
  %2248 = vst [vmem:[#allocation2 + $0xd0] sm:$0xff] %v1913
  %2249 = vst [vmem:[#allocation2 + $0xd8] sm:$0xff] %v1914
  %2250 = vst [vmem:[#allocation2 + $0xe0] sm:$0xf] %v1915
  %2251 = vst [vmem:[#allocation2 + $0xe8] sm:$0xf] %v1916
  %2252 = vst [vmem:[#allocation2 + $0xf0] sm:$0xf] %v1917
  %2253 = vst [vmem:[#allocation2 + $0xf8] sm:$0xf] %v1918
  %2254 = vrot.lane.b32.xlu0 %v1921, 127
  %v2255 = vpop.permute.xlu0 %2254
  %2256 = vrot.lane.b32.xlu0 %v1925, 127
  %v2257 = vpop.permute.xlu0 %2256
  %2258 = vrot.lane.b32.xlu0 %v1929, 127
  %v2259 = vpop.permute.xlu0 %2258
  %2260 = vrot.lane.b32.xlu0 %v1922, 127
  %v2261 = vpop.permute.xlu0 %2260
  %2262 = vrot.lane.b32.xlu0 %v1926, 127
  %v2263 = vpop.permute.xlu0 %2262
  %2264 = vrot.lane.b32.xlu0 %v1930, 127
  %v2265 = vpop.permute.xlu0 %2264
  %2266 = vrot.lane.b32.xlu0 %v1923, 127
  %v2267 = vpop.permute.xlu0 %2266
  %2268 = vrot.lane.b32.xlu0 %v1927, 127
  %v2269 = vpop.permute.xlu0 %2268
  %2270 = vrot.lane.b32.xlu0 %v1931, 127
  %v2271 = vpop.permute.xlu0 %2270
  %2272 = vrot.lane.b32.xlu0 %v1924, 127
  %v2273 = vpop.permute.xlu0 %2272
  %2274 = vrot.lane.b32.xlu0 %v1928, 127
  %v2275 = vpop.permute.xlu0 %2274
  %2276 = vrot.lane.b32.xlu0 %v1932, 127
  %v2277 = vpop.permute.xlu0 %2276
  %v2278 = vsel %vm240, %v2267, %v2273
  %v2279 = vsel %vm240, %v2269, %v2275
  %v2280 = vsel %vm240, %v2271, %v2277
  %v2281 = vsel %vm240, %v2261, %v2267
  %v2282 = vsel %vm240, %v2263, %v2269
  %v2283 = vsel %vm240, %v2265, %v2271
  %v2284 = vsel %vm240, %v2255, %v2261
  %v2285 = vsel %vm240, %v2257, %v2263
  %v2286 = vsel %vm240, %v2259, %v2265
  %v2287 = vsel %vm240, %v2273, %v2255
  %v2288 = vsel %vm240, %v2275, %v2257
  %v2289 = vsel %vm240, %v2277, %v2259
  %v2290 = vmul.f32 %v2284, %v248
  %v2291 = vmul.f32 %v2281, %v252
  %v2292 = vmul.f32 %v2278, %v256
  %v2293 = vmul.f32 %v2287, %v260
  %v2294 = vmul.f32 %v2285, %v248
  %v2295 = vmul.f32 %v2282, %v252
  %v2296 = vmul.f32 %v2279, %v256
  %v2297 = vmul.f32 %v2288, %v260
  %v2298 = vmul.f32 %v2286, %v248
  %v2299 = vmul.f32 %v2283, %v252
  %v2300 = vmul.f32 %v2280, %v256
  %v2301 = vmul.f32 %v2289, %v260
  %v2302 = vpack.c.bf16 %v2294, %v2290
  %v2303 = vpack.c.bf16 %v2295, %v2291
  %v2304 = vpack.c.bf16 %v2296, %v2292
  %v2305 = vpack.c.bf16 %v2297, %v2293
  %v2306 = vpack.c.bf16 %v2298, %v2298
  %v2307 = vpack.c.bf16 %v2299, %v2299
  %v2308 = vpack.c.bf16 %v2300, %v2300
  %v2309 = vpack.c.bf16 %v2301, %v2301
  %v2318 = vrot.slane %v2302, 4
  %v2319 = vrot.slane %v2303, 4
  %v2320 = vrot.slane %v2304, 4
  %v2321 = vrot.slane %v2305, 4
  %v2322 = vrot.slane %v2306, 4
  %v2323 = vsel %vm2061, %v2318, %v2322
  %v2324 = vrot.slane %v2307, 4
  %v2325 = vsel %vm2061, %v2319, %v2324
  %v2326 = vrot.slane %v2308, 4
  %v2327 = vsel %vm2061, %v2320, %v2326
  %v2328 = vrot.slane %v2309, 4
  %v2329 = vsel %vm2061, %v2321, %v2328
  %2338 = vst [vmem:[#allocation2 + $0xe0] sm:$0xf0] %v2318
  %2339 = vst [vmem:[#allocation2 + $0xe8] sm:$0xf0] %v2319
  %2340 = vst [vmem:[#allocation2 + $0xf0] sm:$0xf0] %v2320
  %2341 = vst [vmem:[#allocation2 + $0xf8] sm:$0xf0] %v2321
  %2342 = vst [vmem:[#allocation2 + $0x100] sm:$0xff] %v2323
  %2343 = vst [vmem:[#allocation2 + $0x108] sm:$0xff] %v2325
  %2344 = vst [vmem:[#allocation2 + $0x110] sm:$0xff] %v2327
  %2345 = vst [vmem:[#allocation2 + $0x118] sm:$0xff] %v2329
  %2346 = vrot.lane.b32.xlu0 %v1921, 113
  %v2347 = vpop.permute.xlu0 %2346
  %2348 = vrot.lane.b32.xlu0 %v1925, 113
  %v2349 = vpop.permute.xlu0 %2348
  %2350 = vrot.lane.b32.xlu0 %v1929, 113
  %v2351 = vpop.permute.xlu0 %2350
  %2352 = vrot.lane.b32.xlu0 %v1922, 113
  %v2353 = vpop.permute.xlu0 %2352
  %2354 = vrot.lane.b32.xlu0 %v1926, 113
  %v2355 = vpop.permute.xlu0 %2354
  %2356 = vrot.lane.b32.xlu0 %v1930, 113
  %v2357 = vpop.permute.xlu0 %2356
  %2358 = vrot.lane.b32.xlu0 %v1923, 113
  %v2359 = vpop.permute.xlu0 %2358
  %2360 = vrot.lane.b32.xlu0 %v1927, 113
  %v2361 = vpop.permute.xlu0 %2360
  %2362 = vrot.lane.b32.xlu0 %v1931, 113
  %v2363 = vpop.permute.xlu0 %2362
  %2364 = vrot.lane.b32.xlu0 %v1924, 113
  %v2365 = vpop.permute.xlu0 %2364
  %2366 = vrot.lane.b32.xlu0 %v1928, 113
  %v2367 = vpop.permute.xlu0 %2366
  %2368 = vrot.lane.b32.xlu0 %v1932, 113
  %v2369 = vpop.permute.xlu0 %2368
  %v2370 = vsel %vm293, %v2359, %v2365
  %v2371 = vsel %vm293, %v2361, %v2367
  %v2372 = vsel %vm293, %v2363, %v2369
  %v2373 = vsel %vm293, %v2353, %v2359
  %v2374 = vsel %vm293, %v2355, %v2361
  %v2375 = vsel %vm293, %v2357, %v2363
  %v2376 = vsel %vm293, %v2347, %v2353
  %v2377 = vsel %vm293, %v2349, %v2355
  %v2378 = vsel %vm293, %v2351, %v2357
  %v2379 = vsel %vm293, %v2365, %v2347
  %v2380 = vsel %vm293, %v2367, %v2349
  %v2381 = vsel %vm293, %v2369, %v2351
  %v2382 = vmul.f32 %v2376, %v301
  %v2383 = vmul.f32 %v2373, %v305
  %v2384 = vmul.f32 %v2370, %v309
  %v2385 = vmul.f32 %v2379, %v313
  %v2386 = vmul.f32 %v2377, %v301
  %v2387 = vmul.f32 %v2374, %v305
  %v2388 = vmul.f32 %v2371, %v309
  %v2389 = vmul.f32 %v2380, %v313
  %v2390 = vmul.f32 %v2378, %v301
  %v2391 = vmul.f32 %v2375, %v305
  %v2392 = vmul.f32 %v2372, %v309
  %v2393 = vmul.f32 %v2381, %v313
  %v2394 = vpack.c.bf16 %v2386, %v2382
  %v2395 = vpack.c.bf16 %v2387, %v2383
  %v2396 = vpack.c.bf16 %v2388, %v2384
  %v2397 = vpack.c.bf16 %v2389, %v2385
  %v2398 = vpack.c.bf16 %v2390, %v2390
  %v2399 = vpack.c.bf16 %v2391, %v2391
  %v2400 = vpack.c.bf16 %v2392, %v2392
  %v2401 = vpack.c.bf16 %v2393, %v2393
  %2402 = vst [vmem:[#allocation2 + $0x120] sm:$0xff] %v2394
  %2403 = vst [vmem:[#allocation2 + $0x128] sm:$0xff] %v2395
  %2404 = vst [vmem:[#allocation2 + $0x130] sm:$0xff] %v2396
  %2405 = vst [vmem:[#allocation2 + $0x138] sm:$0xff] %v2397
  %2406 = vst [vmem:[#allocation2 + $0x140] sm:$0xf] %v2398
  %2407 = vst [vmem:[#allocation2 + $0x148] sm:$0xf] %v2399
  %2408 = vst [vmem:[#allocation2 + $0x150] sm:$0xf] %v2400
  %2409 = vst [vmem:[#allocation2 + $0x158] sm:$0xf] %v2401
  %2410 = vrot.lane.b32.xlu0 %v1921, 112
  %v2411 = vpop.permute.xlu0 %2410
  %2412 = vrot.lane.b32.xlu0 %v1925, 112
  %v2413 = vpop.permute.xlu0 %2412
  %2414 = vrot.lane.b32.xlu0 %v1929, 112
  %v2415 = vpop.permute.xlu0 %2414
  %2416 = vrot.lane.b32.xlu0 %v1922, 112
  %v2417 = vpop.permute.xlu0 %2416
  %2418 = vrot.lane.b32.xlu0 %v1926, 112
  %v2419 = vpop.permute.xlu0 %2418
  %2420 = vrot.lane.b32.xlu0 %v1930, 112
  %v2421 = vpop.permute.xlu0 %2420
  %2422 = vrot.lane.b32.xlu0 %v1923, 112
  %v2423 = vpop.permute.xlu0 %2422
  %2424 = vrot.lane.b32.xlu0 %v1927, 112
  %v2425 = vpop.permute.xlu0 %2424
  %2426 = vrot.lane.b32.xlu0 %v1931, 112
  %v2427 = vpop.permute.xlu0 %2426
  %2428 = vrot.lane.b32.xlu0 %v1924, 112
  %v2429 = vpop.permute.xlu0 %2428
  %2430 = vrot.lane.b32.xlu0 %v1928, 112
  %v2431 = vpop.permute.xlu0 %2430
  %2432 = vrot.lane.b32.xlu0 %v1932, 112
  %v2433 = vpop.permute.xlu0 %2432
  %v2434 = vsel %vm334, %v2423, %v2429
  %v2435 = vsel %vm334, %v2425, %v2431
  %v2436 = vsel %vm334, %v2427, %v2433
  %v2437 = vsel %vm334, %v2417, %v2423
  %v2438 = vsel %vm334, %v2419, %v2425
  %v2439 = vsel %vm334, %v2421, %v2427
  %v2440 = vsel %vm334, %v2411, %v2417
  %v2441 = vsel %vm334, %v2413, %v2419
  %v2442 = vsel %vm334, %v2415, %v2421
  %v2443 = vsel %vm334, %v2429, %v2411
  %v2444 = vsel %vm334, %v2431, %v2413
  %v2445 = vsel %vm334, %v2433, %v2415
  %v2446 = vmul.f32 %v2440, %v342
  %v2447 = vmul.f32 %v2437, %v346
  %v2448 = vmul.f32 %v2434, %v350
  %v2449 = vmul.f32 %v2443, %v354
  %v2450 = vmul.f32 %v2441, %v342
  %v2451 = vmul.f32 %v2438, %v346
  %v2452 = vmul.f32 %v2435, %v350
  %v2453 = vmul.f32 %v2444, %v354
  %v2454 = vmul.f32 %v2442, %v342
  %v2455 = vmul.f32 %v2439, %v346
  %v2456 = vmul.f32 %v2436, %v350
  %v2457 = vmul.f32 %v2445, %v354
  %v2458 = vpack.c.bf16 %v2450, %v2446
  %v2459 = vpack.c.bf16 %v2451, %v2447
  %v2460 = vpack.c.bf16 %v2452, %v2448
  %v2461 = vpack.c.bf16 %v2453, %v2449
  %v2462 = vpack.c.bf16 %v2454, %v2454
  %v2463 = vpack.c.bf16 %v2455, %v2455
  %v2464 = vpack.c.bf16 %v2456, %v2456
  %v2465 = vpack.c.bf16 %v2457, %v2457
  %v2474 = vrot.slane %v2458, 4
  %v2475 = vrot.slane %v2459, 4
  %v2476 = vrot.slane %v2460, 4
  %v2477 = vrot.slane %v2461, 4
  %v2478 = vrot.slane %v2462, 4
  %v2479 = vsel %vm2061, %v2474, %v2478
  %v2480 = vrot.slane %v2463, 4
  %v2481 = vsel %vm2061, %v2475, %v2480
  %v2482 = vrot.slane %v2464, 4
  %v2483 = vsel %vm2061, %v2476, %v2482
  %v2484 = vrot.slane %v2465, 4
  %v2485 = vsel %vm2061, %v2477, %v2484
  %2494 = vst [vmem:[#allocation2 + $0x140] sm:$0xf0] %v2474
  %2495 = vst [vmem:[#allocation2 + $0x148] sm:$0xf0] %v2475
  %2496 = vst [vmem:[#allocation2 + $0x150] sm:$0xf0] %v2476
  %2497 = vst [vmem:[#allocation2 + $0x158] sm:$0xf0] %v2477
  %2498 = vst [vmem:[#allocation2 + $0x160] sm:$0xff] %v2479
  %2499 = vst [vmem:[#allocation2 + $0x168] sm:$0xff] %v2481
  %2500 = vst [vmem:[#allocation2 + $0x170] sm:$0xff] %v2483
  %2501 = vst [vmem:[#allocation2 + $0x178] sm:$0xff] %v2485
  %2502 = vrot.lane.b32.xlu0 %v1921, 111
  %v2503 = vpop.permute.xlu0 %2502
  %2504 = vrot.lane.b32.xlu0 %v1925, 111
  %v2505 = vpop.permute.xlu0 %2504
  %2506 = vrot.lane.b32.xlu0 %v1929, 111
  %v2507 = vpop.permute.xlu0 %2506
  %2508 = vrot.lane.b32.xlu0 %v1922, 111
  %v2509 = vpop.permute.xlu0 %2508
  %2510 = vrot.lane.b32.xlu0 %v1926, 111
  %v2511 = vpop.permute.xlu0 %2510
  %2512 = vrot.lane.b32.xlu0 %v1930, 111
  %v2513 = vpop.permute.xlu0 %2512
  %2514 = vrot.lane.b32.xlu0 %v1923, 111
  %v2515 = vpop.permute.xlu0 %2514
  %2516 = vrot.lane.b32.xlu0 %v1927, 111
  %v2517 = vpop.permute.xlu0 %2516
  %2518 = vrot.lane.b32.xlu0 %v1931, 111
  %v2519 = vpop.permute.xlu0 %2518
  %2520 = vrot.lane.b32.xlu0 %v1924, 111
  %v2521 = vpop.permute.xlu0 %2520
  %2522 = vrot.lane.b32.xlu0 %v1928, 111
  %v2523 = vpop.permute.xlu0 %2522
  %2524 = vrot.lane.b32.xlu0 %v1932, 111
  %v2525 = vpop.permute.xlu0 %2524
  %v2526 = vsel %vm387, %v2515, %v2521
  %v2527 = vsel %vm387, %v2517, %v2523
  %v2528 = vsel %vm387, %v2519, %v2525
  %v2529 = vsel %vm387, %v2509, %v2515
  %v2530 = vsel %vm387, %v2511, %v2517
  %v2531 = vsel %vm387, %v2513, %v2519
  %v2532 = vsel %vm387, %v2503, %v2509
  %v2533 = vsel %vm387, %v2505, %v2511
  %v2534 = vsel %vm387, %v2507, %v2513
  %v2535 = vsel %vm387, %v2521, %v2503
  %v2536 = vsel %vm387, %v2523, %v2505
  %v2537 = vsel %vm387, %v2525, %v2507
  %v2538 = vmul.f32 %v2532, %v395
  %v2539 = vmul.f32 %v2529, %v399
  %v2540 = vmul.f32 %v2526, %v403
  %v2541 = vmul.f32 %v2535, %v407
  %v2542 = vmul.f32 %v2533, %v395
  %v2543 = vmul.f32 %v2530, %v399
  %v2544 = vmul.f32 %v2527, %v403
  %v2545 = vmul.f32 %v2536, %v407
  %v2546 = vmul.f32 %v2534, %v395
  %v2547 = vmul.f32 %v2531, %v399
  %v2548 = vmul.f32 %v2528, %v403
  %v2549 = vmul.f32 %v2537, %v407
  %v2550 = vpack.c.bf16 %v2542, %v2538
  %v2551 = vpack.c.bf16 %v2543, %v2539
  %v2552 = vpack.c.bf16 %v2544, %v2540
  %v2553 = vpack.c.bf16 %v2545, %v2541
  %v2554 = vpack.c.bf16 %v2546, %v2546
  %v2555 = vpack.c.bf16 %v2547, %v2547
  %v2556 = vpack.c.bf16 %v2548, %v2548
  %v2557 = vpack.c.bf16 %v2549, %v2549
  %2558 = vst [vmem:[#allocation2 + $0x180] sm:$0xff] %v2550
  %2559 = vst [vmem:[#allocation2 + $0x188] sm:$0xff] %v2551
  %2560 = vst [vmem:[#allocation2 + $0x190] sm:$0xff] %v2552
  %2561 = vst [vmem:[#allocation2 + $0x198] sm:$0xff] %v2553
  %2562 = vst [vmem:[#allocation2 + $0x1a0] sm:$0xf] %v2554
  %2563 = vst [vmem:[#allocation2 + $0x1a8] sm:$0xf] %v2555
  %2564 = vst [vmem:[#allocation2 + $0x1b0] sm:$0xf] %v2556
  %2565 = vst [vmem:[#allocation2 + $0x1b8] sm:$0xf] %v2557
  %v2566 = vld [vmem:[#allocation2] sm:$0xff]
  %v2567 = vld [vmem:[#allocation2 + $0x8] sm:$0xff]
  %v2568 = vld [vmem:[#allocation2 + $0x10] sm:$0xff]
  %v2569 = vld [vmem:[#allocation2 + $0x18] sm:$0xff]
  %v2570 = vld [vmem:[#allocation2 + $0x20] sm:$0xff]
  %v2571 = vld [vmem:[#allocation2 + $0x28] sm:$0xff]
  %v2572 = vld [vmem:[#allocation2 + $0x30] sm:$0xff]
  %v2573 = vld [vmem:[#allocation2 + $0x38] sm:$0xff]
  %v2574 = vld [vmem:[#allocation2 + $0x40] sm:$0xff]
  %v2575 = vld [vmem:[#allocation2 + $0x48] sm:$0xff]
  %v2576 = vld [vmem:[#allocation2 + $0x50] sm:$0xff]
  %v2577 = vld [vmem:[#allocation2 + $0x58] sm:$0xff]
  %v2578 = vld [vmem:[#allocation2 + $0x60] sm:$0xff]
  %v2579 = vld [vmem:[#allocation2 + $0x68] sm:$0xff]
  %v2580 = vld [vmem:[#allocation2 + $0x70] sm:$0xff]
  %v2581 = vld [vmem:[#allocation2 + $0x78] sm:$0xff]
  %v2582 = vld [vmem:[#allocation2 + $0x80] sm:$0xff]
  %v2583 = vld [vmem:[#allocation2 + $0x88] sm:$0xff]
  %v2584 = vld [vmem:[#allocation2 + $0x90] sm:$0xff]
  %v2585 = vld [vmem:[#allocation2 + $0x98] sm:$0xff]
  %v2586 = vld [vmem:[#allocation2 + $0xa0] sm:$0xff]
  %v2587 = vld [vmem:[#allocation2 + $0xa8] sm:$0xff]
  %v2588 = vld [vmem:[#allocation2 + $0xb0] sm:$0xff]
  %v2589 = vld [vmem:[#allocation2 + $0xb8] sm:$0xff]
  %v2590 = vld [vmem:[#allocation2 + $0xc0] sm:$0xff]
  %v2591 = vld [vmem:[#allocation2 + $0xc8] sm:$0xff]
  %v2592 = vld [vmem:[#allocation2 + $0xd0] sm:$0xff]
  %v2593 = vld [vmem:[#allocation2 + $0xd8] sm:$0xff]
  %v2594 = vld [vmem:[#allocation2 + $0xe0] sm:$0xff]
  %v2595 = vld [vmem:[#allocation2 + $0xe8] sm:$0xff]
  %v2596 = vld [vmem:[#allocation2 + $0xf0] sm:$0xff]
  %v2597 = vld [vmem:[#allocation2 + $0xf8] sm:$0xff]
  %v2598 = vld [vmem:[#allocation2 + $0x100] sm:$0xff]
  %v2599 = vld [vmem:[#allocation2 + $0x108] sm:$0xff]
  %v2600 = vld [vmem:[#allocation2 + $0x110] sm:$0xff]
  %v2601 = vld [vmem:[#allocation2 + $0x118] sm:$0xff]
  %v2602 = vld [vmem:[#allocation2 + $0x120] sm:$0xff]
  %v2603 = vld [vmem:[#allocation2 + $0x128] sm:$0xff]
  %v2604 = vld [vmem:[#allocation2 + $0x130] sm:$0xff]
  %v2605 = vld [vmem:[#allocation2 + $0x138] sm:$0xff]
  %v2606 = vld [vmem:[#allocation2 + $0x140] sm:$0xff]
  %v2607 = vld [vmem:[#allocation2 + $0x148] sm:$0xff]
  %v2608 = vld [vmem:[#allocation2 + $0x150] sm:$0xff]
  %v2609 = vld [vmem:[#allocation2 + $0x158] sm:$0xff]
  %v2610 = vld [vmem:[#allocation2 + $0x160] sm:$0xff]
  %v2611 = vld [vmem:[#allocation2 + $0x168] sm:$0xff]
  %v2612 = vld [vmem:[#allocation2 + $0x170] sm:$0xff]
  %v2613 = vld [vmem:[#allocation2 + $0x178] sm:$0xff]
  %v2614 = vld [vmem:[#allocation2 + $0x180] sm:$0xff]
  %v2615 = vld [vmem:[#allocation2 + $0x188] sm:$0xff]
  %v2616 = vld [vmem:[#allocation2 + $0x190] sm:$0xff]
  %v2617 = vld [vmem:[#allocation2 + $0x198] sm:$0xff]
  %v2618 = vld [vmem:[#allocation2 + $0x1a0] sm:$0xf]
  %v2619 = vld [vmem:[#allocation2 + $0x1a8] sm:$0xf]
  %v2620 = vld [vmem:[#allocation2 + $0x1b0] sm:$0xf]
  %v2621 = vld [vmem:[#allocation2 + $0x1b8] sm:$0xf]
  %2623 = vset.pattern.permute.xlu0 0
  %2624 = vperm.xlu0 %2623, %v1920
  %v2625 = vpop.permute.xlu0 %2624
  %v2628 = vunpack.c.l.b16 %v1919
  %v2629 = vunpack.c.h.b16 %v1919
  %v2630 = vpack.c.b16 %v2628, %v2628
  %v2631 = vpack.c.b16 %v2629, %v2629
  %vm2633 = vcmask 719872
  %v2635 = vsel %vm2633, %v2631, 0
  %v2638 = vsel %vm459, %v2618, 0
  %v2641 = vsel %vm459, %v2619, 0
  %v2644 = vsel %vm459, %v2620, 0
  %v2647 = vsel %vm459, %v2621, 0
  %2649 = vmatprep.subr.bf16.mxu0 %v2567
  %2650 = vmatpush1.bf16.msra.mxu0 %v2566
  %2651 = vmatprep.subr.bf16.mxu0 %v2571
  %2652 = vmatpush1.bf16.msra.mxu0 %v2570
  %2653 = vmatprep.subr.bf16.mxu0 %v2575
  %2654 = vmatpush1.bf16.msra.mxu0 %v2574
  %2655 = vmatprep.subr.bf16.mxu0 %v2579
  %2656 = vmatpush1.bf16.msra.mxu0 %v2578
  %2657 = vmatprep.subr.bf16.mxu0 %v2583
  %2658 = vmatpush1.bf16.msra.mxu0 %v2582
  %2659 = vmatprep.subr.bf16.mxu0 %v2587
  %2660 = vmatpush1.bf16.msra.mxu0 %v2586
  %2661 = vmatprep.subr.bf16.mxu0 %v2591
  %2662 = vmatpush1.bf16.msra.mxu0 %v2590
  %2663 = vmatprep.subr.bf16.mxu0 %v2595
  %2664 = vmatpush1.bf16.msra.mxu0 %v2594
  %2665 = vmatprep.subr.bf16.mxu0 %v2599
  %2666 = vmatpush1.bf16.msra.mxu0 %v2598
  %2667 = vmatprep.subr.bf16.mxu0 %v2603
  %2668 = vmatpush1.bf16.msra.mxu0 %v2602
  %2669 = vmatprep.subr.bf16.mxu0 %v2607
  %2670 = vmatpush1.bf16.msra.mxu0 %v2606
  %2671 = vmatprep.subr.bf16.mxu0 %v2611
  %2672 = vmatpush1.bf16.msra.mxu0 %v2610
  %2673 = vmatprep.subr.bf16.mxu0 %v2615
  %2674 = vmatpush1.bf16.msra.mxu0 %v2614
  %2675 = vmatprep.subr.bf16.mxu0 %v2641
  %2676 = vmatpush1.bf16.msra.mxu0 %v2638
  %2677 = vmatprep.subr.bf16.mxu0 0
  %2678 = vmatpush1.bf16.msra.mxu0 0
  %2679 = vmatprep.subr.bf16.mxu0 0
  %2680 = vmatpush1.bf16.msra.mxu0 0
  %2681 = vmatprep.mubr.bf16.mxu0 %v2635
  %2682 = vmatmul.mubr.bf16.gmra.mrb[0].mxu0 %v2630
  %v2683 = vpop.f32.mrb[0].mxu0
  %v2684 = vadd.f32 %v2625, %v2683
  %v2685 = vpop.f32.mrb[0].mxu0
  %v2686 = vadd.f32 %v2625, %v2685
  %v2687 = vpop.f32.mrb[0].mxu0
  %v2688 = vpop.f32.mrb[0].mxu0
  %2689 = vdwg.mxu0
  %2690 = vmatprep.subr.bf16.mxu0 %v2569
  %2691 = vmatpush1.bf16.msra.mxu0 %v2568
  %2692 = vmatprep.subr.bf16.mxu0 %v2573
  %2693 = vmatpush1.bf16.msra.mxu0 %v2572
  %2694 = vmatprep.subr.bf16.mxu0 %v2577
  %2695 = vmatpush1.bf16.msra.mxu0 %v2576
  %2696 = vmatprep.subr.bf16.mxu0 %v2581
  %2697 = vmatpush1.bf16.msra.mxu0 %v2580
  %2698 = vmatprep.subr.bf16.mxu0 %v2585
  %2699 = vmatpush1.bf16.msra.mxu0 %v2584
  %2700 = vmatprep.subr.bf16.mxu0 %v2589
  %2701 = vmatpush1.bf16.msra.mxu0 %v2588
  %2702 = vmatprep.subr.bf16.mxu0 %v2593
  %2703 = vmatpush1.bf16.msra.mxu0 %v2592
  %2704 = vmatprep.subr.bf16.mxu0 %v2597
  %2705 = vmatpush1.bf16.msra.mxu0 %v2596
  %2706 = vmatprep.subr.bf16.mxu0 %v2601
  %2707 = vmatpush1.bf16.msra.mxu0 %v2600
  %2708 = vmatprep.subr.bf16.mxu0 %v2605
  %2709 = vmatpush1.bf16.msra.mxu0 %v2604
  %2710 = vmatprep.subr.bf16.mxu0 %v2609
  %2711 = vmatpush1.bf16.msra.mxu0 %v2608
  %2712 = vmatprep.subr.bf16.mxu0 %v2613
  %2713 = vmatpush1.bf16.msra.mxu0 %v2612
  %2714 = vmatprep.subr.bf16.mxu0 %v2617
  %2715 = vmatpush1.bf16.msra.mxu0 %v2616
  %2716 = vmatprep.subr.bf16.mxu0 %v2647
  %2717 = vmatpush1.bf16.msra.mxu0 %v2644
  %2718 = vmatprep.subr.bf16.mxu0 0
  %2719 = vmatpush1.bf16.msra.mxu0 0
  %2720 = vmatprep.subr.bf16.mxu0 0
  %2721 = vmatpush1.bf16.msra.mxu0 0
  %2722 = vmatprep.mubr.bf16.mxu0 %v2635
  %2723 = vmatmul.mubr.bf16.gmra.mrb[0].mxu0 %v2630
  %v2724 = vpop.f32.mrb[0].mxu0
  %v2725 = vadd.f32 %v2625, %v2724
  %v2726 = vpop.f32.mrb[0].mxu0
  %v2727 = vadd.f32 %v2625, %v2726
  %v2728 = vpop.f32.mrb[0].mxu0
  %v2729 = vpop.f32.mrb[0].mxu0
  %2730 = vdwg.mxu0
  %v2731 = vmax.f32 %v2684, 0.0
  %v2732 = vmax.f32 %v2686, 0.0
  %v2733 = vmax.f32 %v2725, 0.0
  %v2734 = vmax.f32 %v2727, 0.0
  %v2735 = vpack.c.bf16 %v2731, %v2731
  %v2736 = vpack.c.bf16 %v2732, %v2732
  %v2737 = vpack.c.bf16 %v2733, %v2733
  %v2738 = vpack.c.bf16 %v2734, %v2734
  %v2743 = vrot.slane %v2735, 4
  %v2744 = vrot.slane %v2736, 4
  %v2745 = vrot.slane %v2737, 4
  %v2746 = vrot.slane %v2738, 4
  %2751 = vst [vmem:[#allocation3 + $0x20] sm:$0xf0] %v2743
  %2752 = vst [vmem:[#allocation3 + $0x28] sm:$0xf0] %v2744
  %2753 = vst [vmem:[#allocation3 + $0x30] sm:$0xf0] %v2745
  %2754 = vst [vmem:[#allocation3 + $0x38] sm:$0xf0] %v2746
  %v2755 = vld [vmem:[#allocation3] sm:$0xff]
  %v2756 = vld [vmem:[#allocation3 + $0x8] sm:$0xff]
  %v2757 = vld [vmem:[#allocation3 + $0x10] sm:$0xff]
  %v2758 = vld [vmem:[#allocation3 + $0x18] sm:$0xff]
  %v2759 = vld [vmem:[#allocation3 + $0x20] sm:$0xff]
  %v2760 = vld [vmem:[#allocation3 + $0x28] sm:$0xff]
  %v2761 = vld [vmem:[#allocation3 + $0x30] sm:$0xff]
  %v2762 = vld [vmem:[#allocation3 + $0x38] sm:$0xff]
  %v2763 = vld [vmem:[%s2 + $0x50] sm:$0xf]
  %v2764 = vld [vmem:[%s3 + $0x30] sm:$0xff]
  %2766 = vset.pattern.permute.xlu0 0
  %2767 = vperm.xlu0 %2766, %v2764
  %v2768 = vpop.permute.xlu0 %2767
  %vm2770 = vcmask 261120
  %v2772 = vsel %vm2770, %v2763, 0
  %2774 = vmatprep.subr.bf16.mxu0 %v2756
  %2775 = vmatpush1.bf16.msra.mxu0 %v2755
  %2776 = vmatprep.subr.bf16.mxu0 %v2760
  %2777 = vmatpush1.bf16.msra.mxu0 %v2759
  %2778 = vmatprep.subr.bf16.mxu0 0
  %2779 = vmatpush1.bf16.msra.mxu0 0
  %2780 = vmatprep.subr.bf16.mxu0 0
  %2781 = vmatpush1.bf16.msra.mxu0 0
  %2782 = vmatprep.subr.bf16.mxu0 0
  %2783 = vmatpush1.bf16.msra.mxu0 0
  %2784 = vmatprep.subr.bf16.mxu0 0
  %2785 = vmatpush1.bf16.msra.mxu0 0
  %2786 = vmatprep.subr.bf16.mxu0 0
  %2787 = vmatpush1.bf16.msra.mxu0 0
  %2788 = vmatprep.subr.bf16.mxu0 0
  %2789 = vmatpush1.bf16.msra.mxu0 0
  %2790 = vmatprep.subr.bf16.mxu0 0
  %2791 = vmatpush1.bf16.msra.mxu0 0
  %2792 = vmatprep.subr.bf16.mxu0 0
  %2793 = vmatpush1.bf16.msra.mxu0 0
  %2794 = vmatprep.subr.bf16.mxu0 0
  %2795 = vmatpush1.bf16.msra.mxu0 0
  %2796 = vmatprep.subr.bf16.mxu0 0
  %2797 = vmatpush1.bf16.msra.mxu0 0
  %2798 = vmatprep.subr.bf16.mxu0 0
  %2799 = vmatpush1.bf16.msra.mxu0 0
  %2800 = vmatprep.subr.bf16.mxu0 0
  %2801 = vmatpush1.bf16.msra.mxu0 0
  %2802 = vmatprep.subr.bf16.mxu0 0
  %2803 = vmatpush1.bf16.msra.mxu0 0
  %2804 = vmatprep.subr.bf16.mxu0 0
  %2805 = vmatpush1.bf16.msra.mxu0 0
  %2806 = vmatprep.mubr.bf16.mxu0 0
  %2807 = vmatmul.mubr.bf16.gmra.mrb[0].mxu0 %v2772
  %v2808 = vpop.f32.mrb[0].mxu0
  %v2809 = vadd.f32 %v2768, %v2808
  %v2810 = vpop.f32.mrb[0].mxu0
  %v2811 = vadd.f32 %v2768, %v2810
  %v2812 = vpop.f32.mrb[0].mxu0
  %v2813 = vpop.f32.mrb[0].mxu0
  %2814 = vdwg.mxu0
  %2815 = vmatprep.subr.bf16.mxu0 %v2758
  %2816 = vmatpush1.bf16.msra.mxu0 %v2757
  %2817 = vmatprep.subr.bf16.mxu0 %v2762
  %2818 = vmatpush1.bf16.msra.mxu0 %v2761
  %2819 = vmatprep.subr.bf16.mxu0 0
  %2820 = vmatpush1.bf16.msra.mxu0 0
  %2821 = vmatprep.subr.bf16.mxu0 0
  %2822 = vmatpush1.bf16.msra.mxu0 0
  %2823 = vmatprep.subr.bf16.mxu0 0
  %2824 = vmatpush1.bf16.msra.mxu0 0
  %2825 = vmatprep.subr.bf16.mxu0 0
  %2826 = vmatpush1.bf16.msra.mxu0 0
  %2827 = vmatprep.subr.bf16.mxu0 0
  %2828 = vmatpush1.bf16.msra.mxu0 0
  %2829 = vmatprep.subr.bf16.mxu0 0
  %2830 = vmatpush1.bf16.msra.mxu0 0
  %2831 = vmatprep.subr.bf16.mxu0 0
  %2832 = vmatpush1.bf16.msra.mxu0 0
  %2833 = vmatprep.subr.bf16.mxu0 0
  %2834 = vmatpush1.bf16.msra.mxu0 0
  %2835 = vmatprep.subr.bf16.mxu0 0
  %2836 = vmatpush1.bf16.msra.mxu0 0
  %2837 = vmatprep.subr.bf16.mxu0 0
  %2838 = vmatpush1.bf16.msra.mxu0 0
  %2839 = vmatprep.subr.bf16.mxu0 0
  %2840 = vmatpush1.bf16.msra.mxu0 0
  %2841 = vmatprep.subr.bf16.mxu0 0
  %2842 = vmatpush1.bf16.msra.mxu0 0
  %2843 = vmatprep.subr.bf16.mxu0 0
  %2844 = vmatpush1.bf16.msra.mxu0 0
  %2845 = vmatprep.subr.bf16.mxu0 0
  %2846 = vmatpush1.bf16.msra.mxu0 0
  %2847 = vmatprep.mubr.bf16.mxu0 0
  %2848 = vmatmul.mubr.bf16.gmra.mrb[0].mxu0 %v2772
  %v2849 = vpop.f32.mrb[0].mxu0
  %v2850 = vadd.f32 %v2768, %v2849
  %v2851 = vpop.f32.mrb[0].mxu0
  %v2852 = vadd.f32 %v2768, %v2851
  %v2853 = vpop.f32.mrb[0].mxu0
  %v2854 = vpop.f32.mrb[0].mxu0
  %2855 = vdwg.mxu0
  %v2856 = vadd.f32 %v2809, %v974
  %v2857 = vadd.f32 %v2811, %v976
  %v2858 = vadd.f32 %v2850, %v1015
  %v2859 = vadd.f32 %v2852, %v1017
  %v2860 = vpack.c.bf16 %v2856, %v2856
  %v2861 = vpack.c.bf16 %v2857, %v2857
  %v2862 = vpack.c.bf16 %v2858, %v2858
  %v2863 = vpack.c.bf16 %v2859, %v2859
  %2864 = vst [vmem:[#allocation4] sm:$0xf] %v2860
  %2865 = vst [vmem:[#allocation4 + $0x8] sm:$0xf] %v2861
  %2866 = vst [vmem:[#allocation4 + $0x10] sm:$0xf] %v2862
  %2867 = vst [vmem:[#allocation4 + $0x18] sm:$0xf] %v2863
  %2868 = vst [vmem:[#allocation3] sm:$0xf] %v2860
  %2869 = vst [vmem:[#allocation3 + $0x8] sm:$0xf] %v2861
  %2870 = vst [vmem:[#allocation3 + $0x10] sm:$0xf] %v2862
  %2871 = vst [vmem:[#allocation3 + $0x18] sm:$0xf] %v2863
  %v2872 = vld [vmem:[#allocation3] sm:$0xf]
  %v2873 = vld [vmem:[#allocation3 + $0x8] sm:$0xf]
  %v2874 = vld [vmem:[#allocation3 + $0x10] sm:$0xf]
  %v2875 = vld [vmem:[#allocation3 + $0x18] sm:$0xf]
  %v2876 = vld [vmem:[%s2 + $0x60] sm:$0xf]
  %v2877 = vld [vmem:[%s3 + $0x38] sm:$0xff]
  %v2878 = vunpack.c.l.bf16 %v2872
  %v2879 = vunpack.c.l.bf16 %v2873
  %v2880 = vunpack.c.l.bf16 %v2874
  %v2881 = vunpack.c.l.bf16 %v2875
  %2882 = vrot.lane.b32.xlu0 %v2878, 17
  %v2883 = vpop.permute.xlu0 %2882
  %2884 = vrot.lane.b32.xlu0 %v2879, 17
  %v2885 = vpop.permute.xlu0 %2884
  %2886 = vrot.lane.b32.xlu0 %v2880, 17
  %v2887 = vpop.permute.xlu0 %2886
  %2888 = vrot.lane.b32.xlu0 %v2881, 17
  %v2889 = vpop.permute.xlu0 %2888
  %v2890 = vsel %vm44, %v2887, %v2889
  %v2891 = vsel %vm44, %v2885, %v2887
  %v2892 = vsel %vm44, %v2883, %v2885
  %v2893 = vsel %vm44, %v2889, %v2883
  %v2894 = vmul.f32 %v2893, %v52
  %v2895 = vmul.f32 %v2892, %v56
  %v2896 = vmul.f32 %v2891, %v60
  %v2897 = vmul.f32 %v2890, %v64
  %v2898 = vpack.c.bf16 %v2894, %v2894
  %v2899 = vpack.c.bf16 %v2895, %v2895
  %v2900 = vpack.c.bf16 %v2896, %v2896
  %v2901 = vpack.c.bf16 %v2897, %v2897
  %2902 = vst [vmem:[#allocation2] sm:$0xf] %v2898
  %2903 = vst [vmem:[#allocation2 + $0x8] sm:$0xf] %v2899
  %2904 = vst [vmem:[#allocation2 + $0x10] sm:$0xf] %v2900
  %2905 = vst [vmem:[#allocation2 + $0x18] sm:$0xf] %v2901
  %2906 = vrot.lane.b32.xlu0 %v2878, 16
  %v2907 = vpop.permute.xlu0 %2906
  %2908 = vrot.lane.b32.xlu0 %v2879, 16
  %v2909 = vpop.permute.xlu0 %2908
  %2910 = vrot.lane.b32.xlu0 %v2880, 16
  %v2911 = vpop.permute.xlu0 %2910
  %2912 = vrot.lane.b32.xlu0 %v2881, 16
  %v2913 = vpop.permute.xlu0 %2912
  %v2914 = vsel %vm85, %v2911, %v2913
  %v2915 = vsel %vm85, %v2909, %v2911
  %v2916 = vsel %vm85, %v2907, %v2909
  %v2917 = vsel %vm85, %v2913, %v2907
  %v2918 = vmul.f32 %v2917, %v93
  %v2919 = vmul.f32 %v2916, %v97
  %v2920 = vmul.f32 %v2915, %v101
  %v2921 = vmul.f32 %v2914, %v105
  %v2922 = vpack.c.bf16 %v2918, %v2918
  %v2923 = vpack.c.bf16 %v2919, %v2919
  %v2924 = vpack.c.bf16 %v2920, %v2920
  %v2925 = vpack.c.bf16 %v2921, %v2921
  %v2930 = vrot.slane %v2922, 4
  %v2931 = vrot.slane %v2923, 4
  %v2932 = vrot.slane %v2924, 4
  %v2933 = vrot.slane %v2925, 4
  %2938 = vst [vmem:[#allocation2] sm:$0xf0] %v2930
  %2939 = vst [vmem:[#allocation2 + $0x8] sm:$0xf0] %v2931
  %2940 = vst [vmem:[#allocation2 + $0x10] sm:$0xf0] %v2932
  %2941 = vst [vmem:[#allocation2 + $0x18] sm:$0xf0] %v2933
  %2942 = vrot.lane.b32.xlu0 %v2878, 15
  %v2943 = vpop.permute.xlu0 %2942
  %2944 = vrot.lane.b32.xlu0 %v2879, 15
  %v2945 = vpop.permute.xlu0 %2944
  %2946 = vrot.lane.b32.xlu0 %v2880, 15
  %v2947 = vpop.permute.xlu0 %2946
  %2948 = vrot.lane.b32.xlu0 %v2881, 15
  %v2949 = vpop.permute.xlu0 %2948
  %v2950 = vsel %vm138, %v2947, %v2949
  %v2951 = vsel %vm138, %v2945, %v2947
  %v2952 = vsel %vm138, %v2943, %v2945
  %v2953 = vsel %vm138, %v2949, %v2943
  %v2954 = vmul.f32 %v2953, %v146
  %v2955 = vmul.f32 %v2952, %v150
  %v2956 = vmul.f32 %v2951, %v154
  %v2957 = vmul.f32 %v2950, %v158
  %v2958 = vpack.c.bf16 %v2954, %v2954
  %v2959 = vpack.c.bf16 %v2955, %v2955
  %v2960 = vpack.c.bf16 %v2956, %v2956
  %v2961 = vpack.c.bf16 %v2957, %v2957
  %2962 = vst [vmem:[#allocation2 + $0x20] sm:$0xf] %v2958
  %2963 = vst [vmem:[#allocation2 + $0x28] sm:$0xf] %v2959
  %2964 = vst [vmem:[#allocation2 + $0x30] sm:$0xf] %v2960
  %2965 = vst [vmem:[#allocation2 + $0x38] sm:$0xf] %v2961
  %2966 = vrot.lane.b32.xlu0 %v2878, 1
  %v2967 = vpop.permute.xlu0 %2966
  %2968 = vrot.lane.b32.xlu0 %v2879, 1
  %v2969 = vpop.permute.xlu0 %2968
  %2970 = vrot.lane.b32.xlu0 %v2880, 1
  %v2971 = vpop.permute.xlu0 %2970
  %2972 = vrot.lane.b32.xlu0 %v2881, 1
  %v2973 = vpop.permute.xlu0 %2972
  %v2974 = vsel %vm179, %v2971, %v2973
  %v2975 = vsel %vm179, %v2969, %v2971
  %v2976 = vsel %vm179, %v2967, %v2969
  %v2977 = vsel %vm179, %v2973, %v2967
  %v2978 = vmul.f32 %v2977, %v187
  %v2979 = vmul.f32 %v2976, %v191
  %v2980 = vmul.f32 %v2975, %v195
  %v2981 = vmul.f32 %v2974, %v199
  %v2982 = vpack.c.bf16 %v2978, %v2978
  %v2983 = vpack.c.bf16 %v2979, %v2979
  %v2984 = vpack.c.bf16 %v2980, %v2980
  %v2985 = vpack.c.bf16 %v2981, %v2981
  %v2990 = vrot.slane %v2982, 4
  %v2991 = vrot.slane %v2983, 4
  %v2992 = vrot.slane %v2984, 4
  %v2993 = vrot.slane %v2985, 4
  %2998 = vst [vmem:[#allocation2 + $0x20] sm:$0xf0] %v2990
  %2999 = vst [vmem:[#allocation2 + $0x28] sm:$0xf0] %v2991
  %3000 = vst [vmem:[#allocation2 + $0x30] sm:$0xf0] %v2992
  %3001 = vst [vmem:[#allocation2 + $0x38] sm:$0xf0] %v2993
  %3002 = vst [vmem:[#allocation2 + $0x40] sm:$0xf] %v2872
  %3003 = vst [vmem:[#allocation2 + $0x48] sm:$0xf] %v2873
  %3004 = vst [vmem:[#allocation2 + $0x50] sm:$0xf] %v2874
  %3005 = vst [vmem:[#allocation2 + $0x58] sm:$0xf] %v2875
  %3006 = vrot.lane.b32.xlu0 %v2878, 127
  %v3007 = vpop.permute.xlu0 %3006
  %3008 = vrot.lane.b32.xlu0 %v2879, 127
  %v3009 = vpop.permute.xlu0 %3008
  %3010 = vrot.lane.b32.xlu0 %v2880, 127
  %v3011 = vpop.permute.xlu0 %3010
  %3012 = vrot.lane.b32.xlu0 %v2881, 127
  %v3013 = vpop.permute.xlu0 %3012
  %v3014 = vsel %vm240, %v3011, %v3013
  %v3015 = vsel %vm240, %v3009, %v3011
  %v3016 = vsel %vm240, %v3007, %v3009
  %v3017 = vsel %vm240, %v3013, %v3007
  %v3018 = vmul.f32 %v3016, %v248
  %v3019 = vmul.f32 %v3015, %v252
  %v3020 = vmul.f32 %v3014, %v256
  %v3021 = vmul.f32 %v3017, %v260
  %v3022 = vpack.c.bf16 %v3018, %v3018
  %v3023 = vpack.c.bf16 %v3019, %v3019
  %v3024 = vpack.c.bf16 %v3020, %v3020
  %v3025 = vpack.c.bf16 %v3021, %v3021
  %v3030 = vrot.slane %v3022, 4
  %v3031 = vrot.slane %v3023, 4
  %v3032 = vrot.slane %v3024, 4
  %v3033 = vrot.slane %v3025, 4
  %3038 = vst [vmem:[#allocation2 + $0x40] sm:$0xf0] %v3030
  %3039 = vst [vmem:[#allocation2 + $0x48] sm:$0xf0] %v3031
  %3040 = vst [vmem:[#allocation2 + $0x50] sm:$0xf0] %v3032
  %3041 = vst [vmem:[#allocation2 + $0x58] sm:$0xf0] %v3033
  %3042 = vrot.lane.b32.xlu0 %v2878, 113
  %v3043 = vpop.permute.xlu0 %3042
  %3044 = vrot.lane.b32.xlu0 %v2879, 113
  %v3045 = vpop.permute.xlu0 %3044
  %3046 = vrot.lane.b32.xlu0 %v2880, 113
  %v3047 = vpop.permute.xlu0 %3046
  %3048 = vrot.lane.b32.xlu0 %v2881, 113
  %v3049 = vpop.permute.xlu0 %3048
  %v3050 = vsel %vm293, %v3047, %v3049
  %v3051 = vsel %vm293, %v3045, %v3047
  %v3052 = vsel %vm293, %v3043, %v3045
  %v3053 = vsel %vm293, %v3049, %v3043
  %v3054 = vmul.f32 %v3052, %v301
  %v3055 = vmul.f32 %v3051, %v305
  %v3056 = vmul.f32 %v3050, %v309
  %v3057 = vmul.f32 %v3053, %v313
  %v3058 = vpack.c.bf16 %v3054, %v3054
  %v3059 = vpack.c.bf16 %v3055, %v3055
  %v3060 = vpack.c.bf16 %v3056, %v3056
  %v3061 = vpack.c.bf16 %v3057, %v3057
  %3062 = vst [vmem:[#allocation2 + $0x60] sm:$0xf] %v3058
  %3063 = vst [vmem:[#allocation2 + $0x68] sm:$0xf] %v3059
  %3064 = vst [vmem:[#allocation2 + $0x70] sm:$0xf] %v3060
  %3065 = vst [vmem:[#allocation2 + $0x78] sm:$0xf] %v3061
  %3066 = vrot.lane.b32.xlu0 %v2878, 112
  %v3067 = vpop.permute.xlu0 %3066
  %3068 = vrot.lane.b32.xlu0 %v2879, 112
  %v3069 = vpop.permute.xlu0 %3068
  %3070 = vrot.lane.b32.xlu0 %v2880, 112
  %v3071 = vpop.permute.xlu0 %3070
  %3072 = vrot.lane.b32.xlu0 %v2881, 112
  %v3073 = vpop.permute.xlu0 %3072
  %v3074 = vsel %vm334, %v3071, %v3073
  %v3075 = vsel %vm334, %v3069, %v3071
  %v3076 = vsel %vm334, %v3067, %v3069
  %v3077 = vsel %vm334, %v3073, %v3067
  %v3078 = vmul.f32 %v3076, %v342
  %v3079 = vmul.f32 %v3075, %v346
  %v3080 = vmul.f32 %v3074, %v350
  %v3081 = vmul.f32 %v3077, %v354
  %v3082 = vpack.c.bf16 %v3078, %v3078
  %v3083 = vpack.c.bf16 %v3079, %v3079
  %v3084 = vpack.c.bf16 %v3080, %v3080
  %v3085 = vpack.c.bf16 %v3081, %v3081
  %v3090 = vrot.slane %v3082, 4
  %v3091 = vrot.slane %v3083, 4
  %v3092 = vrot.slane %v3084, 4
  %v3093 = vrot.slane %v3085, 4
  %3098 = vst [vmem:[#allocation2 + $0x60] sm:$0xf0] %v3090
  %3099 = vst [vmem:[#allocation2 + $0x68] sm:$0xf0] %v3091
  %3100 = vst [vmem:[#allocation2 + $0x70] sm:$0xf0] %v3092
  %3101 = vst [vmem:[#allocation2 + $0x78] sm:$0xf0] %v3093
  %3102 = vrot.lane.b32.xlu0 %v2878, 111
  %v3103 = vpop.permute.xlu0 %3102
  %3104 = vrot.lane.b32.xlu0 %v2879, 111
  %v3105 = vpop.permute.xlu0 %3104
  %3106 = vrot.lane.b32.xlu0 %v2880, 111
  %v3107 = vpop.permute.xlu0 %3106
  %3108 = vrot.lane.b32.xlu0 %v2881, 111
  %v3109 = vpop.permute.xlu0 %3108
  %v3110 = vsel %vm387, %v3107, %v3109
  %v3111 = vsel %vm387, %v3105, %v3107
  %v3112 = vsel %vm387, %v3103, %v3105
  %v3113 = vsel %vm387, %v3109, %v3103
  %v3114 = vmul.f32 %v3112, %v395
  %v3115 = vmul.f32 %v3111, %v399
  %v3116 = vmul.f32 %v3110, %v403
  %v3117 = vmul.f32 %v3113, %v407
  %v3118 = vpack.c.bf16 %v3114, %v3114
  %v3119 = vpack.c.bf16 %v3115, %v3115
  %v3120 = vpack.c.bf16 %v3116, %v3116
  %v3121 = vpack.c.bf16 %v3117, %v3117
  %3122 = vst [vmem:[#allocation2 + $0x80] sm:$0xf] %v3118
  %3123 = vst [vmem:[#allocation2 + $0x88] sm:$0xf] %v3119
  %3124 = vst [vmem:[#allocation2 + $0x90] sm:$0xf] %v3120
  %3125 = vst [vmem:[#allocation2 + $0x98] sm:$0xf] %v3121
  %v3126 = vld [vmem:[#allocation2] sm:$0xff]
  %v3127 = vld [vmem:[#allocation2 + $0x8] sm:$0xff]
  %v3128 = vld [vmem:[#allocation2 + $0x10] sm:$0xff]
  %v3129 = vld [vmem:[#allocation2 + $0x18] sm:$0xff]
  %v3130 = vld [vmem:[#allocation2 + $0x20] sm:$0xff]
  %v3131 = vld [vmem:[#allocation2 + $0x28] sm:$0xff]
  %v3132 = vld [vmem:[#allocation2 + $0x30] sm:$0xff]
  %v3133 = vld [vmem:[#allocation2 + $0x38] sm:$0xff]
  %v3134 = vld [vmem:[#allocation2 + $0x40] sm:$0xff]
  %v3135 = vld [vmem:[#allocation2 + $0x48] sm:$0xff]
  %v3136 = vld [vmem:[#allocation2 + $0x50] sm:$0xff]
  %v3137 = vld [vmem:[#allocation2 + $0x58] sm:$0xff]
  %v3138 = vld [vmem:[#allocation2 + $0x60] sm:$0xff]
  %v3139 = vld [vmem:[#allocation2 + $0x68] sm:$0xff]
  %v3140 = vld [vmem:[#allocation2 + $0x70] sm:$0xff]
  %v3141 = vld [vmem:[#allocation2 + $0x78] sm:$0xff]
  %v3142 = vld [vmem:[#allocation2 + $0x80] sm:$0xf]
  %v3143 = vld [vmem:[#allocation2 + $0x88] sm:$0xf]
  %v3144 = vld [vmem:[#allocation2 + $0x90] sm:$0xf]
  %v3145 = vld [vmem:[#allocation2 + $0x98] sm:$0xf]
  %3147 = vset.pattern.permute.xlu0 0
  %3148 = vperm.xlu0 %3147, %v2877
  %v3149 = vpop.permute.xlu0 %3148
  %v3152 = vsel %vm455, %v2876, 0
  %v3155 = vsel %vm459, %v3142, 0
  %v3158 = vsel %vm459, %v3143, 0
  %v3161 = vsel %vm459, %v3144, 0
  %v3164 = vsel %vm459, %v3145, 0
  %3166 = vmatprep.subr.bf16.mxu0 %v3127
  %3167 = vmatpush1.bf16.msra.mxu0 %v3126
  %3168 = vmatprep.subr.bf16.mxu0 %v3131
  %3169 = vmatpush1.bf16.msra.mxu0 %v3130
  %3170 = vmatprep.subr.bf16.mxu0 %v3135
  %3171 = vmatpush1.bf16.msra.mxu0 %v3134
  %3172 = vmatprep.subr.bf16.mxu0 %v3139
  %3173 = vmatpush1.bf16.msra.mxu0 %v3138
  %3174 = vmatprep.subr.bf16.mxu0 %v3158
  %3175 = vmatpush1.bf16.msra.mxu0 %v3155
  %3176 = vmatprep.subr.bf16.mxu0 0
  %3177 = vmatpush1.bf16.msra.mxu0 0
  %3178 = vmatprep.subr.bf16.mxu0 0
  %3179 = vmatpush1.bf16.msra.mxu0 0
  %3180 = vmatprep.subr.bf16.mxu0 0
  %3181 = vmatpush1.bf16.msra.mxu0 0
  %3182 = vmatprep.subr.bf16.mxu0 0
  %3183 = vmatpush1.bf16.msra.mxu0 0
  %3184 = vmatprep.subr.bf16.mxu0 0
  %3185 = vmatpush1.bf16.msra.mxu0 0
  %3186 = vmatprep.subr.bf16.mxu0 0
  %3187 = vmatpush1.bf16.msra.mxu0 0
  %3188 = vmatprep.subr.bf16.mxu0 0
  %3189 = vmatpush1.bf16.msra.mxu0 0
  %3190 = vmatprep.subr.bf16.mxu0 0
  %3191 = vmatpush1.bf16.msra.mxu0 0
  %3192 = vmatprep.subr.bf16.mxu0 0
  %3193 = vmatpush1.bf16.msra.mxu0 0
  %3194 = vmatprep.subr.bf16.mxu0 0
  %3195 = vmatpush1.bf16.msra.mxu0 0
  %3196 = vmatprep.subr.bf16.mxu0 0
  %3197 = vmatpush1.bf16.msra.mxu0 0
  %3198 = vmatprep.mubr.bf16.mxu0 0
  %3199 = vmatmul.mubr.bf16.gmra.mrb[0].mxu0 %v3152
  %v3200 = vpop.f32.mrb[0].mxu0
  %v3201 = vadd.f32 %v3149, %v3200
  %v3202 = vpop.f32.mrb[0].mxu0
  %v3203 = vadd.f32 %v3149, %v3202
  %v3204 = vpop.f32.mrb[0].mxu0
  %v3205 = vpop.f32.mrb[0].mxu0
  %3206 = vdwg.mxu0
  %3207 = vmatprep.subr.bf16.mxu0 %v3129
  %3208 = vmatpush1.bf16.msra.mxu0 %v3128
  %3209 = vmatprep.subr.bf16.mxu0 %v3133
  %3210 = vmatpush1.bf16.msra.mxu0 %v3132
  %3211 = vmatprep.subr.bf16.mxu0 %v3137
  %3212 = vmatpush1.bf16.msra.mxu0 %v3136
  %3213 = vmatprep.subr.bf16.mxu0 %v3141
  %3214 = vmatpush1.bf16.msra.mxu0 %v3140
  %3215 = vmatprep.subr.bf16.mxu0 %v3164
  %3216 = vmatpush1.bf16.msra.mxu0 %v3161
  %3217 = vmatprep.subr.bf16.mxu0 0
  %3218 = vmatpush1.bf16.msra.mxu0 0
  %3219 = vmatprep.subr.bf16.mxu0 0
  %3220 = vmatpush1.bf16.msra.mxu0 0
  %3221 = vmatprep.subr.bf16.mxu0 0
  %3222 = vmatpush1.bf16.msra.mxu0 0
  %3223 = vmatprep.subr.bf16.mxu0 0
  %3224 = vmatpush1.bf16.msra.mxu0 0
  %3225 = vmatprep.subr.bf16.mxu0 0
  %3226 = vmatpush1.bf16.msra.mxu0 0
  %3227 = vmatprep.subr.bf16.mxu0 0
  %3228 = vmatpush1.bf16.msra.mxu0 0
  %3229 = vmatprep.subr.bf16.mxu0 0
  %3230 = vmatpush1.bf16.msra.mxu0 0
  %3231 = vmatprep.subr.bf16.mxu0 0
  %3232 = vmatpush1.bf16.msra.mxu0 0
  %3233 = vmatprep.subr.bf16.mxu0 0
  %3234 = vmatpush1.bf16.msra.mxu0 0
  %3235 = vmatprep.subr.bf16.mxu0 0
  %3236 = vmatpush1.bf16.msra.mxu0 0
  %3237 = vmatprep.subr.bf16.mxu0 0
  %3238 = vmatpush1.bf16.msra.mxu0 0
  %3239 = vmatprep.mubr.bf16.mxu0 0
  %3240 = vmatmul.mubr.bf16.gmra.mrb[0].mxu0 %v3152
  %v3241 = vpop.f32.mrb[0].mxu0
  %v3242 = vadd.f32 %v3149, %v3241
  %v3243 = vpop.f32.mrb[0].mxu0
  %v3244 = vadd.f32 %v3149, %v3243
  %v3245 = vpop.f32.mrb[0].mxu0
  %v3246 = vpop.f32.mrb[0].mxu0
  %3247 = vdwg.mxu0
  %v3248 = vmax.f32 %v3201, 0.0
  %v3249 = vmax.f32 %v3203, 0.0
  %v3250 = vmax.f32 %v3242, 0.0
  %v3251 = vmax.f32 %v3244, 0.0
  %v3252 = vpack.c.bf16 %v3248, %v3248
  %v3253 = vpack.c.bf16 %v3249, %v3249
  %v3254 = vpack.c.bf16 %v3250, %v3250
  %v3255 = vpack.c.bf16 %v3251, %v3251
  %v3260 = vrot.slane %v3252, 4
  %v3261 = vrot.slane %v3253, 4
  %v3262 = vrot.slane %v3254, 4
  %v3263 = vrot.slane %v3255, 4
  %3268 = vst [vmem:[#allocation3] sm:$0xf0] %v3260
  %3269 = vst [vmem:[#allocation3 + $0x8] sm:$0xf0] %v3261
  %3270 = vst [vmem:[#allocation3 + $0x10] sm:$0xf0] %v3262
  %3271 = vst [vmem:[#allocation3 + $0x18] sm:$0xf0] %v3263
  %v3272 = vld [vmem:[#allocation3] sm:$0xff]
  %v3273 = vld [vmem:[#allocation3 + $0x8] sm:$0xff]
  %v3274 = vld [vmem:[#allocation3 + $0x10] sm:$0xff]
  %v3275 = vld [vmem:[#allocation3 + $0x18] sm:$0xff]
  %v3276 = vld [vmem:[%s2 + $0x70] sm:$0xff]
  %v3277 = vld [vmem:[%s3 + $0x40] sm:$0xff]
  %v3278 = vunpack.c.l.bf16 %v3272
  %v3279 = vunpack.c.l.bf16 %v3273
  %v3280 = vunpack.c.l.bf16 %v3274
  %v3281 = vunpack.c.l.bf16 %v3275
  %v3282 = vunpack.c.h.bf16 %v3272
  %v3283 = vunpack.c.h.bf16 %v3273
  %v3284 = vunpack.c.h.bf16 %v3274
  %v3285 = vunpack.c.h.bf16 %v3275
  %3286 = vrot.lane.b32.xlu0 %v3278, 17
  %v3287 = vpop.permute.xlu0 %3286
  %3288 = vrot.lane.b32.xlu0 %v3282, 17
  %v3289 = vpop.permute.xlu0 %3288
  %3290 = vrot.lane.b32.xlu0 %v3279, 17
  %v3291 = vpop.permute.xlu0 %3290
  %3292 = vrot.lane.b32.xlu0 %v3283, 17
  %v3293 = vpop.permute.xlu0 %3292
  %3294 = vrot.lane.b32.xlu0 %v3280, 17
  %v3295 = vpop.permute.xlu0 %3294
  %3296 = vrot.lane.b32.xlu0 %v3284, 17
  %v3297 = vpop.permute.xlu0 %3296
  %3298 = vrot.lane.b32.xlu0 %v3281, 17
  %v3299 = vpop.permute.xlu0 %3298
  %3300 = vrot.lane.b32.xlu0 %v3285, 17
  %v3301 = vpop.permute.xlu0 %3300
  %v3302 = vsel %vm44, %v3295, %v3299
  %v3303 = vsel %vm44, %v3297, %v3301
  %v3304 = vsel %vm44, %v3291, %v3295
  %v3305 = vsel %vm44, %v3293, %v3297
  %v3306 = vsel %vm44, %v3287, %v3291
  %v3307 = vsel %vm44, %v3289, %v3293
  %v3308 = vsel %vm44, %v3299, %v3287
  %v3309 = vsel %vm44, %v3301, %v3289
  %v3310 = vmul.f32 %v3308, %v52
  %v3311 = vmul.f32 %v3306, %v56
  %v3312 = vmul.f32 %v3304, %v60
  %v3313 = vmul.f32 %v3302, %v64
  %v3314 = vmul.f32 %v3309, %v52
  %v3315 = vmul.f32 %v3307, %v56
  %v3316 = vmul.f32 %v3305, %v60
  %v3317 = vmul.f32 %v3303, %v64
  %v3318 = vpack.c.bf16 %v3314, %v3310
  %v3319 = vpack.c.bf16 %v3315, %v3311
  %v3320 = vpack.c.bf16 %v3316, %v3312
  %v3321 = vpack.c.bf16 %v3317, %v3313
  %3322 = vst [vmem:[#allocation2] sm:$0xff] %v3318
  %3323 = vst [vmem:[#allocation2 + $0x8] sm:$0xff] %v3319
  %3324 = vst [vmem:[#allocation2 + $0x10] sm:$0xff] %v3320
  %3325 = vst [vmem:[#allocation2 + $0x18] sm:$0xff] %v3321
  %3326 = vrot.lane.b32.xlu0 %v3278, 16
  %v3327 = vpop.permute.xlu0 %3326
  %3328 = vrot.lane.b32.xlu0 %v3282, 16
  %v3329 = vpop.permute.xlu0 %3328
  %3330 = vrot.lane.b32.xlu0 %v3279, 16
  %v3331 = vpop.permute.xlu0 %3330
  %3332 = vrot.lane.b32.xlu0 %v3283, 16
  %v3333 = vpop.permute.xlu0 %3332
  %3334 = vrot.lane.b32.xlu0 %v3280, 16
  %v3335 = vpop.permute.xlu0 %3334
  %3336 = vrot.lane.b32.xlu0 %v3284, 16
  %v3337 = vpop.permute.xlu0 %3336
  %3338 = vrot.lane.b32.xlu0 %v3281, 16
  %v3339 = vpop.permute.xlu0 %3338
  %3340 = vrot.lane.b32.xlu0 %v3285, 16
  %v3341 = vpop.permute.xlu0 %3340
  %v3342 = vsel %vm85, %v3335, %v3339
  %v3343 = vsel %vm85, %v3337, %v3341
  %v3344 = vsel %vm85, %v3331, %v3335
  %v3345 = vsel %vm85, %v3333, %v3337
  %v3346 = vsel %vm85, %v3327, %v3331
  %v3347 = vsel %vm85, %v3329, %v3333
  %v3348 = vsel %vm85, %v3339, %v3327
  %v3349 = vsel %vm85, %v3341, %v3329
  %v3350 = vmul.f32 %v3348, %v93
  %v3351 = vmul.f32 %v3346, %v97
  %v3352 = vmul.f32 %v3344, %v101
  %v3353 = vmul.f32 %v3342, %v105
  %v3354 = vmul.f32 %v3349, %v93
  %v3355 = vmul.f32 %v3347, %v97
  %v3356 = vmul.f32 %v3345, %v101
  %v3357 = vmul.f32 %v3343, %v105
  %v3358 = vpack.c.bf16 %v3354, %v3350
  %v3359 = vpack.c.bf16 %v3355, %v3351
  %v3360 = vpack.c.bf16 %v3356, %v3352
  %v3361 = vpack.c.bf16 %v3357, %v3353
  %3362 = vst [vmem:[#allocation2 + $0x20] sm:$0xff] %v3358
  %3363 = vst [vmem:[#allocation2 + $0x28] sm:$0xff] %v3359
  %3364 = vst [vmem:[#allocation2 + $0x30] sm:$0xff] %v3360
  %3365 = vst [vmem:[#allocation2 + $0x38] sm:$0xff] %v3361
  %3366 = vrot.lane.b32.xlu0 %v3278, 15
  %v3367 = vpop.permute.xlu0 %3366
  %3368 = vrot.lane.b32.xlu0 %v3282, 15
  %v3369 = vpop.permute.xlu0 %3368
  %3370 = vrot.lane.b32.xlu0 %v3279, 15
  %v3371 = vpop.permute.xlu0 %3370
  %3372 = vrot.lane.b32.xlu0 %v3283, 15
  %v3373 = vpop.permute.xlu0 %3372
  %3374 = vrot.lane.b32.xlu0 %v3280, 15
  %v3375 = vpop.permute.xlu0 %3374
  %3376 = vrot.lane.b32.xlu0 %v3284, 15
  %v3377 = vpop.permute.xlu0 %3376
  %3378 = vrot.lane.b32.xlu0 %v3281, 15
  %v3379 = vpop.permute.xlu0 %3378
  %3380 = vrot.lane.b32.xlu0 %v3285, 15
  %v3381 = vpop.permute.xlu0 %3380
  %v3382 = vsel %vm138, %v3375, %v3379
  %v3383 = vsel %vm138, %v3377, %v3381
  %v3384 = vsel %vm138, %v3371, %v3375
  %v3385 = vsel %vm138, %v3373, %v3377
  %v3386 = vsel %vm138, %v3367, %v3371
  %v3387 = vsel %vm138, %v3369, %v3373
  %v3388 = vsel %vm138, %v3379, %v3367
  %v3389 = vsel %vm138, %v3381, %v3369
  %v3390 = vmul.f32 %v3388, %v146
  %v3391 = vmul.f32 %v3386, %v150
  %v3392 = vmul.f32 %v3384, %v154
  %v3393 = vmul.f32 %v3382, %v158
  %v3394 = vmul.f32 %v3389, %v146
  %v3395 = vmul.f32 %v3387, %v150
  %v3396 = vmul.f32 %v3385, %v154
  %v3397 = vmul.f32 %v3383, %v158
  %v3398 = vpack.c.bf16 %v3394, %v3390
  %v3399 = vpack.c.bf16 %v3395, %v3391
  %v3400 = vpack.c.bf16 %v3396, %v3392
  %v3401 = vpack.c.bf16 %v3397, %v3393
  %3402 = vst [vmem:[#allocation2 + $0x40] sm:$0xff] %v3398
  %3403 = vst [vmem:[#allocation2 + $0x48] sm:$0xff] %v3399
  %3404 = vst [vmem:[#allocation2 + $0x50] sm:$0xff] %v3400
  %3405 = vst [vmem:[#allocation2 + $0x58] sm:$0xff] %v3401
  %3406 = vrot.lane.b32.xlu0 %v3278, 1
  %v3407 = vpop.permute.xlu0 %3406
  %3408 = vrot.lane.b32.xlu0 %v3282, 1
  %v3409 = vpop.permute.xlu0 %3408
  %3410 = vrot.lane.b32.xlu0 %v3279, 1
  %v3411 = vpop.permute.xlu0 %3410
  %3412 = vrot.lane.b32.xlu0 %v3283, 1
  %v3413 = vpop.permute.xlu0 %3412
  %3414 = vrot.lane.b32.xlu0 %v3280, 1
  %v3415 = vpop.permute.xlu0 %3414
  %3416 = vrot.lane.b32.xlu0 %v3284, 1
  %v3417 = vpop.permute.xlu0 %3416
  %3418 = vrot.lane.b32.xlu0 %v3281, 1
  %v3419 = vpop.permute.xlu0 %3418
  %3420 = vrot.lane.b32.xlu0 %v3285, 1
  %v3421 = vpop.permute.xlu0 %3420
  %v3422 = vsel %vm179, %v3415, %v3419
  %v3423 = vsel %vm179, %v3417, %v3421
  %v3424 = vsel %vm179, %v3411, %v3415
  %v3425 = vsel %vm179, %v3413, %v3417
  %v3426 = vsel %vm179, %v3407, %v3411
  %v3427 = vsel %vm179, %v3409, %v3413
  %v3428 = vsel %vm179, %v3419, %v3407
  %v3429 = vsel %vm179, %v3421, %v3409
  %v3430 = vmul.f32 %v3428, %v187
  %v3431 = vmul.f32 %v3426, %v191
  %v3432 = vmul.f32 %v3424, %v195
  %v3433 = vmul.f32 %v3422, %v199
  %v3434 = vmul.f32 %v3429, %v187
  %v3435 = vmul.f32 %v3427, %v191
  %v3436 = vmul.f32 %v3425, %v195
  %v3437 = vmul.f32 %v3423, %v199
  %v3438 = vpack.c.bf16 %v3434, %v3430
  %v3439 = vpack.c.bf16 %v3435, %v3431
  %v3440 = vpack.c.bf16 %v3436, %v3432
  %v3441 = vpack.c.bf16 %v3437, %v3433
  %3442 = vst [vmem:[#allocation2 + $0x60] sm:$0xff] %v3438
  %3443 = vst [vmem:[#allocation2 + $0x68] sm:$0xff] %v3439
  %3444 = vst [vmem:[#allocation2 + $0x70] sm:$0xff] %v3440
  %3445 = vst [vmem:[#allocation2 + $0x78] sm:$0xff] %v3441
  %3446 = vst [vmem:[#allocation2 + $0x80] sm:$0xff] %v3272
  %3447 = vst [vmem:[#allocation2 + $0x88] sm:$0xff] %v3273
  %3448 = vst [vmem:[#allocation2 + $0x90] sm:$0xff] %v3274
  %3449 = vst [vmem:[#allocation2 + $0x98] sm:$0xff] %v3275
  %3450 = vrot.lane.b32.xlu0 %v3278, 127
  %v3451 = vpop.permute.xlu0 %3450
  %3452 = vrot.lane.b32.xlu0 %v3282, 127
  %v3453 = vpop.permute.xlu0 %3452
  %3454 = vrot.lane.b32.xlu0 %v3279, 127
  %v3455 = vpop.permute.xlu0 %3454
  %3456 = vrot.lane.b32.xlu0 %v3283, 127
  %v3457 = vpop.permute.xlu0 %3456
  %3458 = vrot.lane.b32.xlu0 %v3280, 127
  %v3459 = vpop.permute.xlu0 %3458
  %3460 = vrot.lane.b32.xlu0 %v3284, 127
  %v3461 = vpop.permute.xlu0 %3460
  %3462 = vrot.lane.b32.xlu0 %v3281, 127
  %v3463 = vpop.permute.xlu0 %3462
  %3464 = vrot.lane.b32.xlu0 %v3285, 127
  %v3465 = vpop.permute.xlu0 %3464
  %v3466 = vsel %vm240, %v3459, %v3463
  %v3467 = vsel %vm240, %v3461, %v3465
  %v3468 = vsel %vm240, %v3455, %v3459
  %v3469 = vsel %vm240, %v3457, %v3461
  %v3470 = vsel %vm240, %v3451, %v3455
  %v3471 = vsel %vm240, %v3453, %v3457
  %v3472 = vsel %vm240, %v3463, %v3451
  %v3473 = vsel %vm240, %v3465, %v3453
  %v3474 = vmul.f32 %v3470, %v248
  %v3475 = vmul.f32 %v3468, %v252
  %v3476 = vmul.f32 %v3466, %v256
  %v3477 = vmul.f32 %v3472, %v260
  %v3478 = vmul.f32 %v3471, %v248
  %v3479 = vmul.f32 %v3469, %v252
  %v3480 = vmul.f32 %v3467, %v256
  %v3481 = vmul.f32 %v3473, %v260
  %v3482 = vpack.c.bf16 %v3478, %v3474
  %v3483 = vpack.c.bf16 %v3479, %v3475
  %v3484 = vpack.c.bf16 %v3480, %v3476
  %v3485 = vpack.c.bf16 %v3481, %v3477
  %3486 = vst [vmem:[#allocation2 + $0xa0] sm:$0xff] %v3482
  %3487 = vst [vmem:[#allocation2 + $0xa8] sm:$0xff] %v3483
  %3488 = vst [vmem:[#allocation2 + $0xb0] sm:$0xff] %v3484
  %3489 = vst [vmem:[#allocation2 + $0xb8] sm:$0xff] %v3485
  %3490 = vrot.lane.b32.xlu0 %v3278, 113
  %v3491 = vpop.permute.xlu0 %3490
  %3492 = vrot.lane.b32.xlu0 %v3282, 113
  %v3493 = vpop.permute.xlu0 %3492
  %3494 = vrot.lane.b32.xlu0 %v3279, 113
  %v3495 = vpop.permute.xlu0 %3494
  %3496 = vrot.lane.b32.xlu0 %v3283, 113
  %v3497 = vpop.permute.xlu0 %3496
  %3498 = vrot.lane.b32.xlu0 %v3280, 113
  %v3499 = vpop.permute.xlu0 %3498
  %3500 = vrot.lane.b32.xlu0 %v3284, 113
  %v3501 = vpop.permute.xlu0 %3500
  %3502 = vrot.lane.b32.xlu0 %v3281, 113
  %v3503 = vpop.permute.xlu0 %3502
  %3504 = vrot.lane.b32.xlu0 %v3285, 113
  %v3505 = vpop.permute.xlu0 %3504
  %v3506 = vsel %vm293, %v3499, %v3503
  %v3507 = vsel %vm293, %v3501, %v3505
  %v3508 = vsel %vm293, %v3495, %v3499
  %v3509 = vsel %vm293, %v3497, %v3501
  %v3510 = vsel %vm293, %v3491, %v3495
  %v3511 = vsel %vm293, %v3493, %v3497
  %v3512 = vsel %vm293, %v3503, %v3491
  %v3513 = vsel %vm293, %v3505, %v3493
  %v3514 = vmul.f32 %v3510, %v301
  %v3515 = vmul.f32 %v3508, %v305
  %v3516 = vmul.f32 %v3506, %v309
  %v3517 = vmul.f32 %v3512, %v313
  %v3518 = vmul.f32 %v3511, %v301
  %v3519 = vmul.f32 %v3509, %v305
  %v3520 = vmul.f32 %v3507, %v309
  %v3521 = vmul.f32 %v3513, %v313
  %v3522 = vpack.c.bf16 %v3518, %v3514
  %v3523 = vpack.c.bf16 %v3519, %v3515
  %v3524 = vpack.c.bf16 %v3520, %v3516
  %v3525 = vpack.c.bf16 %v3521, %v3517
  %3526 = vst [vmem:[#allocation2 + $0xc0] sm:$0xff] %v3522
  %3527 = vst [vmem:[#allocation2 + $0xc8] sm:$0xff] %v3523
  %3528 = vst [vmem:[#allocation2 + $0xd0] sm:$0xff] %v3524
  %3529 = vst [vmem:[#allocation2 + $0xd8] sm:$0xff] %v3525
  %3530 = vrot.lane.b32.xlu0 %v3278, 112
  %v3531 = vpop.permute.xlu0 %3530
  %3532 = vrot.lane.b32.xlu0 %v3282, 112
  %v3533 = vpop.permute.xlu0 %3532
  %3534 = vrot.lane.b32.xlu0 %v3279, 112
  %v3535 = vpop.permute.xlu0 %3534
  %3536 = vrot.lane.b32.xlu0 %v3283, 112
  %v3537 = vpop.permute.xlu0 %3536
  %3538 = vrot.lane.b32.xlu0 %v3280, 112
  %v3539 = vpop.permute.xlu0 %3538
  %3540 = vrot.lane.b32.xlu0 %v3284, 112
  %v3541 = vpop.permute.xlu0 %3540
  %3542 = vrot.lane.b32.xlu0 %v3281, 112
  %v3543 = vpop.permute.xlu0 %3542
  %3544 = vrot.lane.b32.xlu0 %v3285, 112
  %v3545 = vpop.permute.xlu0 %3544
  %v3546 = vsel %vm334, %v3539, %v3543
  %v3547 = vsel %vm334, %v3541, %v3545
  %v3548 = vsel %vm334, %v3535, %v3539
  %v3549 = vsel %vm334, %v3537, %v3541
  %v3550 = vsel %vm334, %v3531, %v3535
  %v3551 = vsel %vm334, %v3533, %v3537
  %v3552 = vsel %vm334, %v3543, %v3531
  %v3553 = vsel %vm334, %v3545, %v3533
  %v3554 = vmul.f32 %v3550, %v342
  %v3555 = vmul.f32 %v3548, %v346
  %v3556 = vmul.f32 %v3546, %v350
  %v3557 = vmul.f32 %v3552, %v354
  %v3558 = vmul.f32 %v3551, %v342
  %v3559 = vmul.f32 %v3549, %v346
  %v3560 = vmul.f32 %v3547, %v350
  %v3561 = vmul.f32 %v3553, %v354
  %v3562 = vpack.c.bf16 %v3558, %v3554
  %v3563 = vpack.c.bf16 %v3559, %v3555
  %v3564 = vpack.c.bf16 %v3560, %v3556
  %v3565 = vpack.c.bf16 %v3561, %v3557
  %3566 = vst [vmem:[#allocation2 + $0xe0] sm:$0xff] %v3562
  %3567 = vst [vmem:[#allocation2 + $0xe8] sm:$0xff] %v3563
  %3568 = vst [vmem:[#allocation2 + $0xf0] sm:$0xff] %v3564
  %3569 = vst [vmem:[#allocation2 + $0xf8] sm:$0xff] %v3565
  %3570 = vrot.lane.b32.xlu0 %v3278, 111
  %v3571 = vpop.permute.xlu0 %3570
  %3572 = vrot.lane.b32.xlu0 %v3282, 111
  %v3573 = vpop.permute.xlu0 %3572
  %3574 = vrot.lane.b32.xlu0 %v3279, 111
  %v3575 = vpop.permute.xlu0 %3574
  %3576 = vrot.lane.b32.xlu0 %v3283, 111
  %v3577 = vpop.permute.xlu0 %3576
  %3578 = vrot.lane.b32.xlu0 %v3280, 111
  %v3579 = vpop.permute.xlu0 %3578
  %3580 = vrot.lane.b32.xlu0 %v3284, 111
  %v3581 = vpop.permute.xlu0 %3580
  %3582 = vrot.lane.b32.xlu0 %v3281, 111
  %v3583 = vpop.permute.xlu0 %3582
  %3584 = vrot.lane.b32.xlu0 %v3285, 111
  %v3585 = vpop.permute.xlu0 %3584
  %v3586 = vsel %vm387, %v3579, %v3583
  %v3587 = vsel %vm387, %v3581, %v3585
  %v3588 = vsel %vm387, %v3575, %v3579
  %v3589 = vsel %vm387, %v3577, %v3581
  %v3590 = vsel %vm387, %v3571, %v3575
  %v3591 = vsel %vm387, %v3573, %v3577
  %v3592 = vsel %vm387, %v3583, %v3571
  %v3593 = vsel %vm387, %v3585, %v3573
  %v3594 = vmul.f32 %v3590, %v395
  %v3595 = vmul.f32 %v3588, %v399
  %v3596 = vmul.f32 %v3586, %v403
  %v3597 = vmul.f32 %v3592, %v407
  %v3598 = vmul.f32 %v3591, %v395
  %v3599 = vmul.f32 %v3589, %v399
  %v3600 = vmul.f32 %v3587, %v403
  %v3601 = vmul.f32 %v3593, %v407
  %v3602 = vpack.c.bf16 %v3598, %v3594
  %v3603 = vpack.c.bf16 %v3599, %v3595
  %v3604 = vpack.c.bf16 %v3600, %v3596
  %v3605 = vpack.c.bf16 %v3601, %v3597
  %3606 = vst [vmem:[#allocation2 + $0x100] sm:$0xff] %v3602
  %3607 = vst [vmem:[#allocation2 + $0x108] sm:$0xff] %v3603
  %3608 = vst [vmem:[#allocation2 + $0x110] sm:$0xff] %v3604
  %3609 = vst [vmem:[#allocation2 + $0x118] sm:$0xff] %v3605
  %v3610 = vld [vmem:[#allocation2] sm:$0xff]
  %v3611 = vld [vmem:[#allocation2 + $0x8] sm:$0xff]
  %v3612 = vld [vmem:[#allocation2 + $0x10] sm:$0xff]
  %v3613 = vld [vmem:[#allocation2 + $0x18] sm:$0xff]
  %v3614 = vld [vmem:[#allocation2 + $0x20] sm:$0xff]
  %v3615 = vld [vmem:[#allocation2 + $0x28] sm:$0xff]
  %v3616 = vld [vmem:[#allocation2 + $0x30] sm:$0xff]
  %v3617 = vld [vmem:[#allocation2 + $0x38] sm:$0xff]
  %v3618 = vld [vmem:[#allocation2 + $0x40] sm:$0xff]
  %v3619 = vld [vmem:[#allocation2 + $0x48] sm:$0xff]
  %v3620 = vld [vmem:[#allocation2 + $0x50] sm:$0xff]
  %v3621 = vld [vmem:[#allocation2 + $0x58] sm:$0xff]
  %v3622 = vld [vmem:[#allocation2 + $0x60] sm:$0xff]
  %v3623 = vld [vmem:[#allocation2 + $0x68] sm:$0xff]
  %v3624 = vld [vmem:[#allocation2 + $0x70] sm:$0xff]
  %v3625 = vld [vmem:[#allocation2 + $0x78] sm:$0xff]
  %v3626 = vld [vmem:[#allocation2 + $0x80] sm:$0xff]
  %v3627 = vld [vmem:[#allocation2 + $0x88] sm:$0xff]
  %v3628 = vld [vmem:[#allocation2 + $0x90] sm:$0xff]
  %v3629 = vld [vmem:[#allocation2 + $0x98] sm:$0xff]
  %v3630 = vld [vmem:[#allocation2 + $0xa0] sm:$0xff]
  %v3631 = vld [vmem:[#allocation2 + $0xa8] sm:$0xff]
  %v3632 = vld [vmem:[#allocation2 + $0xb0] sm:$0xff]
  %v3633 = vld [vmem:[#allocation2 + $0xb8] sm:$0xff]
  %v3634 = vld [vmem:[#allocation2 + $0xc0] sm:$0xff]
  %v3635 = vld [vmem:[#allocation2 + $0xc8] sm:$0xff]
  %v3636 = vld [vmem:[#allocation2 + $0xd0] sm:$0xff]
  %v3637 = vld [vmem:[#allocation2 + $0xd8] sm:$0xff]
  %v3638 = vld [vmem:[#allocation2 + $0xe0] sm:$0xff]
  %v3639 = vld [vmem:[#allocation2 + $0xe8] sm:$0xff]
  %v3640 = vld [vmem:[#allocation2 + $0xf0] sm:$0xff]
  %v3641 = vld [vmem:[#allocation2 + $0xf8] sm:$0xff]
  %v3642 = vld [vmem:[#allocation2 + $0x100] sm:$0xff]
  %v3643 = vld [vmem:[#allocation2 + $0x108] sm:$0xff]
  %v3644 = vld [vmem:[#allocation2 + $0x110] sm:$0xff]
  %v3645 = vld [vmem:[#allocation2 + $0x118] sm:$0xff]
  %3647 = vset.pattern.permute.xlu0 0
  %3648 = vperm.xlu0 %3647, %v3277
  %v3649 = vpop.permute.xlu0 %3648
  %v3652 = vunpack.c.l.b16 %v3276
  %v3653 = vunpack.c.h.b16 %v3276
  %v3654 = vpack.c.b16 %v3652, %v3652
  %v3655 = vpack.c.b16 %v3653, %v3653
  %v3658 = vsel %vm935, %v3655, 0
  %3660 = vmatprep.subr.bf16.mxu0 %v3611
  %3661 = vmatpush1.bf16.msra.mxu0 %v3610
  %3662 = vmatprep.subr.bf16.mxu0 %v3615
  %3663 = vmatpush1.bf16.msra.mxu0 %v3614
  %3664 = vmatprep.subr.bf16.mxu0 %v3619
  %3665 = vmatpush1.bf16.msra.mxu0 %v3618
  %3666 = vmatprep.subr.bf16.mxu0 %v3623
  %3667 = vmatpush1.bf16.msra.mxu0 %v3622
  %3668 = vmatprep.subr.bf16.mxu0 %v3627
  %3669 = vmatpush1.bf16.msra.mxu0 %v3626
  %3670 = vmatprep.subr.bf16.mxu0 %v3631
  %3671 = vmatpush1.bf16.msra.mxu0 %v3630
  %3672 = vmatprep.subr.bf16.mxu0 %v3635
  %3673 = vmatpush1.bf16.msra.mxu0 %v3634
  %3674 = vmatprep.subr.bf16.mxu0 %v3639
  %3675 = vmatpush1.bf16.msra.mxu0 %v3638
  %3676 = vmatprep.subr.bf16.mxu0 %v3643
  %3677 = vmatpush1.bf16.msra.mxu0 %v3642
  %3678 = vmatprep.subr.bf16.mxu0 0
  %3679 = vmatpush1.bf16.msra.mxu0 0
  %3680 = vmatprep.subr.bf16.mxu0 0
  %3681 = vmatpush1.bf16.msra.mxu0 0
  %3682 = vmatprep.subr.bf16.mxu0 0
  %3683 = vmatpush1.bf16.msra.mxu0 0
  %3684 = vmatprep.subr.bf16.mxu0 0
  %3685 = vmatpush1.bf16.msra.mxu0 0
  %3686 = vmatprep.subr.bf16.mxu0 0
  %3687 = vmatpush1.bf16.msra.mxu0 0
  %3688 = vmatprep.subr.bf16.mxu0 0
  %3689 = vmatpush1.bf16.msra.mxu0 0
  %3690 = vmatprep.subr.bf16.mxu0 0
  %3691 = vmatpush1.bf16.msra.mxu0 0
  %3692 = vmatprep.mubr.bf16.mxu0 %v3658
  %3693 = vmatmul.mubr.bf16.gmra.mrb[0].mxu0 %v3654
  %v3694 = vpop.f32.mrb[0].mxu0
  %v3695 = vadd.f32 %v3649, %v3694
  %v3696 = vpop.f32.mrb[0].mxu0
  %v3697 = vadd.f32 %v3649, %v3696
  %v3698 = vpop.f32.mrb[0].mxu0
  %v3699 = vpop.f32.mrb[0].mxu0
  %3700 = vdwg.mxu0
  %3701 = vmatprep.subr.bf16.mxu0 %v3613
  %3702 = vmatpush1.bf16.msra.mxu0 %v3612
  %3703 = vmatprep.subr.bf16.mxu0 %v3617
  %3704 = vmatpush1.bf16.msra.mxu0 %v3616
  %3705 = vmatprep.subr.bf16.mxu0 %v3621
  %3706 = vmatpush1.bf16.msra.mxu0 %v3620
  %3707 = vmatprep.subr.bf16.mxu0 %v3625
  %3708 = vmatpush1.bf16.msra.mxu0 %v3624
  %3709 = vmatprep.subr.bf16.mxu0 %v3629
  %3710 = vmatpush1.bf16.msra.mxu0 %v3628
  %3711 = vmatprep.subr.bf16.mxu0 %v3633
  %3712 = vmatpush1.bf16.msra.mxu0 %v3632
  %3713 = vmatprep.subr.bf16.mxu0 %v3637
  %3714 = vmatpush1.bf16.msra.mxu0 %v3636
  %3715 = vmatprep.subr.bf16.mxu0 %v3641
  %3716 = vmatpush1.bf16.msra.mxu0 %v3640
  %3717 = vmatprep.subr.bf16.mxu0 %v3645
  %3718 = vmatpush1.bf16.msra.mxu0 %v3644
  %3719 = vmatprep.subr.bf16.mxu0 0
  %3720 = vmatpush1.bf16.msra.mxu0 0
  %3721 = vmatprep.subr.bf16.mxu0 0
  %3722 = vmatpush1.bf16.msra.mxu0 0
  %3723 = vmatprep.subr.bf16.mxu0 0
  %3724 = vmatpush1.bf16.msra.mxu0 0
  %3725 = vmatprep.subr.bf16.mxu0 0
  %3726 = vmatpush1.bf16.msra.mxu0 0
  %3727 = vmatprep.subr.bf16.mxu0 0
  %3728 = vmatpush1.bf16.msra.mxu0 0
  %3729 = vmatprep.subr.bf16.mxu0 0
  %3730 = vmatpush1.bf16.msra.mxu0 0
  %3731 = vmatprep.subr.bf16.mxu0 0
  %3732 = vmatpush1.bf16.msra.mxu0 0
  %3733 = vmatprep.mubr.bf16.mxu0 %v3658
  %3734 = vmatmul.mubr.bf16.gmra.mrb[0].mxu0 %v3654
  %v3735 = vpop.f32.mrb[0].mxu0
  %v3736 = vadd.f32 %v3649, %v3735
  %v3737 = vpop.f32.mrb[0].mxu0
  %v3738 = vadd.f32 %v3649, %v3737
  %v3739 = vpop.f32.mrb[0].mxu0
  %v3740 = vpop.f32.mrb[0].mxu0
  %3741 = vdwg.mxu0
  %v3742 = vmax.f32 %v3695, 0.0
  %v3743 = vmax.f32 %v3697, 0.0
  %v3744 = vmax.f32 %v3736, 0.0
  %v3745 = vmax.f32 %v3738, 0.0
  %v3746 = vpack.c.bf16 %v3742, %v3742
  %v3747 = vpack.c.bf16 %v3743, %v3743
  %v3748 = vpack.c.bf16 %v3744, %v3744
  %v3749 = vpack.c.bf16 %v3745, %v3745
  %3750 = vst [vmem:[#allocation3 + $0x20] sm:$0xf] %v3746
  %3751 = vst [vmem:[#allocation3 + $0x28] sm:$0xf] %v3747
  %3752 = vst [vmem:[#allocation3 + $0x30] sm:$0xf] %v3748
  %3753 = vst [vmem:[#allocation3 + $0x38] sm:$0xf] %v3749
  %v3754 = vld [vmem:[#allocation3] sm:$0xff]
  %v3755 = vld [vmem:[#allocation3 + $0x8] sm:$0xff]
  %v3756 = vld [vmem:[#allocation3 + $0x10] sm:$0xff]
  %v3757 = vld [vmem:[#allocation3 + $0x18] sm:$0xff]
  %v3758 = vld [vmem:[#allocation3 + $0x20] sm:$0xf]
  %v3759 = vld [vmem:[#allocation3 + $0x28] sm:$0xf]
  %v3760 = vld [vmem:[#allocation3 + $0x30] sm:$0xf]
  %v3761 = vld [vmem:[#allocation3 + $0x38] sm:$0xf]
  %v3762 = vld [vmem:[%s2 + $0x80] sm:$0xff]
  %v3763 = vld [vmem:[%s3 + $0x48] sm:$0xff]
  %v3764 = vunpack.c.l.bf16 %v3754
  %v3765 = vunpack.c.l.bf16 %v3755
  %v3766 = vunpack.c.l.bf16 %v3756
  %v3767 = vunpack.c.l.bf16 %v3757
  %v3768 = vunpack.c.h.bf16 %v3754
  %v3769 = vunpack.c.h.bf16 %v3755
  %v3770 = vunpack.c.h.bf16 %v3756
  %v3771 = vunpack.c.h.bf16 %v3757
  %v3772 = vunpack.c.l.bf16 %v3758
  %v3773 = vunpack.c.l.bf16 %v3759
  %v3774 = vunpack.c.l.bf16 %v3760
  %v3775 = vunpack.c.l.bf16 %v3761
  %3776 = vrot.lane.b32.xlu0 %v3764, 17
  %v3777 = vpop.permute.xlu0 %3776
  %3778 = vrot.lane.b32.xlu0 %v3768, 17
  %v3779 = vpop.permute.xlu0 %3778
  %3780 = vrot.lane.b32.xlu0 %v3772, 17
  %v3781 = vpop.permute.xlu0 %3780
  %3782 = vrot.lane.b32.xlu0 %v3765, 17
  %v3783 = vpop.permute.xlu0 %3782
  %3784 = vrot.lane.b32.xlu0 %v3769, 17
  %v3785 = vpop.permute.xlu0 %3784
  %3786 = vrot.lane.b32.xlu0 %v3773, 17
  %v3787 = vpop.permute.xlu0 %3786
  %3788 = vrot.lane.b32.xlu0 %v3766, 17
  %v3789 = vpop.permute.xlu0 %3788
  %3790 = vrot.lane.b32.xlu0 %v3770, 17
  %v3791 = vpop.permute.xlu0 %3790
  %3792 = vrot.lane.b32.xlu0 %v3774, 17
  %v3793 = vpop.permute.xlu0 %3792
  %3794 = vrot.lane.b32.xlu0 %v3767, 17
  %v3795 = vpop.permute.xlu0 %3794
  %3796 = vrot.lane.b32.xlu0 %v3771, 17
  %v3797 = vpop.permute.xlu0 %3796
  %3798 = vrot.lane.b32.xlu0 %v3775, 17
  %v3799 = vpop.permute.xlu0 %3798
  %v3800 = vsel %vm44, %v3789, %v3795
  %v3801 = vsel %vm44, %v3791, %v3797
  %v3802 = vsel %vm44, %v3793, %v3799
  %v3803 = vsel %vm44, %v3783, %v3789
  %v3804 = vsel %vm44, %v3785, %v3791
  %v3805 = vsel %vm44, %v3787, %v3793
  %v3806 = vsel %vm44, %v3777, %v3783
  %v3807 = vsel %vm44, %v3779, %v3785
  %v3808 = vsel %vm44, %v3781, %v3787
  %v3809 = vsel %vm44, %v3795, %v3777
  %v3810 = vsel %vm44, %v3797, %v3779
  %v3811 = vsel %vm44, %v3799, %v3781
  %v3812 = vmul.f32 %v3809, %v52
  %v3813 = vmul.f32 %v3806, %v56
  %v3814 = vmul.f32 %v3803, %v60
  %v3815 = vmul.f32 %v3800, %v64
  %v3816 = vmul.f32 %v3810, %v52
  %v3817 = vmul.f32 %v3807, %v56
  %v3818 = vmul.f32 %v3804, %v60
  %v3819 = vmul.f32 %v3801, %v64
  %v3820 = vmul.f32 %v3811, %v52
  %v3821 = vmul.f32 %v3808, %v56
  %v3822 = vmul.f32 %v3805, %v60
  %v3823 = vmul.f32 %v3802, %v64
  %v3824 = vpack.c.bf16 %v3816, %v3812
  %v3825 = vpack.c.bf16 %v3817, %v3813
  %v3826 = vpack.c.bf16 %v3818, %v3814
  %v3827 = vpack.c.bf16 %v3819, %v3815
  %v3828 = vpack.c.bf16 %v3820, %v3820
  %v3829 = vpack.c.bf16 %v3821, %v3821
  %v3830 = vpack.c.bf16 %v3822, %v3822
  %v3831 = vpack.c.bf16 %v3823, %v3823
  %3832 = vst [vmem:[#allocation2] sm:$0xff] %v3824
  %3833 = vst [vmem:[#allocation2 + $0x8] sm:$0xff] %v3825
  %3834 = vst [vmem:[#allocation2 + $0x10] sm:$0xff] %v3826
  %3835 = vst [vmem:[#allocation2 + $0x18] sm:$0xff] %v3827
  %3836 = vst [vmem:[#allocation2 + $0x20] sm:$0xf] %v3828
  %3837 = vst [vmem:[#allocation2 + $0x28] sm:$0xf] %v3829
  %3838 = vst [vmem:[#allocation2 + $0x30] sm:$0xf] %v3830
  %3839 = vst [vmem:[#allocation2 + $0x38] sm:$0xf] %v3831
  %3840 = vrot.lane.b32.xlu0 %v3764, 16
  %v3841 = vpop.permute.xlu0 %3840
  %3842 = vrot.lane.b32.xlu0 %v3768, 16
  %v3843 = vpop.permute.xlu0 %3842
  %3844 = vrot.lane.b32.xlu0 %v3772, 16
  %v3845 = vpop.permute.xlu0 %3844
  %3846 = vrot.lane.b32.xlu0 %v3765, 16
  %v3847 = vpop.permute.xlu0 %3846
  %3848 = vrot.lane.b32.xlu0 %v3769, 16
  %v3849 = vpop.permute.xlu0 %3848
  %3850 = vrot.lane.b32.xlu0 %v3773, 16
  %v3851 = vpop.permute.xlu0 %3850
  %3852 = vrot.lane.b32.xlu0 %v3766, 16
  %v3853 = vpop.permute.xlu0 %3852
  %3854 = vrot.lane.b32.xlu0 %v3770, 16
  %v3855 = vpop.permute.xlu0 %3854
  %3856 = vrot.lane.b32.xlu0 %v3774, 16
  %v3857 = vpop.permute.xlu0 %3856
  %3858 = vrot.lane.b32.xlu0 %v3767, 16
  %v3859 = vpop.permute.xlu0 %3858
  %3860 = vrot.lane.b32.xlu0 %v3771, 16
  %v3861 = vpop.permute.xlu0 %3860
  %3862 = vrot.lane.b32.xlu0 %v3775, 16
  %v3863 = vpop.permute.xlu0 %3862
  %v3864 = vsel %vm85, %v3853, %v3859
  %v3865 = vsel %vm85, %v3855, %v3861
  %v3866 = vsel %vm85, %v3857, %v3863
  %v3867 = vsel %vm85, %v3847, %v3853
  %v3868 = vsel %vm85, %v3849, %v3855
  %v3869 = vsel %vm85, %v3851, %v3857
  %v3870 = vsel %vm85, %v3841, %v3847
  %v3871 = vsel %vm85, %v3843, %v3849
  %v3872 = vsel %vm85, %v3845, %v3851
  %v3873 = vsel %vm85, %v3859, %v3841
  %v3874 = vsel %vm85, %v3861, %v3843
  %v3875 = vsel %vm85, %v3863, %v3845
  %v3876 = vmul.f32 %v3873, %v93
  %v3877 = vmul.f32 %v3870, %v97
  %v3878 = vmul.f32 %v3867, %v101
  %v3879 = vmul.f32 %v3864, %v105
  %v3880 = vmul.f32 %v3874, %v93
  %v3881 = vmul.f32 %v3871, %v97
  %v3882 = vmul.f32 %v3868, %v101
  %v3883 = vmul.f32 %v3865, %v105
  %v3884 = vmul.f32 %v3875, %v93
  %v3885 = vmul.f32 %v3872, %v97
  %v3886 = vmul.f32 %v3869, %v101
  %v3887 = vmul.f32 %v3866, %v105
  %v3888 = vpack.c.bf16 %v3880, %v3876
  %v3889 = vpack.c.bf16 %v3881, %v3877
  %v3890 = vpack.c.bf16 %v3882, %v3878
  %v3891 = vpack.c.bf16 %v3883, %v3879
  %v3892 = vpack.c.bf16 %v3884, %v3884
  %v3893 = vpack.c.bf16 %v3885, %v3885
  %v3894 = vpack.c.bf16 %v3886, %v3886
  %v3895 = vpack.c.bf16 %v3887, %v3887
  %v3904 = vrot.slane %v3888, 4
  %v3905 = vrot.slane %v3889, 4
  %v3906 = vrot.slane %v3890, 4
  %v3907 = vrot.slane %v3891, 4
  %v3908 = vrot.slane %v3892, 4
  %v3909 = vsel %vm2061, %v3904, %v3908
  %v3910 = vrot.slane %v3893, 4
  %v3911 = vsel %vm2061, %v3905, %v3910
  %v3912 = vrot.slane %v3894, 4
  %v3913 = vsel %vm2061, %v3906, %v3912
  %v3914 = vrot.slane %v3895, 4
  %v3915 = vsel %vm2061, %v3907, %v3914
  %3924 = vst [vmem:[#allocation2 + $0x20] sm:$0xf0] %v3904
  %3925 = vst [vmem:[#allocation2 + $0x28] sm:$0xf0] %v3905
  %3926 = vst [vmem:[#allocation2 + $0x30] sm:$0xf0] %v3906
  %3927 = vst [vmem:[#allocation2 + $0x38] sm:$0xf0] %v3907
  %3928 = vst [vmem:[#allocation2 + $0x40] sm:$0xff] %v3909
  %3929 = vst [vmem:[#allocation2 + $0x48] sm:$0xff] %v3911
  %3930 = vst [vmem:[#allocation2 + $0x50] sm:$0xff] %v3913
  %3931 = vst [vmem:[#allocation2 + $0x58] sm:$0xff] %v3915
  %3932 = vrot.lane.b32.xlu0 %v3764, 15
  %v3933 = vpop.permute.xlu0 %3932
  %3934 = vrot.lane.b32.xlu0 %v3768, 15
  %v3935 = vpop.permute.xlu0 %3934
  %3936 = vrot.lane.b32.xlu0 %v3772, 15
  %v3937 = vpop.permute.xlu0 %3936
  %3938 = vrot.lane.b32.xlu0 %v3765, 15
  %v3939 = vpop.permute.xlu0 %3938
  %3940 = vrot.lane.b32.xlu0 %v3769, 15
  %v3941 = vpop.permute.xlu0 %3940
  %3942 = vrot.lane.b32.xlu0 %v3773, 15
  %v3943 = vpop.permute.xlu0 %3942
  %3944 = vrot.lane.b32.xlu0 %v3766, 15
  %v3945 = vpop.permute.xlu0 %3944
  %3946 = vrot.lane.b32.xlu0 %v3770, 15
  %v3947 = vpop.permute.xlu0 %3946
  %3948 = vrot.lane.b32.xlu0 %v3774, 15
  %v3949 = vpop.permute.xlu0 %3948
  %3950 = vrot.lane.b32.xlu0 %v3767, 15
  %v3951 = vpop.permute.xlu0 %3950
  %3952 = vrot.lane.b32.xlu0 %v3771, 15
  %v3953 = vpop.permute.xlu0 %3952
  %3954 = vrot.lane.b32.xlu0 %v3775, 15
  %v3955 = vpop.permute.xlu0 %3954
  %v3956 = vsel %vm138, %v3945, %v3951
  %v3957 = vsel %vm138, %v3947, %v3953
  %v3958 = vsel %vm138, %v3949, %v3955
  %v3959 = vsel %vm138, %v3939, %v3945
  %v3960 = vsel %vm138, %v3941, %v3947
  %v3961 = vsel %vm138, %v3943, %v3949
  %v3962 = vsel %vm138, %v3933, %v3939
  %v3963 = vsel %vm138, %v3935, %v3941
  %v3964 = vsel %vm138, %v3937, %v3943
  %v3965 = vsel %vm138, %v3951, %v3933
  %v3966 = vsel %vm138, %v3953, %v3935
  %v3967 = vsel %vm138, %v3955, %v3937
  %v3968 = vmul.f32 %v3965, %v146
  %v3969 = vmul.f32 %v3962, %v150
  %v3970 = vmul.f32 %v3959, %v154
  %v3971 = vmul.f32 %v3956, %v158
  %v3972 = vmul.f32 %v3966, %v146
  %v3973 = vmul.f32 %v3963, %v150
  %v3974 = vmul.f32 %v3960, %v154
  %v3975 = vmul.f32 %v3957, %v158
  %v3976 = vmul.f32 %v3967, %v146
  %v3977 = vmul.f32 %v3964, %v150
  %v3978 = vmul.f32 %v3961, %v154
  %v3979 = vmul.f32 %v3958, %v158
  %v3980 = vpack.c.bf16 %v3972, %v3968
  %v3981 = vpack.c.bf16 %v3973, %v3969
  %v3982 = vpack.c.bf16 %v3974, %v3970
  %v3983 = vpack.c.bf16 %v3975, %v3971
  %v3984 = vpack.c.bf16 %v3976, %v3976
  %v3985 = vpack.c.bf16 %v3977, %v3977
  %v3986 = vpack.c.bf16 %v3978, %v3978
  %v3987 = vpack.c.bf16 %v3979, %v3979
  %3988 = vst [vmem:[#allocation2 + $0x60] sm:$0xff] %v3980
  %3989 = vst [vmem:[#allocation2 + $0x68] sm:$0xff] %v3981
  %3990 = vst [vmem:[#allocation2 + $0x70] sm:$0xff] %v3982
  %3991 = vst [vmem:[#allocation2 + $0x78] sm:$0xff] %v3983
  %3992 = vst [vmem:[#allocation2 + $0x80] sm:$0xf] %v3984
  %3993 = vst [vmem:[#allocation2 + $0x88] sm:$0xf] %v3985
  %3994 = vst [vmem:[#allocation2 + $0x90] sm:$0xf] %v3986
  %3995 = vst [vmem:[#allocation2 + $0x98] sm:$0xf] %v3987
  %3996 = vrot.lane.b32.xlu0 %v3764, 1
  %v3997 = vpop.permute.xlu0 %3996
  %3998 = vrot.lane.b32.xlu0 %v3768, 1
  %v3999 = vpop.permute.xlu0 %3998
  %4000 = vrot.lane.b32.xlu0 %v3772, 1
  %v4001 = vpop.permute.xlu0 %4000
  %4002 = vrot.lane.b32.xlu0 %v3765, 1
  %v4003 = vpop.permute.xlu0 %4002
  %4004 = vrot.lane.b32.xlu0 %v3769, 1
  %v4005 = vpop.permute.xlu0 %4004
  %4006 = vrot.lane.b32.xlu0 %v3773, 1
  %v4007 = vpop.permute.xlu0 %4006
  %4008 = vrot.lane.b32.xlu0 %v3766, 1
  %v4009 = vpop.permute.xlu0 %4008
  %4010 = vrot.lane.b32.xlu0 %v3770, 1
  %v4011 = vpop.permute.xlu0 %4010
  %4012 = vrot.lane.b32.xlu0 %v3774, 1
  %v4013 = vpop.permute.xlu0 %4012
  %4014 = vrot.lane.b32.xlu0 %v3767, 1
  %v4015 = vpop.permute.xlu0 %4014
  %4016 = vrot.lane.b32.xlu0 %v3771, 1
  %v4017 = vpop.permute.xlu0 %4016
  %4018 = vrot.lane.b32.xlu0 %v3775, 1
  %v4019 = vpop.permute.xlu0 %4018
  %v4020 = vsel %vm179, %v4009, %v4015
  %v4021 = vsel %vm179, %v4011, %v4017
  %v4022 = vsel %vm179, %v4013, %v4019
  %v4023 = vsel %vm179, %v4003, %v4009
  %v4024 = vsel %vm179, %v4005, %v4011
  %v4025 = vsel %vm179, %v4007, %v4013
  %v4026 = vsel %vm179, %v3997, %v4003
  %v4027 = vsel %vm179, %v3999, %v4005
  %v4028 = vsel %vm179, %v4001, %v4007
  %v4029 = vsel %vm179, %v4015, %v3997
  %v4030 = vsel %vm179, %v4017, %v3999
  %v4031 = vsel %vm179, %v4019, %v4001
  %v4032 = vmul.f32 %v4029, %v187
  %v4033 = vmul.f32 %v4026, %v191
  %v4034 = vmul.f32 %v4023, %v195
  %v4035 = vmul.f32 %v4020, %v199
  %v4036 = vmul.f32 %v4030, %v187
  %v4037 = vmul.f32 %v4027, %v191
  %v4038 = vmul.f32 %v4024, %v195
  %v4039 = vmul.f32 %v4021, %v199
  %v4040 = vmul.f32 %v4031, %v187
  %v4041 = vmul.f32 %v4028, %v191
  %v4042 = vmul.f32 %v4025, %v195
  %v4043 = vmul.f32 %v4022, %v199
  %v4044 = vpack.c.bf16 %v4036, %v4032
  %v4045 = vpack.c.bf16 %v4037, %v4033
  %v4046 = vpack.c.bf16 %v4038, %v4034
  %v4047 = vpack.c.bf16 %v4039, %v4035
  %v4048 = vpack.c.bf16 %v4040, %v4040
  %v4049 = vpack.c.bf16 %v4041, %v4041
  %v4050 = vpack.c.bf16 %v4042, %v4042
  %v4051 = vpack.c.bf16 %v4043, %v4043
  %v4060 = vrot.slane %v4044, 4
  %v4061 = vrot.slane %v4045, 4
  %v4062 = vrot.slane %v4046, 4
  %v4063 = vrot.slane %v4047, 4
  %v4064 = vrot.slane %v4048, 4
  %v4065 = vsel %vm2061, %v4060, %v4064
  %v4066 = vrot.slane %v4049, 4
  %v4067 = vsel %vm2061, %v4061, %v4066
  %v4068 = vrot.slane %v4050, 4
  %v4069 = vsel %vm2061, %v4062, %v4068
  %v4070 = vrot.slane %v4051, 4
  %v4071 = vsel %vm2061, %v4063, %v4070
  %4080 = vst [vmem:[#allocation2 + $0x80] sm:$0xf0] %v4060
  %4081 = vst [vmem:[#allocation2 + $0x88] sm:$0xf0] %v4061
  %4082 = vst [vmem:[#allocation2 + $0x90] sm:$0xf0] %v4062
  %4083 = vst [vmem:[#allocation2 + $0x98] sm:$0xf0] %v4063
  %4084 = vst [vmem:[#allocation2 + $0xa0] sm:$0xff] %v4065
  %4085 = vst [vmem:[#allocation2 + $0xa8] sm:$0xff] %v4067
  %4086 = vst [vmem:[#allocation2 + $0xb0] sm:$0xff] %v4069
  %4087 = vst [vmem:[#allocation2 + $0xb8] sm:$0xff] %v4071
  %4088 = vst [vmem:[#allocation2 + $0xc0] sm:$0xff] %v3754
  %4089 = vst [vmem:[#allocation2 + $0xc8] sm:$0xff] %v3755
  %4090 = vst [vmem:[#allocation2 + $0xd0] sm:$0xff] %v3756
  %4091 = vst [vmem:[#allocation2 + $0xd8] sm:$0xff] %v3757
  %4092 = vst [vmem:[#allocation2 + $0xe0] sm:$0xf] %v3758
  %4093 = vst [vmem:[#allocation2 + $0xe8] sm:$0xf] %v3759
  %4094 = vst [vmem:[#allocation2 + $0xf0] sm:$0xf] %v3760
  %4095 = vst [vmem:[#allocation2 + $0xf8] sm:$0xf] %v3761
  %4096 = vrot.lane.b32.xlu0 %v3764, 127
  %v4097 = vpop.permute.xlu0 %4096
  %4098 = vrot.lane.b32.xlu0 %v3768, 127
  %v4099 = vpop.permute.xlu0 %4098
  %4100 = vrot.lane.b32.xlu0 %v3772, 127
  %v4101 = vpop.permute.xlu0 %4100
  %4102 = vrot.lane.b32.xlu0 %v3765, 127
  %v4103 = vpop.permute.xlu0 %4102
  %4104 = vrot.lane.b32.xlu0 %v3769, 127
  %v4105 = vpop.permute.xlu0 %4104
  %4106 = vrot.lane.b32.xlu0 %v3773, 127
  %v4107 = vpop.permute.xlu0 %4106
  %4108 = vrot.lane.b32.xlu0 %v3766, 127
  %v4109 = vpop.permute.xlu0 %4108
  %4110 = vrot.lane.b32.xlu0 %v3770, 127
  %v4111 = vpop.permute.xlu0 %4110
  %4112 = vrot.lane.b32.xlu0 %v3774, 127
  %v4113 = vpop.permute.xlu0 %4112
  %4114 = vrot.lane.b32.xlu0 %v3767, 127
  %v4115 = vpop.permute.xlu0 %4114
  %4116 = vrot.lane.b32.xlu0 %v3771, 127
  %v4117 = vpop.permute.xlu0 %4116
  %4118 = vrot.lane.b32.xlu0 %v3775, 127
  %v4119 = vpop.permute.xlu0 %4118
  %v4120 = vsel %vm240, %v4109, %v4115
  %v4121 = vsel %vm240, %v4111, %v4117
  %v4122 = vsel %vm240, %v4113, %v4119
  %v4123 = vsel %vm240, %v4103, %v4109
  %v4124 = vsel %vm240, %v4105, %v4111
  %v4125 = vsel %vm240, %v4107, %v4113
  %v4126 = vsel %vm240, %v4097, %v4103
  %v4127 = vsel %vm240, %v4099, %v4105
  %v4128 = vsel %vm240, %v4101, %v4107
  %v4129 = vsel %vm240, %v4115, %v4097
  %v4130 = vsel %vm240, %v4117, %v4099
  %v4131 = vsel %vm240, %v4119, %v4101
  %v4132 = vmul.f32 %v4126, %v248
  %v4133 = vmul.f32 %v4123, %v252
  %v4134 = vmul.f32 %v4120, %v256
  %v4135 = vmul.f32 %v4129, %v260
  %v4136 = vmul.f32 %v4127, %v248
  %v4137 = vmul.f32 %v4124, %v252
  %v4138 = vmul.f32 %v4121, %v256
  %v4139 = vmul.f32 %v4130, %v260
  %v4140 = vmul.f32 %v4128, %v248
  %v4141 = vmul.f32 %v4125, %v252
  %v4142 = vmul.f32 %v4122, %v256
  %v4143 = vmul.f32 %v4131, %v260
  %v4144 = vpack.c.bf16 %v4136, %v4132
  %v4145 = vpack.c.bf16 %v4137, %v4133
  %v4146 = vpack.c.bf16 %v4138, %v4134
  %v4147 = vpack.c.bf16 %v4139, %v4135
  %v4148 = vpack.c.bf16 %v4140, %v4140
  %v4149 = vpack.c.bf16 %v4141, %v4141
  %v4150 = vpack.c.bf16 %v4142, %v4142
  %v4151 = vpack.c.bf16 %v4143, %v4143
  %v4160 = vrot.slane %v4144, 4
  %v4161 = vrot.slane %v4145, 4
  %v4162 = vrot.slane %v4146, 4
  %v4163 = vrot.slane %v4147, 4
  %v4164 = vrot.slane %v4148, 4
  %v4165 = vsel %vm2061, %v4160, %v4164
  %v4166 = vrot.slane %v4149, 4
  %v4167 = vsel %vm2061, %v4161, %v4166
  %v4168 = vrot.slane %v4150, 4
  %v4169 = vsel %vm2061, %v4162, %v4168
  %v4170 = vrot.slane %v4151, 4
  %v4171 = vsel %vm2061, %v4163, %v4170
  %4180 = vst [vmem:[#allocation2 + $0xe0] sm:$0xf0] %v4160
  %4181 = vst [vmem:[#allocation2 + $0xe8] sm:$0xf0] %v4161
  %4182 = vst [vmem:[#allocation2 + $0xf0] sm:$0xf0] %v4162
  %4183 = vst [vmem:[#allocation2 + $0xf8] sm:$0xf0] %v4163
  %4184 = vst [vmem:[#allocation2 + $0x100] sm:$0xff] %v4165
  %4185 = vst [vmem:[#allocation2 + $0x108] sm:$0xff] %v4167
  %4186 = vst [vmem:[#allocation2 + $0x110] sm:$0xff] %v4169
  %4187 = vst [vmem:[#allocation2 + $0x118] sm:$0xff] %v4171
  %4188 = vrot.lane.b32.xlu0 %v3764, 113
  %v4189 = vpop.permute.xlu0 %4188
  %4190 = vrot.lane.b32.xlu0 %v3768, 113
  %v4191 = vpop.permute.xlu0 %4190
  %4192 = vrot.lane.b32.xlu0 %v3772, 113
  %v4193 = vpop.permute.xlu0 %4192
  %4194 = vrot.lane.b32.xlu0 %v3765, 113
  %v4195 = vpop.permute.xlu0 %4194
  %4196 = vrot.lane.b32.xlu0 %v3769, 113
  %v4197 = vpop.permute.xlu0 %4196
  %4198 = vrot.lane.b32.xlu0 %v3773, 113
  %v4199 = vpop.permute.xlu0 %4198
  %4200 = vrot.lane.b32.xlu0 %v3766, 113
  %v4201 = vpop.permute.xlu0 %4200
  %4202 = vrot.lane.b32.xlu0 %v3770, 113
  %v4203 = vpop.permute.xlu0 %4202
  %4204 = vrot.lane.b32.xlu0 %v3774, 113
  %v4205 = vpop.permute.xlu0 %4204
  %4206 = vrot.lane.b32.xlu0 %v3767, 113
  %v4207 = vpop.permute.xlu0 %4206
  %4208 = vrot.lane.b32.xlu0 %v3771, 113
  %v4209 = vpop.permute.xlu0 %4208
  %4210 = vrot.lane.b32.xlu0 %v3775, 113
  %v4211 = vpop.permute.xlu0 %4210
  %v4212 = vsel %vm293, %v4201, %v4207
  %v4213 = vsel %vm293, %v4203, %v4209
  %v4214 = vsel %vm293, %v4205, %v4211
  %v4215 = vsel %vm293, %v4195, %v4201
  %v4216 = vsel %vm293, %v4197, %v4203
  %v4217 = vsel %vm293, %v4199, %v4205
  %v4218 = vsel %vm293, %v4189, %v4195
  %v4219 = vsel %vm293, %v4191, %v4197
  %v4220 = vsel %vm293, %v4193, %v4199
  %v4221 = vsel %vm293, %v4207, %v4189
  %v4222 = vsel %vm293, %v4209, %v4191
  %v4223 = vsel %vm293, %v4211, %v4193
  %v4224 = vmul.f32 %v4218, %v301
  %v4225 = vmul.f32 %v4215, %v305
  %v4226 = vmul.f32 %v4212, %v309
  %v4227 = vmul.f32 %v4221, %v313
  %v4228 = vmul.f32 %v4219, %v301
  %v4229 = vmul.f32 %v4216, %v305
  %v4230 = vmul.f32 %v4213, %v309
  %v4231 = vmul.f32 %v4222, %v313
  %v4232 = vmul.f32 %v4220, %v301
  %v4233 = vmul.f32 %v4217, %v305
  %v4234 = vmul.f32 %v4214, %v309
  %v4235 = vmul.f32 %v4223, %v313
  %v4236 = vpack.c.bf16 %v4228, %v4224
  %v4237 = vpack.c.bf16 %v4229, %v4225
  %v4238 = vpack.c.bf16 %v4230, %v4226
  %v4239 = vpack.c.bf16 %v4231, %v4227
  %v4240 = vpack.c.bf16 %v4232, %v4232
  %v4241 = vpack.c.bf16 %v4233, %v4233
  %v4242 = vpack.c.bf16 %v4234, %v4234
  %v4243 = vpack.c.bf16 %v4235, %v4235
  %4244 = vst [vmem:[#allocation2 + $0x120] sm:$0xff] %v4236
  %4245 = vst [vmem:[#allocation2 + $0x128] sm:$0xff] %v4237
  %4246 = vst [vmem:[#allocation2 + $0x130] sm:$0xff] %v4238
  %4247 = vst [vmem:[#allocation2 + $0x138] sm:$0xff] %v4239
  %4248 = vst [vmem:[#allocation2 + $0x140] sm:$0xf] %v4240
  %4249 = vst [vmem:[#allocation2 + $0x148] sm:$0xf] %v4241
  %4250 = vst [vmem:[#allocation2 + $0x150] sm:$0xf] %v4242
  %4251 = vst [vmem:[#allocation2 + $0x158] sm:$0xf] %v4243
  %4252 = vrot.lane.b32.xlu0 %v3764, 112
  %v4253 = vpop.permute.xlu0 %4252
  %4254 = vrot.lane.b32.xlu0 %v3768, 112
  %v4255 = vpop.permute.xlu0 %4254
  %4256 = vrot.lane.b32.xlu0 %v3772, 112
  %v4257 = vpop.permute.xlu0 %4256
  %4258 = vrot.lane.b32.xlu0 %v3765, 112
  %v4259 = vpop.permute.xlu0 %4258
  %4260 = vrot.lane.b32.xlu0 %v3769, 112
  %v4261 = vpop.permute.xlu0 %4260
  %4262 = vrot.lane.b32.xlu0 %v3773, 112
  %v4263 = vpop.permute.xlu0 %4262
  %4264 = vrot.lane.b32.xlu0 %v3766, 112
  %v4265 = vpop.permute.xlu0 %4264
  %4266 = vrot.lane.b32.xlu0 %v3770, 112
  %v4267 = vpop.permute.xlu0 %4266
  %4268 = vrot.lane.b32.xlu0 %v3774, 112
  %v4269 = vpop.permute.xlu0 %4268
  %4270 = vrot.lane.b32.xlu0 %v3767, 112
  %v4271 = vpop.permute.xlu0 %4270
  %4272 = vrot.lane.b32.xlu0 %v3771, 112
  %v4273 = vpop.permute.xlu0 %4272
  %4274 = vrot.lane.b32.xlu0 %v3775, 112
  %v4275 = vpop.permute.xlu0 %4274
  %v4276 = vsel %vm334, %v4265, %v4271
  %v4277 = vsel %vm334, %v4267, %v4273
  %v4278 = vsel %vm334, %v4269, %v4275
  %v4279 = vsel %vm334, %v4259, %v4265
  %v4280 = vsel %vm334, %v4261, %v4267
  %v4281 = vsel %vm334, %v4263, %v4269
  %v4282 = vsel %vm334, %v4253, %v4259
  %v4283 = vsel %vm334, %v4255, %v4261
  %v4284 = vsel %vm334, %v4257, %v4263
  %v4285 = vsel %vm334, %v4271, %v4253
  %v4286 = vsel %vm334, %v4273, %v4255
  %v4287 = vsel %vm334, %v4275, %v4257
  %v4288 = vmul.f32 %v4282, %v342
  %v4289 = vmul.f32 %v4279, %v346
  %v4290 = vmul.f32 %v4276, %v350
  %v4291 = vmul.f32 %v4285, %v354
  %v4292 = vmul.f32 %v4283, %v342
  %v4293 = vmul.f32 %v4280, %v346
  %v4294 = vmul.f32 %v4277, %v350
  %v4295 = vmul.f32 %v4286, %v354
  %v4296 = vmul.f32 %v4284, %v342
  %v4297 = vmul.f32 %v4281, %v346
  %v4298 = vmul.f32 %v4278, %v350
  %v4299 = vmul.f32 %v4287, %v354
  %v4300 = vpack.c.bf16 %v4292, %v4288
  %v4301 = vpack.c.bf16 %v4293, %v4289
  %v4302 = vpack.c.bf16 %v4294, %v4290
  %v4303 = vpack.c.bf16 %v4295, %v4291
  %v4304 = vpack.c.bf16 %v4296, %v4296
  %v4305 = vpack.c.bf16 %v4297, %v4297
  %v4306 = vpack.c.bf16 %v4298, %v4298
  %v4307 = vpack.c.bf16 %v4299, %v4299
  %v4316 = vrot.slane %v4300, 4
  %v4317 = vrot.slane %v4301, 4
  %v4318 = vrot.slane %v4302, 4
  %v4319 = vrot.slane %v4303, 4
  %v4320 = vrot.slane %v4304, 4
  %v4321 = vsel %vm2061, %v4316, %v4320
  %v4322 = vrot.slane %v4305, 4
  %v4323 = vsel %vm2061, %v4317, %v4322
  %v4324 = vrot.slane %v4306, 4
  %v4325 = vsel %vm2061, %v4318, %v4324
  %v4326 = vrot.slane %v4307, 4
  %v4327 = vsel %vm2061, %v4319, %v4326
  %4336 = vst [vmem:[#allocation2 + $0x140] sm:$0xf0] %v4316
  %4337 = vst [vmem:[#allocation2 + $0x148] sm:$0xf0] %v4317
  %4338 = vst [vmem:[#allocation2 + $0x150] sm:$0xf0] %v4318
  %4339 = vst [vmem:[#allocation2 + $0x158] sm:$0xf0] %v4319
  %4340 = vst [vmem:[#allocation2 + $0x160] sm:$0xff] %v4321
  %4341 = vst [vmem:[#allocation2 + $0x168] sm:$0xff] %v4323
  %4342 = vst [vmem:[#allocation2 + $0x170] sm:$0xff] %v4325
  %4343 = vst [vmem:[#allocation2 + $0x178] sm:$0xff] %v4327
  %4344 = vrot.lane.b32.xlu0 %v3764, 111
  %v4345 = vpop.permute.xlu0 %4344
  %4346 = vrot.lane.b32.xlu0 %v3768, 111
  %v4347 = vpop.permute.xlu0 %4346
  %4348 = vrot.lane.b32.xlu0 %v3772, 111
  %v4349 = vpop.permute.xlu0 %4348
  %4350 = vrot.lane.b32.xlu0 %v3765, 111
  %v4351 = vpop.permute.xlu0 %4350
  %4352 = vrot.lane.b32.xlu0 %v3769, 111
  %v4353 = vpop.permute.xlu0 %4352
  %4354 = vrot.lane.b32.xlu0 %v3773, 111
  %v4355 = vpop.permute.xlu0 %4354
  %4356 = vrot.lane.b32.xlu0 %v3766, 111
  %v4357 = vpop.permute.xlu0 %4356
  %4358 = vrot.lane.b32.xlu0 %v3770, 111
  %v4359 = vpop.permute.xlu0 %4358
  %4360 = vrot.lane.b32.xlu0 %v3774, 111
  %v4361 = vpop.permute.xlu0 %4360
  %4362 = vrot.lane.b32.xlu0 %v3767, 111
  %v4363 = vpop.permute.xlu0 %4362
  %4364 = vrot.lane.b32.xlu0 %v3771, 111
  %v4365 = vpop.permute.xlu0 %4364
  %4366 = vrot.lane.b32.xlu0 %v3775, 111
  %v4367 = vpop.permute.xlu0 %4366
  %v4368 = vsel %vm387, %v4357, %v4363
  %v4369 = vsel %vm387, %v4359, %v4365
  %v4370 = vsel %vm387, %v4361, %v4367
  %v4371 = vsel %vm387, %v4351, %v4357
  %v4372 = vsel %vm387, %v4353, %v4359
  %v4373 = vsel %vm387, %v4355, %v4361
  %v4374 = vsel %vm387, %v4345, %v4351
  %v4375 = vsel %vm387, %v4347, %v4353
  %v4376 = vsel %vm387, %v4349, %v4355
  %v4377 = vsel %vm387, %v4363, %v4345
  %v4378 = vsel %vm387, %v4365, %v4347
  %v4379 = vsel %vm387, %v4367, %v4349
  %v4380 = vmul.f32 %v4374, %v395
  %v4381 = vmul.f32 %v4371, %v399
  %v4382 = vmul.f32 %v4368, %v403
  %v4383 = vmul.f32 %v4377, %v407
  %v4384 = vmul.f32 %v4375, %v395
  %v4385 = vmul.f32 %v4372, %v399
  %v4386 = vmul.f32 %v4369, %v403
  %v4387 = vmul.f32 %v4378, %v407
  %v4388 = vmul.f32 %v4376, %v395
  %v4389 = vmul.f32 %v4373, %v399
  %v4390 = vmul.f32 %v4370, %v403
  %v4391 = vmul.f32 %v4379, %v407
  %v4392 = vpack.c.bf16 %v4384, %v4380
  %v4393 = vpack.c.bf16 %v4385, %v4381
  %v4394 = vpack.c.bf16 %v4386, %v4382
  %v4395 = vpack.c.bf16 %v4387, %v4383
  %v4396 = vpack.c.bf16 %v4388, %v4388
  %v4397 = vpack.c.bf16 %v4389, %v4389
  %v4398 = vpack.c.bf16 %v4390, %v4390
  %v4399 = vpack.c.bf16 %v4391, %v4391
  %4400 = vst [vmem:[#allocation2 + $0x180] sm:$0xff] %v4392
  %4401 = vst [vmem:[#allocation2 + $0x188] sm:$0xff] %v4393
  %4402 = vst [vmem:[#allocation2 + $0x190] sm:$0xff] %v4394
  %4403 = vst [vmem:[#allocation2 + $0x198] sm:$0xff] %v4395
  %4404 = vst [vmem:[#allocation2 + $0x1a0] sm:$0xf] %v4396
  %4405 = vst [vmem:[#allocation2 + $0x1a8] sm:$0xf] %v4397
  %4406 = vst [vmem:[#allocation2 + $0x1b0] sm:$0xf] %v4398
  %4407 = vst [vmem:[#allocation2 + $0x1b8] sm:$0xf] %v4399
  %v4408 = vld [vmem:[#allocation2] sm:$0xff]
  %v4409 = vld [vmem:[#allocation2 + $0x8] sm:$0xff]
  %v4410 = vld [vmem:[#allocation2 + $0x10] sm:$0xff]
  %v4411 = vld [vmem:[#allocation2 + $0x18] sm:$0xff]
  %v4412 = vld [vmem:[#allocation2 + $0x20] sm:$0xff]
  %v4413 = vld [vmem:[#allocation2 + $0x28] sm:$0xff]
  %v4414 = vld [vmem:[#allocation2 + $0x30] sm:$0xff]
  %v4415 = vld [vmem:[#allocation2 + $0x38] sm:$0xff]
  %v4416 = vld [vmem:[#allocation2 + $0x40] sm:$0xff]
  %v4417 = vld [vmem:[#allocation2 + $0x48] sm:$0xff]
  %v4418 = vld [vmem:[#allocation2 + $0x50] sm:$0xff]
  %v4419 = vld [vmem:[#allocation2 + $0x58] sm:$0xff]
  %v4420 = vld [vmem:[#allocation2 + $0x60] sm:$0xff]
  %v4421 = vld [vmem:[#allocation2 + $0x68] sm:$0xff]
  %v4422 = vld [vmem:[#allocation2 + $0x70] sm:$0xff]
  %v4423 = vld [vmem:[#allocation2 + $0x78] sm:$0xff]
  %v4424 = vld [vmem:[#allocation2 + $0x80] sm:$0xff]
  %v4425 = vld [vmem:[#allocation2 + $0x88] sm:$0xff]
  %v4426 = vld [vmem:[#allocation2 + $0x90] sm:$0xff]
  %v4427 = vld [vmem:[#allocation2 + $0x98] sm:$0xff]
  %v4428 = vld [vmem:[#allocation2 + $0xa0] sm:$0xff]
  %v4429 = vld [vmem:[#allocation2 + $0xa8] sm:$0xff]
  %v4430 = vld [vmem:[#allocation2 + $0xb0] sm:$0xff]
  %v4431 = vld [vmem:[#allocation2 + $0xb8] sm:$0xff]
  %v4432 = vld [vmem:[#allocation2 + $0xc0] sm:$0xff]
  %v4433 = vld [vmem:[#allocation2 + $0xc8] sm:$0xff]
  %v4434 = vld [vmem:[#allocation2 + $0xd0] sm:$0xff]
  %v4435 = vld [vmem:[#allocation2 + $0xd8] sm:$0xff]
  %v4436 = vld [vmem:[#allocation2 + $0xe0] sm:$0xff]
  %v4437 = vld [vmem:[#allocation2 + $0xe8] sm:$0xff]
  %v4438 = vld [vmem:[#allocation2 + $0xf0] sm:$0xff]
  %v4439 = vld [vmem:[#allocation2 + $0xf8] sm:$0xff]
  %v4440 = vld [vmem:[#allocation2 + $0x100] sm:$0xff]
  %v4441 = vld [vmem:[#allocation2 + $0x108] sm:$0xff]
  %v4442 = vld [vmem:[#allocation2 + $0x110] sm:$0xff]
  %v4443 = vld [vmem:[#allocation2 + $0x118] sm:$0xff]
  %v4444 = vld [vmem:[#allocation2 + $0x120] sm:$0xff]
  %v4445 = vld [vmem:[#allocation2 + $0x128] sm:$0xff]
  %v4446 = vld [vmem:[#allocation2 + $0x130] sm:$0xff]
  %v4447 = vld [vmem:[#allocation2 + $0x138] sm:$0xff]
  %v4448 = vld [vmem:[#allocation2 + $0x140] sm:$0xff]
  %v4449 = vld [vmem:[#allocation2 + $0x148] sm:$0xff]
  %v4450 = vld [vmem:[#allocation2 + $0x150] sm:$0xff]
  %v4451 = vld [vmem:[#allocation2 + $0x158] sm:$0xff]
  %v4452 = vld [vmem:[#allocation2 + $0x160] sm:$0xff]
  %v4453 = vld [vmem:[#allocation2 + $0x168] sm:$0xff]
  %v4454 = vld [vmem:[#allocation2 + $0x170] sm:$0xff]
  %v4455 = vld [vmem:[#allocation2 + $0x178] sm:$0xff]
  %v4456 = vld [vmem:[#allocation2 + $0x180] sm:$0xff]
  %v4457 = vld [vmem:[#allocation2 + $0x188] sm:$0xff]
  %v4458 = vld [vmem:[#allocation2 + $0x190] sm:$0xff]
  %v4459 = vld [vmem:[#allocation2 + $0x198] sm:$0xff]
  %v4460 = vld [vmem:[#allocation2 + $0x1a0] sm:$0xf]
  %v4461 = vld [vmem:[#allocation2 + $0x1a8] sm:$0xf]
  %v4462 = vld [vmem:[#allocation2 + $0x1b0] sm:$0xf]
  %v4463 = vld [vmem:[#allocation2 + $0x1b8] sm:$0xf]
  %4465 = vset.pattern.permute.xlu0 0
  %4466 = vperm.xlu0 %4465, %v3763
  %v4467 = vpop.permute.xlu0 %4466
  %v4470 = vunpack.c.l.b16 %v3762
  %v4471 = vunpack.c.h.b16 %v3762
  %v4472 = vpack.c.b16 %v4470, %v4470
  %v4473 = vpack.c.b16 %v4471, %v4471
  %v4476 = vsel %vm2633, %v4473, 0
  %v4479 = vsel %vm459, %v4460, 0
  %v4482 = vsel %vm459, %v4461, 0
  %v4485 = vsel %vm459, %v4462, 0
  %v4488 = vsel %vm459, %v4463, 0
  %4490 = vmatprep.subr.bf16.mxu0 %v4409
  %4491 = vmatpush1.bf16.msra.mxu0 %v4408
  %4492 = vmatprep.subr.bf16.mxu0 %v4413
  %4493 = vmatpush1.bf16.msra.mxu0 %v4412
  %4494 = vmatprep.subr.bf16.mxu0 %v4417
  %4495 = vmatpush1.bf16.msra.mxu0 %v4416
  %4496 = vmatprep.subr.bf16.mxu0 %v4421
  %4497 = vmatpush1.bf16.msra.mxu0 %v4420
  %4498 = vmatprep.subr.bf16.mxu0 %v4425
  %4499 = vmatpush1.bf16.msra.mxu0 %v4424
  %4500 = vmatprep.subr.bf16.mxu0 %v4429
  %4501 = vmatpush1.bf16.msra.mxu0 %v4428
  %4502 = vmatprep.subr.bf16.mxu0 %v4433
  %4503 = vmatpush1.bf16.msra.mxu0 %v4432
  %4504 = vmatprep.subr.bf16.mxu0 %v4437
  %4505 = vmatpush1.bf16.msra.mxu0 %v4436
  %4506 = vmatprep.subr.bf16.mxu0 %v4441
  %4507 = vmatpush1.bf16.msra.mxu0 %v4440
  %4508 = vmatprep.subr.bf16.mxu0 %v4445
  %4509 = vmatpush1.bf16.msra.mxu0 %v4444
  %4510 = vmatprep.subr.bf16.mxu0 %v4449
  %4511 = vmatpush1.bf16.msra.mxu0 %v4448
  %4512 = vmatprep.subr.bf16.mxu0 %v4453
  %4513 = vmatpush1.bf16.msra.mxu0 %v4452
  %4514 = vmatprep.subr.bf16.mxu0 %v4457
  %4515 = vmatpush1.bf16.msra.mxu0 %v4456
  %4516 = vmatprep.subr.bf16.mxu0 %v4482
  %4517 = vmatpush1.bf16.msra.mxu0 %v4479
  %4518 = vmatprep.subr.bf16.mxu0 0
  %4519 = vmatpush1.bf16.msra.mxu0 0
  %4520 = vmatprep.subr.bf16.mxu0 0
  %4521 = vmatpush1.bf16.msra.mxu0 0
  %4522 = vmatprep.mubr.bf16.mxu0 %v4476
  %4523 = vmatmul.mubr.bf16.gmra.mrb[0].mxu0 %v4472
  %v4524 = vpop.f32.mrb[0].mxu0
  %v4525 = vadd.f32 %v4467, %v4524
  %v4526 = vpop.f32.mrb[0].mxu0
  %v4527 = vadd.f32 %v4467, %v4526
  %v4528 = vpop.f32.mrb[0].mxu0
  %v4529 = vpop.f32.mrb[0].mxu0
  %4530 = vdwg.mxu0
  %4531 = vmatprep.subr.bf16.mxu0 %v4411
  %4532 = vmatpush1.bf16.msra.mxu0 %v4410
  %4533 = vmatprep.subr.bf16.mxu0 %v4415
  %4534 = vmatpush1.bf16.msra.mxu0 %v4414
  %4535 = vmatprep.subr.bf16.mxu0 %v4419
  %4536 = vmatpush1.bf16.msra.mxu0 %v4418
  %4537 = vmatprep.subr.bf16.mxu0 %v4423
  %4538 = vmatpush1.bf16.msra.mxu0 %v4422
  %4539 = vmatprep.subr.bf16.mxu0 %v4427
  %4540 = vmatpush1.bf16.msra.mxu0 %v4426
  %4541 = vmatprep.subr.bf16.mxu0 %v4431
  %4542 = vmatpush1.bf16.msra.mxu0 %v4430
  %4543 = vmatprep.subr.bf16.mxu0 %v4435
  %4544 = vmatpush1.bf16.msra.mxu0 %v4434
  %4545 = vmatprep.subr.bf16.mxu0 %v4439
  %4546 = vmatpush1.bf16.msra.mxu0 %v4438
  %4547 = vmatprep.subr.bf16.mxu0 %v4443
  %4548 = vmatpush1.bf16.msra.mxu0 %v4442
  %4549 = vmatprep.subr.bf16.mxu0 %v4447
  %4550 = vmatpush1.bf16.msra.mxu0 %v4446
  %4551 = vmatprep.subr.bf16.mxu0 %v4451
  %4552 = vmatpush1.bf16.msra.mxu0 %v4450
  %4553 = vmatprep.subr.bf16.mxu0 %v4455
  %4554 = vmatpush1.bf16.msra.mxu0 %v4454
  %4555 = vmatprep.subr.bf16.mxu0 %v4459
  %4556 = vmatpush1.bf16.msra.mxu0 %v4458
  %4557 = vmatprep.subr.bf16.mxu0 %v4488
  %4558 = vmatpush1.bf16.msra.mxu0 %v4485
  %4559 = vmatprep.subr.bf16.mxu0 0
  %4560 = vmatpush1.bf16.msra.mxu0 0
  %4561 = vmatprep.subr.bf16.mxu0 0
  %4562 = vmatpush1.bf16.msra.mxu0 0
  %4563 = vmatprep.mubr.bf16.mxu0 %v4476
  %4564 = vmatmul.mubr.bf16.gmra.mrb[0].mxu0 %v4472
  %v4565 = vpop.f32.mrb[0].mxu0
  %v4566 = vadd.f32 %v4467, %v4565
  %v4567 = vpop.f32.mrb[0].mxu0
  %v4568 = vadd.f32 %v4467, %v4567
  %v4569 = vpop.f32.mrb[0].mxu0
  %v4570 = vpop.f32.mrb[0].mxu0
  %4571 = vdwg.mxu0
  %v4572 = vmax.f32 %v4525, 0.0
  %v4573 = vmax.f32 %v4527, 0.0
  %v4574 = vmax.f32 %v4566, 0.0
  %v4575 = vmax.f32 %v4568, 0.0
  %v4576 = vpack.c.bf16 %v4572, %v4572
  %v4577 = vpack.c.bf16 %v4573, %v4573
  %v4578 = vpack.c.bf16 %v4574, %v4574
  %v4579 = vpack.c.bf16 %v4575, %v4575
  %v4584 = vrot.slane %v4576, 4
  %v4585 = vrot.slane %v4577, 4
  %v4586 = vrot.slane %v4578, 4
  %v4587 = vrot.slane %v4579, 4
  %4592 = vst [vmem:[#allocation3 + $0x20] sm:$0xf0] %v4584
  %4593 = vst [vmem:[#allocation3 + $0x28] sm:$0xf0] %v4585
  %4594 = vst [vmem:[#allocation3 + $0x30] sm:$0xf0] %v4586
  %4595 = vst [vmem:[#allocation3 + $0x38] sm:$0xf0] %v4587
  %v4596 = vld [vmem:[#allocation3] sm:$0xff]
  %v4597 = vld [vmem:[#allocation3 + $0x8] sm:$0xff]
  %v4598 = vld [vmem:[#allocation3 + $0x10] sm:$0xff]
  %v4599 = vld [vmem:[#allocation3 + $0x18] sm:$0xff]
  %v4600 = vld [vmem:[#allocation3 + $0x20] sm:$0xff]
  %v4601 = vld [vmem:[#allocation3 + $0x28] sm:$0xff]
  %v4602 = vld [vmem:[#allocation3 + $0x30] sm:$0xff]
  %v4603 = vld [vmem:[#allocation3 + $0x38] sm:$0xff]
  %v4604 = vld [vmem:[%s2 + $0x90] sm:$0xf]
  %v4605 = vld [vmem:[%s3 + $0x50] sm:$0xff]
  %4607 = vset.pattern.permute.xlu0 0
  %4608 = vperm.xlu0 %4607, %v4605
  %v4609 = vpop.permute.xlu0 %4608
  %v4612 = vsel %vm2770, %v4604, 0
  %4614 = vmatprep.subr.bf16.mxu0 %v4597
  %4615 = vmatpush1.bf16.msra.mxu0 %v4596
  %4616 = vmatprep.subr.bf16.mxu0 %v4601
  %4617 = vmatpush1.bf16.msra.mxu0 %v4600
  %4618 = vmatprep.subr.bf16.mxu0 0
  %4619 = vmatpush1.bf16.msra.mxu0 0
  %4620 = vmatprep.subr.bf16.mxu0 0
  %4621 = vmatpush1.bf16.msra.mxu0 0
  %4622 = vmatprep.subr.bf16.mxu0 0
  %4623 = vmatpush1.bf16.msra.mxu0 0
  %4624 = vmatprep.subr.bf16.mxu0 0
  %4625 = vmatpush1.bf16.msra.mxu0 0
  %4626 = vmatprep.subr.bf16.mxu0 0
  %4627 = vmatpush1.bf16.msra.mxu0 0
  %4628 = vmatprep.subr.bf16.mxu0 0
  %4629 = vmatpush1.bf16.msra.mxu0 0
  %4630 = vmatprep.subr.bf16.mxu0 0
  %4631 = vmatpush1.bf16.msra.mxu0 0
  %4632 = vmatprep.subr.bf16.mxu0 0
  %4633 = vmatpush1.bf16.msra.mxu0 0
  %4634 = vmatprep.subr.bf16.mxu0 0
  %4635 = vmatpush1.bf16.msra.mxu0 0
  %4636 = vmatprep.subr.bf16.mxu0 0
  %4637 = vmatpush1.bf16.msra.mxu0 0
  %4638 = vmatprep.subr.bf16.mxu0 0
  %4639 = vmatpush1.bf16.msra.mxu0 0
  %4640 = vmatprep.subr.bf16.mxu0 0
  %4641 = vmatpush1.bf16.msra.mxu0 0
  %4642 = vmatprep.subr.bf16.mxu0 0
  %4643 = vmatpush1.bf16.msra.mxu0 0
  %4644 = vmatprep.subr.bf16.mxu0 0
  %4645 = vmatpush1.bf16.msra.mxu0 0
  %4646 = vmatprep.mubr.bf16.mxu0 0
  %4647 = vmatmul.mubr.bf16.gmra.mrb[0].mxu0 %v4612
  %v4648 = vpop.f32.mrb[0].mxu0
  %v4649 = vadd.f32 %v4609, %v4648
  %v4650 = vpop.f32.mrb[0].mxu0
  %v4651 = vadd.f32 %v4609, %v4650
  %v4652 = vpop.f32.mrb[0].mxu0
  %v4653 = vpop.f32.mrb[0].mxu0
  %4654 = vdwg.mxu0
  %4655 = vmatprep.subr.bf16.mxu0 %v4599
  %4656 = vmatpush1.bf16.msra.mxu0 %v4598
  %4657 = vmatprep.subr.bf16.mxu0 %v4603
  %4658 = vmatpush1.bf16.msra.mxu0 %v4602
  %4659 = vmatprep.subr.bf16.mxu0 0
  %4660 = vmatpush1.bf16.msra.mxu0 0
  %4661 = vmatprep.subr.bf16.mxu0 0
  %4662 = vmatpush1.bf16.msra.mxu0 0
  %4663 = vmatprep.subr.bf16.mxu0 0
  %4664 = vmatpush1.bf16.msra.mxu0 0
  %4665 = vmatprep.subr.bf16.mxu0 0
  %4666 = vmatpush1.bf16.msra.mxu0 0
  %4667 = vmatprep.subr.bf16.mxu0 0
  %4668 = vmatpush1.bf16.msra.mxu0 0
  %4669 = vmatprep.subr.bf16.mxu0 0
  %4670 = vmatpush1.bf16.msra.mxu0 0
  %4671 = vmatprep.subr.bf16.mxu0 0
  %4672 = vmatpush1.bf16.msra.mxu0 0
  %4673 = vmatprep.subr.bf16.mxu0 0
  %4674 = vmatpush1.bf16.msra.mxu0 0
  %4675 = vmatprep.subr.bf16.mxu0 0
  %4676 = vmatpush1.bf16.msra.mxu0 0
  %4677 = vmatprep.subr.bf16.mxu0 0
  %4678 = vmatpush1.bf16.msra.mxu0 0
  %4679 = vmatprep.subr.bf16.mxu0 0
  %4680 = vmatpush1.bf16.msra.mxu0 0
  %4681 = vmatprep.subr.bf16.mxu0 0
  %4682 = vmatpush1.bf16.msra.mxu0 0
  %4683 = vmatprep.subr.bf16.mxu0 0
  %4684 = vmatpush1.bf16.msra.mxu0 0
  %4685 = vmatprep.subr.bf16.mxu0 0
  %4686 = vmatpush1.bf16.msra.mxu0 0
  %4687 = vmatprep.mubr.bf16.mxu0 0
  %4688 = vmatmul.mubr.bf16.gmra.mrb[0].mxu0 %v4612
  %v4689 = vpop.f32.mrb[0].mxu0
  %v4690 = vadd.f32 %v4609, %v4689
  %v4691 = vpop.f32.mrb[0].mxu0
  %v4692 = vadd.f32 %v4609, %v4691
  %v4693 = vpop.f32.mrb[0].mxu0
  %v4694 = vpop.f32.mrb[0].mxu0
  %4695 = vdwg.mxu0
  %v4696 = vadd.f32 %v4649, %v2856
  %v4697 = vadd.f32 %v4651, %v2857
  %v4698 = vadd.f32 %v4690, %v2858
  %v4699 = vadd.f32 %v4692, %v2859
  %v4700 = vpack.c.bf16 %v4696, %v4696
  %v4701 = vpack.c.bf16 %v4697, %v4697
  %v4702 = vpack.c.bf16 %v4698, %v4698
  %v4703 = vpack.c.bf16 %v4699, %v4699
  %v4708 = vrot.slane %v4700, 4
  %v4709 = vrot.slane %v4701, 4
  %v4710 = vrot.slane %v4702, 4
  %v4711 = vrot.slane %v4703, 4
  %4716 = vst [vmem:[#allocation4] sm:$0xf0] %v4708
  %4717 = vst [vmem:[#allocation4 + $0x8] sm:$0xf0] %v4709
  %4718 = vst [vmem:[#allocation4 + $0x10] sm:$0xf0] %v4710
  %4719 = vst [vmem:[#allocation4 + $0x18] sm:$0xf0] %v4711
  %v4720 = vld [vmem:[#allocation4] sm:$0xff]
  %v4721 = vld [vmem:[#allocation4 + $0x8] sm:$0xff]
  %v4722 = vld [vmem:[#allocation4 + $0x10] sm:$0xff]
  %v4723 = vld [vmem:[#allocation4 + $0x18] sm:$0xff]
  %v4724 = vld [vmem:[%s2 + $0xa0] sm:$0xf]
  %v4725 = vld [vmem:[%s2 + $0xa8] sm:$0xf]
  %v4726 = vld [vmem:[%s3 + $0x58] sm:$0xff]
  %v4727 = vld [vmem:[%s3 + $0x60] sm:$0xff]
  %4729 = vset.pattern.permute.xlu0 0
  %4730 = vperm.xlu0 %4729, %v4726
  %v4731 = vpop.permute.xlu0 %4730
  %4734 = vset.pattern.permute.xlu0 0
  %4735 = vperm.xlu0 %4734, %v4727
  %v4736 = vpop.permute.xlu0 %4735
  %v4740 = vunpack.c.l.b16 %v4724
  %v4741 = vunpack.c.l.b16 %v4725
  %v4742 = vpack.c.b16 %v4741, %v4740
  %v4744 = vsel %vm935, %v4742, 0
  %4746 = vmatprep.subr.bf16.mxu0 %v4721
  %4747 = vmatpush1.bf16.msra.mxu0 %v4720
  %4748 = vmatprep.subr.bf16.mxu0 0
  %4749 = vmatpush1.bf16.msra.mxu0 0
  %4750 = vmatprep.subr.bf16.mxu0 0
  %4751 = vmatpush1.bf16.msra.mxu0 0
  %4752 = vmatprep.subr.bf16.mxu0 0
  %4753 = vmatpush1.bf16.msra.mxu0 0
  %4754 = vmatprep.subr.bf16.mxu0 0
  %4755 = vmatpush1.bf16.msra.mxu0 0
  %4756 = vmatprep.subr.bf16.mxu0 0
  %4757 = vmatpush1.bf16.msra.mxu0 0
  %4758 = vmatprep.subr.bf16.mxu0 0
  %4759 = vmatpush1.bf16.msra.mxu0 0
  %4760 = vmatprep.subr.bf16.mxu0 0
  %4761 = vmatpush1.bf16.msra.mxu0 0
  %4762 = vmatprep.subr.bf16.mxu0 0
  %4763 = vmatpush1.bf16.msra.mxu0 0
  %4764 = vmatprep.subr.bf16.mxu0 0
  %4765 = vmatpush1.bf16.msra.mxu0 0
  %4766 = vmatprep.subr.bf16.mxu0 0
  %4767 = vmatpush1.bf16.msra.mxu0 0
  %4768 = vmatprep.subr.bf16.mxu0 0
  %4769 = vmatpush1.bf16.msra.mxu0 0
  %4770 = vmatprep.subr.bf16.mxu0 0
  %4771 = vmatpush1.bf16.msra.mxu0 0
  %4772 = vmatprep.subr.bf16.mxu0 0
  %4773 = vmatpush1.bf16.msra.mxu0 0
  %4774 = vmatprep.subr.bf16.mxu0 0
  %4775 = vmatpush1.bf16.msra.mxu0 0
  %4776 = vmatprep.subr.bf16.mxu0 0
  %4777 = vmatpush1.bf16.msra.mxu0 0
  %4778 = vmatprep.mubr.bf16.mxu0 0
  %4779 = vmatmul.mubr.bf16.gmra.mrb[0].mxu0 %v4744
  %v4780 = vpop.f32.mrb[0].mxu0
  %v4781 = vadd.f32 %v4731, %v4780
  %v4782 = vpop.f32.mrb[0].mxu0
  %v4783 = vadd.f32 %v4731, %v4782
  %v4784 = vpop.f32.mrb[0].mxu0
  %v4785 = vadd.f32 %v4736, %v4784
  %v4786 = vpop.f32.mrb[0].mxu0
  %v4787 = vadd.f32 %v4736, %v4786
  %4788 = vdwg.mxu0
  %4789 = vmatprep.subr.bf16.mxu0 %v4723
  %4790 = vmatpush1.bf16.msra.mxu0 %v4722
  %4791 = vmatprep.subr.bf16.mxu0 0
  %4792 = vmatpush1.bf16.msra.mxu0 0
  %4793 = vmatprep.subr.bf16.mxu0 0
  %4794 = vmatpush1.bf16.msra.mxu0 0
  %4795 = vmatprep.subr.bf16.mxu0 0
  %4796 = vmatpush1.bf16.msra.mxu0 0
  %4797 = vmatprep.subr.bf16.mxu0 0
  %4798 = vmatpush1.bf16.msra.mxu0 0
  %4799 = vmatprep.subr.bf16.mxu0 0
  %4800 = vmatpush1.bf16.msra.mxu0 0
  %4801 = vmatprep.subr.bf16.mxu0 0
  %4802 = vmatpush1.bf16.msra.mxu0 0
  %4803 = vmatprep.subr.bf16.mxu0 0
  %4804 = vmatpush1.bf16.msra.mxu0 0
  %4805 = vmatprep.subr.bf16.mxu0 0
  %4806 = vmatpush1.bf16.msra.mxu0 0
  %4807 = vmatprep.subr.bf16.mxu0 0
  %4808 = vmatpush1.bf16.msra.mxu0 0
  %4809 = vmatprep.subr.bf16.mxu0 0
  %4810 = vmatpush1.bf16.msra.mxu0 0
  %4811 = vmatprep.subr.bf16.mxu0 0
  %4812 = vmatpush1.bf16.msra.mxu0 0
  %4813 = vmatprep.subr.bf16.mxu0 0
  %4814 = vmatpush1.bf16.msra.mxu0 0
  %4815 = vmatprep.subr.bf16.mxu0 0
  %4816 = vmatpush1.bf16.msra.mxu0 0
  %4817 = vmatprep.subr.bf16.mxu0 0
  %4818 = vmatpush1.bf16.msra.mxu0 0
  %4819 = vmatprep.subr.bf16.mxu0 0
  %4820 = vmatpush1.bf16.msra.mxu0 0
  %4821 = vmatprep.mubr.bf16.mxu0 0
  %4822 = vmatmul.mubr.bf16.gmra.mrb[0].mxu0 %v4744
  %v4823 = vpop.f32.mrb[0].mxu0
  %v4824 = vadd.f32 %v4731, %v4823
  %v4825 = vpop.f32.mrb[0].mxu0
  %v4826 = vadd.f32 %v4731, %v4825
  %v4827 = vpop.f32.mrb[0].mxu0
  %v4828 = vadd.f32 %v4736, %v4827
  %v4829 = vpop.f32.mrb[0].mxu0
  %v4830 = vadd.f32 %v4736, %v4829
  %4831 = vdwg.mxu0
  %v4832 = vld [vmem:[%s2 + $0xb0] sm:$0xff]
  %v4833 = vld [vmem:[%s3 + $0x68] sm:$0xff]
  %4834 = vrot.lane.b32.xlu0 %v4781, 17
  %v4835 = vpop.permute.xlu0 %4834
  %4836 = vrot.lane.b32.xlu0 %v4785, 17
  %v4837 = vpop.permute.xlu0 %4836
  %4838 = vrot.lane.b32.xlu0 %v4783, 17
  %v4839 = vpop.permute.xlu0 %4838
  %4840 = vrot.lane.b32.xlu0 %v4787, 17
  %v4841 = vpop.permute.xlu0 %4840
  %4842 = vrot.lane.b32.xlu0 %v4824, 17
  %v4843 = vpop.permute.xlu0 %4842
  %4844 = vrot.lane.b32.xlu0 %v4828, 17
  %v4845 = vpop.permute.xlu0 %4844
  %4846 = vrot.lane.b32.xlu0 %v4826, 17
  %v4847 = vpop.permute.xlu0 %4846
  %4848 = vrot.lane.b32.xlu0 %v4830, 17
  %v4849 = vpop.permute.xlu0 %4848
  %v4850 = vsel %vm44, %v4843, %v4847
  %v4851 = vsel %vm44, %v4845, %v4849
  %v4852 = vsel %vm44, %v4839, %v4843
  %v4853 = vsel %vm44, %v4841, %v4845
  %v4854 = vsel %vm44, %v4835, %v4839
  %v4855 = vsel %vm44, %v4837, %v4841
  %v4856 = vsel %vm44, %v4847, %v4835
  %v4857 = vsel %vm44, %v4849, %v4837
  %v4858 = vmul.f32 %v4856, %v52
  %v4859 = vmul.f32 %v4854, %v56
  %v4860 = vmul.f32 %v4852, %v60
  %v4861 = vmul.f32 %v4850, %v64
  %v4862 = vmul.f32 %v4857, %v52
  %v4863 = vmul.f32 %v4855, %v56
  %v4864 = vmul.f32 %v4853, %v60
  %v4865 = vmul.f32 %v4851, %v64
  %v4866 = vpack.c.bf16 %v4862, %v4858
  %v4867 = vpack.c.bf16 %v4863, %v4859
  %v4868 = vpack.c.bf16 %v4864, %v4860
  %v4869 = vpack.c.bf16 %v4865, %v4861
  %4870 = vst [vmem:[#allocation2] sm:$0xff] %v4866
  %4871 = vst [vmem:[#allocation2 + $0x8] sm:$0xff] %v4867
  %4872 = vst [vmem:[#allocation2 + $0x10] sm:$0xff] %v4868
  %4873 = vst [vmem:[#allocation2 + $0x18] sm:$0xff] %v4869
  %4874 = vrot.lane.b32.xlu0 %v4781, 16
  %v4875 = vpop.permute.xlu0 %4874
  %4876 = vrot.lane.b32.xlu0 %v4785, 16
  %v4877 = vpop.permute.xlu0 %4876
  %4878 = vrot.lane.b32.xlu0 %v4783, 16
  %v4879 = vpop.permute.xlu0 %4878
  %4880 = vrot.lane.b32.xlu0 %v4787, 16
  %v4881 = vpop.permute.xlu0 %4880
  %4882 = vrot.lane.b32.xlu0 %v4824, 16
  %v4883 = vpop.permute.xlu0 %4882
  %4884 = vrot.lane.b32.xlu0 %v4828, 16
  %v4885 = vpop.permute.xlu0 %4884
  %4886 = vrot.lane.b32.xlu0 %v4826, 16
  %v4887 = vpop.permute.xlu0 %4886
  %4888 = vrot.lane.b32.xlu0 %v4830, 16
  %v4889 = vpop.permute.xlu0 %4888
  %v4890 = vsel %vm85, %v4883, %v4887
  %v4891 = vsel %vm85, %v4885, %v4889
  %v4892 = vsel %vm85, %v4879, %v4883
  %v4893 = vsel %vm85, %v4881, %v4885
  %v4894 = vsel %vm85, %v4875, %v4879
  %v4895 = vsel %vm85, %v4877, %v4881
  %v4896 = vsel %vm85, %v4887, %v4875
  %v4897 = vsel %vm85, %v4889, %v4877
  %v4898 = vmul.f32 %v4896, %v93
  %v4899 = vmul.f32 %v4894, %v97
  %v4900 = vmul.f32 %v4892, %v101
  %v4901 = vmul.f32 %v4890, %v105
  %v4902 = vmul.f32 %v4897, %v93
  %v4903 = vmul.f32 %v4895, %v97
  %v4904 = vmul.f32 %v4893, %v101
  %v4905 = vmul.f32 %v4891, %v105
  %v4906 = vpack.c.bf16 %v4902, %v4898
  %v4907 = vpack.c.bf16 %v4903, %v4899
  %v4908 = vpack.c.bf16 %v4904, %v4900
  %v4909 = vpack.c.bf16 %v4905, %v4901
  %4910 = vst [vmem:[#allocation2 + $0x20] sm:$0xff] %v4906
  %4911 = vst [vmem:[#allocation2 + $0x28] sm:$0xff] %v4907
  %4912 = vst [vmem:[#allocation2 + $0x30] sm:$0xff] %v4908
  %4913 = vst [vmem:[#allocation2 + $0x38] sm:$0xff] %v4909
  %4914 = vrot.lane.b32.xlu0 %v4781, 15
  %v4915 = vpop.permute.xlu0 %4914
  %4916 = vrot.lane.b32.xlu0 %v4785, 15
  %v4917 = vpop.permute.xlu0 %4916
  %4918 = vrot.lane.b32.xlu0 %v4783, 15
  %v4919 = vpop.permute.xlu0 %4918
  %4920 = vrot.lane.b32.xlu0 %v4787, 15
  %v4921 = vpop.permute.xlu0 %4920
  %4922 = vrot.lane.b32.xlu0 %v4824, 15
  %v4923 = vpop.permute.xlu0 %4922
  %4924 = vrot.lane.b32.xlu0 %v4828, 15
  %v4925 = vpop.permute.xlu0 %4924
  %4926 = vrot.lane.b32.xlu0 %v4826, 15
  %v4927 = vpop.permute.xlu0 %4926
  %4928 = vrot.lane.b32.xlu0 %v4830, 15
  %v4929 = vpop.permute.xlu0 %4928
  %v4930 = vsel %vm138, %v4923, %v4927
  %v4931 = vsel %vm138, %v4925, %v4929
  %v4932 = vsel %vm138, %v4919, %v4923
  %v4933 = vsel %vm138, %v4921, %v4925
  %v4934 = vsel %vm138, %v4915, %v4919
  %v4935 = vsel %vm138, %v4917, %v4921
  %v4936 = vsel %vm138, %v4927, %v4915
  %v4937 = vsel %vm138, %v4929, %v4917
  %v4938 = vmul.f32 %v4936, %v146
  %v4939 = vmul.f32 %v4934, %v150
  %v4940 = vmul.f32 %v4932, %v154
  %v4941 = vmul.f32 %v4930, %v158
  %v4942 = vmul.f32 %v4937, %v146
  %v4943 = vmul.f32 %v4935, %v150
  %v4944 = vmul.f32 %v4933, %v154
  %v4945 = vmul.f32 %v4931, %v158
  %v4946 = vpack.c.bf16 %v4942, %v4938
  %v4947 = vpack.c.bf16 %v4943, %v4939
  %v4948 = vpack.c.bf16 %v4944, %v4940
  %v4949 = vpack.c.bf16 %v4945, %v4941
  %4950 = vst [vmem:[#allocation2 + $0x40] sm:$0xff] %v4946
  %4951 = vst [vmem:[#allocation2 + $0x48] sm:$0xff] %v4947
  %4952 = vst [vmem:[#allocation2 + $0x50] sm:$0xff] %v4948
  %4953 = vst [vmem:[#allocation2 + $0x58] sm:$0xff] %v4949
  %4954 = vrot.lane.b32.xlu0 %v4781, 1
  %v4955 = vpop.permute.xlu0 %4954
  %4956 = vrot.lane.b32.xlu0 %v4785, 1
  %v4957 = vpop.permute.xlu0 %4956
  %4958 = vrot.lane.b32.xlu0 %v4783, 1
  %v4959 = vpop.permute.xlu0 %4958
  %4960 = vrot.lane.b32.xlu0 %v4787, 1
  %v4961 = vpop.permute.xlu0 %4960
  %4962 = vrot.lane.b32.xlu0 %v4824, 1
  %v4963 = vpop.permute.xlu0 %4962
  %4964 = vrot.lane.b32.xlu0 %v4828, 1
  %v4965 = vpop.permute.xlu0 %4964
  %4966 = vrot.lane.b32.xlu0 %v4826, 1
  %v4967 = vpop.permute.xlu0 %4966
  %4968 = vrot.lane.b32.xlu0 %v4830, 1
  %v4969 = vpop.permute.xlu0 %4968
  %v4970 = vsel %vm179, %v4963, %v4967
  %v4971 = vsel %vm179, %v4965, %v4969
  %v4972 = vsel %vm179, %v4959, %v4963
  %v4973 = vsel %vm179, %v4961, %v4965
  %v4974 = vsel %vm179, %v4955, %v4959
  %v4975 = vsel %vm179, %v4957, %v4961
  %v4976 = vsel %vm179, %v4967, %v4955
  %v4977 = vsel %vm179, %v4969, %v4957
  %v4978 = vmul.f32 %v4976, %v187
  %v4979 = vmul.f32 %v4974, %v191
  %v4980 = vmul.f32 %v4972, %v195
  %v4981 = vmul.f32 %v4970, %v199
  %v4982 = vmul.f32 %v4977, %v187
  %v4983 = vmul.f32 %v4975, %v191
  %v4984 = vmul.f32 %v4973, %v195
  %v4985 = vmul.f32 %v4971, %v199
  %v4986 = vpack.c.bf16 %v4982, %v4978
  %v4987 = vpack.c.bf16 %v4983, %v4979
  %v4988 = vpack.c.bf16 %v4984, %v4980
  %v4989 = vpack.c.bf16 %v4985, %v4981
  %4990 = vst [vmem:[#allocation2 + $0x60] sm:$0xff] %v4986
  %4991 = vst [vmem:[#allocation2 + $0x68] sm:$0xff] %v4987
  %4992 = vst [vmem:[#allocation2 + $0x70] sm:$0xff] %v4988
  %4993 = vst [vmem:[#allocation2 + $0x78] sm:$0xff] %v4989
  %v4994 = vpack.c.bf16 %v4785, %v4781
  %v4995 = vpack.c.bf16 %v4787, %v4783
  %v4996 = vpack.c.bf16 %v4828, %v4824
  %v4997 = vpack.c.bf16 %v4830, %v4826
  %4998 = vst [vmem:[#allocation2 + $0x80] sm:$0xff] %v4994
  %4999 = vst [vmem:[#allocation2 + $0x88] sm:$0xff] %v4995
  %5000 = vst [vmem:[#allocation2 + $0x90] sm:$0xff] %v4996
  %5001 = vst [vmem:[#allocation2 + $0x98] sm:$0xff] %v4997
  %5002 = vrot.lane.b32.xlu0 %v4781, 127
  %v5003 = vpop.permute.xlu0 %5002
  %5004 = vrot.lane.b32.xlu0 %v4785, 127
  %v5005 = vpop.permute.xlu0 %5004
  %5006 = vrot.lane.b32.xlu0 %v4783, 127
  %v5007 = vpop.permute.xlu0 %5006
  %5008 = vrot.lane.b32.xlu0 %v4787, 127
  %v5009 = vpop.permute.xlu0 %5008
  %5010 = vrot.lane.b32.xlu0 %v4824, 127
  %v5011 = vpop.permute.xlu0 %5010
  %5012 = vrot.lane.b32.xlu0 %v4828, 127
  %v5013 = vpop.permute.xlu0 %5012
  %5014 = vrot.lane.b32.xlu0 %v4826, 127
  %v5015 = vpop.permute.xlu0 %5014
  %5016 = vrot.lane.b32.xlu0 %v4830, 127
  %v5017 = vpop.permute.xlu0 %5016
  %v5018 = vsel %vm240, %v5011, %v5015
  %v5019 = vsel %vm240, %v5013, %v5017
  %v5020 = vsel %vm240, %v5007, %v5011
  %v5021 = vsel %vm240, %v5009, %v5013
  %v5022 = vsel %vm240, %v5003, %v5007
  %v5023 = vsel %vm240, %v5005, %v5009
  %v5024 = vsel %vm240, %v5015, %v5003
  %v5025 = vsel %vm240, %v5017, %v5005
  %v5026 = vmul.f32 %v5022, %v248
  %v5027 = vmul.f32 %v5020, %v252
  %v5028 = vmul.f32 %v5018, %v256
  %v5029 = vmul.f32 %v5024, %v260
  %v5030 = vmul.f32 %v5023, %v248
  %v5031 = vmul.f32 %v5021, %v252
  %v5032 = vmul.f32 %v5019, %v256
  %v5033 = vmul.f32 %v5025, %v260
  %v5034 = vpack.c.bf16 %v5030, %v5026
  %v5035 = vpack.c.bf16 %v5031, %v5027
  %v5036 = vpack.c.bf16 %v5032, %v5028
  %v5037 = vpack.c.bf16 %v5033, %v5029
  %5038 = vst [vmem:[#allocation2 + $0xa0] sm:$0xff] %v5034
  %5039 = vst [vmem:[#allocation2 + $0xa8] sm:$0xff] %v5035
  %5040 = vst [vmem:[#allocation2 + $0xb0] sm:$0xff] %v5036
  %5041 = vst [vmem:[#allocation2 + $0xb8] sm:$0xff] %v5037
  %5042 = vrot.lane.b32.xlu0 %v4781, 113
  %v5043 = vpop.permute.xlu0 %5042
  %5044 = vrot.lane.b32.xlu0 %v4785, 113
  %v5045 = vpop.permute.xlu0 %5044
  %5046 = vrot.lane.b32.xlu0 %v4783, 113
  %v5047 = vpop.permute.xlu0 %5046
  %5048 = vrot.lane.b32.xlu0 %v4787, 113
  %v5049 = vpop.permute.xlu0 %5048
  %5050 = vrot.lane.b32.xlu0 %v4824, 113
  %v5051 = vpop.permute.xlu0 %5050
  %5052 = vrot.lane.b32.xlu0 %v4828, 113
  %v5053 = vpop.permute.xlu0 %5052
  %5054 = vrot.lane.b32.xlu0 %v4826, 113
  %v5055 = vpop.permute.xlu0 %5054
  %5056 = vrot.lane.b32.xlu0 %v4830, 113
  %v5057 = vpop.permute.xlu0 %5056
  %v5058 = vsel %vm293, %v5051, %v5055
  %v5059 = vsel %vm293, %v5053, %v5057
  %v5060 = vsel %vm293, %v5047, %v5051
  %v5061 = vsel %vm293, %v5049, %v5053
  %v5062 = vsel %vm293, %v5043, %v5047
  %v5063 = vsel %vm293, %v5045, %v5049
  %v5064 = vsel %vm293, %v5055, %v5043
  %v5065 = vsel %vm293, %v5057, %v5045
  %v5066 = vmul.f32 %v5062, %v301
  %v5067 = vmul.f32 %v5060, %v305
  %v5068 = vmul.f32 %v5058, %v309
  %v5069 = vmul.f32 %v5064, %v313
  %v5070 = vmul.f32 %v5063, %v301
  %v5071 = vmul.f32 %v5061, %v305
  %v5072 = vmul.f32 %v5059, %v309
  %v5073 = vmul.f32 %v5065, %v313
  %v5074 = vpack.c.bf16 %v5070, %v5066
  %v5075 = vpack.c.bf16 %v5071, %v5067
  %v5076 = vpack.c.bf16 %v5072, %v5068
  %v5077 = vpack.c.bf16 %v5073, %v5069
  %5078 = vst [vmem:[#allocation2 + $0xc0] sm:$0xff] %v5074
  %5079 = vst [vmem:[#allocation2 + $0xc8] sm:$0xff] %v5075
  %5080 = vst [vmem:[#allocation2 + $0xd0] sm:$0xff] %v5076
  %5081 = vst [vmem:[#allocation2 + $0xd8] sm:$0xff] %v5077
  %5082 = vrot.lane.b32.xlu0 %v4781, 112
  %v5083 = vpop.permute.xlu0 %5082
  %5084 = vrot.lane.b32.xlu0 %v4785, 112
  %v5085 = vpop.permute.xlu0 %5084
  %5086 = vrot.lane.b32.xlu0 %v4783, 112
  %v5087 = vpop.permute.xlu0 %5086
  %5088 = vrot.lane.b32.xlu0 %v4787, 112
  %v5089 = vpop.permute.xlu0 %5088
  %5090 = vrot.lane.b32.xlu0 %v4824, 112
  %v5091 = vpop.permute.xlu0 %5090
  %5092 = vrot.lane.b32.xlu0 %v4828, 112
  %v5093 = vpop.permute.xlu0 %5092
  %5094 = vrot.lane.b32.xlu0 %v4826, 112
  %v5095 = vpop.permute.xlu0 %5094
  %5096 = vrot.lane.b32.xlu0 %v4830, 112
  %v5097 = vpop.permute.xlu0 %5096
  %v5098 = vsel %vm334, %v5091, %v5095
  %v5099 = vsel %vm334, %v5093, %v5097
  %v5100 = vsel %vm334, %v5087, %v5091
  %v5101 = vsel %vm334, %v5089, %v5093
  %v5102 = vsel %vm334, %v5083, %v5087
  %v5103 = vsel %vm334, %v5085, %v5089
  %v5104 = vsel %vm334, %v5095, %v5083
  %v5105 = vsel %vm334, %v5097, %v5085
  %v5106 = vmul.f32 %v5102, %v342
  %v5107 = vmul.f32 %v5100, %v346
  %v5108 = vmul.f32 %v5098, %v350
  %v5109 = vmul.f32 %v5104, %v354
  %v5110 = vmul.f32 %v5103, %v342
  %v5111 = vmul.f32 %v5101, %v346
  %v5112 = vmul.f32 %v5099, %v350
  %v5113 = vmul.f32 %v5105, %v354
  %v5114 = vpack.c.bf16 %v5110, %v5106
  %v5115 = vpack.c.bf16 %v5111, %v5107
  %v5116 = vpack.c.bf16 %v5112, %v5108
  %v5117 = vpack.c.bf16 %v5113, %v5109
  %5118 = vst [vmem:[#allocation2 + $0xe0] sm:$0xff] %v5114
  %5119 = vst [vmem:[#allocation2 + $0xe8] sm:$0xff] %v5115
  %5120 = vst [vmem:[#allocation2 + $0xf0] sm:$0xff] %v5116
  %5121 = vst [vmem:[#allocation2 + $0xf8] sm:$0xff] %v5117
  %5122 = vrot.lane.b32.xlu0 %v4781, 111
  %v5123 = vpop.permute.xlu0 %5122
  %5124 = vrot.lane.b32.xlu0 %v4785, 111
  %v5125 = vpop.permute.xlu0 %5124
  %5126 = vrot.lane.b32.xlu0 %v4783, 111
  %v5127 = vpop.permute.xlu0 %5126
  %5128 = vrot.lane.b32.xlu0 %v4787, 111
  %v5129 = vpop.permute.xlu0 %5128
  %5130 = vrot.lane.b32.xlu0 %v4824, 111
  %v5131 = vpop.permute.xlu0 %5130
  %5132 = vrot.lane.b32.xlu0 %v4828, 111
  %v5133 = vpop.permute.xlu0 %5132
  %5134 = vrot.lane.b32.xlu0 %v4826, 111
  %v5135 = vpop.permute.xlu0 %5134
  %5136 = vrot.lane.b32.xlu0 %v4830, 111
  %v5137 = vpop.permute.xlu0 %5136
  %v5138 = vsel %vm387, %v5131, %v5135
  %v5139 = vsel %vm387, %v5133, %v5137
  %v5140 = vsel %vm387, %v5127, %v5131
  %v5141 = vsel %vm387, %v5129, %v5133
  %v5142 = vsel %vm387, %v5123, %v5127
  %v5143 = vsel %vm387, %v5125, %v5129
  %v5144 = vsel %vm387, %v5135, %v5123
  %v5145 = vsel %vm387, %v5137, %v5125
  %v5146 = vmul.f32 %v5142, %v395
  %v5147 = vmul.f32 %v5140, %v399
  %v5148 = vmul.f32 %v5138, %v403
  %v5149 = vmul.f32 %v5144, %v407
  %v5150 = vmul.f32 %v5143, %v395
  %v5151 = vmul.f32 %v5141, %v399
  %v5152 = vmul.f32 %v5139, %v403
  %v5153 = vmul.f32 %v5145, %v407
  %v5154 = vpack.c.bf16 %v5150, %v5146
  %v5155 = vpack.c.bf16 %v5151, %v5147
  %v5156 = vpack.c.bf16 %v5152, %v5148
  %v5157 = vpack.c.bf16 %v5153, %v5149
  %5158 = vst [vmem:[#allocation2 + $0x100] sm:$0xff] %v5154
  %5159 = vst [vmem:[#allocation2 + $0x108] sm:$0xff] %v5155
  %5160 = vst [vmem:[#allocation2 + $0x110] sm:$0xff] %v5156
  %5161 = vst [vmem:[#allocation2 + $0x118] sm:$0xff] %v5157
  %v5162 = vld [vmem:[#allocation2] sm:$0xff]
  %v5163 = vld [vmem:[#allocation2 + $0x8] sm:$0xff]
  %v5164 = vld [vmem:[#allocation2 + $0x10] sm:$0xff]
  %v5165 = vld [vmem:[#allocation2 + $0x18] sm:$0xff]
  %v5166 = vld [vmem:[#allocation2 + $0x20] sm:$0xff]
  %v5167 = vld [vmem:[#allocation2 + $0x28] sm:$0xff]
  %v5168 = vld [vmem:[#allocation2 + $0x30] sm:$0xff]
  %v5169 = vld [vmem:[#allocation2 + $0x38] sm:$0xff]
  %v5170 = vld [vmem:[#allocation2 + $0x40] sm:$0xff]
  %v5171 = vld [vmem:[#allocation2 + $0x48] sm:$0xff]
  %v5172 = vld [vmem:[#allocation2 + $0x50] sm:$0xff]
  %v5173 = vld [vmem:[#allocation2 + $0x58] sm:$0xff]
  %v5174 = vld [vmem:[#allocation2 + $0x60] sm:$0xff]
  %v5175 = vld [vmem:[#allocation2 + $0x68] sm:$0xff]
  %v5176 = vld [vmem:[#allocation2 + $0x70] sm:$0xff]
  %v5177 = vld [vmem:[#allocation2 + $0x78] sm:$0xff]
  %v5178 = vld [vmem:[#allocation2 + $0x80] sm:$0xff]
  %v5179 = vld [vmem:[#allocation2 + $0x88] sm:$0xff]
  %v5180 = vld [vmem:[#allocation2 + $0x90] sm:$0xff]
  %v5181 = vld [vmem:[#allocation2 + $0x98] sm:$0xff]
  %v5182 = vld [vmem:[#allocation2 + $0xa0] sm:$0xff]
  %v5183 = vld [vmem:[#allocation2 + $0xa8] sm:$0xff]
  %v5184 = vld [vmem:[#allocation2 + $0xb0] sm:$0xff]
  %v5185 = vld [vmem:[#allocation2 + $0xb8] sm:$0xff]
  %v5186 = vld [vmem:[#allocation2 + $0xc0] sm:$0xff]
  %v5187 = vld [vmem:[#allocation2 + $0xc8] sm:$0xff]
  %v5188 = vld [vmem:[#allocation2 + $0xd0] sm:$0xff]
  %v5189 = vld [vmem:[#allocation2 + $0xd8] sm:$0xff]
  %v5190 = vld [vmem:[#allocation2 + $0xe0] sm:$0xff]
  %v5191 = vld [vmem:[#allocation2 + $0xe8] sm:$0xff]
  %v5192 = vld [vmem:[#allocation2 + $0xf0] sm:$0xff]
  %v5193 = vld [vmem:[#allocation2 + $0xf8] sm:$0xff]
  %v5194 = vld [vmem:[#allocation2 + $0x100] sm:$0xff]
  %v5195 = vld [vmem:[#allocation2 + $0x108] sm:$0xff]
  %v5196 = vld [vmem:[#allocation2 + $0x110] sm:$0xff]
  %v5197 = vld [vmem:[#allocation2 + $0x118] sm:$0xff]
  %5199 = vset.pattern.permute.xlu0 0
  %5200 = vperm.xlu0 %5199, %v4833
  %v5201 = vpop.permute.xlu0 %5200
  %v5204 = vunpack.c.l.b16 %v4832
  %v5205 = vunpack.c.h.b16 %v4832
  %v5206 = vpack.c.b16 %v5204, %v5204
  %v5207 = vpack.c.b16 %v5205, %v5205
  %v5210 = vsel %vm935, %v5207, 0
  %5212 = vmatprep.subr.bf16.mxu0 %v5163
  %5213 = vmatpush1.bf16.msra.mxu0 %v5162
  %5214 = vmatprep.subr.bf16.mxu0 %v5167
  %5215 = vmatpush1.bf16.msra.mxu0 %v5166
  %5216 = vmatprep.subr.bf16.mxu0 %v5171
  %5217 = vmatpush1.bf16.msra.mxu0 %v5170
  %5218 = vmatprep.subr.bf16.mxu0 %v5175
  %5219 = vmatpush1.bf16.msra.mxu0 %v5174
  %5220 = vmatprep.subr.bf16.mxu0 %v5179
  %5221 = vmatpush1.bf16.msra.mxu0 %v5178
  %5222 = vmatprep.subr.bf16.mxu0 %v5183
  %5223 = vmatpush1.bf16.msra.mxu0 %v5182
  %5224 = vmatprep.subr.bf16.mxu0 %v5187
  %5225 = vmatpush1.bf16.msra.mxu0 %v5186
  %5226 = vmatprep.subr.bf16.mxu0 %v5191
  %5227 = vmatpush1.bf16.msra.mxu0 %v5190
  %5228 = vmatprep.subr.bf16.mxu0 %v5195
  %5229 = vmatpush1.bf16.msra.mxu0 %v5194
  %5230 = vmatprep.subr.bf16.mxu0 0
  %5231 = vmatpush1.bf16.msra.mxu0 0
  %5232 = vmatprep.subr.bf16.mxu0 0
  %5233 = vmatpush1.bf16.msra.mxu0 0
  %5234 = vmatprep.subr.bf16.mxu0 0
  %5235 = vmatpush1.bf16.msra.mxu0 0
  %5236 = vmatprep.subr.bf16.mxu0 0
  %5237 = vmatpush1.bf16.msra.mxu0 0
  %5238 = vmatprep.subr.bf16.mxu0 0
  %5239 = vmatpush1.bf16.msra.mxu0 0
  %5240 = vmatprep.subr.bf16.mxu0 0
  %5241 = vmatpush1.bf16.msra.mxu0 0
  %5242 = vmatprep.subr.bf16.mxu0 0
  %5243 = vmatpush1.bf16.msra.mxu0 0
  %5244 = vmatprep.mubr.bf16.mxu0 %v5210
  %5245 = vmatmul.mubr.bf16.gmra.mrb[0].mxu0 %v5206
  %v5246 = vpop.f32.mrb[0].mxu0
  %v5247 = vadd.f32 %v5201, %v5246
  %v5248 = vpop.f32.mrb[0].mxu0
  %v5249 = vadd.f32 %v5201, %v5248
  %v5250 = vpop.f32.mrb[0].mxu0
  %v5251 = vpop.f32.mrb[0].mxu0
  %5252 = vdwg.mxu0
  %5253 = vmatprep.subr.bf16.mxu0 %v5165
  %5254 = vmatpush1.bf16.msra.mxu0 %v5164
  %5255 = vmatprep.subr.bf16.mxu0 %v5169
  %5256 = vmatpush1.bf16.msra.mxu0 %v5168
  %5257 = vmatprep.subr.bf16.mxu0 %v5173
  %5258 = vmatpush1.bf16.msra.mxu0 %v5172
  %5259 = vmatprep.subr.bf16.mxu0 %v5177
  %5260 = vmatpush1.bf16.msra.mxu0 %v5176
  %5261 = vmatprep.subr.bf16.mxu0 %v5181
  %5262 = vmatpush1.bf16.msra.mxu0 %v5180
  %5263 = vmatprep.subr.bf16.mxu0 %v5185
  %5264 = vmatpush1.bf16.msra.mxu0 %v5184
  %5265 = vmatprep.subr.bf16.mxu0 %v5189
  %5266 = vmatpush1.bf16.msra.mxu0 %v5188
  %5267 = vmatprep.subr.bf16.mxu0 %v5193
  %5268 = vmatpush1.bf16.msra.mxu0 %v5192
  %5269 = vmatprep.subr.bf16.mxu0 %v5197
  %5270 = vmatpush1.bf16.msra.mxu0 %v5196
  %5271 = vmatprep.subr.bf16.mxu0 0
  %5272 = vmatpush1.bf16.msra.mxu0 0
  %5273 = vmatprep.subr.bf16.mxu0 0
  %5274 = vmatpush1.bf16.msra.mxu0 0
  %5275 = vmatprep.subr.bf16.mxu0 0
  %5276 = vmatpush1.bf16.msra.mxu0 0
  %5277 = vmatprep.subr.bf16.mxu0 0
  %5278 = vmatpush1.bf16.msra.mxu0 0
  %5279 = vmatprep.subr.bf16.mxu0 0
  %5280 = vmatpush1.bf16.msra.mxu0 0
  %5281 = vmatprep.subr.bf16.mxu0 0
  %5282 = vmatpush1.bf16.msra.mxu0 0
  %5283 = vmatprep.subr.bf16.mxu0 0
  %5284 = vmatpush1.bf16.msra.mxu0 0
  %5285 = vmatprep.mubr.bf16.mxu0 %v5210
  %5286 = vmatmul.mubr.bf16.gmra.mrb[0].mxu0 %v5206
  %v5287 = vpop.f32.mrb[0].mxu0
  %v5288 = vadd.f32 %v5201, %v5287
  %v5289 = vpop.f32.mrb[0].mxu0
  %v5290 = vadd.f32 %v5201, %v5289
  %v5291 = vpop.f32.mrb[0].mxu0
  %v5292 = vpop.f32.mrb[0].mxu0
  %5293 = vdwg.mxu0
  %v5294 = vld [vmem:[%s2 + $0xc0] sm:$0xf]
  %v5295 = vld [vmem:[%s3 + $0x70] sm:$0xff]
  %5296 = vrot.lane.b32.xlu0 %v5247, 17
  %v5297 = vpop.permute.xlu0 %5296
  %5298 = vrot.lane.b32.xlu0 %v5249, 17
  %v5299 = vpop.permute.xlu0 %5298
  %5300 = vrot.lane.b32.xlu0 %v5288, 17
  %v5301 = vpop.permute.xlu0 %5300
  %5302 = vrot.lane.b32.xlu0 %v5290, 17
  %v5303 = vpop.permute.xlu0 %5302
  %v5304 = vsel %vm44, %v5301, %v5303
  %v5305 = vsel %vm44, %v5299, %v5301
  %v5306 = vsel %vm44, %v5297, %v5299
  %v5307 = vsel %vm44, %v5303, %v5297
  %v5308 = vmul.f32 %v5307, %v52
  %v5309 = vmul.f32 %v5306, %v56
  %v5310 = vmul.f32 %v5305, %v60
  %v5311 = vmul.f32 %v5304, %v64
  %v5312 = vpack.c.bf16 %v5308, %v5308
  %v5313 = vpack.c.bf16 %v5309, %v5309
  %v5314 = vpack.c.bf16 %v5310, %v5310
  %v5315 = vpack.c.bf16 %v5311, %v5311
  %5316 = vst [vmem:[#allocation2] sm:$0xf] %v5312
  %5317 = vst [vmem:[#allocation2 + $0x8] sm:$0xf] %v5313
  %5318 = vst [vmem:[#allocation2 + $0x10] sm:$0xf] %v5314
  %5319 = vst [vmem:[#allocation2 + $0x18] sm:$0xf] %v5315
  %5320 = vrot.lane.b32.xlu0 %v5247, 16
  %v5321 = vpop.permute.xlu0 %5320
  %5322 = vrot.lane.b32.xlu0 %v5249, 16
  %v5323 = vpop.permute.xlu0 %5322
  %5324 = vrot.lane.b32.xlu0 %v5288, 16
  %v5325 = vpop.permute.xlu0 %5324
  %5326 = vrot.lane.b32.xlu0 %v5290, 16
  %v5327 = vpop.permute.xlu0 %5326
  %v5328 = vsel %vm85, %v5325, %v5327
  %v5329 = vsel %vm85, %v5323, %v5325
  %v5330 = vsel %vm85, %v5321, %v5323
  %v5331 = vsel %vm85, %v5327, %v5321
  %v5332 = vmul.f32 %v5331, %v93
  %v5333 = vmul.f32 %v5330, %v97
  %v5334 = vmul.f32 %v5329, %v101
  %v5335 = vmul.f32 %v5328, %v105
  %v5336 = vpack.c.bf16 %v5332, %v5332
  %v5337 = vpack.c.bf16 %v5333, %v5333
  %v5338 = vpack.c.bf16 %v5334, %v5334
  %v5339 = vpack.c.bf16 %v5335, %v5335
  %v5344 = vrot.slane %v5336, 4
  %v5345 = vrot.slane %v5337, 4
  %v5346 = vrot.slane %v5338, 4
  %v5347 = vrot.slane %v5339, 4
  %5352 = vst [vmem:[#allocation2] sm:$0xf0] %v5344
  %5353 = vst [vmem:[#allocation2 + $0x8] sm:$0xf0] %v5345
  %5354 = vst [vmem:[#allocation2 + $0x10] sm:$0xf0] %v5346
  %5355 = vst [vmem:[#allocation2 + $0x18] sm:$0xf0] %v5347
  %5356 = vrot.lane.b32.xlu0 %v5247, 15
  %v5357 = vpop.permute.xlu0 %5356
  %5358 = vrot.lane.b32.xlu0 %v5249, 15
  %v5359 = vpop.permute.xlu0 %5358
  %5360 = vrot.lane.b32.xlu0 %v5288, 15
  %v5361 = vpop.permute.xlu0 %5360
  %5362 = vrot.lane.b32.xlu0 %v5290, 15
  %v5363 = vpop.permute.xlu0 %5362
  %v5364 = vsel %vm138, %v5361, %v5363
  %v5365 = vsel %vm138, %v5359, %v5361
  %v5366 = vsel %vm138, %v5357, %v5359
  %v5367 = vsel %vm138, %v5363, %v5357
  %v5368 = vmul.f32 %v5367, %v146
  %v5369 = vmul.f32 %v5366, %v150
  %v5370 = vmul.f32 %v5365, %v154
  %v5371 = vmul.f32 %v5364, %v158
  %v5372 = vpack.c.bf16 %v5368, %v5368
  %v5373 = vpack.c.bf16 %v5369, %v5369
  %v5374 = vpack.c.bf16 %v5370, %v5370
  %v5375 = vpack.c.bf16 %v5371, %v5371
  %5376 = vst [vmem:[#allocation2 + $0x20] sm:$0xf] %v5372
  %5377 = vst [vmem:[#allocation2 + $0x28] sm:$0xf] %v5373
  %5378 = vst [vmem:[#allocation2 + $0x30] sm:$0xf] %v5374
  %5379 = vst [vmem:[#allocation2 + $0x38] sm:$0xf] %v5375
  %5380 = vrot.lane.b32.xlu0 %v5247, 1
  %v5381 = vpop.permute.xlu0 %5380
  %5382 = vrot.lane.b32.xlu0 %v5249, 1
  %v5383 = vpop.permute.xlu0 %5382
  %5384 = vrot.lane.b32.xlu0 %v5288, 1
  %v5385 = vpop.permute.xlu0 %5384
  %5386 = vrot.lane.b32.xlu0 %v5290, 1
  %v5387 = vpop.permute.xlu0 %5386
  %v5388 = vsel %vm179, %v5385, %v5387
  %v5389 = vsel %vm179, %v5383, %v5385
  %v5390 = vsel %vm179, %v5381, %v5383
  %v5391 = vsel %vm179, %v5387, %v5381
  %v5392 = vmul.f32 %v5391, %v187
  %v5393 = vmul.f32 %v5390, %v191
  %v5394 = vmul.f32 %v5389, %v195
  %v5395 = vmul.f32 %v5388, %v199
  %v5396 = vpack.c.bf16 %v5392, %v5392
  %v5397 = vpack.c.bf16 %v5393, %v5393
  %v5398 = vpack.c.bf16 %v5394, %v5394
  %v5399 = vpack.c.bf16 %v5395, %v5395
  %v5404 = vrot.slane %v5396, 4
  %v5405 = vrot.slane %v5397, 4
  %v5406 = vrot.slane %v5398, 4
  %v5407 = vrot.slane %v5399, 4
  %5412 = vst [vmem:[#allocation2 + $0x20] sm:$0xf0] %v5404
  %5413 = vst [vmem:[#allocation2 + $0x28] sm:$0xf0] %v5405
  %5414 = vst [vmem:[#allocation2 + $0x30] sm:$0xf0] %v5406
  %5415 = vst [vmem:[#allocation2 + $0x38] sm:$0xf0] %v5407
  %v5416 = vpack.c.bf16 %v5247, %v5247
  %v5417 = vpack.c.bf16 %v5249, %v5249
  %v5418 = vpack.c.bf16 %v5288, %v5288
  %v5419 = vpack.c.bf16 %v5290, %v5290
  %5420 = vst [vmem:[#allocation2 + $0x40] sm:$0xf] %v5416
  %5421 = vst [vmem:[#allocation2 + $0x48] sm:$0xf] %v5417
  %5422 = vst [vmem:[#allocation2 + $0x50] sm:$0xf] %v5418
  %5423 = vst [vmem:[#allocation2 + $0x58] sm:$0xf] %v5419
  %5424 = vrot.lane.b32.xlu0 %v5247, 127
  %v5425 = vpop.permute.xlu0 %5424
  %5426 = vrot.lane.b32.xlu0 %v5249, 127
  %v5427 = vpop.permute.xlu0 %5426
  %5428 = vrot.lane.b32.xlu0 %v5288, 127
  %v5429 = vpop.permute.xlu0 %5428
  %5430 = vrot.lane.b32.xlu0 %v5290, 127
  %v5431 = vpop.permute.xlu0 %5430
  %v5432 = vsel %vm240, %v5429, %v5431
  %v5433 = vsel %vm240, %v5427, %v5429
  %v5434 = vsel %vm240, %v5425, %v5427
  %v5435 = vsel %vm240, %v5431, %v5425
  %v5436 = vmul.f32 %v5434, %v248
  %v5437 = vmul.f32 %v5433, %v252
  %v5438 = vmul.f32 %v5432, %v256
  %v5439 = vmul.f32 %v5435, %v260
  %v5440 = vpack.c.bf16 %v5436, %v5436
  %v5441 = vpack.c.bf16 %v5437, %v5437
  %v5442 = vpack.c.bf16 %v5438, %v5438
  %v5443 = vpack.c.bf16 %v5439, %v5439
  %v5448 = vrot.slane %v5440, 4
  %v5449 = vrot.slane %v5441, 4
  %v5450 = vrot.slane %v5442, 4
  %v5451 = vrot.slane %v5443, 4
  %5456 = vst [vmem:[#allocation2 + $0x40] sm:$0xf0] %v5448
  %5457 = vst [vmem:[#allocation2 + $0x48] sm:$0xf0] %v5449
  %5458 = vst [vmem:[#allocation2 + $0x50] sm:$0xf0] %v5450
  %5459 = vst [vmem:[#allocation2 + $0x58] sm:$0xf0] %v5451
  %5460 = vrot.lane.b32.xlu0 %v5247, 113
  %v5461 = vpop.permute.xlu0 %5460
  %5462 = vrot.lane.b32.xlu0 %v5249, 113
  %v5463 = vpop.permute.xlu0 %5462
  %5464 = vrot.lane.b32.xlu0 %v5288, 113
  %v5465 = vpop.permute.xlu0 %5464
  %5466 = vrot.lane.b32.xlu0 %v5290, 113
  %v5467 = vpop.permute.xlu0 %5466
  %v5468 = vsel %vm293, %v5465, %v5467
  %v5469 = vsel %vm293, %v5463, %v5465
  %v5470 = vsel %vm293, %v5461, %v5463
  %v5471 = vsel %vm293, %v5467, %v5461
  %v5472 = vmul.f32 %v5470, %v301
  %v5473 = vmul.f32 %v5469, %v305
  %v5474 = vmul.f32 %v5468, %v309
  %v5475 = vmul.f32 %v5471, %v313
  %v5476 = vpack.c.bf16 %v5472, %v5472
  %v5477 = vpack.c.bf16 %v5473, %v5473
  %v5478 = vpack.c.bf16 %v5474, %v5474
  %v5479 = vpack.c.bf16 %v5475, %v5475
  %5480 = vst [vmem:[#allocation2 + $0x60] sm:$0xf] %v5476
  %5481 = vst [vmem:[#allocation2 + $0x68] sm:$0xf] %v5477
  %5482 = vst [vmem:[#allocation2 + $0x70] sm:$0xf] %v5478
  %5483 = vst [vmem:[#allocation2 + $0x78] sm:$0xf] %v5479
  %5484 = vrot.lane.b32.xlu0 %v5247, 112
  %v5485 = vpop.permute.xlu0 %5484
  %5486 = vrot.lane.b32.xlu0 %v5249, 112
  %v5487 = vpop.permute.xlu0 %5486
  %5488 = vrot.lane.b32.xlu0 %v5288, 112
  %v5489 = vpop.permute.xlu0 %5488
  %5490 = vrot.lane.b32.xlu0 %v5290, 112
  %v5491 = vpop.permute.xlu0 %5490
  %v5492 = vsel %vm334, %v5489, %v5491
  %v5493 = vsel %vm334, %v5487, %v5489
  %v5494 = vsel %vm334, %v5485, %v5487
  %v5495 = vsel %vm334, %v5491, %v5485
  %v5496 = vmul.f32 %v5494, %v342
  %v5497 = vmul.f32 %v5493, %v346
  %v5498 = vmul.f32 %v5492, %v350
  %v5499 = vmul.f32 %v5495, %v354
  %v5500 = vpack.c.bf16 %v5496, %v5496
  %v5501 = vpack.c.bf16 %v5497, %v5497
  %v5502 = vpack.c.bf16 %v5498, %v5498
  %v5503 = vpack.c.bf16 %v5499, %v5499
  %v5508 = vrot.slane %v5500, 4
  %v5509 = vrot.slane %v5501, 4
  %v5510 = vrot.slane %v5502, 4
  %v5511 = vrot.slane %v5503, 4
  %5516 = vst [vmem:[#allocation2 + $0x60] sm:$0xf0] %v5508
  %5517 = vst [vmem:[#allocation2 + $0x68] sm:$0xf0] %v5509
  %5518 = vst [vmem:[#allocation2 + $0x70] sm:$0xf0] %v5510
  %5519 = vst [vmem:[#allocation2 + $0x78] sm:$0xf0] %v5511
  %5520 = vrot.lane.b32.xlu0 %v5247, 111
  %v5521 = vpop.permute.xlu0 %5520
  %5522 = vrot.lane.b32.xlu0 %v5249, 111
  %v5523 = vpop.permute.xlu0 %5522
  %5524 = vrot.lane.b32.xlu0 %v5288, 111
  %v5525 = vpop.permute.xlu0 %5524
  %5526 = vrot.lane.b32.xlu0 %v5290, 111
  %v5527 = vpop.permute.xlu0 %5526
  %v5528 = vsel %vm387, %v5525, %v5527
  %v5529 = vsel %vm387, %v5523, %v5525
  %v5530 = vsel %vm387, %v5521, %v5523
  %v5531 = vsel %vm387, %v5527, %v5521
  %v5532 = vmul.f32 %v5530, %v395
  %v5533 = vmul.f32 %v5529, %v399
  %v5534 = vmul.f32 %v5528, %v403
  %v5535 = vmul.f32 %v5531, %v407
  %v5536 = vpack.c.bf16 %v5532, %v5532
  %v5537 = vpack.c.bf16 %v5533, %v5533
  %v5538 = vpack.c.bf16 %v5534, %v5534
  %v5539 = vpack.c.bf16 %v5535, %v5535
  %5540 = vst [vmem:[#allocation2 + $0x80] sm:$0xf] %v5536
  %5541 = vst [vmem:[#allocation2 + $0x88] sm:$0xf] %v5537
  %5542 = vst [vmem:[#allocation2 + $0x90] sm:$0xf] %v5538
  %5543 = vst [vmem:[#allocation2 + $0x98] sm:$0xf] %v5539
  %v5544 = vld [vmem:[#allocation2] sm:$0xff]
  %v5545 = vld [vmem:[#allocation2 + $0x8] sm:$0xff]
  %v5546 = vld [vmem:[#allocation2 + $0x10] sm:$0xff]
  %v5547 = vld [vmem:[#allocation2 + $0x18] sm:$0xff]
  %v5548 = vld [vmem:[#allocation2 + $0x20] sm:$0xff]
  %v5549 = vld [vmem:[#allocation2 + $0x28] sm:$0xff]
  %v5550 = vld [vmem:[#allocation2 + $0x30] sm:$0xff]
  %v5551 = vld [vmem:[#allocation2 + $0x38] sm:$0xff]
  %v5552 = vld [vmem:[#allocation2 + $0x40] sm:$0xff]
  %v5553 = vld [vmem:[#allocation2 + $0x48] sm:$0xff]
  %v5554 = vld [vmem:[#allocation2 + $0x50] sm:$0xff]
  %v5555 = vld [vmem:[#allocation2 + $0x58] sm:$0xff]
  %v5556 = vld [vmem:[#allocation2 + $0x60] sm:$0xff]
  %v5557 = vld [vmem:[#allocation2 + $0x68] sm:$0xff]
  %v5558 = vld [vmem:[#allocation2 + $0x70] sm:$0xff]
  %v5559 = vld [vmem:[#allocation2 + $0x78] sm:$0xff]
  %v5560 = vld [vmem:[#allocation2 + $0x80] sm:$0xf]
  %v5561 = vld [vmem:[#allocation2 + $0x88] sm:$0xf]
  %v5562 = vld [vmem:[#allocation2 + $0x90] sm:$0xf]
  %v5563 = vld [vmem:[#allocation2 + $0x98] sm:$0xf]
  %5565 = vset.pattern.permute.xlu0 0
  %5566 = vperm.xlu0 %5565, %v5295
  %v5567 = vpop.permute.xlu0 %5566
  %v5570 = vsel %vm455, %v5294, 0
  %v5573 = vsel %vm459, %v5560, 0
  %v5576 = vsel %vm459, %v5561, 0
  %v5579 = vsel %vm459, %v5562, 0
  %v5582 = vsel %vm459, %v5563, 0
  %5584 = vmatprep.subr.bf16.mxu0 %v5545
  %5585 = vmatpush1.bf16.msra.mxu0 %v5544
  %5586 = vmatprep.subr.bf16.mxu0 %v5549
  %5587 = vmatpush1.bf16.msra.mxu0 %v5548
  %5588 = vmatprep.subr.bf16.mxu0 %v5553
  %5589 = vmatpush1.bf16.msra.mxu0 %v5552
  %5590 = vmatprep.subr.bf16.mxu0 %v5557
  %5591 = vmatpush1.bf16.msra.mxu0 %v5556
  %5592 = vmatprep.subr.bf16.mxu0 %v5576
  %5593 = vmatpush1.bf16.msra.mxu0 %v5573
  %5594 = vmatprep.subr.bf16.mxu0 0
  %5595 = vmatpush1.bf16.msra.mxu0 0
  %5596 = vmatprep.subr.bf16.mxu0 0
  %5597 = vmatpush1.bf16.msra.mxu0 0
  %5598 = vmatprep.subr.bf16.mxu0 0
  %5599 = vmatpush1.bf16.msra.mxu0 0
  %5600 = vmatprep.subr.bf16.mxu0 0
  %5601 = vmatpush1.bf16.msra.mxu0 0
  %5602 = vmatprep.subr.bf16.mxu0 0
  %5603 = vmatpush1.bf16.msra.mxu0 0
  %5604 = vmatprep.subr.bf16.mxu0 0
  %5605 = vmatpush1.bf16.msra.mxu0 0
  %5606 = vmatprep.subr.bf16.mxu0 0
  %5607 = vmatpush1.bf16.msra.mxu0 0
  %5608 = vmatprep.subr.bf16.mxu0 0
  %5609 = vmatpush1.bf16.msra.mxu0 0
  %5610 = vmatprep.subr.bf16.mxu0 0
  %5611 = vmatpush1.bf16.msra.mxu0 0
  %5612 = vmatprep.subr.bf16.mxu0 0
  %5613 = vmatpush1.bf16.msra.mxu0 0
  %5614 = vmatprep.subr.bf16.mxu0 0
  %5615 = vmatpush1.bf16.msra.mxu0 0
  %5616 = vmatprep.mubr.bf16.mxu0 0
  %5617 = vmatmul.mubr.bf16.gmra.mrb[0].mxu0 %v5570
  %v5618 = vpop.f32.mrb[0].mxu0
  %v5619 = vadd.f32 %v5567, %v5618
  %v5620 = vpop.f32.mrb[0].mxu0
  %v5621 = vadd.f32 %v5567, %v5620
  %v5622 = vpop.f32.mrb[0].mxu0
  %v5623 = vpop.f32.mrb[0].mxu0
  %5624 = vdwg.mxu0
  %5625 = vmatprep.subr.bf16.mxu0 %v5547
  %5626 = vmatpush1.bf16.msra.mxu0 %v5546
  %5627 = vmatprep.subr.bf16.mxu0 %v5551
  %5628 = vmatpush1.bf16.msra.mxu0 %v5550
  %5629 = vmatprep.subr.bf16.mxu0 %v5555
  %5630 = vmatpush1.bf16.msra.mxu0 %v5554
  %5631 = vmatprep.subr.bf16.mxu0 %v5559
  %5632 = vmatpush1.bf16.msra.mxu0 %v5558
  %5633 = vmatprep.subr.bf16.mxu0 %v5582
  %5634 = vmatpush1.bf16.msra.mxu0 %v5579
  %5635 = vmatprep.subr.bf16.mxu0 0
  %5636 = vmatpush1.bf16.msra.mxu0 0
  %5637 = vmatprep.subr.bf16.mxu0 0
  %5638 = vmatpush1.bf16.msra.mxu0 0
  %5639 = vmatprep.subr.bf16.mxu0 0
  %5640 = vmatpush1.bf16.msra.mxu0 0
  %5641 = vmatprep.subr.bf16.mxu0 0
  %5642 = vmatpush1.bf16.msra.mxu0 0
  %5643 = vmatprep.subr.bf16.mxu0 0
  %5644 = vmatpush1.bf16.msra.mxu0 0
  %5645 = vmatprep.subr.bf16.mxu0 0
  %5646 = vmatpush1.bf16.msra.mxu0 0
  %5647 = vmatprep.subr.bf16.mxu0 0
  %5648 = vmatpush1.bf16.msra.mxu0 0
  %5649 = vmatprep.subr.bf16.mxu0 0
  %5650 = vmatpush1.bf16.msra.mxu0 0
  %5651 = vmatprep.subr.bf16.mxu0 0
  %5652 = vmatpush1.bf16.msra.mxu0 0
  %5653 = vmatprep.subr.bf16.mxu0 0
  %5654 = vmatpush1.bf16.msra.mxu0 0
  %5655 = vmatprep.subr.bf16.mxu0 0
  %5656 = vmatpush1.bf16.msra.mxu0 0
  %5657 = vmatprep.mubr.bf16.mxu0 0
  %5658 = vmatmul.mubr.bf16.gmra.mrb[0].mxu0 %v5570
  %v5659 = vpop.f32.mrb[0].mxu0
  %v5660 = vadd.f32 %v5567, %v5659
  %v5661 = vpop.f32.mrb[0].mxu0
  %v5662 = vadd.f32 %v5567, %v5661
  %v5663 = vpop.f32.mrb[0].mxu0
  %v5664 = vpop.f32.mrb[0].mxu0
  %5665 = vdwg.mxu0
  %5666 = vst [vmem:[%s4] sm:$0xff] %v5619
  %5667 = vst [vmem:[%s4 + $0x8] sm:$0xff] %v5621
  %5668 = vst [vmem:[%s4 + $0x10] sm:$0xff] %v5660
  %5669 = vst [vmem:[%s4 + $0x18] sm:$0xff] %v5662
  // Predicated region
  $region18: #{rdn_forward.1} parent=0 // pred_check
    _
  $region19: #{rdn_forward.1} parent=0 // pred_check_branch
    %5671 = sbr.rel (0) target = $region21
  $region20: #{rdn_forward.1} parent=0 // pred_region
    _
  $region21: #{rdn_forward.1} parent=0 // pred_fallthru
    _
  // Predicated region
  $region22: #{rdn_forward.1} parent=0 // pred_check
    _
  $region23: #{rdn_forward.1} parent=0 // pred_check_branch
    %5673 = sbr.rel (0) target = $region25
  $region24: #{rdn_forward.1} parent=0 // pred_region
    _
  $region25: #{rdn_forward.1} parent=0 // pred_fallthru
    _

</llo_original>
